<compile_context>
chip_gen: v7x
topology: tpu7x:2x2x1
jax: 0.10.0
libtpu: 0.0.40
codegen_flags: <defaults>
</compile_context>

<pallas_src>
import functools

import jax
import jax.numpy as jnp
from jax import lax
from jax.experimental import pallas as pl
from jax.experimental.pallas import tpu as pltpu

LANE = 128   # channel dims are zero-padded to multiples of the TPU lane width


def _ceil_to(v, m):
    return ((v + m - 1) // m) * m


def _fold_bn(gamma, beta, mean, var, eps=1e-5):
    scale = gamma / jnp.sqrt(var + eps)
    return scale, beta - mean * scale


def _pick_th(Hout, Wout):
    """Output-row tile height: target M = th*Wout in the 128..512 range."""
    cands = [t for t in range(1, Hout + 1)
             if Hout % t == 0 and (t == Hout or (t * Wout) % 8 == 0)]
    in_band = [t for t in cands if 128 <= t * Wout <= 512]
    if in_band:
        ge = [t for t in in_band if t * Wout >= 256]
        return min(ge) if ge else max(in_band)
    return min(cands, key=lambda t: (abs(t * Wout - 256), -t))


# ----------------------------------------------------------------------------
# Fused kernel.  Grid = (batch, output-row tiles); every step is independent.
# ----------------------------------------------------------------------------
def _bottleneck_kernel(x_ref, w1_ref, b1_ref, w2_ref, b2_ref, w3_ref, b3_ref,
                       *rest, H, W, Wout, th, stride, has_proj, bottom_halo):
    if has_proj:
        ws_ref, bs_ref, o_ref, out1_scr = rest
    else:
        o_ref, out1_scr = rest

    Cp = x_ref.shape[-1]
    Pp = w1_ref.shape[-1]
    Ep = w3_ref.shape[-1]
    s = stride
    span = (th - 1) * s + 3                  # out1 rows needed by this tile
    r = pl.program_id(1)
    p0 = r * (th * s)                        # first padded-x row of the span

    # ---- conv1 (1x1) + BN + ReLU, only for the rows this tile needs.
    xs = x_ref[pl.ds(p0, span), :, :]                              # (span, W, Cp)
    y1 = jnp.dot(xs.reshape(span * W, Cp), w1_ref[...],
                 preferred_element_type=jnp.float32)
    y1 = jnp.maximum(y1 + b1_ref[...], 0.0)
    # offset-1 interior store (masked sublane store) is accepted; cheap.
    out1_scr[:, 1:W + 1, :] = y1.reshape(span, W, Pp).astype(out1_scr.dtype)

    # ---- zero ONLY the 3x3 halo of the scratch: left/right column always,
    #      top / bottom row only on the first / last row tile.
    zcol = jnp.zeros((span, 1, Pp), out1_scr.dtype)
    out1_scr[:, 0:1, :] = zcol
    out1_scr[:, W + 1:W + 2, :] = zcol
    zrow = jnp.zeros((1, W + 2, Pp), out1_scr.dtype)

    @pl.when(r == 0)
    def _():
        out1_scr[0:1, :, :] = zrow

    if bottom_halo:
        @pl.when(r == pl.num_programs(1) - 1)
        def _():
            out1_scr[span - 1:span, :, :] = zrow

    # ---- conv2 (3x3, stride) + BN + ReLU.  Build 3 kw-shifted slabs once;
    #      the 3 kh taps are row-offset views -> 3 accumulating MXU matmuls.
    def kw_slab(kw):
        if s == 1:
            return out1_scr[:, kw:kw + Wout, :]
        # TODO(synk): stride>1 tap gather implemented but unexercised below.
        return out1_scr[:, pl.ds(kw, Wout, s), :]

    a = jnp.concatenate([kw_slab(0), kw_slab(1), kw_slab(2)], axis=-1)
    acc = jnp.zeros((th * Wout, Pp), jnp.float32)
    for kh in range(3):
        ak = a[kh:kh + th] if s == 1 else a[kh:kh + (th - 1) * s + 1:s]
        acc = acc + jnp.dot(ak.reshape(th * Wout, 3 * Pp), w2_ref[kh],
                            preferred_element_type=jnp.float32)
    y2 = jnp.maximum(acc + b2_ref[...], 0.0).astype(jnp.bfloat16)

    # ---- conv3 (1x1) + BN
    y3 = jnp.dot(y2, w3_ref[...], preferred_element_type=jnp.float32) + b3_ref[...]

    # ---- shortcut (projection 1x1 conv + BN, or identity), add + ReLU.
    if has_proj:
        if s == 1:
            xsc = x_ref[pl.ds(p0 + 1, th), :, :]
        else:
            # TODO(synk): stride>1 projection subsampling unexercised below.
            xsc = x_ref[pl.ds(p0 + 1, th, s), pl.ds(0, Wout, s), :]
        sc = jnp.dot(xsc.reshape(th * Wout, Cp), ws_ref[...],
                     preferred_element_type=jnp.float32) + bs_ref[...]
    else:
        # Residual added from the bf16-cast input (tiny extra rounding vs the
        # f32 reference; well inside the test tolerance).
        sc = x_ref[pl.ds(p0 + 1, th), :, :].reshape(th * Wout, Ep).astype(jnp.float32)

    o_ref[...] = jnp.maximum(y3 + sc, 0.0).astype(o_ref.dtype)


# ----------------------------------------------------------------------------
# Wrapper: layout transforms, BN folding, channel padding, tiling decisions.
# ----------------------------------------------------------------------------
def bottleneck_forward(x_nchw, params, *, stride=1):
    x = jnp.transpose(x_nchw, (0, 2, 3, 1)).astype(jnp.float32)   # NCHW -> NHWC
    N, H, W, Cin = x.shape
    P = params["w1"].shape[1]
    E = params["w3"].shape[1]
    Hout = (H - 1) // stride + 1
    Wout = (W - 1) // stride + 1
    has_proj = (stride != 1) or (Cin != E)

    # Channel dims padded to multiples of 128 -> lane-dense matmuls / stores.
    Cp, Pp, Ep = _ceil_to(Cin, LANE), _ceil_to(P, LANE), _ceil_to(E, LANE)

    # Fold BN scale into the conv weights; kernels only add a bias.
    s1, b1 = _fold_bn(*params["bn1"])
    s2, b2 = _fold_bn(*params["bn2"])
    s3, b3 = _fold_bn(*params["bn3"])

    w1 = jnp.pad(params["w1"] * s1[None, :], ((0, Cp - Cin), (0, Pp - P)))
    w2 = jnp.pad(params["w2"] * s2[None, None, None, :],
                 ((0, 0), (0, 0), (0, Pp - P), (0, Pp - P))).reshape(3, 3 * Pp, Pp)
    w3 = jnp.pad(params["w3"] * s3[None, :], ((0, Pp - P), (0, Ep - E)))
    b1p = jnp.pad(b1, (0, Pp - P)).reshape(1, Pp).astype(jnp.float32)
    b2p = jnp.pad(b2, (0, Pp - P)).reshape(1, Pp).astype(jnp.float32)
    b3p = jnp.pad(b3, (0, Ep - E)).reshape(1, Ep).astype(jnp.float32)

    # NHWC bf16, channels padded to the lane width, one zero row above/below
    # (conv2's vertical halo).  All of this fuses into a single XLA pass.
    xb = jnp.pad(x, ((0, 0), (1, 1), (0, 0), (0, Cp - Cin))).astype(jnp.bfloat16)
    w1b, w2b, w3b = (w.astype(jnp.bfloat16) for w in (w1, w2, w3))

    if has_proj:
        ss, bs = _fold_bn(*params["bns"])
        wsb = jnp.pad(params["ws"] * ss[None, :],
                      ((0, Cp - Cin), (0, Ep - E))).astype(jnp.bfloat16)
        bsp = jnp.pad(bs, (0, Ep - E)).reshape(1, Ep).astype(jnp.float32)

    th = _pick_th(Hout, Wout)
    R = Hout // th
    span = (th - 1) * stride + 3

    kernel = functools.partial(
        _bottleneck_kernel, H=H, W=W, Wout=Wout, th=th, stride=stride,
        has_proj=has_proj, bottom_halo=((Hout - 1) * stride + 1 >= H))

    # Per-generation VMEM cap with headroom (96 MiB on 128-MiB chips, 48 MiB
    # on v7x's 64 MiB physical).
    try:
        vmem_phys = pltpu.get_tpu_info().vmem_capacity_bytes
    except Exception:
        vmem_phys = 64 * 2 ** 20
    vmem_cap = 96 * 2 ** 20 if vmem_phys >= 100 * 2 ** 20 else 48 * 2 ** 20

    def build_and_run(single_buffer_weights):
        def const_spec(shape):
            zeros = (0,) * len(shape)
            if single_buffer_weights:
                return pl.BlockSpec(shape, lambda n, r: zeros,
                                    pipeline_mode=pl.Buffered(1))
            return pl.BlockSpec(shape, lambda n, r: zeros)

        in_specs = [
            pl.BlockSpec((None, H + 2, W, Cp), lambda n, r: (n, 0, 0, 0)),
            const_spec((Cp, Pp)), const_spec((1, Pp)),
            const_spec((3, 3 * Pp, Pp)), const_spec((1, Pp)),
            const_spec((Pp, Ep)), const_spec((1, Ep)),
        ]
        args = [xb, w1b, b1p, w2b, b2p, w3b, b3p]
        if has_proj:
            in_specs += [const_spec((Cp, Ep)), const_spec((1, Ep))]
            args += [wsb, bsp]

        # Explicit per-buffer VMEM estimate (blocks, scratch, in-kernel temps).
        bpe = 2
        wfac = 1 if single_buffer_weights else 2
        w_bytes = (Cp * Pp + 9 * Pp * Pp + Pp * Ep
                   + (Cp * Ep if has_proj else 0)) * bpe * wfac
        w_bytes += (2 * Pp + (2 if has_proj else 1) * Ep) * 4 * wfac
        est = (2 * (H + 2) * W * Cp * bpe          # x block (double-buffered)
               + 2 * th * Wout * Ep * bpe          # out block (double-buffered)
               + span * (W + 2) * Pp * bpe         # out1 scratch
               + w_bytes
               + span * W * Cp * bpe               # conv1 input slab
               + span * W * Pp * (4 + bpe)         # y1 f32 + bf16
               + 2 * span * Wout * 3 * Pp * bpe    # kw slabs + concat
               + th * Wout * 3 * Pp * bpe          # per-kh matmul operand
               + th * Wout * Pp * (4 + bpe)        # conv2 accumulator f32 + bf16
               + 2 * th * Wout * Ep * 4            # conv3 out + shortcut f32
               + th * Wout * Cp * bpe)             # shortcut input slab
        vmem_limit = int(min(vmem_cap, max(est + 8 * 2 ** 20, 32 * 2 ** 20)))

        return pl.pallas_call(
            kernel,
            out_shape=jax.ShapeDtypeStruct((N, Hout * Wout, Ep), jnp.bfloat16),
            grid_spec=pltpu.PrefetchScalarGridSpec(
                num_scalar_prefetch=0,
                grid=(N, R),
                in_specs=in_specs,
                out_specs=pl.BlockSpec((None, th * Wout, Ep),
                                       lambda n, r: (n, r, 0)),
                scratch_shapes=[pltpu.VMEM((span, W + 2, Pp), jnp.bfloat16)],
            ),
            compiler_params=pltpu.CompilerParams(
                dimension_semantics=("parallel", "parallel"),
                vmem_limit_bytes=vmem_limit,
            ),
        )(*args)

    try:
        out = build_and_run(True)     # single-buffer the constant-index weights
    except Exception:
        out = build_and_run(False)    # fallback: default double-buffering

    # In a full network the next block would consume this NHWC, lane-padded
    # bf16 tensor directly; the slice/transpose/cast below only restore the
    # module's NCHW float32 interface for the standalone test.
    out = out.reshape(N, Hout, Wout, Ep)[..., :E]
    return jnp.transpose(out, (0, 3, 1, 2)).astype(jnp.float32)


# ----------------------------------------------------------------------------
# Pure-JAX f32 reference (module semantics) for correctness checking.
# ----------------------------------------------------------------------------
def reference_forward(x_nchw, params, *, stride=1):
    x = jnp.transpose(x_nchw, (0, 2, 3, 1))
    dn = ("NHWC", "HWIO", "NHWC")

    def conv(inp, w_hwio, s, pad):
        return lax.conv_general_dilated(inp, w_hwio, (s, s), pad,
                                        dimension_numbers=dn)

    def bn(inp, p):
        sc, bi = _fold_bn(*p)
        return inp * sc + bi

    Cin = x.shape[-1]
    E = params["w3"].shape[1]
    o = jax.nn.relu(bn(conv(x, params["w1"][None, None], 1, "VALID"), params["bn1"]))
    o = jax.nn.relu(bn(conv(o, params["w2"], stride, [(1, 1), (1, 1)]), params["bn2"]))
    o = bn(conv(o, params["w3"][None, None], 1, "VALID"), params["bn3"])
    if stride != 1 or Cin != E:
        sc = bn(conv(x, params["ws"][None, None], stride, "VALID"), params["bns"])
    else:
        sc = x
    o = jax.nn.relu(o + sc)
    return jnp.transpose(o, (0, 3, 1, 2))


# ----------------------------------------------------------------------------
def make_params(key, in_planes, planes, expansion=4):
    E = expansion * planes
    ks = jax.random.split(key, 16)

    def bn_params(k, c):
        k1, k2, k3, k4 = jax.random.split(k, 4)
        gamma = jax.random.uniform(k1, (c,), jnp.float32, 0.5, 1.5)
        beta = 0.1 * jax.random.normal(k2, (c,), jnp.float32)
        mean = 0.1 * jax.random.normal(k3, (c,), jnp.float32)
        var = jax.random.uniform(k4, (c,), jnp.float32, 0.5, 1.5)
        return (gamma, beta, mean, var)

    return {
        "w1": 0.2 * jax.random.normal(ks[0], (in_planes, planes), jnp.float32),
        "w2": 0.2 * jax.random.normal(ks[1], (3, 3, planes, planes), jnp.float32),
        "w3": 0.2 * jax.random.normal(ks[2], (planes, E), jnp.float32),
        "ws": 0.2 * jax.random.normal(ks[3], (in_planes, E), jnp.float32),
        "bn1": bn_params(ks[4], planes),
        "bn2": bn_params(ks[5], planes),
        "bn3": bn_params(ks[6], E),
        "bns": bn_params(ks[7], E),
    }


if __name__ == "__main__":
    key = jax.random.PRNGKey(0)
    N = 2
    configs = [
        # (in_planes, planes, stride, H, W)
        (16, 8, 1, 32, 16),   # projection shortcut, 2 output-row tiles (R=2)
        (32, 8, 1, 16, 16),   # identity shortcut (in_planes == expansion*planes)
        (16, 8, 1, 8, 8),     # single row tile: both halos handled in one step
    ]
    for i, (in_planes, planes, stride, H, W) in enumerate(configs):
        kx, kp = jax.random.split(jax.random.fold_in(key, i))
        x = jax.random.normal(kx, (N, in_planes, H, W), jnp.float32)   # NCHW
        params = make_params(kp, in_planes, planes)

        out = jax.block_until_ready(bottleneck_forward(x, params, stride=stride))
        ref = reference_forward(x, params, stride=stride)

        Hout = (H - 1) // stride + 1
        Wout = (W - 1) // stride + 1
        assert out.shape == ref.shape == (N, 4 * planes, Hout, Wout)
        # bf16 operands/outputs with f32 accumulation -> loosened tolerance.
        err = jnp.max(jnp.abs(out - ref))
        assert jnp.allclose(out, ref, atol=1e-1, rtol=5e-2), (
            f"cfg {i}: max abs err {err}")

    print("KERNEL_OK")
</pallas_src>

<mosaic_0001>
module attributes {stable_mosaic.version = 11 : i64} {
  func.func @_bottleneck_kernel(%arg0: i32, %arg1: i32, %arg2: memref<1x34x16x128xbf16, #tpu.memory_space<vmem>>, %arg3: memref<128x128xbf16, #tpu.memory_space<vmem>>, %arg4: memref<1x128xf32, #tpu.memory_space<vmem>>, %arg5: memref<3x384x128xbf16, #tpu.memory_space<vmem>>, %arg6: memref<1x128xf32, #tpu.memory_space<vmem>>, %arg7: memref<128x128xbf16, #tpu.memory_space<vmem>>, %arg8: memref<1x128xf32, #tpu.memory_space<vmem>>, %arg9: memref<128x128xbf16, #tpu.memory_space<vmem>>, %arg10: memref<1x128xf32, #tpu.memory_space<vmem>>, %arg11: memref<1x256x128xbf16, #tpu.memory_space<vmem>>, %arg12: memref<18x18x128xbf16, #tpu.memory_space<vmem>>) attributes {dimension_semantics = [#tpu.dimension_semantics<parallel>, #tpu.dimension_semantics<parallel>], iteration_bounds = array<i64: 2, 2>, scalar_prefetch = 0 : i64, scratch_operands = 1 : i64, tpu.core_type = #tpu.core_type<tc>, window_params = [{transform_indices = @transform_0, window_bounds = array<i64: 1, 34, 16, 128>}, {pipeline_mode = #tpu.pipeline_mode<synchronous>, transform_indices = @transform_1, window_bounds = array<i64: 128, 128>}, {pipeline_mode = #tpu.pipeline_mode<synchronous>, transform_indices = @transform_2, window_bounds = array<i64: 1, 128>}, {pipeline_mode = #tpu.pipeline_mode<synchronous>, transform_indices = @transform_3, window_bounds = array<i64: 3, 384, 128>}, {pipeline_mode = #tpu.pipeline_mode<synchronous>, transform_indices = @transform_4, window_bounds = array<i64: 1, 128>}, {pipeline_mode = #tpu.pipeline_mode<synchronous>, transform_indices = @transform_5, window_bounds = array<i64: 128, 128>}, {pipeline_mode = #tpu.pipeline_mode<synchronous>, transform_indices = @transform_6, window_bounds = array<i64: 1, 128>}, {pipeline_mode = #tpu.pipeline_mode<synchronous>, transform_indices = @transform_7, window_bounds = array<i64: 128, 128>}, {pipeline_mode = #tpu.pipeline_mode<synchronous>, transform_indices = @transform_8, window_bounds = array<i64: 1, 128>}, {transform_indices = @transform_9, window_bounds = array<i64: 1, 256, 128>}]} {
    %c16_i32 = arith.constant 16 : i32
    %0 = arith.muli %arg1, %c16_i32 : i32
    %c0 = arith.constant 0 : index
    %1 = arith.index_cast %0 : i32 to index
    %c0_0 = arith.constant 0 : index
    %c0_1 = arith.constant 0 : index
    %2 = vector.load %arg2[%c0, %1, %c0_0, %c0_1] : memref<1x34x16x128xbf16, #tpu.memory_space<vmem>>, vector<1x18x16x128xbf16>
    %3 = vector.shape_cast %2 : vector<1x18x16x128xbf16> to vector<18x16x128xbf16>
    %4 = vector.shape_cast %3 : vector<18x16x128xbf16> to vector<288x128xbf16>
    %c0_2 = arith.constant 0 : index
    %c0_3 = arith.constant 0 : index
    %5 = vector.load %arg3[%c0_2, %c0_3] : memref<128x128xbf16, #tpu.memory_space<vmem>>, vector<128x128xbf16>
    %cst = arith.constant dense<0.000000e+00> : vector<288x128xf32>
    %6 = tpu.matmul %4, %5, %cst {dimension_numbers = #tpu.dot_dimension_numbers<[1], [0], [0], [1], [0, 0, 1, 1], [], []>} : vector<288x128xbf16>, vector<128x128xbf16>, vector<288x128xf32> -> vector<288x128xf32>
    %c0_4 = arith.constant 0 : index
    %c0_5 = arith.constant 0 : index
    %7 = vector.load %arg4[%c0_4, %c0_5] : memref<1x128xf32, #tpu.memory_space<vmem>>, vector<1x128xf32>
    %8 = vector.broadcast %7 : vector<1x128xf32> to vector<288x128xf32>
    %9 = arith.addf %6, %8 : vector<288x128xf32>
    %cst_6 = arith.constant 0.000000e+00 : f32
    %10 = vector.broadcast %cst_6 : f32 to vector<288x128xf32>
    %11 = arith.maximumf %9, %10 : vector<288x128xf32>
    %12 = vector.shape_cast %11 : vector<288x128xf32> to vector<18x16x128xf32>
    %13 = arith.truncf %12 : vector<18x16x128xf32> to vector<18x16x128xbf16>
    %c0_7 = arith.constant 0 : index
    %c1 = arith.constant 1 : index
    %c0_8 = arith.constant 0 : index
    %14 = vector.load %arg12[%c0_7, %c1, %c0_8] : memref<18x18x128xbf16, #tpu.memory_space<vmem>>, vector<18x16x128xbf16>
    tpu.vector_store %arg12[%c0_7, %c1, %c0_8], %13 {strides = array<i32>} : memref<18x18x128xbf16, #tpu.memory_space<vmem>>, vector<18x16x128xbf16>,
    %cst_9 = arith.constant 0.000000e+00 : bf16
    %15 = vector.broadcast %cst_9 : bf16 to vector<18x1x128xbf16>
    %c0_10 = arith.constant 0 : index
    %c0_11 = arith.constant 0 : index
    %c0_12 = arith.constant 0 : index
    %16 = vector.load %arg12[%c0_10, %c0_11, %c0_12] : memref<18x18x128xbf16, #tpu.memory_space<vmem>>, vector<18x1x128xbf16>
    tpu.vector_store %arg12[%c0_10, %c0_11, %c0_12], %15 {strides = array<i32>} : memref<18x18x128xbf16, #tpu.memory_space<vmem>>, vector<18x1x128xbf16>,
    %c0_13 = arith.constant 0 : index
    %c17 = arith.constant 17 : index
    %c0_14 = arith.constant 0 : index
    %17 = vector.load %arg12[%c0_13, %c17, %c0_14] : memref<18x18x128xbf16, #tpu.memory_space<vmem>>, vector<18x1x128xbf16>
    tpu.vector_store %arg12[%c0_13, %c17, %c0_14], %15 {strides = array<i32>} : memref<18x18x128xbf16, #tpu.memory_space<vmem>>, vector<18x1x128xbf16>,
    %cst_15 = arith.constant 0.000000e+00 : bf16
    %18 = vector.broadcast %cst_15 : bf16 to vector<1x18x128xbf16>
    %c0_i32 = arith.constant 0 : i32
    %19 = arith.cmpi eq, %arg1, %c0_i32 : i32
    %20 = arith.extui %19 : i1 to i32
    %c0_i32_16 = arith.constant 0 : i32
    %21 = arith.cmpi ne, %20, %c0_i32_16 : i32
    scf.if %21 {
      %c0_60 = arith.constant 0 : index
      %c0_61 = arith.constant 0 : index
      %c0_62 = arith.constant 0 : index
      %76 = vector.load %arg12[%c0_60, %c0_61, %c0_62] : memref<18x18x128xbf16, #tpu.memory_space<vmem>>, vector<1x18x128xbf16>
      tpu.vector_store %arg12[%c0_60, %c0_61, %c0_62], %18 {strides = array<i32>} : memref<18x18x128xbf16, #tpu.memory_space<vmem>>, vector<1x18x128xbf16>,
    } else {
    }
    %c1_i32 = arith.constant 1 : i32
    %22 = arith.cmpi eq, %arg1, %c1_i32 : i32
    %23 = arith.extui %22 : i1 to i32
    %c0_i32_17 = arith.constant 0 : i32
    %24 = arith.cmpi ne, %23, %c0_i32_17 : i32
    scf.if %24 {
      %c17_60 = arith.constant 17 : index
      %c0_61 = arith.constant 0 : index
      %c0_62 = arith.constant 0 : index
      %76 = vector.load %arg12[%c17_60, %c0_61, %c0_62] : memref<18x18x128xbf16, #tpu.memory_space<vmem>>, vector<1x18x128xbf16>
      tpu.vector_store %arg12[%c17_60, %c0_61, %c0_62], %18 {strides = array<i32>} : memref<18x18x128xbf16, #tpu.memory_space<vmem>>, vector<1x18x128xbf16>,
    } else {
    }
    %c0_18 = arith.constant 0 : index
    %c0_19 = arith.constant 0 : index
    %c0_20 = arith.constant 0 : index
    %25 = vector.load %arg12[%c0_18, %c0_19, %c0_20] : memref<18x18x128xbf16, #tpu.memory_space<vmem>>, vector<18x16x128xbf16>
    %c0_21 = arith.constant 0 : index
    %c1_22 = arith.constant 1 : index
    %c0_23 = arith.constant 0 : index
    %26 = vector.load %arg12[%c0_21, %c1_22, %c0_23] : memref<18x18x128xbf16, #tpu.memory_space<vmem>>, vector<18x16x128xbf16>
    %c0_24 = arith.constant 0 : index
    %c2 = arith.constant 2 : index
    %c0_25 = arith.constant 0 : index
    %27 = vector.load %arg12[%c0_24, %c2, %c0_25] : memref<18x18x128xbf16, #tpu.memory_space<vmem>>, vector<18x16x128xbf16>
    %28 = tpu.concatenate %25, %26, %27 in 2 : vector<18x16x128xbf16>, vector<18x16x128xbf16>, vector<18x16x128xbf16> -> vector<18x16x384xbf16>
    %cst_26 = arith.constant 0.000000e+00 : f32
    %29 = vector.broadcast %cst_26 : f32 to vector<256x128xf32>
    %30 = vector.extract_strided_slice %28 {offsets = [0, 0, 0], sizes = [16, 16, 384], strides = [1, 1, 1]} : vector<18x16x384xbf16> to vector<16x16x384xbf16>
    %31 = vector.shape_cast %30 : vector<16x16x384xbf16> to vector<256x384xbf16>
    %c0_27 = arith.constant 0 : index
    %c0_28 = arith.constant 0 : index
    %c0_29 = arith.constant 0 : index
    %32 = vector.load %arg5[%c0_27, %c0_28, %c0_29] : memref<3x384x128xbf16, #tpu.memory_space<vmem>>, vector<1x384x128xbf16>
    %33 = vector.shape_cast %32 : vector<1x384x128xbf16> to vector<384x128xbf16>
    %cst_30 = arith.constant dense<0.000000e+00> : vector<256x128xf32>
    %34 = tpu.matmul %31, %33, %cst_30 {dimension_numbers = #tpu.dot_dimension_numbers<[1], [0], [0], [1], [0, 0, 1, 1], [], []>} : vector<256x384xbf16>, vector<384x128xbf16>, vector<256x128xf32> -> vector<256x128xf32>
    %35 = arith.addf %29, %34 : vector<256x128xf32>
    %36 = vector.extract_strided_slice %28 {offsets = [1, 0, 0], sizes = [16, 16, 384], strides = [1, 1, 1]} : vector<18x16x384xbf16> to vector<16x16x384xbf16>
    %37 = vector.shape_cast %36 : vector<16x16x384xbf16> to vector<256x384xbf16>
    %c1_31 = arith.constant 1 : index
    %c0_32 = arith.constant 0 : index
    %c0_33 = arith.constant 0 : index
    %38 = vector.load %arg5[%c1_31, %c0_32, %c0_33] : memref<3x384x128xbf16, #tpu.memory_space<vmem>>, vector<1x384x128xbf16>
    %39 = vector.shape_cast %38 : vector<1x384x128xbf16> to vector<384x128xbf16>
    %cst_34 = arith.constant dense<0.000000e+00> : vector<256x128xf32>
    %40 = tpu.matmul %37, %39, %cst_34 {dimension_numbers = #tpu.dot_dimension_numbers<[1], [0], [0], [1], [0, 0, 1, 1], [], []>} : vector<256x384xbf16>, vector<384x128xbf16>, vector<256x128xf32> -> vector<256x128xf32>
    %41 = arith.addf %35, %40 : vector<256x128xf32>
    %42 = vector.extract_strided_slice %28 {offsets = [2, 0, 0], sizes = [16, 16, 384], strides = [1, 1, 1]} : vector<18x16x384xbf16> to vector<16x16x384xbf16>
    %43 = vector.shape_cast %42 : vector<16x16x384xbf16> to vector<256x384xbf16>
    %c2_35 = arith.constant 2 : index
    %c0_36 = arith.constant 0 : index
    %c0_37 = arith.constant 0 : index
    %44 = vector.load %arg5[%c2_35, %c0_36, %c0_37] : memref<3x384x128xbf16, #tpu.memory_space<vmem>>, vector<1x384x128xbf16>
    %45 = vector.shape_cast %44 : vector<1x384x128xbf16> to vector<384x128xbf16>
    %cst_38 = arith.constant dense<0.000000e+00> : vector<256x128xf32>
    %46 = tpu.matmul %43, %45, %cst_38 {dimension_numbers = #tpu.dot_dimension_numbers<[1], [0], [0], [1], [0, 0, 1, 1], [], []>} : vector<256x384xbf16>, vector<384x128xbf16>, vector<256x128xf32> -> vector<256x128xf32>
    %47 = arith.addf %41, %46 : vector<256x128xf32>
    %c0_39 = arith.constant 0 : index
    %c0_40 = arith.constant 0 : index
    %48 = vector.load %arg6[%c0_39, %c0_40] : memref<1x128xf32, #tpu.memory_space<vmem>>, vector<1x128xf32>
    %49 = vector.broadcast %48 : vector<1x128xf32> to vector<256x128xf32>
    %50 = arith.addf %47, %49 : vector<256x128xf32>
    %cst_41 = arith.constant 0.000000e+00 : f32
    %51 = vector.broadcast %cst_41 : f32 to vector<256x128xf32>
    %52 = arith.maximumf %50, %51 : vector<256x128xf32>
    %53 = arith.truncf %52 : vector<256x128xf32> to vector<256x128xbf16>
    %c0_42 = arith.constant 0 : index
    %c0_43 = arith.constant 0 : index
    %54 = vector.load %arg7[%c0_42, %c0_43] : memref<128x128xbf16, #tpu.memory_space<vmem>>, vector<128x128xbf16>
    %cst_44 = arith.constant dense<0.000000e+00> : vector<256x128xf32>
    %55 = tpu.matmul %53, %54, %cst_44 {dimension_numbers = #tpu.dot_dimension_numbers<[1], [0], [0], [1], [0, 0, 1, 1], [], []>} : vector<256x128xbf16>, vector<128x128xbf16>, vector<256x128xf32> -> vector<256x128xf32>
    %c0_45 = arith.constant 0 : index
    %c0_46 = arith.constant 0 : index
    %56 = vector.load %arg8[%c0_45, %c0_46] : memref<1x128xf32, #tpu.memory_space<vmem>>, vector<1x128xf32>
    %57 = vector.broadcast %56 : vector<1x128xf32> to vector<256x128xf32>
    %58 = arith.addf %55, %57 : vector<256x128xf32>
    %c1_i32_47 = arith.constant 1 : i32
    %59 = arith.addi %0, %c1_i32_47 : i32
    %c0_48 = arith.constant 0 : index
    %60 = arith.index_cast %59 : i32 to index
    %c0_49 = arith.constant 0 : index
    %c0_50 = arith.constant 0 : index
    %61 = vector.load %arg2[%c0_48, %60, %c0_49, %c0_50] : memref<1x34x16x128xbf16, #tpu.memory_space<vmem>>, vector<1x16x16x128xbf16>
    %62 = vector.shape_cast %61 : vector<1x16x16x128xbf16> to vector<16x16x128xbf16>
    %63 = vector.shape_cast %62 : vector<16x16x128xbf16> to vector<256x128xbf16>
    %c0_51 = arith.constant 0 : index
    %c0_52 = arith.constant 0 : index
    %64 = vector.load %arg9[%c0_51, %c0_52] : memref<128x128xbf16, #tpu.memory_space<vmem>>, vector<128x128xbf16>
    %cst_53 = arith.constant dense<0.000000e+00> : vector<256x128xf32>
    %65 = tpu.matmul %63, %64, %cst_53 {dimension_numbers = #tpu.dot_dimension_numbers<[1], [0], [0], [1], [0, 0, 1, 1], [], []>} : vector<256x128xbf16>, vector<128x128xbf16>, vector<256x128xf32> -> vector<256x128xf32>
    %c0_54 = arith.constant 0 : index
    %c0_55 = arith.constant 0 : index
    %66 = vector.load %arg10[%c0_54, %c0_55] : memref<1x128xf32, #tpu.memory_space<vmem>>, vector<1x128xf32>
    %67 = vector.broadcast %66 : vector<1x128xf32> to vector<256x128xf32>
    %68 = arith.addf %65, %67 : vector<256x128xf32>
    %69 = arith.addf %58, %68 : vector<256x128xf32>
    %cst_56 = arith.constant 0.000000e+00 : f32
    %70 = vector.broadcast %cst_56 : f32 to vector<256x128xf32>
    %71 = arith.maximumf %69, %70 : vector<256x128xf32>
    %72 = arith.truncf %71 : vector<256x128xf32> to vector<256x128xbf16>
    %c0_57 = arith.constant 0 : index
    %c0_58 = arith.constant 0 : index
    %c0_59 = arith.constant 0 : index
    %73 = vector.load %arg11[%c0_57, %c0_58, %c0_59] : memref<1x256x128xbf16, #tpu.memory_space<vmem>>, vector<1x256x128xbf16>
    %74 = vector.shape_cast %73 : vector<1x256x128xbf16> to vector<256x128xbf16>
    %75 = vector.shape_cast %72 : vector<256x128xbf16> to vector<1x256x128xbf16>
    tpu.vector_store %arg11[%c0_57, %c0_58, %c0_59], %75 {strides = array<i32>} : memref<1x256x128xbf16, #tpu.memory_space<vmem>>, vector<1x256x128xbf16>,
    return
  }
  func.func @transform_0(%arg0: i32, %arg1: i32) -> (i32, i32, i32, i32) {
    %c0_i32 = arith.constant 0 : i32
    %c0_i32_0 = arith.constant 0 : i32
    %c0_i32_1 = arith.constant 0 : i32
    %c0_i32_2 = arith.constant 0 : i32
    return %arg0, %c0_i32, %c0_i32_0, %c0_i32_1 : i32, i32, i32, i32
  }
  func.func @transform_1(%arg0: i32, %arg1: i32) -> (i32, i32) {
    %c0_i32 = arith.constant 0 : i32
    %c0_i32_0 = arith.constant 0 : i32
    %c0_i32_1 = arith.constant 0 : i32
    return %c0_i32, %c0_i32_0 : i32, i32
  }
  func.func @transform_2(%arg0: i32, %arg1: i32) -> (i32, i32) {
    %c0_i32 = arith.constant 0 : i32
    %c0_i32_0 = arith.constant 0 : i32
    %c0_i32_1 = arith.constant 0 : i32
    return %c0_i32, %c0_i32_0 : i32, i32
  }
  func.func @transform_3(%arg0: i32, %arg1: i32) -> (i32, i32, i32) {
    %c0_i32 = arith.constant 0 : i32
    %c0_i32_0 = arith.constant 0 : i32
    %c0_i32_1 = arith.constant 0 : i32
    %c0_i32_2 = arith.constant 0 : i32
    return %c0_i32, %c0_i32_0, %c0_i32_1 : i32, i32, i32
  }
  func.func @transform_4(%arg0: i32, %arg1: i32) -> (i32, i32) {
    %c0_i32 = arith.constant 0 : i32
    %c0_i32_0 = arith.constant 0 : i32
    %c0_i32_1 = arith.constant 0 : i32
    return %c0_i32, %c0_i32_0 : i32, i32
  }
  func.func @transform_5(%arg0: i32, %arg1: i32) -> (i32, i32) {
    %c0_i32 = arith.constant 0 : i32
    %c0_i32_0 = arith.constant 0 : i32
    %c0_i32_1 = arith.constant 0 : i32
    return %c0_i32, %c0_i32_0 : i32, i32
  }
  func.func @transform_6(%arg0: i32, %arg1: i32) -> (i32, i32) {
    %c0_i32 = arith.constant 0 : i32
    %c0_i32_0 = arith.constant 0 : i32
    %c0_i32_1 = arith.constant 0 : i32
    return %c0_i32, %c0_i32_0 : i32, i32
  }
  func.func @transform_7(%arg0: i32, %arg1: i32) -> (i32, i32) {
    %c0_i32 = arith.constant 0 : i32
    %c0_i32_0 = arith.constant 0 : i32
    %c0_i32_1 = arith.constant 0 : i32
    return %c0_i32, %c0_i32_0 : i32, i32
  }
  func.func @transform_8(%arg0: i32, %arg1: i32) -> (i32, i32) {
    %c0_i32 = arith.constant 0 : i32
    %c0_i32_0 = arith.constant 0 : i32
    %c0_i32_1 = arith.constant 0 : i32
    return %c0_i32, %c0_i32_0 : i32, i32
  }
  func.func @transform_9(%arg0: i32, %arg1: i32) -> (i32, i32, i32) {
    %c0_i32 = arith.constant 0 : i32
    %c0_i32_0 = arith.constant 0 : i32
    return %arg0, %arg1, %c0_i32 : i32, i32, i32
  }
}

module attributes {stable_mosaic.version = 11 : i64} {
  func.func @_bottleneck_kernel(%arg0: i32, %arg1: i32, %arg2: memref<1x34x16x128xbf16, #tpu.memory_space<vmem>>, %arg3: memref<128x128xbf16, #tpu.memory_space<vmem>>, %arg4: memref<1x128xf32, #tpu.memory_space<vmem>>, %arg5: memref<3x384x128xbf16, #tpu.memory_space<vmem>>, %arg6: memref<1x128xf32, #tpu.memory_space<vmem>>, %arg7: memref<128x128xbf16, #tpu.memory_space<vmem>>, %arg8: memref<1x128xf32, #tpu.memory_space<vmem>>, %arg9: memref<128x128xbf16, #tpu.memory_space<vmem>>, %arg10: memref<1x128xf32, #tpu.memory_space<vmem>>, %arg11: memref<1x256x128xbf16, #tpu.memory_space<vmem>>, %arg12: memref<18x18x128xbf16, #tpu.memory_space<vmem>>) attributes {dimension_semantics = [#tpu.dimension_semantics<parallel>, #tpu.dimension_semantics<parallel>], iteration_bounds = array<i64: 2, 2>, scalar_prefetch = 0 : i64, scratch_operands = 1 : i64, tpu.core_type = #tpu.core_type<tc>, window_params = [{transform_indices = @transform_0, window_bounds = array<i64: 1, 34, 16, 128>}, {pipeline_mode = #tpu.pipeline_mode<synchronous>, transform_indices = @transform_1, window_bounds = array<i64: 128, 128>}, {pipeline_mode = #tpu.pipeline_mode<synchronous>, transform_indices = @transform_2, window_bounds = array<i64: 1, 128>}, {pipeline_mode = #tpu.pipeline_mode<synchronous>, transform_indices = @transform_3, window_bounds = array<i64: 3, 384, 128>}, {pipeline_mode = #tpu.pipeline_mode<synchronous>, transform_indices = @transform_4, window_bounds = array<i64: 1, 128>}, {pipeline_mode = #tpu.pipeline_mode<synchronous>, transform_indices = @transform_5, window_bounds = array<i64: 128, 128>}, {pipeline_mode = #tpu.pipeline_mode<synchronous>, transform_indices = @transform_6, window_bounds = array<i64: 1, 128>}, {pipeline_mode = #tpu.pipeline_mode<synchronous>, transform_indices = @transform_7, window_bounds = array<i64: 128, 128>}, {pipeline_mode = #tpu.pipeline_mode<synchronous>, transform_indices = @transform_8, window_bounds = array<i64: 1, 128>}, {transform_indices = @transform_9, window_bounds = array<i64: 1, 256, 128>}]} {
    %c16_i32 = arith.constant 16 : i32
    %0 = arith.muli %arg1, %c16_i32 : i32
    %c0 = arith.constant 0 : index
    %1 = arith.index_cast %0 : i32 to index
    %c0_0 = arith.constant 0 : index
    %c0_1 = arith.constant 0 : index
    %2 = vector.load %arg2[%c0, %1, %c0_0, %c0_1] : memref<1x34x16x128xbf16, #tpu.memory_space<vmem>>, vector<1x18x16x128xbf16>
    %3 = vector.shape_cast %2 : vector<1x18x16x128xbf16> to vector<18x16x128xbf16>
    %4 = vector.shape_cast %3 : vector<18x16x128xbf16> to vector<288x128xbf16>
    %c0_2 = arith.constant 0 : index
    %c0_3 = arith.constant 0 : index
    %5 = vector.load %arg3[%c0_2, %c0_3] : memref<128x128xbf16, #tpu.memory_space<vmem>>, vector<128x128xbf16>
    %cst = arith.constant dense<0.000000e+00> : vector<288x128xf32>
    %6 = tpu.matmul %4, %5, %cst {dimension_numbers = #tpu.dot_dimension_numbers<[1], [0], [0], [1], [0, 0, 1, 1], [], []>} : vector<288x128xbf16>, vector<128x128xbf16>, vector<288x128xf32> -> vector<288x128xf32>
    %c0_4 = arith.constant 0 : index
    %c0_5 = arith.constant 0 : index
    %7 = vector.load %arg4[%c0_4, %c0_5] : memref<1x128xf32, #tpu.memory_space<vmem>>, vector<1x128xf32>
    %8 = vector.broadcast %7 : vector<1x128xf32> to vector<288x128xf32>
    %9 = arith.addf %6, %8 : vector<288x128xf32>
    %cst_6 = arith.constant 0.000000e+00 : f32
    %10 = vector.broadcast %cst_6 : f32 to vector<288x128xf32>
    %11 = arith.maximumf %9, %10 : vector<288x128xf32>
    %12 = vector.shape_cast %11 : vector<288x128xf32> to vector<18x16x128xf32>
    %13 = arith.truncf %12 : vector<18x16x128xf32> to vector<18x16x128xbf16>
    %c0_7 = arith.constant 0 : index
    %c1 = arith.constant 1 : index
    %c0_8 = arith.constant 0 : index
    %14 = vector.load %arg12[%c0_7, %c1, %c0_8] : memref<18x18x128xbf16, #tpu.memory_space<vmem>>, vector<18x16x128xbf16>
    tpu.vector_store %arg12[%c0_7, %c1, %c0_8], %13 {strides = array<i32>} : memref<18x18x128xbf16, #tpu.memory_space<vmem>>, vector<18x16x128xbf16>,
    %cst_9 = arith.constant 0.000000e+00 : bf16
    %15 = vector.broadcast %cst_9 : bf16 to vector<18x1x128xbf16>
    %c0_10 = arith.constant 0 : index
    %c0_11 = arith.constant 0 : index
    %c0_12 = arith.constant 0 : index
    %16 = vector.load %arg12[%c0_10, %c0_11, %c0_12] : memref<18x18x128xbf16, #tpu.memory_space<vmem>>, vector<18x1x128xbf16>
    tpu.vector_store %arg12[%c0_10, %c0_11, %c0_12], %15 {strides = array<i32>} : memref<18x18x128xbf16, #tpu.memory_space<vmem>>, vector<18x1x128xbf16>,
    %c0_13 = arith.constant 0 : index
    %c17 = arith.constant 17 : index
    %c0_14 = arith.constant 0 : index
    %17 = vector.load %arg12[%c0_13, %c17, %c0_14] : memref<18x18x128xbf16, #tpu.memory_space<vmem>>, vector<18x1x128xbf16>
    tpu.vector_store %arg12[%c0_13, %c17, %c0_14], %15 {strides = array<i32>} : memref<18x18x128xbf16, #tpu.memory_space<vmem>>, vector<18x1x128xbf16>,
    %cst_15 = arith.constant 0.000000e+00 : bf16
    %18 = vector.broadcast %cst_15 : bf16 to vector<1x18x128xbf16>
    %c0_i32 = arith.constant 0 : i32
    %19 = arith.cmpi eq, %arg1, %c0_i32 : i32
    %20 = arith.extui %19 : i1 to i32
    %c0_i32_16 = arith.constant 0 : i32
    %21 = arith.cmpi ne, %20, %c0_i32_16 : i32
    scf.if %21 {
      %c0_60 = arith.constant 0 : index
      %c0_61 = arith.constant 0 : index
      %c0_62 = arith.constant 0 : index
      %76 = vector.load %arg12[%c0_60, %c0_61, %c0_62] : memref<18x18x128xbf16, #tpu.memory_space<vmem>>, vector<1x18x128xbf16>
      tpu.vector_store %arg12[%c0_60, %c0_61, %c0_62], %18 {strides = array<i32>} : memref<18x18x128xbf16, #tpu.memory_space<vmem>>, vector<1x18x128xbf16>,
    } else {
    }
    %c1_i32 = arith.constant 1 : i32
    %22 = arith.cmpi eq, %arg1, %c1_i32 : i32
    %23 = arith.extui %22 : i1 to i32
    %c0_i32_17 = arith.constant 0 : i32
    %24 = arith.cmpi ne, %23, %c0_i32_17 : i32
    scf.if %24 {
      %c17_60 = arith.constant 17 : index
      %c0_61 = arith.constant 0 : index
      %c0_62 = arith.constant 0 : index
      %76 = vector.load %arg12[%c17_60, %c0_61, %c0_62] : memref<18x18x128xbf16, #tpu.memory_space<vmem>>, vector<1x18x128xbf16>
      tpu.vector_store %arg12[%c17_60, %c0_61, %c0_62], %18 {strides = array<i32>} : memref<18x18x128xbf16, #tpu.memory_space<vmem>>, vector<1x18x128xbf16>,
    } else {
    }
    %c0_18 = arith.constant 0 : index
    %c0_19 = arith.constant 0 : index
    %c0_20 = arith.constant 0 : index
    %25 = vector.load %arg12[%c0_18, %c0_19, %c0_20] : memref<18x18x128xbf16, #tpu.memory_space<vmem>>, vector<18x16x128xbf16>
    %c0_21 = arith.constant 0 : index
    %c1_22 = arith.constant 1 : index
    %c0_23 = arith.constant 0 : index
    %26 = vector.load %arg12[%c0_21, %c1_22, %c0_23] : memref<18x18x128xbf16, #tpu.memory_space<vmem>>, vector<18x16x128xbf16>
    %c0_24 = arith.constant 0 : index
    %c2 = arith.constant 2 : index
    %c0_25 = arith.constant 0 : index
    %27 = vector.load %arg12[%c0_24, %c2, %c0_25] : memref<18x18x128xbf16, #tpu.memory_space<vmem>>, vector<18x16x128xbf16>
    %28 = tpu.concatenate %25, %26, %27 in 2 : vector<18x16x128xbf16>, vector<18x16x128xbf16>, vector<18x16x128xbf16> -> vector<18x16x384xbf16>
    %cst_26 = arith.constant 0.000000e+00 : f32
    %29 = vector.broadcast %cst_26 : f32 to vector<256x128xf32>
    %30 = vector.extract_strided_slice %28 {offsets = [0, 0, 0], sizes = [16, 16, 384], strides = [1, 1, 1]} : vector<18x16x384xbf16> to vector<16x16x384xbf16>
    %31 = vector.shape_cast %30 : vector<16x16x384xbf16> to vector<256x384xbf16>
    %c0_27 = arith.constant 0 : index
    %c0_28 = arith.constant 0 : index
    %c0_29 = arith.constant 0 : index
    %32 = vector.load %arg5[%c0_27, %c0_28, %c0_29] : memref<3x384x128xbf16, #tpu.memory_space<vmem>>, vector<1x384x128xbf16>
    %33 = vector.shape_cast %32 : vector<1x384x128xbf16> to vector<384x128xbf16>
    %cst_30 = arith.constant dense<0.000000e+00> : vector<256x128xf32>
    %34 = tpu.matmul %31, %33, %cst_30 {dimension_numbers = #tpu.dot_dimension_numbers<[1], [0], [0], [1], [0, 0, 1, 1], [], []>} : vector<256x384xbf16>, vector<384x128xbf16>, vector<256x128xf32> -> vector<256x128xf32>
    %35 = arith.addf %29, %34 : vector<256x128xf32>
    %36 = vector.extract_strided_slice %28 {offsets = [1, 0, 0], sizes = [16, 16, 384], strides = [1, 1, 1]} : vector<18x16x384xbf16> to vector<16x16x384xbf16>
    %37 = vector.shape_cast %36 : vector<16x16x384xbf16> to vector<256x384xbf16>
    %c1_31 = arith.constant 1 : index
    %c0_32 = arith.constant 0 : index
    %c0_33 = arith.constant 0 : index
    %38 = vector.load %arg5[%c1_31, %c0_32, %c0_33] : memref<3x384x128xbf16, #tpu.memory_space<vmem>>, vector<1x384x128xbf16>
    %39 = vector.shape_cast %38 : vector<1x384x128xbf16> to vector<384x128xbf16>
    %cst_34 = arith.constant dense<0.000000e+00> : vector<256x128xf32>
    %40 = tpu.matmul %37, %39, %cst_34 {dimension_numbers = #tpu.dot_dimension_numbers<[1], [0], [0], [1], [0, 0, 1, 1], [], []>} : vector<256x384xbf16>, vector<384x128xbf16>, vector<256x128xf32> -> vector<256x128xf32>
    %41 = arith.addf %35, %40 : vector<256x128xf32>
    %42 = vector.extract_strided_slice %28 {offsets = [2, 0, 0], sizes = [16, 16, 384], strides = [1, 1, 1]} : vector<18x16x384xbf16> to vector<16x16x384xbf16>
    %43 = vector.shape_cast %42 : vector<16x16x384xbf16> to vector<256x384xbf16>
    %c2_35 = arith.constant 2 : index
    %c0_36 = arith.constant 0 : index
    %c0_37 = arith.constant 0 : index
    %44 = vector.load %arg5[%c2_35, %c0_36, %c0_37] : memref<3x384x128xbf16, #tpu.memory_space<vmem>>, vector<1x384x128xbf16>
    %45 = vector.shape_cast %44 : vector<1x384x128xbf16> to vector<384x128xbf16>
    %cst_38 = arith.constant dense<0.000000e+00> : vector<256x128xf32>
    %46 = tpu.matmul %43, %45, %cst_38 {dimension_numbers = #tpu.dot_dimension_numbers<[1], [0], [0], [1], [0, 0, 1, 1], [], []>} : vector<256x384xbf16>, vector<384x128xbf16>, vector<256x128xf32> -> vector<256x128xf32>
    %47 = arith.addf %41, %46 : vector<256x128xf32>
    %c0_39 = arith.constant 0 : index
    %c0_40 = arith.constant 0 : index
    %48 = vector.load %arg6[%c0_39, %c0_40] : memref<1x128xf32, #tpu.memory_space<vmem>>, vector<1x128xf32>
    %49 = vector.broadcast %48 : vector<1x128xf32> to vector<256x128xf32>
    %50 = arith.addf %47, %49 : vector<256x128xf32>
    %cst_41 = arith.constant 0.000000e+00 : f32
    %51 = vector.broadcast %cst_41 : f32 to vector<256x128xf32>
    %52 = arith.maximumf %50, %51 : vector<256x128xf32>
    %53 = arith.truncf %52 : vector<256x128xf32> to vector<256x128xbf16>
    %c0_42 = arith.constant 0 : index
    %c0_43 = arith.constant 0 : index
    %54 = vector.load %arg7[%c0_42, %c0_43] : memref<128x128xbf16, #tpu.memory_space<vmem>>, vector<128x128xbf16>
    %cst_44 = arith.constant dense<0.000000e+00> : vector<256x128xf32>
    %55 = tpu.matmul %53, %54, %cst_44 {dimension_numbers = #tpu.dot_dimension_numbers<[1], [0], [0], [1], [0, 0, 1, 1], [], []>} : vector<256x128xbf16>, vector<128x128xbf16>, vector<256x128xf32> -> vector<256x128xf32>
    %c0_45 = arith.constant 0 : index
    %c0_46 = arith.constant 0 : index
    %56 = vector.load %arg8[%c0_45, %c0_46] : memref<1x128xf32, #tpu.memory_space<vmem>>, vector<1x128xf32>
    %57 = vector.broadcast %56 : vector<1x128xf32> to vector<256x128xf32>
    %58 = arith.addf %55, %57 : vector<256x128xf32>
    %c1_i32_47 = arith.constant 1 : i32
    %59 = arith.addi %0, %c1_i32_47 : i32
    %c0_48 = arith.constant 0 : index
    %60 = arith.index_cast %59 : i32 to index
    %c0_49 = arith.constant 0 : index
    %c0_50 = arith.constant 0 : index
    %61 = vector.load %arg2[%c0_48, %60, %c0_49, %c0_50] : memref<1x34x16x128xbf16, #tpu.memory_space<vmem>>, vector<1x16x16x128xbf16>
    %62 = vector.shape_cast %61 : vector<1x16x16x128xbf16> to vector<16x16x128xbf16>
    %63 = vector.shape_cast %62 : vector<16x16x128xbf16> to vector<256x128xbf16>
    %c0_51 = arith.constant 0 : index
    %c0_52 = arith.constant 0 : index
    %64 = vector.load %arg9[%c0_51, %c0_52] : memref<128x128xbf16, #tpu.memory_space<vmem>>, vector<128x128xbf16>
    %cst_53 = arith.constant dense<0.000000e+00> : vector<256x128xf32>
    %65 = tpu.matmul %63, %64, %cst_53 {dimension_numbers = #tpu.dot_dimension_numbers<[1], [0], [0], [1], [0, 0, 1, 1], [], []>} : vector<256x128xbf16>, vector<128x128xbf16>, vector<256x128xf32> -> vector<256x128xf32>
    %c0_54 = arith.constant 0 : index
    %c0_55 = arith.constant 0 : index
    %66 = vector.load %arg10[%c0_54, %c0_55] : memref<1x128xf32, #tpu.memory_space<vmem>>, vector<1x128xf32>
    %67 = vector.broadcast %66 : vector<1x128xf32> to vector<256x128xf32>
    %68 = arith.addf %65, %67 : vector<256x128xf32>
    %69 = arith.addf %58, %68 : vector<256x128xf32>
    %cst_56 = arith.constant 0.000000e+00 : f32
    %70 = vector.broadcast %cst_56 : f32 to vector<256x128xf32>
    %71 = arith.maximumf %69, %70 : vector<256x128xf32>
    %72 = arith.truncf %71 : vector<256x128xf32> to vector<256x128xbf16>
    %c0_57 = arith.constant 0 : index
    %c0_58 = arith.constant 0 : index
    %c0_59 = arith.constant 0 : index
    %73 = vector.load %arg11[%c0_57, %c0_58, %c0_59] : memref<1x256x128xbf16, #tpu.memory_space<vmem>>, vector<1x256x128xbf16>
    %74 = vector.shape_cast %73 : vector<1x256x128xbf16> to vector<256x128xbf16>
    %75 = vector.shape_cast %72 : vector<256x128xbf16> to vector<1x256x128xbf16>
    tpu.vector_store %arg11[%c0_57, %c0_58, %c0_59], %75 {strides = array<i32>} : memref<1x256x128xbf16, #tpu.memory_space<vmem>>, vector<1x256x128xbf16>,
    return
  }
  func.func @transform_0(%arg0: i32, %arg1: i32) -> (i32, i32, i32, i32) {
    %c0_i32 = arith.constant 0 : i32
    %c0_i32_0 = arith.constant 0 : i32
    %c0_i32_1 = arith.constant 0 : i32
    %c0_i32_2 = arith.constant 0 : i32
    return %arg0, %c0_i32, %c0_i32_0, %c0_i32_1 : i32, i32, i32, i32
  }
  func.func @transform_1(%arg0: i32, %arg1: i32) -> (i32, i32) {
    %c0_i32 = arith.constant 0 : i32
    %c0_i32_0 = arith.constant 0 : i32
    %c0_i32_1 = arith.constant 0 : i32
    return %c0_i32, %c0_i32_0 : i32, i32
  }
  func.func @transform_2(%arg0: i32, %arg1: i32) -> (i32, i32) {
    %c0_i32 = arith.constant 0 : i32
    %c0_i32_0 = arith.constant 0 : i32
    %c0_i32_1 = arith.constant 0 : i32
    return %c0_i32, %c0_i32_0 : i32, i32
  }
  func.func @transform_3(%arg0: i32, %arg1: i32) -> (i32, i32, i32) {
    %c0_i32 = arith.constant 0 : i32
    %c0_i32_0 = arith.constant 0 : i32
    %c0_i32_1 = arith.constant 0 : i32
    %c0_i32_2 = arith.constant 0 : i32
    return %c0_i32, %c0_i32_0, %c0_i32_1 : i32, i32, i32
  }
  func.func @transform_4(%arg0: i32, %arg1: i32) -> (i32, i32) {
    %c0_i32 = arith.constant 0 : i32
    %c0_i32_0 = arith.constant 0 : i32
    %c0_i32_1 = arith.constant 0 : i32
    return %c0_i32, %c0_i32_0 : i32, i32
  }
  func.func @transform_5(%arg0: i32, %arg1: i32) -> (i32, i32) {
    %c0_i32 = arith.constant 0 : i32
    %c0_i32_0 = arith.constant 0 : i32
    %c0_i32_1 = arith.constant 0 : i32
    return %c0_i32, %c0_i32_0 : i32, i32
  }
  func.func @transform_6(%arg0: i32, %arg1: i32) -> (i32, i32) {
    %c0_i32 = arith.constant 0 : i32
    %c0_i32_0 = arith.constant 0 : i32
    %c0_i32_1 = arith.constant 0 : i32
    return %c0_i32, %c0_i32_0 : i32, i32
  }
  func.func @transform_7(%arg0: i32, %arg1: i32) -> (i32, i32) {
    %c0_i32 = arith.constant 0 : i32
    %c0_i32_0 = arith.constant 0 : i32
    %c0_i32_1 = arith.constant 0 : i32
    return %c0_i32, %c0_i32_0 : i32, i32
  }
  func.func @transform_8(%arg0: i32, %arg1: i32) -> (i32, i32) {
    %c0_i32 = arith.constant 0 : i32
    %c0_i32_0 = arith.constant 0 : i32
    %c0_i32_1 = arith.constant 0 : i32
    return %c0_i32, %c0_i32_0 : i32, i32
  }
  func.func @transform_9(%arg0: i32, %arg1: i32) -> (i32, i32, i32) {
    %c0_i32 = arith.constant 0 : i32
    %c0_i32_0 = arith.constant 0 : i32
    return %arg0, %arg1, %c0_i32 : i32, i32, i32
  }
}

</mosaic_0001>

<llo_original>
// kernel: tpu_custom_call.1
$region0: #{tpu_custom_call.1}
  #allocation0 [shape = 'u32[]', space=smem, size = 0x4, offset = 0x4, fixed_abs, tag = 'smem constant byte address 0x4 - core index']
  #allocation1 [shape = 'u32[144,128]{1,0:T(1,128)}', space=vmem, size = 0x12000, scoped, tag = 'internal scratch']
  #allocation2 [shape = 'bf16[18,18,128]{2,1,0:T(8,128)(2,1)}', space=vmem, size = 0x1b000, scoped, tag = 'scratch operand']
  %s0 = inlined_call_operand.hbm [shape: bf16[2,34,16,128], index: 0, kind: input, shape index: {}]
  %s1 = inlined_call_operand.hbm [shape: bf16[128,128], index: 1, kind: input, shape index: {}]
  %s2 = inlined_call_operand.vmem [shape: f32[1,128], index: 2, kind: input, shape index: {}]
  %s3 = inlined_call_operand.hbm [shape: bf16[3,384,128], index: 3, kind: input, shape index: {}]
  %s4 = inlined_call_operand.vmem [shape: f32[1,128], index: 4, kind: input, shape index: {}]
  %s5 = inlined_call_operand.hbm [shape: bf16[128,128], index: 5, kind: input, shape index: {}]
  %s6 = inlined_call_operand.vmem [shape: f32[1,128], index: 6, kind: input, shape index: {}]
  %s7 = inlined_call_operand.hbm [shape: bf16[128,128], index: 7, kind: input, shape index: {}]
  %s8 = inlined_call_operand.vmem [shape: f32[1,128], index: 8, kind: input, shape index: {}]
  %s9 = inlined_call_operand.hbm [shape: bf16[2,512,128], index: 9, kind: output, shape index: {}]
  %s10 = sld [smem:[#allocation0]]
  $region97: #{tpu_custom_call.1} parent=0
    _
  %s12 = ssub.s32 1, %s10
  %s13 = scalar_select 0, %s12, %s10
  $region1: #{tpu_custom_call.1} parent=0
    #allocation3 [shape = 'u8[278528]{0}', space=vmem, size = 0x44000, scoped, tag = 'input window, operand 0']
    #allocation4 [shape = 's32[2]{0}', space=sflag, size = 0x8, scoped, tag = 'scoped memory for tpu_custom_call.1']
    #allocation5 [shape = 's32[2]{0}', space=sflag, size = 0x8, scoped, tag = 'scoped memory for tpu_custom_call.1']
    #allocation6 [shape = 'u8[32768]{0}', space=vmem, size = 0x8000, scoped, tag = 'input window, operand 1, single buffered']
    #allocation7 [shape = 's32[1]{0}', space=sflag, size = 0x4, scoped, tag = 'scoped memory for tpu_custom_call.1']
    #allocation8 [shape = 'u8[294912]{0}', space=vmem, size = 0x48000, scoped, tag = 'input window, operand 3, single buffered']
    #allocation9 [shape = 'u8[32768]{0}', space=vmem, size = 0x8000, scoped, tag = 'input window, operand 5, single buffered']
    #allocation10 [shape = 's32[1]{0}', space=sflag, size = 0x4, scoped, tag = 'scoped memory for tpu_custom_call.1']
    #allocation11 [shape = 'u8[32768]{0}', space=vmem, size = 0x8000, scoped, tag = 'input window, operand 7, single buffered']
    #allocation12 [shape = 'u8[131072]{0}', space=vmem, size = 0x20000, scoped, tag = 'output window, operand 0']
    %14 = vsyncpa [#allocation4], 0
    %s15 = scalar_lea.sflag [#allocation4], 1
    %16 = vsyncpa %s15, 0
    %17 = vsyncpa [#allocation7], 0
    %18 = vsyncpa [#allocation10], 0
    %19 = vsyncpa [#allocation5], 0
    %s20 = scalar_lea.sflag [#allocation5], 1
    %21 = vsyncpa %s20, 0
    loop: start=0, step=1, limit=6
    $region2: #{tpu_custom_call.1} parent=1 // loop_pre_header
      _
    $region3: #{tpu_custom_call.1} parent=1 // loop_header
      %s23 = sphi 0, %s27
      %p24 = scmp.ge.s32.totalorder %s23, 6
      %s30 = sphi 0, %s42
      %s31 = sphi 0, %s38
      %s32 = sphi 0, %s30
      %s33 = sphi 0, %s31
      %s34 = sphi 0, %s32
      %s35 = sphi 0, %s33
      %s45 = sphi 0, %s47
      %s48 = sphi 0, %s45
      %s49 = sphi 0, %s48
      %s65 = sphi 0, %s49
      %s69 = sphi 0, %s69
      %s71 = sphi 0, %s69
      %s72 = sphi 0, %s71
      %s86 = sphi 0, %s72
      %s90 = sphi 0, %s90
      %s92 = sphi 0, %s90
      %s93 = sphi 0, %s92
      %s107 = sphi 0, %s93
      %s111 = sphi 0, %s111
      %s113 = sphi 0, %s111
      %s114 = sphi 0, %s113
      %s128 = sphi 0, %s114
      %s132 = sphi 0, %s132
      %s134 = sphi 0, %s132
      %s135 = sphi 0, %s134
      %s149 = sphi 0, %s135
      %s153 = sphi 0, %s153
      %s155 = sphi 0, %s153
      %s156 = sphi 0, %s155
      %s170 = sphi 0, %s156
      %s174 = sphi 0, %s174
      %s176 = sphi 0, %s174
      %s177 = sphi 0, %s176
      %s191 = sphi 0, %s177
      %s195 = sphi 0, %s195
      %s197 = sphi 0, %s195
      %s198 = sphi 0, %s197
      %s212 = sphi 0, %s198
      %s216 = sphi 0, %s216
      %s218 = sphi 0, %s216
      %s219 = sphi 0, %s218
      %s233 = sphi 0, %s219
      %s241 = sphi 0, %s243
      %s244 = sphi 0, %s241
      %s245 = sphi 0, %s244
      %s261 = sphi 0, %s245
    $region4: #{tpu_custom_call.1} parent=1 // loop_header_branch
      %26 = sbr.rel (%p24) target = $region8
    $region5: #{tpu_custom_call.1} parent=1 // loop_body
      %s28 = ssub.s32 %s23, 1
      %s29 = ssub.s32 %s23, 2
      %s36 = sadd.s32 1, %s31
      %p37 = scmp.ge.s32.totalorder %s36, 2
      %s38 = scalar_select %p37, 0, %s36
      %s39 = sadd.s32 1, %s30
      %s40 = scalar_select %p37, %s39, %s30
      %p41 = scmp.ge.s32.totalorder %s40, 2
      %s42 = scalar_select %p41, 0, %s40
      %s43 = ssub.s32 %s30, %s42
      %p44 = scmp.eq.s32.totalorder %s43, 0
      %s46 = sadd.s32 %s45, 1
      %s47 = scalar_select %p44, %s45, %s46
      %p50 = pneg %p44
      %p51 = scmp.eq.s32.totalorder %s23, 3
      %p52 = por %p50, %p51
      %p53 = scmp.ne.s32.totalorder %s45, %s48
      %p54 = scmp.eq.s32.totalorder %s23, 0
      %p55 = por %p53, %p54
      %p56 = scmp.ne.s32.totalorder %s45, %s48
      %p57 = scmp.eq.s32.totalorder %s28, 3
      %p58 = por %p56, %p57
      %p59 = scmp.ne.s32.totalorder %s48, %s49
      %p60 = scmp.eq.s32.totalorder %s28, 0
      %p61 = por %p59, %p60
      %p62 = scmp.ne.s32.totalorder %s48, %s49
      %p63 = scmp.eq.s32.totalorder %s29, 3
      %p64 = por %p62, %p63
      %p66 = scmp.ne.s32.totalorder %s49, %s65
      %p67 = scmp.eq.s32.totalorder %s29, 0
      %p68 = por %p66, %p67
      %s70 = sadd.s32 %s69, 1
      %p73 = scmp.eq.s32.totalorder %s23, 3
      %p74 = scmp.ne.s32.totalorder %s69, %s71
      %p75 = scmp.eq.s32.totalorder %s23, 0
      %p76 = por %p74, %p75
      %p77 = scmp.ne.s32.totalorder %s69, %s71
      %p78 = scmp.eq.s32.totalorder %s28, 3
      %p79 = por %p77, %p78
      %p80 = scmp.ne.s32.totalorder %s71, %s72
      %p81 = scmp.eq.s32.totalorder %s28, 0
      %p82 = por %p80, %p81
      %p83 = scmp.ne.s32.totalorder %s71, %s72
      %p84 = scmp.eq.s32.totalorder %s29, 3
      %p85 = por %p83, %p84
      %p87 = scmp.ne.s32.totalorder %s72, %s86
      %p88 = scmp.eq.s32.totalorder %s29, 0
      %p89 = por %p87, %p88
      %s91 = sadd.s32 %s90, 1
      %p94 = scmp.eq.s32.totalorder %s23, 3
      %p95 = scmp.ne.s32.totalorder %s90, %s92
      %p96 = scmp.eq.s32.totalorder %s23, 0
      %p97 = por %p95, %p96
      %p98 = scmp.ne.s32.totalorder %s90, %s92
      %p99 = scmp.eq.s32.totalorder %s28, 3
      %p100 = por %p98, %p99
      %p101 = scmp.ne.s32.totalorder %s92, %s93
      %p102 = scmp.eq.s32.totalorder %s28, 0
      %p103 = por %p101, %p102
      %p104 = scmp.ne.s32.totalorder %s92, %s93
      %p105 = scmp.eq.s32.totalorder %s29, 3
      %p106 = por %p104, %p105
      %p108 = scmp.ne.s32.totalorder %s93, %s107
      %p109 = scmp.eq.s32.totalorder %s29, 0
      %p110 = por %p108, %p109
      %s112 = sadd.s32 %s111, 1
      %p115 = scmp.eq.s32.totalorder %s23, 3
      %p116 = scmp.ne.s32.totalorder %s111, %s113
      %p117 = scmp.eq.s32.totalorder %s23, 0
      %p118 = por %p116, %p117
      %p119 = scmp.ne.s32.totalorder %s111, %s113
      %p120 = scmp.eq.s32.totalorder %s28, 3
      %p121 = por %p119, %p120
      %p122 = scmp.ne.s32.totalorder %s113, %s114
      %p123 = scmp.eq.s32.totalorder %s28, 0
      %p124 = por %p122, %p123
      %p125 = scmp.ne.s32.totalorder %s113, %s114
      %p126 = scmp.eq.s32.totalorder %s29, 3
      %p127 = por %p125, %p126
      %p129 = scmp.ne.s32.totalorder %s114, %s128
      %p130 = scmp.eq.s32.totalorder %s29, 0
      %p131 = por %p129, %p130
      %s133 = sadd.s32 %s132, 1
      %p136 = scmp.eq.s32.totalorder %s23, 3
      %p137 = scmp.ne.s32.totalorder %s132, %s134
      %p138 = scmp.eq.s32.totalorder %s23, 0
      %p139 = por %p137, %p138
      %p140 = scmp.ne.s32.totalorder %s132, %s134
      %p141 = scmp.eq.s32.totalorder %s28, 3
      %p142 = por %p140, %p141
      %p143 = scmp.ne.s32.totalorder %s134, %s135
      %p144 = scmp.eq.s32.totalorder %s28, 0
      %p145 = por %p143, %p144
      %p146 = scmp.ne.s32.totalorder %s134, %s135
      %p147 = scmp.eq.s32.totalorder %s29, 3
      %p148 = por %p146, %p147
      %p150 = scmp.ne.s32.totalorder %s135, %s149
      %p151 = scmp.eq.s32.totalorder %s29, 0
      %p152 = por %p150, %p151
      %s154 = sadd.s32 %s153, 1
      %p157 = scmp.eq.s32.totalorder %s23, 3
      %p158 = scmp.ne.s32.totalorder %s153, %s155
      %p159 = scmp.eq.s32.totalorder %s23, 0
      %p160 = por %p158, %p159
      %p161 = scmp.ne.s32.totalorder %s153, %s155
      %p162 = scmp.eq.s32.totalorder %s28, 3
      %p163 = por %p161, %p162
      %p164 = scmp.ne.s32.totalorder %s155, %s156
      %p165 = scmp.eq.s32.totalorder %s28, 0
      %p166 = por %p164, %p165
      %p167 = scmp.ne.s32.totalorder %s155, %s156
      %p168 = scmp.eq.s32.totalorder %s29, 3
      %p169 = por %p167, %p168
      %p171 = scmp.ne.s32.totalorder %s156, %s170
      %p172 = scmp.eq.s32.totalorder %s29, 0
      %p173 = por %p171, %p172
      %s175 = sadd.s32 %s174, 1
      %p178 = scmp.eq.s32.totalorder %s23, 3
      %p179 = scmp.ne.s32.totalorder %s174, %s176
      %p180 = scmp.eq.s32.totalorder %s23, 0
      %p181 = por %p179, %p180
      %p182 = scmp.ne.s32.totalorder %s174, %s176
      %p183 = scmp.eq.s32.totalorder %s28, 3
      %p184 = por %p182, %p183
      %p185 = scmp.ne.s32.totalorder %s176, %s177
      %p186 = scmp.eq.s32.totalorder %s28, 0
      %p187 = por %p185, %p186
      %p188 = scmp.ne.s32.totalorder %s176, %s177
      %p189 = scmp.eq.s32.totalorder %s29, 3
      %p190 = por %p188, %p189
      %p192 = scmp.ne.s32.totalorder %s177, %s191
      %p193 = scmp.eq.s32.totalorder %s29, 0
      %p194 = por %p192, %p193
      %s196 = sadd.s32 %s195, 1
      %p199 = scmp.eq.s32.totalorder %s23, 3
      %p200 = scmp.ne.s32.totalorder %s195, %s197
      %p201 = scmp.eq.s32.totalorder %s23, 0
      %p202 = por %p200, %p201
      %p203 = scmp.ne.s32.totalorder %s195, %s197
      %p204 = scmp.eq.s32.totalorder %s28, 3
      %p205 = por %p203, %p204
      %p206 = scmp.ne.s32.totalorder %s197, %s198
      %p207 = scmp.eq.s32.totalorder %s28, 0
      %p208 = por %p206, %p207
      %p209 = scmp.ne.s32.totalorder %s197, %s198
      %p210 = scmp.eq.s32.totalorder %s29, 3
      %p211 = por %p209, %p210
      %p213 = scmp.ne.s32.totalorder %s198, %s212
      %p214 = scmp.eq.s32.totalorder %s29, 0
      %p215 = por %p213, %p214
      %s217 = sadd.s32 %s216, 1
      %p220 = scmp.eq.s32.totalorder %s23, 3
      %p221 = scmp.ne.s32.totalorder %s216, %s218
      %p222 = scmp.eq.s32.totalorder %s23, 0
      %p223 = por %p221, %p222
      %p224 = scmp.ne.s32.totalorder %s216, %s218
      %p225 = scmp.eq.s32.totalorder %s28, 3
      %p226 = por %p224, %p225
      %p227 = scmp.ne.s32.totalorder %s218, %s219
      %p228 = scmp.eq.s32.totalorder %s28, 0
      %p229 = por %p227, %p228
      %p230 = scmp.ne.s32.totalorder %s218, %s219
      %p231 = scmp.eq.s32.totalorder %s29, 3
      %p232 = por %p230, %p231
      %p234 = scmp.ne.s32.totalorder %s219, %s233
      %p235 = scmp.eq.s32.totalorder %s29, 0
      %p236 = por %p234, %p235
      %s237 = ssub.s32 %s30, %s42
      %s238 = ssub.s32 %s31, %s38
      %s239 = sor.u32 %s237, %s238
      %p240 = scmp.eq.s32.totalorder %s239, 0
      %s242 = sadd.s32 %s241, 1
      %s243 = scalar_select %p240, %s241, %s242
      %p246 = pneg %p240
      %p247 = scmp.eq.s32.totalorder %s23, 3
      %p248 = por %p246, %p247
      %p249 = scmp.ne.s32.totalorder %s241, %s244
      %p250 = scmp.eq.s32.totalorder %s23, 0
      %p251 = por %p249, %p250
      %p252 = scmp.ne.s32.totalorder %s241, %s244
      %p253 = scmp.eq.s32.totalorder %s28, 3
      %p254 = por %p252, %p253
      %p255 = scmp.ne.s32.totalorder %s244, %s245
      %p256 = scmp.eq.s32.totalorder %s28, 0
      %p257 = por %p255, %p256
      %p258 = scmp.ne.s32.totalorder %s244, %s245
      %p259 = scmp.eq.s32.totalorder %s29, 3
      %p260 = por %p258, %p259
      %p262 = scmp.ne.s32.totalorder %s245, %s261
      %p263 = scmp.eq.s32.totalorder %s29, 0
      %p264 = por %p262, %p263
      %p265 = scmp.le.s32.totalorder 1, %s23
      %p266 = scmp.lt.s32.totalorder %s23, 5
      %p267 = pnand %p265, %p266
      %p268 = pneg %p267
      // Predicated region
      $region9: #{tpu_custom_call.1} parent=5 // pred_check
        _
      $region10: #{tpu_custom_call.1} parent=5 // pred_check_branch
        %270 = sbr.rel (%p267) target = $region12
      $region11: #{tpu_custom_call.1} parent=5 // pred_region
        %s271 = ssub.s32 %s23, 1
        // Predicated region
        $region13: #{tpu_custom_call.1} parent=11 // pred_check
          %p272 = pneg %p82
        $region14: #{tpu_custom_call.1} parent=11 // pred_check_branch
          %274 = sbr.rel (%p272) target = $region16
        $region15: #{tpu_custom_call.1} parent=11 // pred_region
          %s276 = ssub.s32 1024, 1024
          %277 = vsyncadd [#allocation7], %s276
          %s278 = sshll.u32 [#allocation6], 4
          %s279 = int_to_ptr.vmem [resolvable:$true] %s278
          %284 = dma.hbm_to_vmem [thread:$0]  %s1, 1024, %s279, [#allocation7], 64, 64, 4
        $region16: #{tpu_custom_call.1} parent=11 // pred_fallthru
          _
        // Predicated region
        $region17: #{tpu_custom_call.1} parent=11 // pred_check
          %p285 = pneg %p103
        $region18: #{tpu_custom_call.1} parent=11 // pred_check_branch
          %287 = sbr.rel (%p285) target = $region20
        $region19: #{tpu_custom_call.1} parent=11 // pred_region
          _
        $region20: #{tpu_custom_call.1} parent=11 // pred_fallthru
          _
        // Predicated region
        $region21: #{tpu_custom_call.1} parent=11 // pred_check
          %p288 = pneg %p124
        $region22: #{tpu_custom_call.1} parent=11 // pred_check_branch
          %290 = sbr.rel (%p288) target = $region24
        $region23: #{tpu_custom_call.1} parent=11 // pred_region
          %s292 = ssub.s32 9216, 9216
          %293 = vsyncadd [#allocation7], %s292
          %s294 = sshll.u32 [#allocation8], 4
          %s295 = int_to_ptr.vmem [resolvable:$true] %s294
          %300 = dma.hbm_to_vmem [thread:$0]  %s3, 9216, %s295, [#allocation7], 64, 64, 4
        $region24: #{tpu_custom_call.1} parent=11 // pred_fallthru
          _
        // Predicated region
        $region25: #{tpu_custom_call.1} parent=11 // pred_check
          %p301 = pneg %p145
        $region26: #{tpu_custom_call.1} parent=11 // pred_check_branch
          %303 = sbr.rel (%p301) target = $region28
        $region27: #{tpu_custom_call.1} parent=11 // pred_region
          _
        $region28: #{tpu_custom_call.1} parent=11 // pred_fallthru
          _
        // Predicated region
        $region29: #{tpu_custom_call.1} parent=11 // pred_check
          %p304 = pneg %p166
        $region30: #{tpu_custom_call.1} parent=11 // pred_check_branch
          %306 = sbr.rel (%p304) target = $region32
        $region31: #{tpu_custom_call.1} parent=11 // pred_region
          %s308 = ssub.s32 1024, 1024
          %309 = vsyncadd [#allocation10], %s308
          %s310 = sshll.u32 [#allocation9], 4
          %s311 = int_to_ptr.vmem [resolvable:$true] %s310
          %316 = dma.hbm_to_vmem [thread:$0]  %s5, 1024, %s311, [#allocation10], 64, 64, 4
        $region32: #{tpu_custom_call.1} parent=11 // pred_fallthru
          _
        // Predicated region
        $region33: #{tpu_custom_call.1} parent=11 // pred_check
          %p317 = pneg %p187
        $region34: #{tpu_custom_call.1} parent=11 // pred_check_branch
          %319 = sbr.rel (%p317) target = $region36
        $region35: #{tpu_custom_call.1} parent=11 // pred_region
          _
        $region36: #{tpu_custom_call.1} parent=11 // pred_fallthru
          _
        // Predicated region
        $region37: #{tpu_custom_call.1} parent=11 // pred_check
          %p320 = pneg %p208
        $region38: #{tpu_custom_call.1} parent=11 // pred_check_branch
          %322 = sbr.rel (%p320) target = $region40
        $region39: #{tpu_custom_call.1} parent=11 // pred_region
          %s324 = ssub.s32 1024, 1024
          %325 = vsyncadd [#allocation10], %s324
          %s326 = sshll.u32 [#allocation11], 4
          %s327 = int_to_ptr.vmem [resolvable:$true] %s326
          %332 = dma.hbm_to_vmem [thread:$0]  %s7, 1024, %s327, [#allocation10], 64, 64, 4
        $region40: #{tpu_custom_call.1} parent=11 // pred_fallthru
          _
        // Predicated region
        $region41: #{tpu_custom_call.1} parent=11 // pred_check
          %p333 = pneg %p229
        $region42: #{tpu_custom_call.1} parent=11 // pred_check_branch
          %335 = sbr.rel (%p333) target = $region44
        $region43: #{tpu_custom_call.1} parent=11 // pred_region
          _
        $region44: #{tpu_custom_call.1} parent=11 // pred_fallthru
          _
      $region12: #{tpu_custom_call.1} parent=5 // pred_fallthru
        _
      %p336 = scmp.lt.s32.totalorder %s23, 4
      // Predicated region
      $region45: #{tpu_custom_call.1} parent=5 // pred_check
        %p337 = pneg %p336
      $region46: #{tpu_custom_call.1} parent=5 // pred_check_branch
        %339 = sbr.rel (%p337) target = $region48
      $region47: #{tpu_custom_call.1} parent=5 // pred_region
        // Predicated region
        $region49: #{tpu_custom_call.1} parent=47 // pred_check
          %p340 = pneg %p55
        $region50: #{tpu_custom_call.1} parent=47 // pred_check_branch
          %342 = sbr.rel (%p340) target = $region52
        $region51: #{tpu_custom_call.1} parent=47 // pred_region
          %s343 = sand.u32 %s45, 1
          %s344 = scalar_lea.sflag [#allocation4], %s343
          %s345 = sand.u32 %s45, 1
          %s346 = smul.addr %s345, 272
          %s347 = scalar_lea.vmem [#allocation3], %s346
          %s349 = ssub.s32 4352, 4352
          %350 = vsyncadd %s344, %s349
          %s351 = smul.addr %s30, 68
          %s352 = smul.addr %s351, 64
          %s353 = scalar_lea.hbm %s0, %s352
          %s354 = sshll.u32 %s347, 4
          %s355 = int_to_ptr.vmem [resolvable:$true] %s354
          %360 = dma.hbm_to_vmem [thread:$0]  %s353, 4352, %s355, %s344, 64, 64, 4
        $region52: #{tpu_custom_call.1} parent=47 // pred_fallthru
          _
      $region48: #{tpu_custom_call.1} parent=5 // pred_fallthru
        _
      %p361 = scmp.le.s32.totalorder 1, %s23
      %p362 = scmp.lt.s32.totalorder %s23, 5
      %p363 = pnand %p361, %p362
      %p364 = pneg %p363
      // Predicated region
      $region53: #{tpu_custom_call.1} parent=5 // pred_check
        _
      $region54: #{tpu_custom_call.1} parent=5 // pred_check_branch
        %366 = sbr.rel (%p363) target = $region56
      $region55: #{tpu_custom_call.1} parent=5 // pred_region
        %s367 = ssub.s32 %s23, 1
        %s368 = sand.u32 %s48, 1
        %s369 = scalar_lea.sflag [#allocation4], %s368
        %s370 = sand.u32 %s48, 1
        %s371 = smul.addr %s370, 272
        %s372 = scalar_lea.vmem [#allocation3], %s371
        // Predicated region
        $region57: #{tpu_custom_call.1} parent=55 // pred_check
          %p373 = pneg %p61
        $region58: #{tpu_custom_call.1} parent=55 // pred_check_branch
          %375 = sbr.rel (%p373) target = $region60
        $region59: #{tpu_custom_call.1} parent=55 // pred_region
          %376 = dma.done %s369, 4352
        $region60: #{tpu_custom_call.1} parent=55 // pred_fallthru
          _
        // Predicated region
        $region61: #{tpu_custom_call.1} parent=55 // pred_check
          %p377 = pneg %p82
        $region62: #{tpu_custom_call.1} parent=55 // pred_check_branch
          %379 = sbr.rel (%p377) target = $region64
        $region63: #{tpu_custom_call.1} parent=55 // pred_region
          %380 = dma.done [#allocation7], 1024
        $region64: #{tpu_custom_call.1} parent=55 // pred_fallthru
          _
        // Predicated region
        $region65: #{tpu_custom_call.1} parent=55 // pred_check
          %p381 = pneg %p124
        $region66: #{tpu_custom_call.1} parent=55 // pred_check_branch
          %383 = sbr.rel (%p381) target = $region68
        $region67: #{tpu_custom_call.1} parent=55 // pred_region
          %384 = dma.done [#allocation7], 9216
        $region68: #{tpu_custom_call.1} parent=55 // pred_fallthru
          _
        // Predicated region
        $region69: #{tpu_custom_call.1} parent=55 // pred_check
          %p385 = pneg %p166
        $region70: #{tpu_custom_call.1} parent=55 // pred_check_branch
          %387 = sbr.rel (%p385) target = $region72
        $region71: #{tpu_custom_call.1} parent=55 // pred_region
          %388 = dma.done [#allocation10], 1024
        $region72: #{tpu_custom_call.1} parent=55 // pred_fallthru
          _
        // Predicated region
        $region73: #{tpu_custom_call.1} parent=55 // pred_check
          %p389 = pneg %p208
        $region74: #{tpu_custom_call.1} parent=55 // pred_check_branch
          %391 = sbr.rel (%p389) target = $region76
        $region75: #{tpu_custom_call.1} parent=55 // pred_region
          %392 = dma.done [#allocation10], 1024
        $region76: #{tpu_custom_call.1} parent=55 // pred_fallthru
          _
        %s393 = sand.u32 %s48, 1
        %s394 = scalar_lea.sflag [#allocation4], %s393
        %s395 = sand.u32 %s48, 1
        %s396 = smul.addr %s395, 272
        %s397 = scalar_lea.vmem [#allocation3], %s396
        %p398 = pneg %p61
        %p399 = pneg %p58
        %p400 = pneg %p82
        %p401 = pneg %p79
        %p402 = pneg %p103
        %p403 = pneg %p100
        %p404 = pneg %p124
        %p405 = pneg %p121
        %p406 = pneg %p145
        %p407 = pneg %p142
        %p408 = pneg %p166
        %p409 = pneg %p163
        %p410 = pneg %p187
        %p411 = pneg %p184
        %p412 = pneg %p208
        %p413 = pneg %p205
        %p414 = pneg %p229
        %p415 = pneg %p226
        %p416 = pneg %p257
        %p417 = pneg %p254
        %s418 = sand.u32 %s244, 1
        %s419 = scalar_lea.sflag [#allocation5], %s418
        %s420 = sand.u32 %s244, 1
        %s421 = smul.addr %s420, 128
        %s422 = scalar_lea.vmem [#allocation12], %s421
        %s423 = smul.u32 32, %s33
        %s425 = smul.u32 %s33, 16
        %s426 = smul.u32 %s425, 2
        %s427 = smul.addr %s426, 4
        %s428 = scalar_lea.vmem %s372, %s427 [#allocation3]
        %v429 = vld [vmem:[%s428] sm:$0xf]
        %v430 = vld [vmem:[%s428 + $0x4] sm:$0xf]
        %v431 = vld [vmem:[%s428 + $0x8] sm:$0xf]
        %v432 = vld [vmem:[%s428 + $0xc] sm:$0xf]
        %v433 = vld [vmem:[%s428 + $0x10] sm:$0xf]
        %v434 = vld [vmem:[%s428 + $0x14] sm:$0xf]
        %v435 = vld [vmem:[%s428 + $0x18] sm:$0xf]
        %v436 = vld [vmem:[%s428 + $0x1c] sm:$0xf]
        %v437 = vld [vmem:[%s428 + $0x20] sm:$0xf]
        %v438 = vld [vmem:[%s428 + $0x24] sm:$0xf]
        %v439 = vld [vmem:[%s428 + $0x28] sm:$0xf]
        %v440 = vld [vmem:[%s428 + $0x2c] sm:$0xf]
        %v441 = vld [vmem:[%s428 + $0x30] sm:$0xf]
        %v442 = vld [vmem:[%s428 + $0x34] sm:$0xf]
        %v443 = vld [vmem:[%s428 + $0x38] sm:$0xf]
        %v444 = vld [vmem:[%s428 + $0x3c] sm:$0xf]
        %v445 = vld [vmem:[%s428 + $0x40] sm:$0xf]
        %v446 = vld [vmem:[%s428 + $0x44] sm:$0xf]
        %v447 = vld [vmem:[%s428 + $0x48] sm:$0xf]
        %v448 = vld [vmem:[%s428 + $0x4c] sm:$0xf]
        %v449 = vld [vmem:[%s428 + $0x50] sm:$0xf]
        %v450 = vld [vmem:[%s428 + $0x54] sm:$0xf]
        %v451 = vld [vmem:[%s428 + $0x58] sm:$0xf]
        %v452 = vld [vmem:[%s428 + $0x5c] sm:$0xf]
        %v453 = vld [vmem:[%s428 + $0x60] sm:$0xf]
        %v454 = vld [vmem:[%s428 + $0x64] sm:$0xf]
        %v455 = vld [vmem:[%s428 + $0x68] sm:$0xf]
        %v456 = vld [vmem:[%s428 + $0x6c] sm:$0xf]
        %v457 = vld [vmem:[%s428 + $0x70] sm:$0xf]
        %v458 = vld [vmem:[%s428 + $0x74] sm:$0xf]
        %v459 = vld [vmem:[%s428 + $0x78] sm:$0xf]
        %v460 = vld [vmem:[%s428 + $0x7c] sm:$0xf]
        %v461 = vld [vmem:[%s428 + $0x80] sm:$0xf]
        %v462 = vld [vmem:[%s428 + $0x84] sm:$0xf]
        %v463 = vld [vmem:[%s428 + $0x88] sm:$0xf]
        %v464 = vld [vmem:[%s428 + $0x8c] sm:$0xf]
        %v465 = vld [vmem:[#allocation6] sm:$0xf]
        %v466 = vld [vmem:[#allocation6 + $0x4] sm:$0xf]
        %v467 = vld [vmem:[#allocation6 + $0x8] sm:$0xf]
        %v468 = vld [vmem:[#allocation6 + $0xc] sm:$0xf]
        %v469 = vld [vmem:[#allocation6 + $0x10] sm:$0xf]
        %v470 = vld [vmem:[#allocation6 + $0x14] sm:$0xf]
        %v471 = vld [vmem:[#allocation6 + $0x18] sm:$0xf]
        %v472 = vld [vmem:[#allocation6 + $0x1c] sm:$0xf]
        %v473 = vld [vmem:[#allocation6 + $0x20] sm:$0xf]
        %v474 = vld [vmem:[#allocation6 + $0x24] sm:$0xf]
        %v475 = vld [vmem:[#allocation6 + $0x28] sm:$0xf]
        %v476 = vld [vmem:[#allocation6 + $0x2c] sm:$0xf]
        %v477 = vld [vmem:[#allocation6 + $0x30] sm:$0xf]
        %v478 = vld [vmem:[#allocation6 + $0x34] sm:$0xf]
        %v479 = vld [vmem:[#allocation6 + $0x38] sm:$0xf]
        %v480 = vld [vmem:[#allocation6 + $0x3c] sm:$0xf]
        %v481 = vld [vmem:[%s2] sm:$0x1]
        %v483 = vlaneseq
        %v484 = vshrl.u32 %v483, 7
        %v485 = vsub.s32 0, %v484
        %v486 = vrot.slane %v481, %v485
        %v524 = vunpack.c.l.b16 %v429
        %v525 = vunpack.c.l.b16 %v430
        %v526 = vunpack.c.l.b16 %v431
        %v527 = vunpack.c.l.b16 %v432
        %v528 = vunpack.c.l.b16 %v433
        %v529 = vunpack.c.l.b16 %v434
        %v530 = vunpack.c.l.b16 %v435
        %v531 = vunpack.c.l.b16 %v436
        %v532 = vunpack.c.l.b16 %v437
        %v533 = vunpack.c.l.b16 %v438
        %v534 = vunpack.c.l.b16 %v439
        %v535 = vunpack.c.l.b16 %v440
        %v536 = vunpack.c.l.b16 %v441
        %v537 = vunpack.c.l.b16 %v442
        %v538 = vunpack.c.l.b16 %v443
        %v539 = vunpack.c.l.b16 %v444
        %v540 = vunpack.c.l.b16 %v445
        %v541 = vunpack.c.l.b16 %v446
        %v542 = vunpack.c.l.b16 %v447
        %v543 = vunpack.c.l.b16 %v448
        %v544 = vunpack.c.l.b16 %v449
        %v545 = vunpack.c.l.b16 %v450
        %v546 = vunpack.c.l.b16 %v451
        %v547 = vunpack.c.l.b16 %v452
        %v548 = vunpack.c.l.b16 %v453
        %v549 = vunpack.c.l.b16 %v454
        %v550 = vunpack.c.l.b16 %v455
        %v551 = vunpack.c.l.b16 %v456
        %v552 = vunpack.c.l.b16 %v457
        %v553 = vunpack.c.l.b16 %v458
        %v554 = vunpack.c.l.b16 %v459
        %v555 = vunpack.c.l.b16 %v460
        %v556 = vunpack.c.l.b16 %v461
        %v557 = vunpack.c.l.b16 %v462
        %v558 = vunpack.c.l.b16 %v463
        %v559 = vunpack.c.l.b16 %v464
        %v560 = vpack.c.b16 %v525, %v524
        %v561 = vpack.c.b16 %v527, %v526
        %v562 = vpack.c.b16 %v529, %v528
        %v563 = vpack.c.b16 %v531, %v530
        %v564 = vpack.c.b16 %v533, %v532
        %v565 = vpack.c.b16 %v535, %v534
        %v566 = vpack.c.b16 %v537, %v536
        %v567 = vpack.c.b16 %v539, %v538
        %v568 = vpack.c.b16 %v541, %v540
        %v569 = vpack.c.b16 %v543, %v542
        %v570 = vpack.c.b16 %v545, %v544
        %v571 = vpack.c.b16 %v547, %v546
        %v572 = vpack.c.b16 %v549, %v548
        %v573 = vpack.c.b16 %v551, %v550
        %v574 = vpack.c.b16 %v553, %v552
        %v575 = vpack.c.b16 %v555, %v554
        %v576 = vpack.c.b16 %v557, %v556
        %v577 = vpack.c.b16 %v559, %v558
        %v612 = vunpack.c.l.b16 %v465
        %v613 = vunpack.c.l.b16 %v466
        %v614 = vunpack.c.l.b16 %v467
        %v615 = vunpack.c.l.b16 %v468
        %v616 = vunpack.c.l.b16 %v469
        %v617 = vunpack.c.l.b16 %v470
        %v618 = vunpack.c.l.b16 %v471
        %v619 = vunpack.c.l.b16 %v472
        %v620 = vunpack.c.l.b16 %v473
        %v621 = vunpack.c.l.b16 %v474
        %v622 = vunpack.c.l.b16 %v475
        %v623 = vunpack.c.l.b16 %v476
        %v624 = vunpack.c.l.b16 %v477
        %v625 = vunpack.c.l.b16 %v478
        %v626 = vunpack.c.l.b16 %v479
        %v627 = vunpack.c.l.b16 %v480
        %v628 = vpack.c.b16 %v613, %v612
        %v629 = vpack.c.b16 %v615, %v614
        %v630 = vpack.c.b16 %v617, %v616
        %v631 = vpack.c.b16 %v619, %v618
        %v632 = vpack.c.b16 %v621, %v620
        %v633 = vpack.c.b16 %v623, %v622
        %v634 = vpack.c.b16 %v625, %v624
        %v635 = vpack.c.b16 %v627, %v626
        %644 = vmatprep.subr.bf16.mxu0 0
        %645 = vmatpush1.bf16.msra.mxu0 %v628
        %646 = vmatprep.subr.bf16.mxu0 0
        %647 = vmatpush1.bf16.msra.mxu0 %v629
        %648 = vmatprep.subr.bf16.mxu0 0
        %649 = vmatpush1.bf16.msra.mxu0 %v630
        %650 = vmatprep.subr.bf16.mxu0 0
        %651 = vmatpush1.bf16.msra.mxu0 %v631
        %652 = vmatprep.subr.bf16.mxu0 0
        %653 = vmatpush1.bf16.msra.mxu0 %v632
        %654 = vmatprep.subr.bf16.mxu0 0
        %655 = vmatpush1.bf16.msra.mxu0 %v633
        %656 = vmatprep.subr.bf16.mxu0 0
        %657 = vmatpush1.bf16.msra.mxu0 %v634
        %658 = vmatprep.subr.bf16.mxu0 0
        %659 = vmatpush1.bf16.msra.mxu0 %v635
        %660 = vmatprep.subr.bf16.mxu0 0
        %661 = vmatpush1.bf16.msra.mxu0 0
        %662 = vmatprep.subr.bf16.mxu0 0
        %663 = vmatpush1.bf16.msra.mxu0 0
        %664 = vmatprep.subr.bf16.mxu0 0
        %665 = vmatpush1.bf16.msra.mxu0 0
        %666 = vmatprep.subr.bf16.mxu0 0
        %667 = vmatpush1.bf16.msra.mxu0 0
        %668 = vmatprep.subr.bf16.mxu0 0
        %669 = vmatpush1.bf16.msra.mxu0 0
        %670 = vmatprep.subr.bf16.mxu0 0
        %671 = vmatpush1.bf16.msra.mxu0 0
        %672 = vmatprep.subr.bf16.mxu0 0
        %673 = vmatpush1.bf16.msra.mxu0 0
        %674 = vmatprep.subr.bf16.mxu0 0
        %675 = vmatpush1.bf16.msra.mxu0 0
        %676 = vmatprep.mubr.bf16.mxu0 0
        %677 = vmatmul.mubr.bf16.gmra.mrb[0].mxu0 %v560
        %v678 = vpop.f32.mrb[0].mxu0
        %v679 = vadd.f32 %v486, %v678
        %v680 = vpop.f32.mrb[0].mxu0
        %v681 = vpop.f32.mrb[0].mxu0
        %v682 = vadd.f32 %v486, %v681
        %v683 = vpop.f32.mrb[0].mxu0
        %684 = vmatprep.mubr.bf16.mxu0 0
        %685 = vmatmul.mubr.bf16.gmra.mrb[0].mxu0 %v561
        %v686 = vpop.f32.mrb[0].mxu0
        %v687 = vadd.f32 %v486, %v686
        %v688 = vpop.f32.mrb[0].mxu0
        %v689 = vpop.f32.mrb[0].mxu0
        %v690 = vadd.f32 %v486, %v689
        %v691 = vpop.f32.mrb[0].mxu0
        %692 = vmatprep.mubr.bf16.mxu0 0
        %693 = vmatmul.mubr.bf16.gmra.mrb[0].mxu0 %v562
        %v694 = vpop.f32.mrb[0].mxu0
        %v695 = vadd.f32 %v486, %v694
        %v696 = vpop.f32.mrb[0].mxu0
        %v697 = vpop.f32.mrb[0].mxu0
        %v698 = vadd.f32 %v486, %v697
        %v699 = vpop.f32.mrb[0].mxu0
        %700 = vmatprep.mubr.bf16.mxu0 0
        %701 = vmatmul.mubr.bf16.gmra.mrb[0].mxu0 %v563
        %v702 = vpop.f32.mrb[0].mxu0
        %v703 = vadd.f32 %v486, %v702
        %v704 = vpop.f32.mrb[0].mxu0
        %v705 = vpop.f32.mrb[0].mxu0
        %v706 = vadd.f32 %v486, %v705
        %v707 = vpop.f32.mrb[0].mxu0
        %708 = vmatprep.mubr.bf16.mxu0 0
        %709 = vmatmul.mubr.bf16.gmra.mrb[0].mxu0 %v564
        %v710 = vpop.f32.mrb[0].mxu0
        %v711 = vadd.f32 %v486, %v710
        %v712 = vpop.f32.mrb[0].mxu0
        %v713 = vpop.f32.mrb[0].mxu0
        %v714 = vadd.f32 %v486, %v713
        %v715 = vpop.f32.mrb[0].mxu0
        %716 = vmatprep.mubr.bf16.mxu0 0
        %717 = vmatmul.mubr.bf16.gmra.mrb[0].mxu0 %v565
        %v718 = vpop.f32.mrb[0].mxu0
        %v719 = vadd.f32 %v486, %v718
        %v720 = vpop.f32.mrb[0].mxu0
        %v721 = vpop.f32.mrb[0].mxu0
        %v722 = vadd.f32 %v486, %v721
        %v723 = vpop.f32.mrb[0].mxu0
        %724 = vmatprep.mubr.bf16.mxu0 0
        %725 = vmatmul.mubr.bf16.gmra.mrb[0].mxu0 %v566
        %v726 = vpop.f32.mrb[0].mxu0
        %v727 = vadd.f32 %v486, %v726
        %v728 = vpop.f32.mrb[0].mxu0
        %v729 = vpop.f32.mrb[0].mxu0
        %v730 = vadd.f32 %v486, %v729
        %v731 = vpop.f32.mrb[0].mxu0
        %732 = vmatprep.mubr.bf16.mxu0 0
        %733 = vmatmul.mubr.bf16.gmra.mrb[0].mxu0 %v567
        %v734 = vpop.f32.mrb[0].mxu0
        %v735 = vadd.f32 %v486, %v734
        %v736 = vpop.f32.mrb[0].mxu0
        %v737 = vpop.f32.mrb[0].mxu0
        %v738 = vadd.f32 %v486, %v737
        %v739 = vpop.f32.mrb[0].mxu0
        %740 = vmatprep.mubr.bf16.mxu0 0
        %741 = vmatmul.mubr.bf16.gmra.mrb[0].mxu0 %v568
        %v742 = vpop.f32.mrb[0].mxu0
        %v743 = vadd.f32 %v486, %v742
        %v744 = vpop.f32.mrb[0].mxu0
        %v745 = vpop.f32.mrb[0].mxu0
        %v746 = vadd.f32 %v486, %v745
        %v747 = vpop.f32.mrb[0].mxu0
        %748 = vmatprep.mubr.bf16.mxu0 0
        %749 = vmatmul.mubr.bf16.gmra.mrb[0].mxu0 %v569
        %v750 = vpop.f32.mrb[0].mxu0
        %v751 = vadd.f32 %v486, %v750
        %v752 = vpop.f32.mrb[0].mxu0
        %v753 = vpop.f32.mrb[0].mxu0
        %v754 = vadd.f32 %v486, %v753
        %v755 = vpop.f32.mrb[0].mxu0
        %756 = vmatprep.mubr.bf16.mxu0 0
        %757 = vmatmul.mubr.bf16.gmra.mrb[0].mxu0 %v570
        %v758 = vpop.f32.mrb[0].mxu0
        %v759 = vadd.f32 %v486, %v758
        %v760 = vpop.f32.mrb[0].mxu0
        %v761 = vpop.f32.mrb[0].mxu0
        %v762 = vadd.f32 %v486, %v761
        %v763 = vpop.f32.mrb[0].mxu0
        %764 = vmatprep.mubr.bf16.mxu0 0
        %765 = vmatmul.mubr.bf16.gmra.mrb[0].mxu0 %v571
        %v766 = vpop.f32.mrb[0].mxu0
        %v767 = vadd.f32 %v486, %v766
        %v768 = vpop.f32.mrb[0].mxu0
        %v769 = vpop.f32.mrb[0].mxu0
        %v770 = vadd.f32 %v486, %v769
        %v771 = vpop.f32.mrb[0].mxu0
        %772 = vmatprep.mubr.bf16.mxu0 0
        %773 = vmatmul.mubr.bf16.gmra.mrb[0].mxu0 %v572
        %v774 = vpop.f32.mrb[0].mxu0
        %v775 = vadd.f32 %v486, %v774
        %v776 = vpop.f32.mrb[0].mxu0
        %v777 = vpop.f32.mrb[0].mxu0
        %v778 = vadd.f32 %v486, %v777
        %v779 = vpop.f32.mrb[0].mxu0
        %780 = vmatprep.mubr.bf16.mxu0 0
        %781 = vmatmul.mubr.bf16.gmra.mrb[0].mxu0 %v573
        %v782 = vpop.f32.mrb[0].mxu0
        %v783 = vadd.f32 %v486, %v782
        %v784 = vpop.f32.mrb[0].mxu0
        %v785 = vpop.f32.mrb[0].mxu0
        %v786 = vadd.f32 %v486, %v785
        %v787 = vpop.f32.mrb[0].mxu0
        %788 = vmatprep.mubr.bf16.mxu0 0
        %789 = vmatmul.mubr.bf16.gmra.mrb[0].mxu0 %v574
        %v790 = vpop.f32.mrb[0].mxu0
        %v791 = vadd.f32 %v486, %v790
        %v792 = vpop.f32.mrb[0].mxu0
        %v793 = vpop.f32.mrb[0].mxu0
        %v794 = vadd.f32 %v486, %v793
        %v795 = vpop.f32.mrb[0].mxu0
        %796 = vmatprep.mubr.bf16.mxu0 0
        %797 = vmatmul.mubr.bf16.gmra.mrb[0].mxu0 %v575
        %v798 = vpop.f32.mrb[0].mxu0
        %v799 = vadd.f32 %v486, %v798
        %v800 = vpop.f32.mrb[0].mxu0
        %v801 = vpop.f32.mrb[0].mxu0
        %v802 = vadd.f32 %v486, %v801
        %v803 = vpop.f32.mrb[0].mxu0
        %804 = vmatprep.mubr.bf16.mxu0 0
        %805 = vmatmul.mubr.bf16.gmra.mrb[0].mxu0 %v576
        %v806 = vpop.f32.mrb[0].mxu0
        %v807 = vadd.f32 %v486, %v806
        %v808 = vpop.f32.mrb[0].mxu0
        %v809 = vpop.f32.mrb[0].mxu0
        %v810 = vadd.f32 %v486, %v809
        %v811 = vpop.f32.mrb[0].mxu0
        %812 = vmatprep.mubr.bf16.mxu0 0
        %813 = vmatmul.mubr.bf16.gmra.mrb[0].mxu0 %v577
        %v814 = vpop.f32.mrb[0].mxu0
        %v815 = vadd.f32 %v486, %v814
        %v816 = vpop.f32.mrb[0].mxu0
        %v817 = vpop.f32.mrb[0].mxu0
        %v818 = vadd.f32 %v486, %v817
        %v819 = vpop.f32.mrb[0].mxu0
        %820 = vdwg.mxu0
        %v821 = vmax.f32 %v679, 0.0
        %v822 = vmax.f32 %v682, 0.0
        %v823 = vmax.f32 %v687, 0.0
        %v824 = vmax.f32 %v690, 0.0
        %v825 = vmax.f32 %v695, 0.0
        %v826 = vmax.f32 %v698, 0.0
        %v827 = vmax.f32 %v703, 0.0
        %v828 = vmax.f32 %v706, 0.0
        %v829 = vmax.f32 %v711, 0.0
        %v830 = vmax.f32 %v714, 0.0
        %v831 = vmax.f32 %v719, 0.0
        %v832 = vmax.f32 %v722, 0.0
        %v833 = vmax.f32 %v727, 0.0
        %v834 = vmax.f32 %v730, 0.0
        %v835 = vmax.f32 %v735, 0.0
        %v836 = vmax.f32 %v738, 0.0
        %v837 = vmax.f32 %v743, 0.0
        %v838 = vmax.f32 %v746, 0.0
        %v839 = vmax.f32 %v751, 0.0
        %v840 = vmax.f32 %v754, 0.0
        %v841 = vmax.f32 %v759, 0.0
        %v842 = vmax.f32 %v762, 0.0
        %v843 = vmax.f32 %v767, 0.0
        %v844 = vmax.f32 %v770, 0.0
        %v845 = vmax.f32 %v775, 0.0
        %v846 = vmax.f32 %v778, 0.0
        %v847 = vmax.f32 %v783, 0.0
        %v848 = vmax.f32 %v786, 0.0
        %v849 = vmax.f32 %v791, 0.0
        %v850 = vmax.f32 %v794, 0.0
        %v851 = vmax.f32 %v799, 0.0
        %v852 = vmax.f32 %v802, 0.0
        %v853 = vmax.f32 %v807, 0.0
        %v854 = vmax.f32 %v810, 0.0
        %v855 = vmax.f32 %v815, 0.0
        %v856 = vmax.f32 %v818, 0.0
        %v857 = vpack.c.bf16 %v822, %v821
        %v858 = vpack.c.bf16 %v824, %v823
        %v859 = vpack.c.bf16 %v826, %v825
        %v860 = vpack.c.bf16 %v828, %v827
        %v861 = vpack.c.bf16 %v830, %v829
        %v862 = vpack.c.bf16 %v832, %v831
        %v863 = vpack.c.bf16 %v834, %v833
        %v864 = vpack.c.bf16 %v836, %v835
        %v865 = vpack.c.bf16 %v838, %v837
        %v866 = vpack.c.bf16 %v840, %v839
        %v867 = vpack.c.bf16 %v842, %v841
        %v868 = vpack.c.bf16 %v844, %v843
        %v869 = vpack.c.bf16 %v846, %v845
        %v870 = vpack.c.bf16 %v848, %v847
        %v871 = vpack.c.bf16 %v850, %v849
        %v872 = vpack.c.bf16 %v852, %v851
        %v873 = vpack.c.bf16 %v854, %v853
        %v874 = vpack.c.bf16 %v856, %v855
        %v893 = vunpack.c.l.b16 %v857
        %v894 = vunpack.c.h.b16 %v857
        %v895 = vunpack.c.l.b16 %v858
        %v896 = vunpack.c.h.b16 %v858
        %v897 = vunpack.c.l.b16 %v859
        %v898 = vunpack.c.h.b16 %v859
        %v899 = vunpack.c.l.b16 %v860
        %v900 = vunpack.c.h.b16 %v860
        %v901 = vunpack.c.l.b16 %v861
        %v902 = vunpack.c.h.b16 %v861
        %v903 = vunpack.c.l.b16 %v862
        %v904 = vunpack.c.h.b16 %v862
        %v905 = vunpack.c.l.b16 %v863
        %v906 = vunpack.c.h.b16 %v863
        %v907 = vunpack.c.l.b16 %v864
        %v908 = vunpack.c.h.b16 %v864
        %v909 = vunpack.c.l.b16 %v865
        %v910 = vunpack.c.h.b16 %v865
        %v911 = vunpack.c.l.b16 %v866
        %v912 = vunpack.c.h.b16 %v866
        %v913 = vunpack.c.l.b16 %v867
        %v914 = vunpack.c.h.b16 %v867
        %v915 = vunpack.c.l.b16 %v868
        %v916 = vunpack.c.h.b16 %v868
        %v917 = vunpack.c.l.b16 %v869
        %v918 = vunpack.c.h.b16 %v869
        %v919 = vunpack.c.l.b16 %v870
        %v920 = vunpack.c.h.b16 %v870
        %v921 = vunpack.c.l.b16 %v871
        %v922 = vunpack.c.h.b16 %v871
        %v923 = vunpack.c.l.b16 %v872
        %v924 = vunpack.c.h.b16 %v872
        %v925 = vunpack.c.l.b16 %v873
        %v926 = vunpack.c.h.b16 %v873
        %v927 = vunpack.c.l.b16 %v874
        %v928 = vunpack.c.h.b16 %v874
        %v929 = vpack.c.b16 %v893, %v893
        %v930 = vpack.c.b16 %v894, %v894
        %v931 = vpack.c.b16 %v895, %v895
        %v932 = vpack.c.b16 %v896, %v896
        %v933 = vpack.c.b16 %v897, %v897
        %v934 = vpack.c.b16 %v898, %v898
        %v935 = vpack.c.b16 %v899, %v899
        %v936 = vpack.c.b16 %v900, %v900
        %v937 = vpack.c.b16 %v901, %v901
        %v938 = vpack.c.b16 %v902, %v902
        %v939 = vpack.c.b16 %v903, %v903
        %v940 = vpack.c.b16 %v904, %v904
        %v941 = vpack.c.b16 %v905, %v905
        %v942 = vpack.c.b16 %v906, %v906
        %v943 = vpack.c.b16 %v907, %v907
        %v944 = vpack.c.b16 %v908, %v908
        %v945 = vpack.c.b16 %v909, %v909
        %v946 = vpack.c.b16 %v910, %v910
        %v947 = vpack.c.b16 %v911, %v911
        %v948 = vpack.c.b16 %v912, %v912
        %v949 = vpack.c.b16 %v913, %v913
        %v950 = vpack.c.b16 %v914, %v914
        %v951 = vpack.c.b16 %v915, %v915
        %v952 = vpack.c.b16 %v916, %v916
        %v953 = vpack.c.b16 %v917, %v917
        %v954 = vpack.c.b16 %v918, %v918
        %v955 = vpack.c.b16 %v919, %v919
        %v956 = vpack.c.b16 %v920, %v920
        %v957 = vpack.c.b16 %v921, %v921
        %v958 = vpack.c.b16 %v922, %v922
        %v959 = vpack.c.b16 %v923, %v923
        %v960 = vpack.c.b16 %v924, %v924
        %v961 = vpack.c.b16 %v925, %v925
        %v962 = vpack.c.b16 %v926, %v926
        %v963 = vpack.c.b16 %v927, %v927
        %v964 = vpack.c.b16 %v928, %v928
        %vm965 = vsmask.f32 256
        %vm966 = vsmask.f32 4368
        %vm967 = vmor %vm965, %vm966
        %v969 = vshrl.u32 %v929, 16
        %v971 = vrot.slane %v969, 7
        %v972 = vshll.u32 %v929, 16
        %v974 = vor.u32 %v971, %v972
        %v975 = vrot.slane %v971, 4
        %v977 = vshrl.u32 %v930, 16
        %v979 = vrot.slane %v977, 7
        %v980 = vshll.u32 %v930, 16
        %v982 = vor.u32 %v979, %v980
        %v983 = vsel %vm967, %v975, %v982
        %v984 = vrot.slane %v979, 4
        %v986 = vshrl.u32 %v931, 16
        %v988 = vrot.slane %v986, 7
        %v989 = vshll.u32 %v931, 16
        %v991 = vor.u32 %v988, %v989
        %v992 = vrot.slane %v988, 4
        %v994 = vshrl.u32 %v932, 16
        %v996 = vrot.slane %v994, 7
        %v997 = vshll.u32 %v932, 16
        %v999 = vor.u32 %v996, %v997
        %v1000 = vsel %vm967, %v992, %v999
        %v1001 = vrot.slane %v996, 4
        %v1003 = vshrl.u32 %v933, 16
        %v1005 = vrot.slane %v1003, 7
        %v1006 = vshll.u32 %v933, 16
        %v1008 = vor.u32 %v1005, %v1006
        %v1009 = vrot.slane %v1005, 4
        %v1011 = vshrl.u32 %v934, 16
        %v1013 = vrot.slane %v1011, 7
        %v1014 = vshll.u32 %v934, 16
        %v1016 = vor.u32 %v1013, %v1014
        %v1017 = vsel %vm967, %v1009, %v1016
        %v1018 = vrot.slane %v1013, 4
        %v1020 = vshrl.u32 %v935, 16
        %v1022 = vrot.slane %v1020, 7
        %v1023 = vshll.u32 %v935, 16
        %v1025 = vor.u32 %v1022, %v1023
        %v1026 = vrot.slane %v1022, 4
        %v1028 = vshrl.u32 %v936, 16
        %v1030 = vrot.slane %v1028, 7
        %v1031 = vshll.u32 %v936, 16
        %v1033 = vor.u32 %v1030, %v1031
        %v1034 = vsel %vm967, %v1026, %v1033
        %v1035 = vrot.slane %v1030, 4
        %v1037 = vshrl.u32 %v937, 16
        %v1039 = vrot.slane %v1037, 7
        %v1040 = vshll.u32 %v937, 16
        %v1042 = vor.u32 %v1039, %v1040
        %v1043 = vrot.slane %v1039, 4
        %v1045 = vshrl.u32 %v938, 16
        %v1047 = vrot.slane %v1045, 7
        %v1048 = vshll.u32 %v938, 16
        %v1050 = vor.u32 %v1047, %v1048
        %v1051 = vsel %vm967, %v1043, %v1050
        %v1052 = vrot.slane %v1047, 4
        %v1054 = vshrl.u32 %v939, 16
        %v1056 = vrot.slane %v1054, 7
        %v1057 = vshll.u32 %v939, 16
        %v1059 = vor.u32 %v1056, %v1057
        %v1060 = vrot.slane %v1056, 4
        %v1062 = vshrl.u32 %v940, 16
        %v1064 = vrot.slane %v1062, 7
        %v1065 = vshll.u32 %v940, 16
        %v1067 = vor.u32 %v1064, %v1065
        %v1068 = vsel %vm967, %v1060, %v1067
        %v1069 = vrot.slane %v1064, 4
        %v1071 = vshrl.u32 %v941, 16
        %v1073 = vrot.slane %v1071, 7
        %v1074 = vshll.u32 %v941, 16
        %v1076 = vor.u32 %v1073, %v1074
        %v1077 = vrot.slane %v1073, 4
        %v1079 = vshrl.u32 %v942, 16
        %v1081 = vrot.slane %v1079, 7
        %v1082 = vshll.u32 %v942, 16
        %v1084 = vor.u32 %v1081, %v1082
        %v1085 = vsel %vm967, %v1077, %v1084
        %v1086 = vrot.slane %v1081, 4
        %v1088 = vshrl.u32 %v943, 16
        %v1090 = vrot.slane %v1088, 7
        %v1091 = vshll.u32 %v943, 16
        %v1093 = vor.u32 %v1090, %v1091
        %v1094 = vrot.slane %v1090, 4
        %v1096 = vshrl.u32 %v944, 16
        %v1098 = vrot.slane %v1096, 7
        %v1099 = vshll.u32 %v944, 16
        %v1101 = vor.u32 %v1098, %v1099
        %v1102 = vsel %vm967, %v1094, %v1101
        %v1103 = vrot.slane %v1098, 4
        %v1105 = vshrl.u32 %v945, 16
        %v1107 = vrot.slane %v1105, 7
        %v1108 = vshll.u32 %v945, 16
        %v1110 = vor.u32 %v1107, %v1108
        %v1111 = vrot.slane %v1107, 4
        %v1113 = vshrl.u32 %v946, 16
        %v1115 = vrot.slane %v1113, 7
        %v1116 = vshll.u32 %v946, 16
        %v1118 = vor.u32 %v1115, %v1116
        %v1119 = vsel %vm967, %v1111, %v1118
        %v1120 = vrot.slane %v1115, 4
        %v1122 = vshrl.u32 %v947, 16
        %v1124 = vrot.slane %v1122, 7
        %v1125 = vshll.u32 %v947, 16
        %v1127 = vor.u32 %v1124, %v1125
        %v1128 = vrot.slane %v1124, 4
        %v1130 = vshrl.u32 %v948, 16
        %v1132 = vrot.slane %v1130, 7
        %v1133 = vshll.u32 %v948, 16
        %v1135 = vor.u32 %v1132, %v1133
        %v1136 = vsel %vm967, %v1128, %v1135
        %v1137 = vrot.slane %v1132, 4
        %v1139 = vshrl.u32 %v949, 16
        %v1141 = vrot.slane %v1139, 7
        %v1142 = vshll.u32 %v949, 16
        %v1144 = vor.u32 %v1141, %v1142
        %v1145 = vrot.slane %v1141, 4
        %v1147 = vshrl.u32 %v950, 16
        %v1149 = vrot.slane %v1147, 7
        %v1150 = vshll.u32 %v950, 16
        %v1152 = vor.u32 %v1149, %v1150
        %v1153 = vsel %vm967, %v1145, %v1152
        %v1154 = vrot.slane %v1149, 4
        %v1156 = vshrl.u32 %v951, 16
        %v1158 = vrot.slane %v1156, 7
        %v1159 = vshll.u32 %v951, 16
        %v1161 = vor.u32 %v1158, %v1159
        %v1162 = vrot.slane %v1158, 4
        %v1164 = vshrl.u32 %v952, 16
        %v1166 = vrot.slane %v1164, 7
        %v1167 = vshll.u32 %v952, 16
        %v1169 = vor.u32 %v1166, %v1167
        %v1170 = vsel %vm967, %v1162, %v1169
        %v1171 = vrot.slane %v1166, 4
        %v1173 = vshrl.u32 %v953, 16
        %v1175 = vrot.slane %v1173, 7
        %v1176 = vshll.u32 %v953, 16
        %v1178 = vor.u32 %v1175, %v1176
        %v1179 = vrot.slane %v1175, 4
        %v1181 = vshrl.u32 %v954, 16
        %v1183 = vrot.slane %v1181, 7
        %v1184 = vshll.u32 %v954, 16
        %v1186 = vor.u32 %v1183, %v1184
        %v1187 = vsel %vm967, %v1179, %v1186
        %v1188 = vrot.slane %v1183, 4
        %v1190 = vshrl.u32 %v955, 16
        %v1192 = vrot.slane %v1190, 7
        %v1193 = vshll.u32 %v955, 16
        %v1195 = vor.u32 %v1192, %v1193
        %v1196 = vrot.slane %v1192, 4
        %v1198 = vshrl.u32 %v956, 16
        %v1200 = vrot.slane %v1198, 7
        %v1201 = vshll.u32 %v956, 16
        %v1203 = vor.u32 %v1200, %v1201
        %v1204 = vsel %vm967, %v1196, %v1203
        %v1205 = vrot.slane %v1200, 4
        %v1207 = vshrl.u32 %v957, 16
        %v1209 = vrot.slane %v1207, 7
        %v1210 = vshll.u32 %v957, 16
        %v1212 = vor.u32 %v1209, %v1210
        %v1213 = vrot.slane %v1209, 4
        %v1215 = vshrl.u32 %v958, 16
        %v1217 = vrot.slane %v1215, 7
        %v1218 = vshll.u32 %v958, 16
        %v1220 = vor.u32 %v1217, %v1218
        %v1221 = vsel %vm967, %v1213, %v1220
        %v1222 = vrot.slane %v1217, 4
        %v1224 = vshrl.u32 %v959, 16
        %v1226 = vrot.slane %v1224, 7
        %v1227 = vshll.u32 %v959, 16
        %v1229 = vor.u32 %v1226, %v1227
        %v1230 = vrot.slane %v1226, 4
        %v1232 = vshrl.u32 %v960, 16
        %v1234 = vrot.slane %v1232, 7
        %v1235 = vshll.u32 %v960, 16
        %v1237 = vor.u32 %v1234, %v1235
        %v1238 = vsel %vm967, %v1230, %v1237
        %v1239 = vrot.slane %v1234, 4
        %v1241 = vshrl.u32 %v961, 16
        %v1243 = vrot.slane %v1241, 7
        %v1244 = vshll.u32 %v961, 16
        %v1246 = vor.u32 %v1243, %v1244
        %v1247 = vrot.slane %v1243, 4
        %v1249 = vshrl.u32 %v962, 16
        %v1251 = vrot.slane %v1249, 7
        %v1252 = vshll.u32 %v962, 16
        %v1254 = vor.u32 %v1251, %v1252
        %v1255 = vsel %vm967, %v1247, %v1254
        %v1256 = vrot.slane %v1251, 4
        %v1258 = vshrl.u32 %v963, 16
        %v1260 = vrot.slane %v1258, 7
        %v1261 = vshll.u32 %v963, 16
        %v1263 = vor.u32 %v1260, %v1261
        %v1264 = vrot.slane %v1260, 4
        %v1266 = vshrl.u32 %v964, 16
        %v1268 = vrot.slane %v1266, 7
        %v1269 = vshll.u32 %v964, 16
        %v1271 = vor.u32 %v1268, %v1269
        %v1272 = vsel %vm967, %v1264, %v1271
        %v1273 = vrot.slane %v1268, 4
        %vm1328 = vcmask 1043456
        %vm1329 = vsmask.f32 7938
        %vm1330 = vmand %vm1328, %vm1329
        %v1331 = vld [vmem:[#allocation2] sm:$0xf]
        %v1332 = vsel %vm1330, %v974, %v1331
        %1333 = vst [vmem:[#allocation2] sm:$0xf] %v1332
        %1334 = vst [vmem:[#allocation2 + $0x4] sm:$0xf] %v983
        %vm1335 = vcmask 1040384
        %vm1336 = vmand %vm1335, %vm965
        %v1337 = vld [vmem:[#allocation2 + $0x8] sm:$0x1]
        %v1338 = vsel %vm1336, %v984, %v1337
        %1339 = vst [vmem:[#allocation2 + $0x8] sm:$0x1] %v1338
        %v1340 = vld [vmem:[#allocation2 + $0xc] sm:$0xf]
        %v1341 = vsel %vm1330, %v991, %v1340
        %1342 = vst [vmem:[#allocation2 + $0xc] sm:$0xf] %v1341
        %1343 = vst [vmem:[#allocation2 + $0x10] sm:$0xf] %v1000
        %v1344 = vld [vmem:[#allocation2 + $0x14] sm:$0x1]
        %v1345 = vsel %vm1336, %v1001, %v1344
        %1346 = vst [vmem:[#allocation2 + $0x14] sm:$0x1] %v1345
        %v1347 = vld [vmem:[#allocation2 + $0x18] sm:$0xf]
        %v1348 = vsel %vm1330, %v1008, %v1347
        %1349 = vst [vmem:[#allocation2 + $0x18] sm:$0xf] %v1348
        %1350 = vst [vmem:[#allocation2 + $0x1c] sm:$0xf] %v1017
        %v1351 = vld [vmem:[#allocation2 + $0x20] sm:$0x1]
        %v1352 = vsel %vm1336, %v1018, %v1351
        %1353 = vst [vmem:[#allocation2 + $0x20] sm:$0x1] %v1352
        %v1354 = vld [vmem:[#allocation2 + $0x24] sm:$0xf]
        %v1355 = vsel %vm1330, %v1025, %v1354
        %1356 = vst [vmem:[#allocation2 + $0x24] sm:$0xf] %v1355
        %1357 = vst [vmem:[#allocation2 + $0x28] sm:$0xf] %v1034
        %v1358 = vld [vmem:[#allocation2 + $0x2c] sm:$0x1]
        %v1359 = vsel %vm1336, %v1035, %v1358
        %1360 = vst [vmem:[#allocation2 + $0x2c] sm:$0x1] %v1359
        %v1361 = vld [vmem:[#allocation2 + $0x30] sm:$0xf]
        %v1362 = vsel %vm1330, %v1042, %v1361
        %1363 = vst [vmem:[#allocation2 + $0x30] sm:$0xf] %v1362
        %1364 = vst [vmem:[#allocation2 + $0x34] sm:$0xf] %v1051
        %v1365 = vld [vmem:[#allocation2 + $0x38] sm:$0x1]
        %v1366 = vsel %vm1336, %v1052, %v1365
        %1367 = vst [vmem:[#allocation2 + $0x38] sm:$0x1] %v1366
        %v1368 = vld [vmem:[#allocation2 + $0x3c] sm:$0xf]
        %v1369 = vsel %vm1330, %v1059, %v1368
        %1370 = vst [vmem:[#allocation2 + $0x3c] sm:$0xf] %v1369
        %1371 = vst [vmem:[#allocation2 + $0x40] sm:$0xf] %v1068
        %v1372 = vld [vmem:[#allocation2 + $0x44] sm:$0x1]
        %v1373 = vsel %vm1336, %v1069, %v1372
        %1374 = vst [vmem:[#allocation2 + $0x44] sm:$0x1] %v1373
        %v1375 = vld [vmem:[#allocation2 + $0x48] sm:$0xf]
        %v1376 = vsel %vm1330, %v1076, %v1375
        %1377 = vst [vmem:[#allocation2 + $0x48] sm:$0xf] %v1376
        %1378 = vst [vmem:[#allocation2 + $0x4c] sm:$0xf] %v1085
        %v1379 = vld [vmem:[#allocation2 + $0x50] sm:$0x1]
        %v1380 = vsel %vm1336, %v1086, %v1379
        %1381 = vst [vmem:[#allocation2 + $0x50] sm:$0x1] %v1380
        %v1382 = vld [vmem:[#allocation2 + $0x54] sm:$0xf]
        %v1383 = vsel %vm1330, %v1093, %v1382
        %1384 = vst [vmem:[#allocation2 + $0x54] sm:$0xf] %v1383
        %1385 = vst [vmem:[#allocation2 + $0x58] sm:$0xf] %v1102
        %v1386 = vld [vmem:[#allocation2 + $0x5c] sm:$0x1]
        %v1387 = vsel %vm1336, %v1103, %v1386
        %1388 = vst [vmem:[#allocation2 + $0x5c] sm:$0x1] %v1387
        %v1389 = vld [vmem:[#allocation2 + $0x60] sm:$0xf]
        %v1390 = vsel %vm1330, %v1110, %v1389
        %1391 = vst [vmem:[#allocation2 + $0x60] sm:$0xf] %v1390
        %1392 = vst [vmem:[#allocation2 + $0x64] sm:$0xf] %v1119
        %v1393 = vld [vmem:[#allocation2 + $0x68] sm:$0x1]
        %v1394 = vsel %vm1336, %v1120, %v1393
        %1395 = vst [vmem:[#allocation2 + $0x68] sm:$0x1] %v1394
        %v1396 = vld [vmem:[#allocation2 + $0x6c] sm:$0xf]
        %v1397 = vsel %vm1330, %v1127, %v1396
        %1398 = vst [vmem:[#allocation2 + $0x6c] sm:$0xf] %v1397
        %1399 = vst [vmem:[#allocation2 + $0x70] sm:$0xf] %v1136
        %v1400 = vld [vmem:[#allocation2 + $0x74] sm:$0x1]
        %v1401 = vsel %vm1336, %v1137, %v1400
        %1402 = vst [vmem:[#allocation2 + $0x74] sm:$0x1] %v1401
        %v1403 = vld [vmem:[#allocation2 + $0x78] sm:$0xf]
        %v1404 = vsel %vm1330, %v1144, %v1403
        %1405 = vst [vmem:[#allocation2 + $0x78] sm:$0xf] %v1404
        %1406 = vst [vmem:[#allocation2 + $0x7c] sm:$0xf] %v1153
        %v1407 = vld [vmem:[#allocation2 + $0x80] sm:$0x1]
        %v1408 = vsel %vm1336, %v1154, %v1407
        %1409 = vst [vmem:[#allocation2 + $0x80] sm:$0x1] %v1408
        %v1410 = vld [vmem:[#allocation2 + $0x84] sm:$0xf]
        %v1411 = vsel %vm1330, %v1161, %v1410
        %1412 = vst [vmem:[#allocation2 + $0x84] sm:$0xf] %v1411
        %1413 = vst [vmem:[#allocation2 + $0x88] sm:$0xf] %v1170
        %v1414 = vld [vmem:[#allocation2 + $0x8c] sm:$0x1]
        %v1415 = vsel %vm1336, %v1171, %v1414
        %1416 = vst [vmem:[#allocation2 + $0x8c] sm:$0x1] %v1415
        %v1417 = vld [vmem:[#allocation2 + $0x90] sm:$0xf]
        %v1418 = vsel %vm1330, %v1178, %v1417
        %1419 = vst [vmem:[#allocation2 + $0x90] sm:$0xf] %v1418
        %1420 = vst [vmem:[#allocation2 + $0x94] sm:$0xf] %v1187
        %v1421 = vld [vmem:[#allocation2 + $0x98] sm:$0x1]
        %v1422 = vsel %vm1336, %v1188, %v1421
        %1423 = vst [vmem:[#allocation2 + $0x98] sm:$0x1] %v1422
        %v1424 = vld [vmem:[#allocation2 + $0x9c] sm:$0xf]
        %v1425 = vsel %vm1330, %v1195, %v1424
        %1426 = vst [vmem:[#allocation2 + $0x9c] sm:$0xf] %v1425
        %1427 = vst [vmem:[#allocation2 + $0xa0] sm:$0xf] %v1204
        %v1428 = vld [vmem:[#allocation2 + $0xa4] sm:$0x1]
        %v1429 = vsel %vm1336, %v1205, %v1428
        %1430 = vst [vmem:[#allocation2 + $0xa4] sm:$0x1] %v1429
        %v1431 = vld [vmem:[#allocation2 + $0xa8] sm:$0xf]
        %v1432 = vsel %vm1330, %v1212, %v1431
        %1433 = vst [vmem:[#allocation2 + $0xa8] sm:$0xf] %v1432
        %1434 = vst [vmem:[#allocation2 + $0xac] sm:$0xf] %v1221
        %v1435 = vld [vmem:[#allocation2 + $0xb0] sm:$0x1]
        %v1436 = vsel %vm1336, %v1222, %v1435
        %1437 = vst [vmem:[#allocation2 + $0xb0] sm:$0x1] %v1436
        %v1438 = vld [vmem:[#allocation2 + $0xb4] sm:$0xf]
        %v1439 = vsel %vm1330, %v1229, %v1438
        %1440 = vst [vmem:[#allocation2 + $0xb4] sm:$0xf] %v1439
        %1441 = vst [vmem:[#allocation2 + $0xb8] sm:$0xf] %v1238
        %v1442 = vld [vmem:[#allocation2 + $0xbc] sm:$0x1]
        %v1443 = vsel %vm1336, %v1239, %v1442
        %1444 = vst [vmem:[#allocation2 + $0xbc] sm:$0x1] %v1443
        %v1445 = vld [vmem:[#allocation2 + $0xc0] sm:$0xf]
        %v1446 = vsel %vm1330, %v1246, %v1445
        %1447 = vst [vmem:[#allocation2 + $0xc0] sm:$0xf] %v1446
        %1448 = vst [vmem:[#allocation2 + $0xc4] sm:$0xf] %v1255
        %v1449 = vld [vmem:[#allocation2 + $0xc8] sm:$0x1]
        %v1450 = vsel %vm1336, %v1256, %v1449
        %1451 = vst [vmem:[#allocation2 + $0xc8] sm:$0x1] %v1450
        %v1452 = vld [vmem:[#allocation2 + $0xcc] sm:$0xf]
        %v1453 = vsel %vm1330, %v1263, %v1452
        %1454 = vst [vmem:[#allocation2 + $0xcc] sm:$0xf] %v1453
        %1455 = vst [vmem:[#allocation2 + $0xd0] sm:$0xf] %v1272
        %v1456 = vld [vmem:[#allocation2 + $0xd4] sm:$0x1]
        %v1457 = vsel %vm1336, %v1273, %v1456
        %1458 = vst [vmem:[#allocation2 + $0xd4] sm:$0x1] %v1457
        %v1459 = vld [vmem:[#allocation2] sm:$0x1]
        %v1460 = vsel %vm1336, 0, %v1459
        %1461 = vst [vmem:[#allocation2] sm:$0x1] %v1460
        %v1462 = vld [vmem:[#allocation2 + $0xc] sm:$0x1]
        %v1463 = vsel %vm1336, 0, %v1462
        %1464 = vst [vmem:[#allocation2 + $0xc] sm:$0x1] %v1463
        %v1465 = vld [vmem:[#allocation2 + $0x18] sm:$0x1]
        %v1466 = vsel %vm1336, 0, %v1465
        %1467 = vst [vmem:[#allocation2 + $0x18] sm:$0x1] %v1466
        %v1468 = vld [vmem:[#allocation2 + $0x24] sm:$0x1]
        %v1469 = vsel %vm1336, 0, %v1468
        %1470 = vst [vmem:[#allocation2 + $0x24] sm:$0x1] %v1469
        %v1471 = vld [vmem:[#allocation2 + $0x30] sm:$0x1]
        %v1472 = vsel %vm1336, 0, %v1471
        %1473 = vst [vmem:[#allocation2 + $0x30] sm:$0x1] %v1472
        %v1474 = vld [vmem:[#allocation2 + $0x3c] sm:$0x1]
        %v1475 = vsel %vm1336, 0, %v1474
        %1476 = vst [vmem:[#allocation2 + $0x3c] sm:$0x1] %v1475
        %v1477 = vld [vmem:[#allocation2 + $0x48] sm:$0x1]
        %v1478 = vsel %vm1336, 0, %v1477
        %1479 = vst [vmem:[#allocation2 + $0x48] sm:$0x1] %v1478
        %v1480 = vld [vmem:[#allocation2 + $0x54] sm:$0x1]
        %v1481 = vsel %vm1336, 0, %v1480
        %1482 = vst [vmem:[#allocation2 + $0x54] sm:$0x1] %v1481
        %v1483 = vld [vmem:[#allocation2 + $0x60] sm:$0x1]
        %v1484 = vsel %vm1336, 0, %v1483
        %1485 = vst [vmem:[#allocation2 + $0x60] sm:$0x1] %v1484
        %v1486 = vld [vmem:[#allocation2 + $0x6c] sm:$0x1]
        %v1487 = vsel %vm1336, 0, %v1486
        %1488 = vst [vmem:[#allocation2 + $0x6c] sm:$0x1] %v1487
        %v1489 = vld [vmem:[#allocation2 + $0x78] sm:$0x1]
        %v1490 = vsel %vm1336, 0, %v1489
        %1491 = vst [vmem:[#allocation2 + $0x78] sm:$0x1] %v1490
        %v1492 = vld [vmem:[#allocation2 + $0x84] sm:$0x1]
        %v1493 = vsel %vm1336, 0, %v1492
        %1494 = vst [vmem:[#allocation2 + $0x84] sm:$0x1] %v1493
        %v1495 = vld [vmem:[#allocation2 + $0x90] sm:$0x1]
        %v1496 = vsel %vm1336, 0, %v1495
        %1497 = vst [vmem:[#allocation2 + $0x90] sm:$0x1] %v1496
        %v1498 = vld [vmem:[#allocation2 + $0x9c] sm:$0x1]
        %v1499 = vsel %vm1336, 0, %v1498
        %1500 = vst [vmem:[#allocation2 + $0x9c] sm:$0x1] %v1499
        %v1501 = vld [vmem:[#allocation2 + $0xa8] sm:$0x1]
        %v1502 = vsel %vm1336, 0, %v1501
        %1503 = vst [vmem:[#allocation2 + $0xa8] sm:$0x1] %v1502
        %v1504 = vld [vmem:[#allocation2 + $0xb4] sm:$0x1]
        %v1505 = vsel %vm1336, 0, %v1504
        %1506 = vst [vmem:[#allocation2 + $0xb4] sm:$0x1] %v1505
        %v1507 = vld [vmem:[#allocation2 + $0xc0] sm:$0x1]
        %v1508 = vsel %vm1336, 0, %v1507
        %1509 = vst [vmem:[#allocation2 + $0xc0] sm:$0x1] %v1508
        %v1510 = vld [vmem:[#allocation2 + $0xcc] sm:$0x1]
        %v1511 = vsel %vm1336, 0, %v1510
        %1512 = vst [vmem:[#allocation2 + $0xcc] sm:$0x1] %v1511
        %vm1513 = vmand %vm1335, %vm1329
        %v1514 = vld [vmem:[#allocation2 + $0x8] sm:$0x1]
        %v1515 = vsel %vm1513, 0, %v1514
        %1516 = vst [vmem:[#allocation2 + $0x8] sm:$0x1] %v1515
        %v1517 = vld [vmem:[#allocation2 + $0x14] sm:$0x1]
        %v1518 = vsel %vm1513, 0, %v1517
        %1519 = vst [vmem:[#allocation2 + $0x14] sm:$0x1] %v1518
        %v1520 = vld [vmem:[#allocation2 + $0x20] sm:$0x1]
        %v1521 = vsel %vm1513, 0, %v1520
        %1522 = vst [vmem:[#allocation2 + $0x20] sm:$0x1] %v1521
        %v1523 = vld [vmem:[#allocation2 + $0x2c] sm:$0x1]
        %v1524 = vsel %vm1513, 0, %v1523
        %1525 = vst [vmem:[#allocation2 + $0x2c] sm:$0x1] %v1524
        %v1526 = vld [vmem:[#allocation2 + $0x38] sm:$0x1]
        %v1527 = vsel %vm1513, 0, %v1526
        %1528 = vst [vmem:[#allocation2 + $0x38] sm:$0x1] %v1527
        %v1529 = vld [vmem:[#allocation2 + $0x44] sm:$0x1]
        %v1530 = vsel %vm1513, 0, %v1529
        %1531 = vst [vmem:[#allocation2 + $0x44] sm:$0x1] %v1530
        %v1532 = vld [vmem:[#allocation2 + $0x50] sm:$0x1]
        %v1533 = vsel %vm1513, 0, %v1532
        %1534 = vst [vmem:[#allocation2 + $0x50] sm:$0x1] %v1533
        %v1535 = vld [vmem:[#allocation2 + $0x5c] sm:$0x1]
        %v1536 = vsel %vm1513, 0, %v1535
        %1537 = vst [vmem:[#allocation2 + $0x5c] sm:$0x1] %v1536
        %v1538 = vld [vmem:[#allocation2 + $0x68] sm:$0x1]
        %v1539 = vsel %vm1513, 0, %v1538
        %1540 = vst [vmem:[#allocation2 + $0x68] sm:$0x1] %v1539
        %v1541 = vld [vmem:[#allocation2 + $0x74] sm:$0x1]
        %v1542 = vsel %vm1513, 0, %v1541
        %1543 = vst [vmem:[#allocation2 + $0x74] sm:$0x1] %v1542
        %v1544 = vld [vmem:[#allocation2 + $0x80] sm:$0x1]
        %v1545 = vsel %vm1513, 0, %v1544
        %1546 = vst [vmem:[#allocation2 + $0x80] sm:$0x1] %v1545
        %v1547 = vld [vmem:[#allocation2 + $0x8c] sm:$0x1]
        %v1548 = vsel %vm1513, 0, %v1547
        %1549 = vst [vmem:[#allocation2 + $0x8c] sm:$0x1] %v1548
        %v1550 = vld [vmem:[#allocation2 + $0x98] sm:$0x1]
        %v1551 = vsel %vm1513, 0, %v1550
        %1552 = vst [vmem:[#allocation2 + $0x98] sm:$0x1] %v1551
        %v1553 = vld [vmem:[#allocation2 + $0xa4] sm:$0x1]
        %v1554 = vsel %vm1513, 0, %v1553
        %1555 = vst [vmem:[#allocation2 + $0xa4] sm:$0x1] %v1554
        %v1556 = vld [vmem:[#allocation2 + $0xb0] sm:$0x1]
        %v1557 = vsel %vm1513, 0, %v1556
        %1558 = vst [vmem:[#allocation2 + $0xb0] sm:$0x1] %v1557
        %v1559 = vld [vmem:[#allocation2 + $0xbc] sm:$0x1]
        %v1560 = vsel %vm1513, 0, %v1559
        %1561 = vst [vmem:[#allocation2 + $0xbc] sm:$0x1] %v1560
        %v1562 = vld [vmem:[#allocation2 + $0xc8] sm:$0x1]
        %v1563 = vsel %vm1513, 0, %v1562
        %1564 = vst [vmem:[#allocation2 + $0xc8] sm:$0x1] %v1563
        %v1565 = vld [vmem:[#allocation2 + $0xd4] sm:$0x1]
        %v1566 = vsel %vm1513, 0, %v1565
        %1567 = vst [vmem:[#allocation2 + $0xd4] sm:$0x1] %v1566
        %p1568 = scmp.eq.s32.totalorder %s33, 0
        // Predicated region
        $region77: #{tpu_custom_call.1} parent=55 // pred_check
          %p1569 = pneg %p1568
        $region78: #{tpu_custom_call.1} parent=55 // pred_check_branch
          %1571 = sbr.rel (%p1569) target = $region80
        $region79: #{tpu_custom_call.1} parent=55 // pred_region
          %1572 = vst [vmem:[#allocation2] sm:$0xf] 0
          %1573 = vst [vmem:[#allocation2 + $0x4] sm:$0xf] 0
          %1574 = vst [vmem:[#allocation2 + $0x8] sm:$0x1] 0
        $region80: #{tpu_custom_call.1} parent=55 // pred_fallthru
          _
        %p1575 = scmp.eq.s32.totalorder %s33, 1
        // Predicated region
        $region81: #{tpu_custom_call.1} parent=55 // pred_check
          %p1576 = pneg %p1575
        $region82: #{tpu_custom_call.1} parent=55 // pred_check_branch
          %1578 = sbr.rel (%p1576) target = $region84
        $region83: #{tpu_custom_call.1} parent=55 // pred_region
          %s1579 = scalar_lea.vmem [#allocation2], 204
          %1580 = vst [vmem:[%s1579] sm:$0xf] 0
          %1581 = vst [vmem:[%s1579 + $0x4] sm:$0xf] 0
          %1582 = vst [vmem:[%s1579 + $0x8] sm:$0x1] 0
        $region84: #{tpu_custom_call.1} parent=55 // pred_fallthru
          _
        %v1583 = vld [vmem:[#allocation2] sm:$0xf]
        %v1584 = vld [vmem:[#allocation2 + $0x4] sm:$0xf]
        %v1585 = vld [vmem:[#allocation2 + $0xc] sm:$0xf]
        %v1586 = vld [vmem:[#allocation2 + $0x10] sm:$0xf]
        %v1587 = vld [vmem:[#allocation2 + $0x18] sm:$0xf]
        %v1588 = vld [vmem:[#allocation2 + $0x1c] sm:$0xf]
        %v1589 = vld [vmem:[#allocation2 + $0x24] sm:$0xf]
        %v1590 = vld [vmem:[#allocation2 + $0x28] sm:$0xf]
        %v1591 = vld [vmem:[#allocation2 + $0x30] sm:$0xf]
        %v1592 = vld [vmem:[#allocation2 + $0x34] sm:$0xf]
        %v1593 = vld [vmem:[#allocation2 + $0x3c] sm:$0xf]
        %v1594 = vld [vmem:[#allocation2 + $0x40] sm:$0xf]
        %v1595 = vld [vmem:[#allocation2 + $0x48] sm:$0xf]
        %v1596 = vld [vmem:[#allocation2 + $0x4c] sm:$0xf]
        %v1597 = vld [vmem:[#allocation2 + $0x54] sm:$0xf]
        %v1598 = vld [vmem:[#allocation2 + $0x58] sm:$0xf]
        %v1599 = vld [vmem:[#allocation2 + $0x60] sm:$0xf]
        %v1600 = vld [vmem:[#allocation2 + $0x64] sm:$0xf]
        %v1601 = vld [vmem:[#allocation2 + $0x6c] sm:$0xf]
        %v1602 = vld [vmem:[#allocation2 + $0x70] sm:$0xf]
        %v1603 = vld [vmem:[#allocation2 + $0x78] sm:$0xf]
        %v1604 = vld [vmem:[#allocation2 + $0x7c] sm:$0xf]
        %v1605 = vld [vmem:[#allocation2 + $0x84] sm:$0xf]
        %v1606 = vld [vmem:[#allocation2 + $0x88] sm:$0xf]
        %v1607 = vld [vmem:[#allocation2 + $0x90] sm:$0xf]
        %v1608 = vld [vmem:[#allocation2 + $0x94] sm:$0xf]
        %v1609 = vld [vmem:[#allocation2 + $0x9c] sm:$0xf]
        %v1610 = vld [vmem:[#allocation2 + $0xa0] sm:$0xf]
        %v1611 = vld [vmem:[#allocation2 + $0xa8] sm:$0xf]
        %v1612 = vld [vmem:[#allocation2 + $0xac] sm:$0xf]
        %v1613 = vld [vmem:[#allocation2 + $0xb4] sm:$0xf]
        %v1614 = vld [vmem:[#allocation2 + $0xb8] sm:$0xf]
        %v1615 = vld [vmem:[#allocation2 + $0xc0] sm:$0xf]
        %v1616 = vld [vmem:[#allocation2 + $0xc4] sm:$0xf]
        %v1617 = vld [vmem:[#allocation2 + $0xcc] sm:$0xf]
        %v1618 = vld [vmem:[#allocation2 + $0xd0] sm:$0xf]
        %v1619 = vld [vmem:[#allocation2 + $0x8] sm:$0x1]
        %v1620 = vld [vmem:[#allocation2 + $0x14] sm:$0x1]
        %v1621 = vld [vmem:[#allocation2 + $0x20] sm:$0x1]
        %v1622 = vld [vmem:[#allocation2 + $0x2c] sm:$0x1]
        %v1623 = vld [vmem:[#allocation2 + $0x38] sm:$0x1]
        %v1624 = vld [vmem:[#allocation2 + $0x44] sm:$0x1]
        %v1625 = vld [vmem:[#allocation2 + $0x50] sm:$0x1]
        %v1626 = vld [vmem:[#allocation2 + $0x5c] sm:$0x1]
        %v1627 = vld [vmem:[#allocation2 + $0x68] sm:$0x1]
        %v1628 = vld [vmem:[#allocation2 + $0x74] sm:$0x1]
        %v1629 = vld [vmem:[#allocation2 + $0x80] sm:$0x1]
        %v1630 = vld [vmem:[#allocation2 + $0x8c] sm:$0x1]
        %v1631 = vld [vmem:[#allocation2 + $0x98] sm:$0x1]
        %v1632 = vld [vmem:[#allocation2 + $0xa4] sm:$0x1]
        %v1633 = vld [vmem:[#allocation2 + $0xb0] sm:$0x1]
        %v1634 = vld [vmem:[#allocation2 + $0xbc] sm:$0x1]
        %v1635 = vld [vmem:[#allocation2 + $0xc8] sm:$0x1]
        %v1636 = vld [vmem:[#allocation2 + $0xd4] sm:$0x1]
        %v1637 = vld [vmem:[#allocation2] sm:$0xe]
        %v1638 = vld [vmem:[#allocation2 + $0xc] sm:$0xe]
        %v1639 = vld [vmem:[#allocation2 + $0x18] sm:$0xe]
        %v1640 = vld [vmem:[#allocation2 + $0x24] sm:$0xe]
        %v1641 = vld [vmem:[#allocation2 + $0x30] sm:$0xe]
        %v1642 = vld [vmem:[#allocation2 + $0x3c] sm:$0xe]
        %v1643 = vld [vmem:[#allocation2 + $0x48] sm:$0xe]
        %v1644 = vld [vmem:[#allocation2 + $0x54] sm:$0xe]
        %v1645 = vld [vmem:[#allocation2 + $0x60] sm:$0xe]
        %v1646 = vld [vmem:[#allocation2 + $0x6c] sm:$0xe]
        %v1647 = vld [vmem:[#allocation2 + $0x78] sm:$0xe]
        %v1648 = vld [vmem:[#allocation2 + $0x84] sm:$0xe]
        %v1649 = vld [vmem:[#allocation2 + $0x90] sm:$0xe]
        %v1650 = vld [vmem:[#allocation2 + $0x9c] sm:$0xe]
        %v1651 = vld [vmem:[#allocation2 + $0xa8] sm:$0xe]
        %v1652 = vld [vmem:[#allocation2 + $0xb4] sm:$0xe]
        %v1653 = vld [vmem:[#allocation2 + $0xc0] sm:$0xe]
        %v1654 = vld [vmem:[#allocation2 + $0xcc] sm:$0xe]
        %v1691 = vunpack.c.l.b16 %v1583
        %v1692 = vunpack.c.l.b16 %v1584
        %v1693 = vunpack.c.l.b16 %v1585
        %v1694 = vunpack.c.l.b16 %v1586
        %v1695 = vunpack.c.l.b16 %v1587
        %v1696 = vunpack.c.l.b16 %v1588
        %v1697 = vunpack.c.l.b16 %v1589
        %v1698 = vunpack.c.l.b16 %v1590
        %v1699 = vunpack.c.l.b16 %v1591
        %v1700 = vunpack.c.l.b16 %v1592
        %v1701 = vunpack.c.l.b16 %v1593
        %v1702 = vunpack.c.l.b16 %v1594
        %v1703 = vunpack.c.l.b16 %v1595
        %v1704 = vunpack.c.l.b16 %v1596
        %v1705 = vunpack.c.l.b16 %v1597
        %v1706 = vunpack.c.l.b16 %v1598
        %v1707 = vunpack.c.l.b16 %v1599
        %v1708 = vunpack.c.l.b16 %v1600
        %v1709 = vunpack.c.l.b16 %v1601
        %v1710 = vunpack.c.l.b16 %v1602
        %v1711 = vunpack.c.l.b16 %v1603
        %v1712 = vunpack.c.l.b16 %v1604
        %v1713 = vunpack.c.l.b16 %v1605
        %v1714 = vunpack.c.l.b16 %v1606
        %v1715 = vunpack.c.l.b16 %v1607
        %v1716 = vunpack.c.l.b16 %v1608
        %v1717 = vunpack.c.l.b16 %v1609
        %v1718 = vunpack.c.l.b16 %v1610
        %v1719 = vunpack.c.l.b16 %v1611
        %v1720 = vunpack.c.l.b16 %v1612
        %v1721 = vunpack.c.l.b16 %v1613
        %v1722 = vunpack.c.l.b16 %v1614
        %v1723 = vunpack.c.l.b16 %v1615
        %v1724 = vunpack.c.l.b16 %v1616
        %v1725 = vunpack.c.l.b16 %v1617
        %v1726 = vunpack.c.l.b16 %v1618
        %v1727 = vpack.c.b16 %v1692, %v1691
        %v1728 = vpack.c.b16 %v1694, %v1693
        %v1729 = vpack.c.b16 %v1696, %v1695
        %v1730 = vpack.c.b16 %v1698, %v1697
        %v1731 = vpack.c.b16 %v1700, %v1699
        %v1732 = vpack.c.b16 %v1702, %v1701
        %v1733 = vpack.c.b16 %v1704, %v1703
        %v1734 = vpack.c.b16 %v1706, %v1705
        %v1735 = vpack.c.b16 %v1708, %v1707
        %v1736 = vpack.c.b16 %v1710, %v1709
        %v1737 = vpack.c.b16 %v1712, %v1711
        %v1738 = vpack.c.b16 %v1714, %v1713
        %v1739 = vpack.c.b16 %v1716, %v1715
        %v1740 = vpack.c.b16 %v1718, %v1717
        %v1741 = vpack.c.b16 %v1720, %v1719
        %v1742 = vpack.c.b16 %v1722, %v1721
        %v1743 = vpack.c.b16 %v1724, %v1723
        %v1744 = vpack.c.b16 %v1726, %v1725
        %v1781 = vunpack.c.l.b16 %v1619
        %v1782 = vunpack.c.l.b16 %v1620
        %v1783 = vunpack.c.l.b16 %v1621
        %v1784 = vunpack.c.l.b16 %v1622
        %v1785 = vunpack.c.l.b16 %v1623
        %v1786 = vunpack.c.l.b16 %v1624
        %v1787 = vunpack.c.l.b16 %v1625
        %v1788 = vunpack.c.l.b16 %v1626
        %v1789 = vunpack.c.l.b16 %v1627
        %v1790 = vunpack.c.l.b16 %v1628
        %v1791 = vunpack.c.l.b16 %v1629
        %v1792 = vunpack.c.l.b16 %v1630
        %v1793 = vunpack.c.l.b16 %v1631
        %v1794 = vunpack.c.l.b16 %v1632
        %v1795 = vunpack.c.l.b16 %v1633
        %v1796 = vunpack.c.l.b16 %v1634
        %v1797 = vunpack.c.l.b16 %v1635
        %v1798 = vunpack.c.l.b16 %v1636
        %v1799 = vpack.c.b16 %v1781, %v1781
        %v1800 = vpack.c.b16 %v1782, %v1782
        %v1801 = vpack.c.b16 %v1783, %v1783
        %v1802 = vpack.c.b16 %v1784, %v1784
        %v1803 = vpack.c.b16 %v1785, %v1785
        %v1804 = vpack.c.b16 %v1786, %v1786
        %v1805 = vpack.c.b16 %v1787, %v1787
        %v1806 = vpack.c.b16 %v1788, %v1788
        %v1807 = vpack.c.b16 %v1789, %v1789
        %v1808 = vpack.c.b16 %v1790, %v1790
        %v1809 = vpack.c.b16 %v1791, %v1791
        %v1810 = vpack.c.b16 %v1792, %v1792
        %v1811 = vpack.c.b16 %v1793, %v1793
        %v1812 = vpack.c.b16 %v1794, %v1794
        %v1813 = vpack.c.b16 %v1795, %v1795
        %v1814 = vpack.c.b16 %v1796, %v1796
        %v1815 = vpack.c.b16 %v1797, %v1797
        %v1816 = vpack.c.b16 %v1798, %v1798
        %vm1817 = vsmask.f32 7424
        %v1819 = vshrl.u32 %v1727, 16
        %v1821 = vshll.u32 %v1727, 16
        %v1823 = vrot.slane %v1821, 1
        %v1824 = vor.u32 %v1819, %v1823
        %v1826 = vshll.u32 %v1799, 16
        %v1828 = vrot.slane %v1826, 1
        %v1829 = vsel %vm1817, %v1824, %v1828
        %v1831 = vshrl.u32 %v1728, 16
        %v1833 = vshll.u32 %v1728, 16
        %v1835 = vrot.slane %v1833, 1
        %v1836 = vor.u32 %v1831, %v1835
        %v1838 = vshll.u32 %v1800, 16
        %v1840 = vrot.slane %v1838, 1
        %v1841 = vsel %vm1817, %v1836, %v1840
        %v1843 = vshrl.u32 %v1729, 16
        %v1845 = vshll.u32 %v1729, 16
        %v1847 = vrot.slane %v1845, 1
        %v1848 = vor.u32 %v1843, %v1847
        %v1850 = vshll.u32 %v1801, 16
        %v1852 = vrot.slane %v1850, 1
        %v1853 = vsel %vm1817, %v1848, %v1852
        %v1855 = vshrl.u32 %v1730, 16
        %v1857 = vshll.u32 %v1730, 16
        %v1859 = vrot.slane %v1857, 1
        %v1860 = vor.u32 %v1855, %v1859
        %v1862 = vshll.u32 %v1802, 16
        %v1864 = vrot.slane %v1862, 1
        %v1865 = vsel %vm1817, %v1860, %v1864
        %v1867 = vshrl.u32 %v1731, 16
        %v1869 = vshll.u32 %v1731, 16
        %v1871 = vrot.slane %v1869, 1
        %v1872 = vor.u32 %v1867, %v1871
        %v1874 = vshll.u32 %v1803, 16
        %v1876 = vrot.slane %v1874, 1
        %v1877 = vsel %vm1817, %v1872, %v1876
        %v1879 = vshrl.u32 %v1732, 16
        %v1881 = vshll.u32 %v1732, 16
        %v1883 = vrot.slane %v1881, 1
        %v1884 = vor.u32 %v1879, %v1883
        %v1886 = vshll.u32 %v1804, 16
        %v1888 = vrot.slane %v1886, 1
        %v1889 = vsel %vm1817, %v1884, %v1888
        %v1891 = vshrl.u32 %v1733, 16
        %v1893 = vshll.u32 %v1733, 16
        %v1895 = vrot.slane %v1893, 1
        %v1896 = vor.u32 %v1891, %v1895
        %v1898 = vshll.u32 %v1805, 16
        %v1900 = vrot.slane %v1898, 1
        %v1901 = vsel %vm1817, %v1896, %v1900
        %v1903 = vshrl.u32 %v1734, 16
        %v1905 = vshll.u32 %v1734, 16
        %v1907 = vrot.slane %v1905, 1
        %v1908 = vor.u32 %v1903, %v1907
        %v1910 = vshll.u32 %v1806, 16
        %v1912 = vrot.slane %v1910, 1
        %v1913 = vsel %vm1817, %v1908, %v1912
        %v1915 = vshrl.u32 %v1735, 16
        %v1917 = vshll.u32 %v1735, 16
        %v1919 = vrot.slane %v1917, 1
        %v1920 = vor.u32 %v1915, %v1919
        %v1922 = vshll.u32 %v1807, 16
        %v1924 = vrot.slane %v1922, 1
        %v1925 = vsel %vm1817, %v1920, %v1924
        %v1927 = vshrl.u32 %v1736, 16
        %v1929 = vshll.u32 %v1736, 16
        %v1931 = vrot.slane %v1929, 1
        %v1932 = vor.u32 %v1927, %v1931
        %v1934 = vshll.u32 %v1808, 16
        %v1936 = vrot.slane %v1934, 1
        %v1937 = vsel %vm1817, %v1932, %v1936
        %v1939 = vshrl.u32 %v1737, 16
        %v1941 = vshll.u32 %v1737, 16
        %v1943 = vrot.slane %v1941, 1
        %v1944 = vor.u32 %v1939, %v1943
        %v1946 = vshll.u32 %v1809, 16
        %v1948 = vrot.slane %v1946, 1
        %v1949 = vsel %vm1817, %v1944, %v1948
        %v1951 = vshrl.u32 %v1738, 16
        %v1953 = vshll.u32 %v1738, 16
        %v1955 = vrot.slane %v1953, 1
        %v1956 = vor.u32 %v1951, %v1955
        %v1958 = vshll.u32 %v1810, 16
        %v1960 = vrot.slane %v1958, 1
        %v1961 = vsel %vm1817, %v1956, %v1960
        %v1963 = vshrl.u32 %v1739, 16
        %v1965 = vshll.u32 %v1739, 16
        %v1967 = vrot.slane %v1965, 1
        %v1968 = vor.u32 %v1963, %v1967
        %v1970 = vshll.u32 %v1811, 16
        %v1972 = vrot.slane %v1970, 1
        %v1973 = vsel %vm1817, %v1968, %v1972
        %v1975 = vshrl.u32 %v1740, 16
        %v1977 = vshll.u32 %v1740, 16
        %v1979 = vrot.slane %v1977, 1
        %v1980 = vor.u32 %v1975, %v1979
        %v1982 = vshll.u32 %v1812, 16
        %v1984 = vrot.slane %v1982, 1
        %v1985 = vsel %vm1817, %v1980, %v1984
        %v1987 = vshrl.u32 %v1741, 16
        %v1989 = vshll.u32 %v1741, 16
        %v1991 = vrot.slane %v1989, 1
        %v1992 = vor.u32 %v1987, %v1991
        %v1994 = vshll.u32 %v1813, 16
        %v1996 = vrot.slane %v1994, 1
        %v1997 = vsel %vm1817, %v1992, %v1996
        %v1999 = vshrl.u32 %v1742, 16
        %v2001 = vshll.u32 %v1742, 16
        %v2003 = vrot.slane %v2001, 1
        %v2004 = vor.u32 %v1999, %v2003
        %v2006 = vshll.u32 %v1814, 16
        %v2008 = vrot.slane %v2006, 1
        %v2009 = vsel %vm1817, %v2004, %v2008
        %v2011 = vshrl.u32 %v1743, 16
        %v2013 = vshll.u32 %v1743, 16
        %v2015 = vrot.slane %v2013, 1
        %v2016 = vor.u32 %v2011, %v2015
        %v2018 = vshll.u32 %v1815, 16
        %v2020 = vrot.slane %v2018, 1
        %v2021 = vsel %vm1817, %v2016, %v2020
        %v2023 = vshrl.u32 %v1744, 16
        %v2025 = vshll.u32 %v1744, 16
        %v2027 = vrot.slane %v2025, 1
        %v2028 = vor.u32 %v2023, %v2027
        %v2030 = vshll.u32 %v1816, 16
        %v2032 = vrot.slane %v2030, 1
        %v2033 = vsel %vm1817, %v2028, %v2032
        %v2070 = vunpack.c.l.b16 %v1637
        %v2071 = vunpack.c.l.b16 %v1638
        %v2072 = vunpack.c.l.b16 %v1639
        %v2073 = vunpack.c.l.b16 %v1640
        %v2074 = vunpack.c.l.b16 %v1641
        %v2075 = vunpack.c.l.b16 %v1642
        %v2076 = vunpack.c.l.b16 %v1643
        %v2077 = vunpack.c.l.b16 %v1644
        %v2078 = vunpack.c.l.b16 %v1645
        %v2079 = vunpack.c.l.b16 %v1646
        %v2080 = vunpack.c.l.b16 %v1647
        %v2081 = vunpack.c.l.b16 %v1648
        %v2082 = vunpack.c.l.b16 %v1649
        %v2083 = vunpack.c.l.b16 %v1650
        %v2084 = vunpack.c.l.b16 %v1651
        %v2085 = vunpack.c.l.b16 %v1652
        %v2086 = vunpack.c.l.b16 %v1653
        %v2087 = vunpack.c.l.b16 %v1654
        %v2088 = vpack.c.b16 %v1692, %v2070
        %v2089 = vpack.c.b16 %v1694, %v2071
        %v2090 = vpack.c.b16 %v1696, %v2072
        %v2091 = vpack.c.b16 %v1698, %v2073
        %v2092 = vpack.c.b16 %v1700, %v2074
        %v2093 = vpack.c.b16 %v1702, %v2075
        %v2094 = vpack.c.b16 %v1704, %v2076
        %v2095 = vpack.c.b16 %v1706, %v2077
        %v2096 = vpack.c.b16 %v1708, %v2078
        %v2097 = vpack.c.b16 %v1710, %v2079
        %v2098 = vpack.c.b16 %v1712, %v2080
        %v2099 = vpack.c.b16 %v1714, %v2081
        %v2100 = vpack.c.b16 %v1716, %v2082
        %v2101 = vpack.c.b16 %v1718, %v2083
        %v2102 = vpack.c.b16 %v1720, %v2084
        %v2103 = vpack.c.b16 %v1722, %v2085
        %v2104 = vpack.c.b16 %v1724, %v2086
        %v2105 = vpack.c.b16 %v1726, %v2087
        %vm2106 = vcmask 1046528
        %v2107 = vrot.slane %v2088, 1
        %v2108 = vrot.slane %v1799, 1
        %v2109 = vsel %vm2106, %v2107, %v2108
        %v2110 = vrot.slane %v2089, 1
        %v2111 = vrot.slane %v1800, 1
        %v2112 = vsel %vm2106, %v2110, %v2111
        %v2113 = vrot.slane %v2090, 1
        %v2114 = vrot.slane %v1801, 1
        %v2115 = vsel %vm2106, %v2113, %v2114
        %v2116 = vrot.slane %v2091, 1
        %v2117 = vrot.slane %v1802, 1
        %v2118 = vsel %vm2106, %v2116, %v2117
        %v2119 = vrot.slane %v2092, 1
        %v2120 = vrot.slane %v1803, 1
        %v2121 = vsel %vm2106, %v2119, %v2120
        %v2122 = vrot.slane %v2093, 1
        %v2123 = vrot.slane %v1804, 1
        %v2124 = vsel %vm2106, %v2122, %v2123
        %v2125 = vrot.slane %v2094, 1
        %v2126 = vrot.slane %v1805, 1
        %v2127 = vsel %vm2106, %v2125, %v2126
        %v2128 = vrot.slane %v2095, 1
        %v2129 = vrot.slane %v1806, 1
        %v2130 = vsel %vm2106, %v2128, %v2129
        %v2131 = vrot.slane %v2096, 1
        %v2132 = vrot.slane %v1807, 1
        %v2133 = vsel %vm2106, %v2131, %v2132
        %v2134 = vrot.slane %v2097, 1
        %v2135 = vrot.slane %v1808, 1
        %v2136 = vsel %vm2106, %v2134, %v2135
        %v2137 = vrot.slane %v2098, 1
        %v2138 = vrot.slane %v1809, 1
        %v2139 = vsel %vm2106, %v2137, %v2138
        %v2140 = vrot.slane %v2099, 1
        %v2141 = vrot.slane %v1810, 1
        %v2142 = vsel %vm2106, %v2140, %v2141
        %v2143 = vrot.slane %v2100, 1
        %v2144 = vrot.slane %v1811, 1
        %v2145 = vsel %vm2106, %v2143, %v2144
        %v2146 = vrot.slane %v2101, 1
        %v2147 = vrot.slane %v1812, 1
        %v2148 = vsel %vm2106, %v2146, %v2147
        %v2149 = vrot.slane %v2102, 1
        %v2150 = vrot.slane %v1813, 1
        %v2151 = vsel %vm2106, %v2149, %v2150
        %v2152 = vrot.slane %v2103, 1
        %v2153 = vrot.slane %v1814, 1
        %v2154 = vsel %vm2106, %v2152, %v2153
        %v2155 = vrot.slane %v2104, 1
        %v2156 = vrot.slane %v1815, 1
        %v2157 = vsel %vm2106, %v2155, %v2156
        %v2158 = vrot.slane %v2105, 1
        %v2159 = vrot.slane %v1816, 1
        %v2160 = vsel %vm2106, %v2158, %v2159
        %v2179 = vld [vmem:[#allocation8] sm:$0xf]
        %v2180 = vld [vmem:[#allocation8 + $0x4] sm:$0xf]
        %v2181 = vld [vmem:[#allocation8 + $0x8] sm:$0xf]
        %v2182 = vld [vmem:[#allocation8 + $0xc] sm:$0xf]
        %v2183 = vld [vmem:[#allocation8 + $0x10] sm:$0xf]
        %v2184 = vld [vmem:[#allocation8 + $0x14] sm:$0xf]
        %v2185 = vld [vmem:[#allocation8 + $0x18] sm:$0xf]
        %v2186 = vld [vmem:[#allocation8 + $0x1c] sm:$0xf]
        %v2187 = vld [vmem:[#allocation8 + $0x20] sm:$0xf]
        %v2188 = vld [vmem:[#allocation8 + $0x24] sm:$0xf]
        %v2189 = vld [vmem:[#allocation8 + $0x28] sm:$0xf]
        %v2190 = vld [vmem:[#allocation8 + $0x2c] sm:$0xf]
        %v2191 = vld [vmem:[#allocation8 + $0x30] sm:$0xf]
        %v2192 = vld [vmem:[#allocation8 + $0x34] sm:$0xf]
        %v2193 = vld [vmem:[#allocation8 + $0x38] sm:$0xf]
        %v2194 = vld [vmem:[#allocation8 + $0x3c] sm:$0xf]
        %v2195 = vld [vmem:[#allocation8 + $0x40] sm:$0xf]
        %v2196 = vld [vmem:[#allocation8 + $0x44] sm:$0xf]
        %v2197 = vld [vmem:[#allocation8 + $0x48] sm:$0xf]
        %v2198 = vld [vmem:[#allocation8 + $0x4c] sm:$0xf]
        %v2199 = vld [vmem:[#allocation8 + $0x50] sm:$0xf]
        %v2200 = vld [vmem:[#allocation8 + $0x54] sm:$0xf]
        %v2201 = vld [vmem:[#allocation8 + $0x58] sm:$0xf]
        %v2202 = vld [vmem:[#allocation8 + $0x5c] sm:$0xf]
        %v2203 = vld [vmem:[#allocation8 + $0x60] sm:$0xf]
        %v2204 = vld [vmem:[#allocation8 + $0x64] sm:$0xf]
        %v2205 = vld [vmem:[#allocation8 + $0x68] sm:$0xf]
        %v2206 = vld [vmem:[#allocation8 + $0x6c] sm:$0xf]
        %v2207 = vld [vmem:[#allocation8 + $0x70] sm:$0xf]
        %v2208 = vld [vmem:[#allocation8 + $0x74] sm:$0xf]
        %v2209 = vld [vmem:[#allocation8 + $0x78] sm:$0xf]
        %v2210 = vld [vmem:[#allocation8 + $0x7c] sm:$0xf]
        %v2211 = vld [vmem:[#allocation8 + $0x80] sm:$0xf]
        %v2212 = vld [vmem:[#allocation8 + $0x84] sm:$0xf]
        %v2213 = vld [vmem:[#allocation8 + $0x88] sm:$0xf]
        %v2214 = vld [vmem:[#allocation8 + $0x8c] sm:$0xf]
        %v2215 = vld [vmem:[#allocation8 + $0x90] sm:$0xf]
        %v2216 = vld [vmem:[#allocation8 + $0x94] sm:$0xf]
        %v2217 = vld [vmem:[#allocation8 + $0x98] sm:$0xf]
        %v2218 = vld [vmem:[#allocation8 + $0x9c] sm:$0xf]
        %v2219 = vld [vmem:[#allocation8 + $0xa0] sm:$0xf]
        %v2220 = vld [vmem:[#allocation8 + $0xa4] sm:$0xf]
        %v2221 = vld [vmem:[#allocation8 + $0xa8] sm:$0xf]
        %v2222 = vld [vmem:[#allocation8 + $0xac] sm:$0xf]
        %v2223 = vld [vmem:[#allocation8 + $0xb0] sm:$0xf]
        %v2224 = vld [vmem:[#allocation8 + $0xb4] sm:$0xf]
        %v2225 = vld [vmem:[#allocation8 + $0xb8] sm:$0xf]
        %v2226 = vld [vmem:[#allocation8 + $0xbc] sm:$0xf]
        %s2227 = scalar_lea.vmem [#allocation8], 192
        %v2228 = vld [vmem:[%s2227] sm:$0xf]
        %v2229 = vld [vmem:[%s2227 + $0x4] sm:$0xf]
        %v2230 = vld [vmem:[%s2227 + $0x8] sm:$0xf]
        %v2231 = vld [vmem:[%s2227 + $0xc] sm:$0xf]
        %v2232 = vld [vmem:[%s2227 + $0x10] sm:$0xf]
        %v2233 = vld [vmem:[%s2227 + $0x14] sm:$0xf]
        %v2234 = vld [vmem:[%s2227 + $0x18] sm:$0xf]
        %v2235 = vld [vmem:[%s2227 + $0x1c] sm:$0xf]
        %v2236 = vld [vmem:[%s2227 + $0x20] sm:$0xf]
        %v2237 = vld [vmem:[%s2227 + $0x24] sm:$0xf]
        %v2238 = vld [vmem:[%s2227 + $0x28] sm:$0xf]
        %v2239 = vld [vmem:[%s2227 + $0x2c] sm:$0xf]
        %v2240 = vld [vmem:[%s2227 + $0x30] sm:$0xf]
        %v2241 = vld [vmem:[%s2227 + $0x34] sm:$0xf]
        %v2242 = vld [vmem:[%s2227 + $0x38] sm:$0xf]
        %v2243 = vld [vmem:[%s2227 + $0x3c] sm:$0xf]
        %v2244 = vld [vmem:[%s2227 + $0x40] sm:$0xf]
        %v2245 = vld [vmem:[%s2227 + $0x44] sm:$0xf]
        %v2246 = vld [vmem:[%s2227 + $0x48] sm:$0xf]
        %v2247 = vld [vmem:[%s2227 + $0x4c] sm:$0xf]
        %v2248 = vld [vmem:[%s2227 + $0x50] sm:$0xf]
        %v2249 = vld [vmem:[%s2227 + $0x54] sm:$0xf]
        %v2250 = vld [vmem:[%s2227 + $0x58] sm:$0xf]
        %v2251 = vld [vmem:[%s2227 + $0x5c] sm:$0xf]
        %v2252 = vld [vmem:[%s2227 + $0x60] sm:$0xf]
        %v2253 = vld [vmem:[%s2227 + $0x64] sm:$0xf]
        %v2254 = vld [vmem:[%s2227 + $0x68] sm:$0xf]
        %v2255 = vld [vmem:[%s2227 + $0x6c] sm:$0xf]
        %v2256 = vld [vmem:[%s2227 + $0x70] sm:$0xf]
        %v2257 = vld [vmem:[%s2227 + $0x74] sm:$0xf]
        %v2258 = vld [vmem:[%s2227 + $0x78] sm:$0xf]
        %v2259 = vld [vmem:[%s2227 + $0x7c] sm:$0xf]
        %v2260 = vld [vmem:[%s2227 + $0x80] sm:$0xf]
        %v2261 = vld [vmem:[%s2227 + $0x84] sm:$0xf]
        %v2262 = vld [vmem:[%s2227 + $0x88] sm:$0xf]
        %v2263 = vld [vmem:[%s2227 + $0x8c] sm:$0xf]
        %v2264 = vld [vmem:[%s2227 + $0x90] sm:$0xf]
        %v2265 = vld [vmem:[%s2227 + $0x94] sm:$0xf]
        %v2266 = vld [vmem:[%s2227 + $0x98] sm:$0xf]
        %v2267 = vld [vmem:[%s2227 + $0x9c] sm:$0xf]
        %v2268 = vld [vmem:[%s2227 + $0xa0] sm:$0xf]
        %v2269 = vld [vmem:[%s2227 + $0xa4] sm:$0xf]
        %v2270 = vld [vmem:[%s2227 + $0xa8] sm:$0xf]
        %v2271 = vld [vmem:[%s2227 + $0xac] sm:$0xf]
        %v2272 = vld [vmem:[%s2227 + $0xb0] sm:$0xf]
        %v2273 = vld [vmem:[%s2227 + $0xb4] sm:$0xf]
        %v2274 = vld [vmem:[%s2227 + $0xb8] sm:$0xf]
        %v2275 = vld [vmem:[%s2227 + $0xbc] sm:$0xf]
        %v2324 = vunpack.c.l.b16 %v2228
        %v2325 = vunpack.c.l.b16 %v2229
        %v2326 = vunpack.c.l.b16 %v2230
        %v2327 = vunpack.c.l.b16 %v2231
        %v2328 = vunpack.c.l.b16 %v2232
        %v2329 = vunpack.c.l.b16 %v2233
        %v2330 = vunpack.c.l.b16 %v2234
        %v2331 = vunpack.c.l.b16 %v2235
        %v2332 = vunpack.c.l.b16 %v2236
        %v2333 = vunpack.c.l.b16 %v2237
        %v2334 = vunpack.c.l.b16 %v2238
        %v2335 = vunpack.c.l.b16 %v2239
        %v2336 = vunpack.c.l.b16 %v2240
        %v2337 = vunpack.c.l.b16 %v2241
        %v2338 = vunpack.c.l.b16 %v2242
        %v2339 = vunpack.c.l.b16 %v2243
        %v2340 = vunpack.c.l.b16 %v2244
        %v2341 = vunpack.c.l.b16 %v2245
        %v2342 = vunpack.c.l.b16 %v2246
        %v2343 = vunpack.c.l.b16 %v2247
        %v2344 = vunpack.c.l.b16 %v2248
        %v2345 = vunpack.c.l.b16 %v2249
        %v2346 = vunpack.c.l.b16 %v2250
        %v2347 = vunpack.c.l.b16 %v2251
        %v2348 = vunpack.c.l.b16 %v2252
        %v2349 = vunpack.c.l.b16 %v2253
        %v2350 = vunpack.c.l.b16 %v2254
        %v2351 = vunpack.c.l.b16 %v2255
        %v2352 = vunpack.c.l.b16 %v2256
        %v2353 = vunpack.c.l.b16 %v2257
        %v2354 = vunpack.c.l.b16 %v2258
        %v2355 = vunpack.c.l.b16 %v2259
        %v2356 = vunpack.c.l.b16 %v2260
        %v2357 = vunpack.c.l.b16 %v2261
        %v2358 = vunpack.c.l.b16 %v2262
        %v2359 = vunpack.c.l.b16 %v2263
        %v2360 = vunpack.c.l.b16 %v2264
        %v2361 = vunpack.c.l.b16 %v2265
        %v2362 = vunpack.c.l.b16 %v2266
        %v2363 = vunpack.c.l.b16 %v2267
        %v2364 = vunpack.c.l.b16 %v2268
        %v2365 = vunpack.c.l.b16 %v2269
        %v2366 = vunpack.c.l.b16 %v2270
        %v2367 = vunpack.c.l.b16 %v2271
        %v2368 = vunpack.c.l.b16 %v2272
        %v2369 = vunpack.c.l.b16 %v2273
        %v2370 = vunpack.c.l.b16 %v2274
        %v2371 = vunpack.c.l.b16 %v2275
        %v2372 = vpack.c.b16 %v2325, %v2324
        %v2373 = vpack.c.b16 %v2327, %v2326
        %v2374 = vpack.c.b16 %v2329, %v2328
        %v2375 = vpack.c.b16 %v2331, %v2330
        %v2376 = vpack.c.b16 %v2333, %v2332
        %v2377 = vpack.c.b16 %v2335, %v2334
        %v2378 = vpack.c.b16 %v2337, %v2336
        %v2379 = vpack.c.b16 %v2339, %v2338
        %v2380 = vpack.c.b16 %v2341, %v2340
        %v2381 = vpack.c.b16 %v2343, %v2342
        %v2382 = vpack.c.b16 %v2345, %v2344
        %v2383 = vpack.c.b16 %v2347, %v2346
        %v2384 = vpack.c.b16 %v2349, %v2348
        %v2385 = vpack.c.b16 %v2351, %v2350
        %v2386 = vpack.c.b16 %v2353, %v2352
        %v2387 = vpack.c.b16 %v2355, %v2354
        %v2388 = vpack.c.b16 %v2357, %v2356
        %v2389 = vpack.c.b16 %v2359, %v2358
        %v2390 = vpack.c.b16 %v2361, %v2360
        %v2391 = vpack.c.b16 %v2363, %v2362
        %v2392 = vpack.c.b16 %v2365, %v2364
        %v2393 = vpack.c.b16 %v2367, %v2366
        %v2394 = vpack.c.b16 %v2369, %v2368
        %v2395 = vpack.c.b16 %v2371, %v2370
        %2420 = vmatprep.subr.bf16.mxu0 0
        %2421 = vmatpush1.bf16.msra.mxu0 %v2372
        %2422 = vmatprep.subr.bf16.mxu0 0
        %2423 = vmatpush1.bf16.msra.mxu0 %v2373
        %2424 = vmatprep.subr.bf16.mxu0 0
        %2425 = vmatpush1.bf16.msra.mxu0 %v2374
        %2426 = vmatprep.subr.bf16.mxu0 0
        %2427 = vmatpush1.bf16.msra.mxu0 %v2375
        %2428 = vmatprep.subr.bf16.mxu0 0
        %2429 = vmatpush1.bf16.msra.mxu0 %v2376
        %2430 = vmatprep.subr.bf16.mxu0 0
        %2431 = vmatpush1.bf16.msra.mxu0 %v2377
        %2432 = vmatprep.subr.bf16.mxu0 0
        %2433 = vmatpush1.bf16.msra.mxu0 %v2378
        %2434 = vmatprep.subr.bf16.mxu0 0
        %2435 = vmatpush1.bf16.msra.mxu0 %v2379
        %2436 = vmatprep.subr.bf16.mxu0 0
        %2437 = vmatpush1.bf16.msra.mxu0 %v2380
        %2438 = vmatprep.subr.bf16.mxu0 0
        %2439 = vmatpush1.bf16.msra.mxu0 %v2381
        %2440 = vmatprep.subr.bf16.mxu0 0
        %2441 = vmatpush1.bf16.msra.mxu0 %v2382
        %2442 = vmatprep.subr.bf16.mxu0 0
        %2443 = vmatpush1.bf16.msra.mxu0 %v2383
        %2444 = vmatprep.subr.bf16.mxu0 0
        %2445 = vmatpush1.bf16.msra.mxu0 %v2384
        %2446 = vmatprep.subr.bf16.mxu0 0
        %2447 = vmatpush1.bf16.msra.mxu0 %v2385
        %2448 = vmatprep.subr.bf16.mxu0 0
        %2449 = vmatpush1.bf16.msra.mxu0 %v2386
        %2450 = vmatprep.subr.bf16.mxu0 0
        %2451 = vmatpush1.bf16.msra.mxu0 %v2387
        %2452 = vmatprep.mubr.bf16.mxu0 %v1841
        %2453 = vmatmul.mubr.bf16.gmra.mrb[0].mxu0 %v1728
        %v2454 = vpop.f32.mrb[0].mxu0
        %v2455 = vadd.f32 0.0, %v2454
        %v2456 = vpop.f32.mrb[0].mxu0
        %v2457 = vpop.f32.mrb[0].mxu0
        %v2458 = vadd.f32 0.0, %v2457
        %v2459 = vpop.f32.mrb[0].mxu0
        %2460 = vmatprep.mubr.bf16.mxu0 %v1853
        %2461 = vmatmul.mubr.bf16.gmra.mrb[0].mxu0 %v1729
        %v2462 = vpop.f32.mrb[0].mxu0
        %v2463 = vadd.f32 0.0, %v2462
        %v2464 = vpop.f32.mrb[0].mxu0
        %v2465 = vpop.f32.mrb[0].mxu0
        %v2466 = vadd.f32 0.0, %v2465
        %v2467 = vpop.f32.mrb[0].mxu0
        %2468 = vmatprep.mubr.bf16.mxu0 %v1865
        %2469 = vmatmul.mubr.bf16.gmra.mrb[0].mxu0 %v1730
        %v2470 = vpop.f32.mrb[0].mxu0
        %v2471 = vadd.f32 0.0, %v2470
        %v2472 = vpop.f32.mrb[0].mxu0
        %v2473 = vpop.f32.mrb[0].mxu0
        %v2474 = vadd.f32 0.0, %v2473
        %v2475 = vpop.f32.mrb[0].mxu0
        %2476 = vmatprep.mubr.bf16.mxu0 %v1877
        %2477 = vmatmul.mubr.bf16.gmra.mrb[0].mxu0 %v1731
        %v2478 = vpop.f32.mrb[0].mxu0
        %v2479 = vadd.f32 0.0, %v2478
        %v2480 = vpop.f32.mrb[0].mxu0
        %v2481 = vpop.f32.mrb[0].mxu0
        %v2482 = vadd.f32 0.0, %v2481
        %v2483 = vpop.f32.mrb[0].mxu0
        %2484 = vmatprep.mubr.bf16.mxu0 %v1889
        %2485 = vmatmul.mubr.bf16.gmra.mrb[0].mxu0 %v1732
        %v2486 = vpop.f32.mrb[0].mxu0
        %v2487 = vadd.f32 0.0, %v2486
        %v2488 = vpop.f32.mrb[0].mxu0
        %v2489 = vpop.f32.mrb[0].mxu0
        %v2490 = vadd.f32 0.0, %v2489
        %v2491 = vpop.f32.mrb[0].mxu0
        %2492 = vmatprep.mubr.bf16.mxu0 %v1901
        %2493 = vmatmul.mubr.bf16.gmra.mrb[0].mxu0 %v1733
        %v2494 = vpop.f32.mrb[0].mxu0
        %v2495 = vadd.f32 0.0, %v2494
        %v2496 = vpop.f32.mrb[0].mxu0
        %v2497 = vpop.f32.mrb[0].mxu0
        %v2498 = vadd.f32 0.0, %v2497
        %v2499 = vpop.f32.mrb[0].mxu0
        %2500 = vmatprep.mubr.bf16.mxu0 %v1913
        %2501 = vmatmul.mubr.bf16.gmra.mrb[0].mxu0 %v1734
        %v2502 = vpop.f32.mrb[0].mxu0
        %v2503 = vadd.f32 0.0, %v2502
        %v2504 = vpop.f32.mrb[0].mxu0
        %v2505 = vpop.f32.mrb[0].mxu0
        %v2506 = vadd.f32 0.0, %v2505
        %v2507 = vpop.f32.mrb[0].mxu0
        %2508 = vmatprep.mubr.bf16.mxu0 %v1925
        %2509 = vmatmul.mubr.bf16.gmra.mrb[0].mxu0 %v1735
        %v2510 = vpop.f32.mrb[0].mxu0
        %v2511 = vadd.f32 0.0, %v2510
        %v2512 = vpop.f32.mrb[0].mxu0
        %v2513 = vpop.f32.mrb[0].mxu0
        %v2514 = vadd.f32 0.0, %v2513
        %v2515 = vpop.f32.mrb[0].mxu0
        %2516 = vmatprep.mubr.bf16.mxu0 %v1937
        %2517 = vmatmul.mubr.bf16.gmra.mrb[0].mxu0 %v1736
        %v2518 = vpop.f32.mrb[0].mxu0
        %v2519 = vadd.f32 0.0, %v2518
        %v2520 = vpop.f32.mrb[0].mxu0
        %v2521 = vpop.f32.mrb[0].mxu0
        %v2522 = vadd.f32 0.0, %v2521
        %v2523 = vpop.f32.mrb[0].mxu0
        %2524 = vmatprep.mubr.bf16.mxu0 %v1949
        %2525 = vmatmul.mubr.bf16.gmra.mrb[0].mxu0 %v1737
        %v2526 = vpop.f32.mrb[0].mxu0
        %v2527 = vadd.f32 0.0, %v2526
        %v2528 = vpop.f32.mrb[0].mxu0
        %v2529 = vpop.f32.mrb[0].mxu0
        %v2530 = vadd.f32 0.0, %v2529
        %v2531 = vpop.f32.mrb[0].mxu0
        %2532 = vmatprep.mubr.bf16.mxu0 %v1961
        %2533 = vmatmul.mubr.bf16.gmra.mrb[0].mxu0 %v1738
        %v2534 = vpop.f32.mrb[0].mxu0
        %v2535 = vadd.f32 0.0, %v2534
        %v2536 = vpop.f32.mrb[0].mxu0
        %v2537 = vpop.f32.mrb[0].mxu0
        %v2538 = vadd.f32 0.0, %v2537
        %v2539 = vpop.f32.mrb[0].mxu0
        %2540 = vmatprep.mubr.bf16.mxu0 %v1973
        %2541 = vmatmul.mubr.bf16.gmra.mrb[0].mxu0 %v1739
        %v2542 = vpop.f32.mrb[0].mxu0
        %v2543 = vadd.f32 0.0, %v2542
        %v2544 = vpop.f32.mrb[0].mxu0
        %v2545 = vpop.f32.mrb[0].mxu0
        %v2546 = vadd.f32 0.0, %v2545
        %v2547 = vpop.f32.mrb[0].mxu0
        %2548 = vmatprep.mubr.bf16.mxu0 %v1985
        %2549 = vmatmul.mubr.bf16.gmra.mrb[0].mxu0 %v1740
        %v2550 = vpop.f32.mrb[0].mxu0
        %v2551 = vadd.f32 0.0, %v2550
        %v2552 = vpop.f32.mrb[0].mxu0
        %v2553 = vpop.f32.mrb[0].mxu0
        %v2554 = vadd.f32 0.0, %v2553
        %v2555 = vpop.f32.mrb[0].mxu0
        %2556 = vmatprep.mubr.bf16.mxu0 %v1997
        %2557 = vmatmul.mubr.bf16.gmra.mrb[0].mxu0 %v1741
        %v2558 = vpop.f32.mrb[0].mxu0
        %v2559 = vadd.f32 0.0, %v2558
        %v2560 = vpop.f32.mrb[0].mxu0
        %v2561 = vpop.f32.mrb[0].mxu0
        %v2562 = vadd.f32 0.0, %v2561
        %v2563 = vpop.f32.mrb[0].mxu0
        %2564 = vmatprep.mubr.bf16.mxu0 %v2009
        %2565 = vmatmul.mubr.bf16.gmra.mrb[0].mxu0 %v1742
        %v2566 = vpop.f32.mrb[0].mxu0
        %v2567 = vadd.f32 0.0, %v2566
        %v2568 = vpop.f32.mrb[0].mxu0
        %v2569 = vpop.f32.mrb[0].mxu0
        %v2570 = vadd.f32 0.0, %v2569
        %v2571 = vpop.f32.mrb[0].mxu0
        %2572 = vmatprep.mubr.bf16.mxu0 %v2021
        %2573 = vmatmul.mubr.bf16.gmra.mrb[0].mxu0 %v1743
        %v2574 = vpop.f32.mrb[0].mxu0
        %v2575 = vadd.f32 0.0, %v2574
        %v2576 = vpop.f32.mrb[0].mxu0
        %v2577 = vpop.f32.mrb[0].mxu0
        %v2578 = vadd.f32 0.0, %v2577
        %v2579 = vpop.f32.mrb[0].mxu0
        %2580 = vdwg.mxu0
        %2581 = vmatprep.subr.bf16.mxu0 0
        %2582 = vmatpush1.bf16.msra.mxu0 %v2388
        %2583 = vmatprep.subr.bf16.mxu0 0
        %2584 = vmatpush1.bf16.msra.mxu0 %v2389
        %2585 = vmatprep.subr.bf16.mxu0 0
        %2586 = vmatpush1.bf16.msra.mxu0 %v2390
        %2587 = vmatprep.subr.bf16.mxu0 0
        %2588 = vmatpush1.bf16.msra.mxu0 %v2391
        %2589 = vmatprep.subr.bf16.mxu0 0
        %2590 = vmatpush1.bf16.msra.mxu0 %v2392
        %2591 = vmatprep.subr.bf16.mxu0 0
        %2592 = vmatpush1.bf16.msra.mxu0 %v2393
        %2593 = vmatprep.subr.bf16.mxu0 0
        %2594 = vmatpush1.bf16.msra.mxu0 %v2394
        %2595 = vmatprep.subr.bf16.mxu0 0
        %2596 = vmatpush1.bf16.msra.mxu0 %v2395
        %2597 = vmatprep.subr.bf16.mxu0 0
        %2598 = vmatpush1.bf16.msra.mxu0 0
        %2599 = vmatprep.subr.bf16.mxu0 0
        %2600 = vmatpush1.bf16.msra.mxu0 0
        %2601 = vmatprep.subr.bf16.mxu0 0
        %2602 = vmatpush1.bf16.msra.mxu0 0
        %2603 = vmatprep.subr.bf16.mxu0 0
        %2604 = vmatpush1.bf16.msra.mxu0 0
        %2605 = vmatprep.subr.bf16.mxu0 0
        %2606 = vmatpush1.bf16.msra.mxu0 0
        %2607 = vmatprep.subr.bf16.mxu0 0
        %2608 = vmatpush1.bf16.msra.mxu0 0
        %2609 = vmatprep.subr.bf16.mxu0 0
        %2610 = vmatpush1.bf16.msra.mxu0 0
        %2611 = vmatprep.subr.bf16.mxu0 0
        %2612 = vmatpush1.bf16.msra.mxu0 0
        %2613 = vmatprep.mubr.bf16.mxu0 0
        %2614 = vmatmul.mubr.bf16.gmra.mrb[0].mxu0 %v2112
        %v2615 = vpop.f32.mrb[0].mxu0
        %v2616 = vadd.f32 %v2455, %v2615
        %v2617 = vpop.f32.mrb[0].mxu0
        %v2618 = vpop.f32.mrb[0].mxu0
        %v2619 = vadd.f32 %v2458, %v2618
        %v2620 = vpop.f32.mrb[0].mxu0
        %2621 = vmatprep.mubr.bf16.mxu0 0
        %2622 = vmatmul.mubr.bf16.gmra.mrb[0].mxu0 %v2115
        %v2623 = vpop.f32.mrb[0].mxu0
        %v2624 = vadd.f32 %v2463, %v2623
        %v2625 = vpop.f32.mrb[0].mxu0
        %v2626 = vpop.f32.mrb[0].mxu0
        %v2627 = vadd.f32 %v2466, %v2626
        %v2628 = vpop.f32.mrb[0].mxu0
        %2629 = vmatprep.mubr.bf16.mxu0 0
        %2630 = vmatmul.mubr.bf16.gmra.mrb[0].mxu0 %v2118
        %v2631 = vpop.f32.mrb[0].mxu0
        %v2632 = vadd.f32 %v2471, %v2631
        %v2633 = vpop.f32.mrb[0].mxu0
        %v2634 = vpop.f32.mrb[0].mxu0
        %v2635 = vadd.f32 %v2474, %v2634
        %v2636 = vpop.f32.mrb[0].mxu0
        %2637 = vmatprep.mubr.bf16.mxu0 0
        %2638 = vmatmul.mubr.bf16.gmra.mrb[0].mxu0 %v2121
        %v2639 = vpop.f32.mrb[0].mxu0
        %v2640 = vadd.f32 %v2479, %v2639
        %v2641 = vpop.f32.mrb[0].mxu0
        %v2642 = vpop.f32.mrb[0].mxu0
        %v2643 = vadd.f32 %v2482, %v2642
        %v2644 = vpop.f32.mrb[0].mxu0
        %2645 = vmatprep.mubr.bf16.mxu0 0
        %2646 = vmatmul.mubr.bf16.gmra.mrb[0].mxu0 %v2124
        %v2647 = vpop.f32.mrb[0].mxu0
        %v2648 = vadd.f32 %v2487, %v2647
        %v2649 = vpop.f32.mrb[0].mxu0
        %v2650 = vpop.f32.mrb[0].mxu0
        %v2651 = vadd.f32 %v2490, %v2650
        %v2652 = vpop.f32.mrb[0].mxu0
        %2653 = vmatprep.mubr.bf16.mxu0 0
        %2654 = vmatmul.mubr.bf16.gmra.mrb[0].mxu0 %v2127
        %v2655 = vpop.f32.mrb[0].mxu0
        %v2656 = vadd.f32 %v2495, %v2655
        %v2657 = vpop.f32.mrb[0].mxu0
        %v2658 = vpop.f32.mrb[0].mxu0
        %v2659 = vadd.f32 %v2498, %v2658
        %v2660 = vpop.f32.mrb[0].mxu0
        %2661 = vmatprep.mubr.bf16.mxu0 0
        %2662 = vmatmul.mubr.bf16.gmra.mrb[0].mxu0 %v2130
        %v2663 = vpop.f32.mrb[0].mxu0
        %v2664 = vadd.f32 %v2503, %v2663
        %v2665 = vpop.f32.mrb[0].mxu0
        %v2666 = vpop.f32.mrb[0].mxu0
        %v2667 = vadd.f32 %v2506, %v2666
        %v2668 = vpop.f32.mrb[0].mxu0
        %2669 = vmatprep.mubr.bf16.mxu0 0
        %2670 = vmatmul.mubr.bf16.gmra.mrb[0].mxu0 %v2133
        %v2671 = vpop.f32.mrb[0].mxu0
        %v2672 = vadd.f32 %v2511, %v2671
        %v2673 = vpop.f32.mrb[0].mxu0
        %v2674 = vpop.f32.mrb[0].mxu0
        %v2675 = vadd.f32 %v2514, %v2674
        %v2676 = vpop.f32.mrb[0].mxu0
        %2677 = vmatprep.mubr.bf16.mxu0 0
        %2678 = vmatmul.mubr.bf16.gmra.mrb[0].mxu0 %v2136
        %v2679 = vpop.f32.mrb[0].mxu0
        %v2680 = vadd.f32 %v2519, %v2679
        %v2681 = vpop.f32.mrb[0].mxu0
        %v2682 = vpop.f32.mrb[0].mxu0
        %v2683 = vadd.f32 %v2522, %v2682
        %v2684 = vpop.f32.mrb[0].mxu0
        %2685 = vmatprep.mubr.bf16.mxu0 0
        %2686 = vmatmul.mubr.bf16.gmra.mrb[0].mxu0 %v2139
        %v2687 = vpop.f32.mrb[0].mxu0
        %v2688 = vadd.f32 %v2527, %v2687
        %v2689 = vpop.f32.mrb[0].mxu0
        %v2690 = vpop.f32.mrb[0].mxu0
        %v2691 = vadd.f32 %v2530, %v2690
        %v2692 = vpop.f32.mrb[0].mxu0
        %2693 = vmatprep.mubr.bf16.mxu0 0
        %2694 = vmatmul.mubr.bf16.gmra.mrb[0].mxu0 %v2142
        %v2695 = vpop.f32.mrb[0].mxu0
        %v2696 = vadd.f32 %v2535, %v2695
        %v2697 = vpop.f32.mrb[0].mxu0
        %v2698 = vpop.f32.mrb[0].mxu0
        %v2699 = vadd.f32 %v2538, %v2698
        %v2700 = vpop.f32.mrb[0].mxu0
        %2701 = vmatprep.mubr.bf16.mxu0 0
        %2702 = vmatmul.mubr.bf16.gmra.mrb[0].mxu0 %v2145
        %v2703 = vpop.f32.mrb[0].mxu0
        %v2704 = vadd.f32 %v2543, %v2703
        %v2705 = vpop.f32.mrb[0].mxu0
        %v2706 = vpop.f32.mrb[0].mxu0
        %v2707 = vadd.f32 %v2546, %v2706
        %v2708 = vpop.f32.mrb[0].mxu0
        %2709 = vmatprep.mubr.bf16.mxu0 0
        %2710 = vmatmul.mubr.bf16.gmra.mrb[0].mxu0 %v2148
        %v2711 = vpop.f32.mrb[0].mxu0
        %v2712 = vadd.f32 %v2551, %v2711
        %v2713 = vpop.f32.mrb[0].mxu0
        %v2714 = vpop.f32.mrb[0].mxu0
        %v2715 = vadd.f32 %v2554, %v2714
        %v2716 = vpop.f32.mrb[0].mxu0
        %2717 = vmatprep.mubr.bf16.mxu0 0
        %2718 = vmatmul.mubr.bf16.gmra.mrb[0].mxu0 %v2151
        %v2719 = vpop.f32.mrb[0].mxu0
        %v2720 = vadd.f32 %v2559, %v2719
        %v2721 = vpop.f32.mrb[0].mxu0
        %v2722 = vpop.f32.mrb[0].mxu0
        %v2723 = vadd.f32 %v2562, %v2722
        %v2724 = vpop.f32.mrb[0].mxu0
        %2725 = vmatprep.mubr.bf16.mxu0 0
        %2726 = vmatmul.mubr.bf16.gmra.mrb[0].mxu0 %v2154
        %v2727 = vpop.f32.mrb[0].mxu0
        %v2728 = vadd.f32 %v2567, %v2727
        %v2729 = vpop.f32.mrb[0].mxu0
        %v2730 = vpop.f32.mrb[0].mxu0
        %v2731 = vadd.f32 %v2570, %v2730
        %v2732 = vpop.f32.mrb[0].mxu0
        %2733 = vmatprep.mubr.bf16.mxu0 0
        %2734 = vmatmul.mubr.bf16.gmra.mrb[0].mxu0 %v2157
        %v2735 = vpop.f32.mrb[0].mxu0
        %v2736 = vadd.f32 %v2575, %v2735
        %v2737 = vpop.f32.mrb[0].mxu0
        %v2738 = vpop.f32.mrb[0].mxu0
        %v2739 = vadd.f32 %v2578, %v2738
        %v2740 = vpop.f32.mrb[0].mxu0
        %2741 = vdwg.mxu0
        %v2790 = vunpack.c.l.b16 %v2179
        %v2791 = vunpack.c.l.b16 %v2180
        %v2792 = vunpack.c.l.b16 %v2181
        %v2793 = vunpack.c.l.b16 %v2182
        %v2794 = vunpack.c.l.b16 %v2183
        %v2795 = vunpack.c.l.b16 %v2184
        %v2796 = vunpack.c.l.b16 %v2185
        %v2797 = vunpack.c.l.b16 %v2186
        %v2798 = vunpack.c.l.b16 %v2187
        %v2799 = vunpack.c.l.b16 %v2188
        %v2800 = vunpack.c.l.b16 %v2189
        %v2801 = vunpack.c.l.b16 %v2190
        %v2802 = vunpack.c.l.b16 %v2191
        %v2803 = vunpack.c.l.b16 %v2192
        %v2804 = vunpack.c.l.b16 %v2193
        %v2805 = vunpack.c.l.b16 %v2194
        %v2806 = vunpack.c.l.b16 %v2195
        %v2807 = vunpack.c.l.b16 %v2196
        %v2808 = vunpack.c.l.b16 %v2197
        %v2809 = vunpack.c.l.b16 %v2198
        %v2810 = vunpack.c.l.b16 %v2199
        %v2811 = vunpack.c.l.b16 %v2200
        %v2812 = vunpack.c.l.b16 %v2201
        %v2813 = vunpack.c.l.b16 %v2202
        %v2814 = vunpack.c.l.b16 %v2203
        %v2815 = vunpack.c.l.b16 %v2204
        %v2816 = vunpack.c.l.b16 %v2205
        %v2817 = vunpack.c.l.b16 %v2206
        %v2818 = vunpack.c.l.b16 %v2207
        %v2819 = vunpack.c.l.b16 %v2208
        %v2820 = vunpack.c.l.b16 %v2209
        %v2821 = vunpack.c.l.b16 %v2210
        %v2822 = vunpack.c.l.b16 %v2211
        %v2823 = vunpack.c.l.b16 %v2212
        %v2824 = vunpack.c.l.b16 %v2213
        %v2825 = vunpack.c.l.b16 %v2214
        %v2826 = vunpack.c.l.b16 %v2215
        %v2827 = vunpack.c.l.b16 %v2216
        %v2828 = vunpack.c.l.b16 %v2217
        %v2829 = vunpack.c.l.b16 %v2218
        %v2830 = vunpack.c.l.b16 %v2219
        %v2831 = vunpack.c.l.b16 %v2220
        %v2832 = vunpack.c.l.b16 %v2221
        %v2833 = vunpack.c.l.b16 %v2222
        %v2834 = vunpack.c.l.b16 %v2223
        %v2835 = vunpack.c.l.b16 %v2224
        %v2836 = vunpack.c.l.b16 %v2225
        %v2837 = vunpack.c.l.b16 %v2226
        %v2838 = vpack.c.b16 %v2791, %v2790
        %v2839 = vpack.c.b16 %v2793, %v2792
        %v2840 = vpack.c.b16 %v2795, %v2794
        %v2841 = vpack.c.b16 %v2797, %v2796
        %v2842 = vpack.c.b16 %v2799, %v2798
        %v2843 = vpack.c.b16 %v2801, %v2800
        %v2844 = vpack.c.b16 %v2803, %v2802
        %v2845 = vpack.c.b16 %v2805, %v2804
        %v2846 = vpack.c.b16 %v2807, %v2806
        %v2847 = vpack.c.b16 %v2809, %v2808
        %v2848 = vpack.c.b16 %v2811, %v2810
        %v2849 = vpack.c.b16 %v2813, %v2812
        %v2850 = vpack.c.b16 %v2815, %v2814
        %v2851 = vpack.c.b16 %v2817, %v2816
        %v2852 = vpack.c.b16 %v2819, %v2818
        %v2853 = vpack.c.b16 %v2821, %v2820
        %v2854 = vpack.c.b16 %v2823, %v2822
        %v2855 = vpack.c.b16 %v2825, %v2824
        %v2856 = vpack.c.b16 %v2827, %v2826
        %v2857 = vpack.c.b16 %v2829, %v2828
        %v2858 = vpack.c.b16 %v2831, %v2830
        %v2859 = vpack.c.b16 %v2833, %v2832
        %v2860 = vpack.c.b16 %v2835, %v2834
        %v2861 = vpack.c.b16 %v2837, %v2836
        %2886 = vmatprep.subr.bf16.mxu0 0
        %2887 = vmatpush1.bf16.msra.mxu0 %v2838
        %2888 = vmatprep.subr.bf16.mxu0 0
        %2889 = vmatpush1.bf16.msra.mxu0 %v2839
        %2890 = vmatprep.subr.bf16.mxu0 0
        %2891 = vmatpush1.bf16.msra.mxu0 %v2840
        %2892 = vmatprep.subr.bf16.mxu0 0
        %2893 = vmatpush1.bf16.msra.mxu0 %v2841
        %2894 = vmatprep.subr.bf16.mxu0 0
        %2895 = vmatpush1.bf16.msra.mxu0 %v2842
        %2896 = vmatprep.subr.bf16.mxu0 0
        %2897 = vmatpush1.bf16.msra.mxu0 %v2843
        %2898 = vmatprep.subr.bf16.mxu0 0
        %2899 = vmatpush1.bf16.msra.mxu0 %v2844
        %2900 = vmatprep.subr.bf16.mxu0 0
        %2901 = vmatpush1.bf16.msra.mxu0 %v2845
        %2902 = vmatprep.subr.bf16.mxu0 0
        %2903 = vmatpush1.bf16.msra.mxu0 %v2846
        %2904 = vmatprep.subr.bf16.mxu0 0
        %2905 = vmatpush1.bf16.msra.mxu0 %v2847
        %2906 = vmatprep.subr.bf16.mxu0 0
        %2907 = vmatpush1.bf16.msra.mxu0 %v2848
        %2908 = vmatprep.subr.bf16.mxu0 0
        %2909 = vmatpush1.bf16.msra.mxu0 %v2849
        %2910 = vmatprep.subr.bf16.mxu0 0
        %2911 = vmatpush1.bf16.msra.mxu0 %v2850
        %2912 = vmatprep.subr.bf16.mxu0 0
        %2913 = vmatpush1.bf16.msra.mxu0 %v2851
        %2914 = vmatprep.subr.bf16.mxu0 0
        %2915 = vmatpush1.bf16.msra.mxu0 %v2852
        %2916 = vmatprep.subr.bf16.mxu0 0
        %2917 = vmatpush1.bf16.msra.mxu0 %v2853
        %2918 = vmatprep.mubr.bf16.mxu0 %v1829
        %2919 = vmatmul.mubr.bf16.gmra.mrb[0].mxu0 %v1727
        %v2920 = vpop.f32.mrb[0].mxu0
        %v2921 = vadd.f32 %v2616, %v2920
        %v2922 = vpop.f32.mrb[0].mxu0
        %v2923 = vpop.f32.mrb[0].mxu0
        %v2924 = vadd.f32 %v2619, %v2923
        %v2925 = vpop.f32.mrb[0].mxu0
        %2926 = vmatprep.mubr.bf16.mxu0 %v1841
        %2927 = vmatmul.mubr.bf16.gmra.mrb[0].mxu0 %v1728
        %v2928 = vpop.f32.mrb[0].mxu0
        %v2929 = vadd.f32 %v2624, %v2928
        %v2930 = vpop.f32.mrb[0].mxu0
        %v2931 = vpop.f32.mrb[0].mxu0
        %v2932 = vadd.f32 %v2627, %v2931
        %v2933 = vpop.f32.mrb[0].mxu0
        %2934 = vmatprep.mubr.bf16.mxu0 %v1853
        %2935 = vmatmul.mubr.bf16.gmra.mrb[0].mxu0 %v1729
        %v2936 = vpop.f32.mrb[0].mxu0
        %v2937 = vadd.f32 %v2632, %v2936
        %v2938 = vpop.f32.mrb[0].mxu0
        %v2939 = vpop.f32.mrb[0].mxu0
        %v2940 = vadd.f32 %v2635, %v2939
        %v2941 = vpop.f32.mrb[0].mxu0
        %2942 = vmatprep.mubr.bf16.mxu0 %v1865
        %2943 = vmatmul.mubr.bf16.gmra.mrb[0].mxu0 %v1730
        %v2944 = vpop.f32.mrb[0].mxu0
        %v2945 = vadd.f32 %v2640, %v2944
        %v2946 = vpop.f32.mrb[0].mxu0
        %v2947 = vpop.f32.mrb[0].mxu0
        %v2948 = vadd.f32 %v2643, %v2947
        %v2949 = vpop.f32.mrb[0].mxu0
        %2950 = vmatprep.mubr.bf16.mxu0 %v1877
        %2951 = vmatmul.mubr.bf16.gmra.mrb[0].mxu0 %v1731
        %v2952 = vpop.f32.mrb[0].mxu0
        %v2953 = vadd.f32 %v2648, %v2952
        %v2954 = vpop.f32.mrb[0].mxu0
        %v2955 = vpop.f32.mrb[0].mxu0
        %v2956 = vadd.f32 %v2651, %v2955
        %v2957 = vpop.f32.mrb[0].mxu0
        %2958 = vmatprep.mubr.bf16.mxu0 %v1889
        %2959 = vmatmul.mubr.bf16.gmra.mrb[0].mxu0 %v1732
        %v2960 = vpop.f32.mrb[0].mxu0
        %v2961 = vadd.f32 %v2656, %v2960
        %v2962 = vpop.f32.mrb[0].mxu0
        %v2963 = vpop.f32.mrb[0].mxu0
        %v2964 = vadd.f32 %v2659, %v2963
        %v2965 = vpop.f32.mrb[0].mxu0
        %2966 = vmatprep.mubr.bf16.mxu0 %v1901
        %2967 = vmatmul.mubr.bf16.gmra.mrb[0].mxu0 %v1733
        %v2968 = vpop.f32.mrb[0].mxu0
        %v2969 = vadd.f32 %v2664, %v2968
        %v2970 = vpop.f32.mrb[0].mxu0
        %v2971 = vpop.f32.mrb[0].mxu0
        %v2972 = vadd.f32 %v2667, %v2971
        %v2973 = vpop.f32.mrb[0].mxu0
        %2974 = vmatprep.mubr.bf16.mxu0 %v1913
        %2975 = vmatmul.mubr.bf16.gmra.mrb[0].mxu0 %v1734
        %v2976 = vpop.f32.mrb[0].mxu0
        %v2977 = vadd.f32 %v2672, %v2976
        %v2978 = vpop.f32.mrb[0].mxu0
        %v2979 = vpop.f32.mrb[0].mxu0
        %v2980 = vadd.f32 %v2675, %v2979
        %v2981 = vpop.f32.mrb[0].mxu0
        %2982 = vmatprep.mubr.bf16.mxu0 %v1925
        %2983 = vmatmul.mubr.bf16.gmra.mrb[0].mxu0 %v1735
        %v2984 = vpop.f32.mrb[0].mxu0
        %v2985 = vadd.f32 %v2680, %v2984
        %v2986 = vpop.f32.mrb[0].mxu0
        %v2987 = vpop.f32.mrb[0].mxu0
        %v2988 = vadd.f32 %v2683, %v2987
        %v2989 = vpop.f32.mrb[0].mxu0
        %2990 = vmatprep.mubr.bf16.mxu0 %v1937
        %2991 = vmatmul.mubr.bf16.gmra.mrb[0].mxu0 %v1736
        %v2992 = vpop.f32.mrb[0].mxu0
        %v2993 = vadd.f32 %v2688, %v2992
        %v2994 = vpop.f32.mrb[0].mxu0
        %v2995 = vpop.f32.mrb[0].mxu0
        %v2996 = vadd.f32 %v2691, %v2995
        %v2997 = vpop.f32.mrb[0].mxu0
        %2998 = vmatprep.mubr.bf16.mxu0 %v1949
        %2999 = vmatmul.mubr.bf16.gmra.mrb[0].mxu0 %v1737
        %v3000 = vpop.f32.mrb[0].mxu0
        %v3001 = vadd.f32 %v2696, %v3000
        %v3002 = vpop.f32.mrb[0].mxu0
        %v3003 = vpop.f32.mrb[0].mxu0
        %v3004 = vadd.f32 %v2699, %v3003
        %v3005 = vpop.f32.mrb[0].mxu0
        %3006 = vmatprep.mubr.bf16.mxu0 %v1961
        %3007 = vmatmul.mubr.bf16.gmra.mrb[0].mxu0 %v1738
        %v3008 = vpop.f32.mrb[0].mxu0
        %v3009 = vadd.f32 %v2704, %v3008
        %v3010 = vpop.f32.mrb[0].mxu0
        %v3011 = vpop.f32.mrb[0].mxu0
        %v3012 = vadd.f32 %v2707, %v3011
        %v3013 = vpop.f32.mrb[0].mxu0
        %3014 = vmatprep.mubr.bf16.mxu0 %v1973
        %3015 = vmatmul.mubr.bf16.gmra.mrb[0].mxu0 %v1739
        %v3016 = vpop.f32.mrb[0].mxu0
        %v3017 = vadd.f32 %v2712, %v3016
        %v3018 = vpop.f32.mrb[0].mxu0
        %v3019 = vpop.f32.mrb[0].mxu0
        %v3020 = vadd.f32 %v2715, %v3019
        %v3021 = vpop.f32.mrb[0].mxu0
        %3022 = vmatprep.mubr.bf16.mxu0 %v1985
        %3023 = vmatmul.mubr.bf16.gmra.mrb[0].mxu0 %v1740
        %v3024 = vpop.f32.mrb[0].mxu0
        %v3025 = vadd.f32 %v2720, %v3024
        %v3026 = vpop.f32.mrb[0].mxu0
        %v3027 = vpop.f32.mrb[0].mxu0
        %v3028 = vadd.f32 %v2723, %v3027
        %v3029 = vpop.f32.mrb[0].mxu0
        %3030 = vmatprep.mubr.bf16.mxu0 %v1997
        %3031 = vmatmul.mubr.bf16.gmra.mrb[0].mxu0 %v1741
        %v3032 = vpop.f32.mrb[0].mxu0
        %v3033 = vadd.f32 %v2728, %v3032
        %v3034 = vpop.f32.mrb[0].mxu0
        %v3035 = vpop.f32.mrb[0].mxu0
        %v3036 = vadd.f32 %v2731, %v3035
        %v3037 = vpop.f32.mrb[0].mxu0
        %3038 = vmatprep.mubr.bf16.mxu0 %v2009
        %3039 = vmatmul.mubr.bf16.gmra.mrb[0].mxu0 %v1742
        %v3040 = vpop.f32.mrb[0].mxu0
        %v3041 = vadd.f32 %v2736, %v3040
        %v3042 = vpop.f32.mrb[0].mxu0
        %v3043 = vpop.f32.mrb[0].mxu0
        %v3044 = vadd.f32 %v2739, %v3043
        %v3045 = vpop.f32.mrb[0].mxu0
        %3046 = vdwg.mxu0
        %3047 = vmatprep.subr.bf16.mxu0 0
        %3048 = vmatpush1.bf16.msra.mxu0 %v2854
        %3049 = vmatprep.subr.bf16.mxu0 0
        %3050 = vmatpush1.bf16.msra.mxu0 %v2855
        %3051 = vmatprep.subr.bf16.mxu0 0
        %3052 = vmatpush1.bf16.msra.mxu0 %v2856
        %3053 = vmatprep.subr.bf16.mxu0 0
        %3054 = vmatpush1.bf16.msra.mxu0 %v2857
        %3055 = vmatprep.subr.bf16.mxu0 0
        %3056 = vmatpush1.bf16.msra.mxu0 %v2858
        %3057 = vmatprep.subr.bf16.mxu0 0
        %3058 = vmatpush1.bf16.msra.mxu0 %v2859
        %3059 = vmatprep.subr.bf16.mxu0 0
        %3060 = vmatpush1.bf16.msra.mxu0 %v2860
        %3061 = vmatprep.subr.bf16.mxu0 0
        %3062 = vmatpush1.bf16.msra.mxu0 %v2861
        %3063 = vmatprep.subr.bf16.mxu0 0
        %3064 = vmatpush1.bf16.msra.mxu0 0
        %3065 = vmatprep.subr.bf16.mxu0 0
        %3066 = vmatpush1.bf16.msra.mxu0 0
        %3067 = vmatprep.subr.bf16.mxu0 0
        %3068 = vmatpush1.bf16.msra.mxu0 0
        %3069 = vmatprep.subr.bf16.mxu0 0
        %3070 = vmatpush1.bf16.msra.mxu0 0
        %3071 = vmatprep.subr.bf16.mxu0 0
        %3072 = vmatpush1.bf16.msra.mxu0 0
        %3073 = vmatprep.subr.bf16.mxu0 0
        %3074 = vmatpush1.bf16.msra.mxu0 0
        %3075 = vmatprep.subr.bf16.mxu0 0
        %3076 = vmatpush1.bf16.msra.mxu0 0
        %3077 = vmatprep.subr.bf16.mxu0 0
        %3078 = vmatpush1.bf16.msra.mxu0 0
        %3079 = vmatprep.mubr.bf16.mxu0 0
        %3080 = vmatmul.mubr.bf16.gmra.mrb[0].mxu0 %v2109
        %v3081 = vpop.f32.mrb[0].mxu0
        %v3082 = vadd.f32 %v2921, %v3081
        %v3083 = vpop.f32.mrb[0].mxu0
        %v3084 = vpop.f32.mrb[0].mxu0
        %v3085 = vadd.f32 %v2924, %v3084
        %v3086 = vpop.f32.mrb[0].mxu0
        %3087 = vmatprep.mubr.bf16.mxu0 0
        %3088 = vmatmul.mubr.bf16.gmra.mrb[0].mxu0 %v2112
        %v3089 = vpop.f32.mrb[0].mxu0
        %v3090 = vadd.f32 %v2929, %v3089
        %v3091 = vpop.f32.mrb[0].mxu0
        %v3092 = vpop.f32.mrb[0].mxu0
        %v3093 = vadd.f32 %v2932, %v3092
        %v3094 = vpop.f32.mrb[0].mxu0
        %3095 = vmatprep.mubr.bf16.mxu0 0
        %3096 = vmatmul.mubr.bf16.gmra.mrb[0].mxu0 %v2115
        %v3097 = vpop.f32.mrb[0].mxu0
        %v3098 = vadd.f32 %v2937, %v3097
        %v3099 = vpop.f32.mrb[0].mxu0
        %v3100 = vpop.f32.mrb[0].mxu0
        %v3101 = vadd.f32 %v2940, %v3100
        %v3102 = vpop.f32.mrb[0].mxu0
        %3103 = vmatprep.mubr.bf16.mxu0 0
        %3104 = vmatmul.mubr.bf16.gmra.mrb[0].mxu0 %v2118
        %v3105 = vpop.f32.mrb[0].mxu0
        %v3106 = vadd.f32 %v2945, %v3105
        %v3107 = vpop.f32.mrb[0].mxu0
        %v3108 = vpop.f32.mrb[0].mxu0
        %v3109 = vadd.f32 %v2948, %v3108
        %v3110 = vpop.f32.mrb[0].mxu0
        %3111 = vmatprep.mubr.bf16.mxu0 0
        %3112 = vmatmul.mubr.bf16.gmra.mrb[0].mxu0 %v2121
        %v3113 = vpop.f32.mrb[0].mxu0
        %v3114 = vadd.f32 %v2953, %v3113
        %v3115 = vpop.f32.mrb[0].mxu0
        %v3116 = vpop.f32.mrb[0].mxu0
        %v3117 = vadd.f32 %v2956, %v3116
        %v3118 = vpop.f32.mrb[0].mxu0
        %3119 = vmatprep.mubr.bf16.mxu0 0
        %3120 = vmatmul.mubr.bf16.gmra.mrb[0].mxu0 %v2124
        %v3121 = vpop.f32.mrb[0].mxu0
        %v3122 = vadd.f32 %v2961, %v3121
        %v3123 = vpop.f32.mrb[0].mxu0
        %v3124 = vpop.f32.mrb[0].mxu0
        %v3125 = vadd.f32 %v2964, %v3124
        %v3126 = vpop.f32.mrb[0].mxu0
        %3127 = vmatprep.mubr.bf16.mxu0 0
        %3128 = vmatmul.mubr.bf16.gmra.mrb[0].mxu0 %v2127
        %v3129 = vpop.f32.mrb[0].mxu0
        %v3130 = vadd.f32 %v2969, %v3129
        %v3131 = vpop.f32.mrb[0].mxu0
        %v3132 = vpop.f32.mrb[0].mxu0
        %v3133 = vadd.f32 %v2972, %v3132
        %v3134 = vpop.f32.mrb[0].mxu0
        %3135 = vmatprep.mubr.bf16.mxu0 0
        %3136 = vmatmul.mubr.bf16.gmra.mrb[0].mxu0 %v2130
        %v3137 = vpop.f32.mrb[0].mxu0
        %v3138 = vadd.f32 %v2977, %v3137
        %v3139 = vpop.f32.mrb[0].mxu0
        %v3140 = vpop.f32.mrb[0].mxu0
        %v3141 = vadd.f32 %v2980, %v3140
        %v3142 = vpop.f32.mrb[0].mxu0
        %3143 = vmatprep.mubr.bf16.mxu0 0
        %3144 = vmatmul.mubr.bf16.gmra.mrb[0].mxu0 %v2133
        %v3145 = vpop.f32.mrb[0].mxu0
        %v3146 = vadd.f32 %v2985, %v3145
        %v3147 = vpop.f32.mrb[0].mxu0
        %v3148 = vpop.f32.mrb[0].mxu0
        %v3149 = vadd.f32 %v2988, %v3148
        %v3150 = vpop.f32.mrb[0].mxu0
        %3151 = vmatprep.mubr.bf16.mxu0 0
        %3152 = vmatmul.mubr.bf16.gmra.mrb[0].mxu0 %v2136
        %v3153 = vpop.f32.mrb[0].mxu0
        %v3154 = vadd.f32 %v2993, %v3153
        %v3155 = vpop.f32.mrb[0].mxu0
        %v3156 = vpop.f32.mrb[0].mxu0
        %v3157 = vadd.f32 %v2996, %v3156
        %v3158 = vpop.f32.mrb[0].mxu0
        %3159 = vmatprep.mubr.bf16.mxu0 0
        %3160 = vmatmul.mubr.bf16.gmra.mrb[0].mxu0 %v2139
        %v3161 = vpop.f32.mrb[0].mxu0
        %v3162 = vadd.f32 %v3001, %v3161
        %v3163 = vpop.f32.mrb[0].mxu0
        %v3164 = vpop.f32.mrb[0].mxu0
        %v3165 = vadd.f32 %v3004, %v3164
        %v3166 = vpop.f32.mrb[0].mxu0
        %3167 = vmatprep.mubr.bf16.mxu0 0
        %3168 = vmatmul.mubr.bf16.gmra.mrb[0].mxu0 %v2142
        %v3169 = vpop.f32.mrb[0].mxu0
        %v3170 = vadd.f32 %v3009, %v3169
        %v3171 = vpop.f32.mrb[0].mxu0
        %v3172 = vpop.f32.mrb[0].mxu0
        %v3173 = vadd.f32 %v3012, %v3172
        %v3174 = vpop.f32.mrb[0].mxu0
        %3175 = vmatprep.mubr.bf16.mxu0 0
        %3176 = vmatmul.mubr.bf16.gmra.mrb[0].mxu0 %v2145
        %v3177 = vpop.f32.mrb[0].mxu0
        %v3178 = vadd.f32 %v3017, %v3177
        %v3179 = vpop.f32.mrb[0].mxu0
        %v3180 = vpop.f32.mrb[0].mxu0
        %v3181 = vadd.f32 %v3020, %v3180
        %v3182 = vpop.f32.mrb[0].mxu0
        %3183 = vmatprep.mubr.bf16.mxu0 0
        %3184 = vmatmul.mubr.bf16.gmra.mrb[0].mxu0 %v2148
        %v3185 = vpop.f32.mrb[0].mxu0
        %v3186 = vadd.f32 %v3025, %v3185
        %v3187 = vpop.f32.mrb[0].mxu0
        %v3188 = vpop.f32.mrb[0].mxu0
        %v3189 = vadd.f32 %v3028, %v3188
        %v3190 = vpop.f32.mrb[0].mxu0
        %3191 = vmatprep.mubr.bf16.mxu0 0
        %3192 = vmatmul.mubr.bf16.gmra.mrb[0].mxu0 %v2151
        %v3193 = vpop.f32.mrb[0].mxu0
        %v3194 = vadd.f32 %v3033, %v3193
        %v3195 = vpop.f32.mrb[0].mxu0
        %v3196 = vpop.f32.mrb[0].mxu0
        %v3197 = vadd.f32 %v3036, %v3196
        %v3198 = vpop.f32.mrb[0].mxu0
        %3199 = vmatprep.mubr.bf16.mxu0 0
        %3200 = vmatmul.mubr.bf16.gmra.mrb[0].mxu0 %v2154
        %v3201 = vpop.f32.mrb[0].mxu0
        %v3202 = vadd.f32 %v3041, %v3201
        %v3203 = vpop.f32.mrb[0].mxu0
        %v3204 = vpop.f32.mrb[0].mxu0
        %v3205 = vadd.f32 %v3044, %v3204
        %v3206 = vpop.f32.mrb[0].mxu0
        %3207 = vdwg.mxu0
        %s3208 = scalar_lea.vmem [#allocation8], 384
        %v3209 = vld [vmem:[%s3208] sm:$0xf]
        %v3210 = vld [vmem:[%s3208 + $0x4] sm:$0xf]
        %v3211 = vld [vmem:[%s3208 + $0x8] sm:$0xf]
        %v3212 = vld [vmem:[%s3208 + $0xc] sm:$0xf]
        %v3213 = vld [vmem:[%s3208 + $0x10] sm:$0xf]
        %v3214 = vld [vmem:[%s3208 + $0x14] sm:$0xf]
        %v3215 = vld [vmem:[%s3208 + $0x18] sm:$0xf]
        %v3216 = vld [vmem:[%s3208 + $0x1c] sm:$0xf]
        %v3217 = vld [vmem:[%s3208 + $0x20] sm:$0xf]
        %v3218 = vld [vmem:[%s3208 + $0x24] sm:$0xf]
        %v3219 = vld [vmem:[%s3208 + $0x28] sm:$0xf]
        %v3220 = vld [vmem:[%s3208 + $0x2c] sm:$0xf]
        %v3221 = vld [vmem:[%s3208 + $0x30] sm:$0xf]
        %v3222 = vld [vmem:[%s3208 + $0x34] sm:$0xf]
        %v3223 = vld [vmem:[%s3208 + $0x38] sm:$0xf]
        %v3224 = vld [vmem:[%s3208 + $0x3c] sm:$0xf]
        %v3225 = vld [vmem:[%s3208 + $0x40] sm:$0xf]
        %v3226 = vld [vmem:[%s3208 + $0x44] sm:$0xf]
        %v3227 = vld [vmem:[%s3208 + $0x48] sm:$0xf]
        %v3228 = vld [vmem:[%s3208 + $0x4c] sm:$0xf]
        %v3229 = vld [vmem:[%s3208 + $0x50] sm:$0xf]
        %v3230 = vld [vmem:[%s3208 + $0x54] sm:$0xf]
        %v3231 = vld [vmem:[%s3208 + $0x58] sm:$0xf]
        %v3232 = vld [vmem:[%s3208 + $0x5c] sm:$0xf]
        %v3233 = vld [vmem:[%s3208 + $0x60] sm:$0xf]
        %v3234 = vld [vmem:[%s3208 + $0x64] sm:$0xf]
        %v3235 = vld [vmem:[%s3208 + $0x68] sm:$0xf]
        %v3236 = vld [vmem:[%s3208 + $0x6c] sm:$0xf]
        %v3237 = vld [vmem:[%s3208 + $0x70] sm:$0xf]
        %v3238 = vld [vmem:[%s3208 + $0x74] sm:$0xf]
        %v3239 = vld [vmem:[%s3208 + $0x78] sm:$0xf]
        %v3240 = vld [vmem:[%s3208 + $0x7c] sm:$0xf]
        %v3241 = vld [vmem:[%s3208 + $0x80] sm:$0xf]
        %v3242 = vld [vmem:[%s3208 + $0x84] sm:$0xf]
        %v3243 = vld [vmem:[%s3208 + $0x88] sm:$0xf]
        %v3244 = vld [vmem:[%s3208 + $0x8c] sm:$0xf]
        %v3245 = vld [vmem:[%s3208 + $0x90] sm:$0xf]
        %v3246 = vld [vmem:[%s3208 + $0x94] sm:$0xf]
        %v3247 = vld [vmem:[%s3208 + $0x98] sm:$0xf]
        %v3248 = vld [vmem:[%s3208 + $0x9c] sm:$0xf]
        %v3249 = vld [vmem:[%s3208 + $0xa0] sm:$0xf]
        %v3250 = vld [vmem:[%s3208 + $0xa4] sm:$0xf]
        %v3251 = vld [vmem:[%s3208 + $0xa8] sm:$0xf]
        %v3252 = vld [vmem:[%s3208 + $0xac] sm:$0xf]
        %v3253 = vld [vmem:[%s3208 + $0xb0] sm:$0xf]
        %v3254 = vld [vmem:[%s3208 + $0xb4] sm:$0xf]
        %v3255 = vld [vmem:[%s3208 + $0xb8] sm:$0xf]
        %v3256 = vld [vmem:[%s3208 + $0xbc] sm:$0xf]
        %v3305 = vunpack.c.l.b16 %v3209
        %v3306 = vunpack.c.l.b16 %v3210
        %v3307 = vunpack.c.l.b16 %v3211
        %v3308 = vunpack.c.l.b16 %v3212
        %v3309 = vunpack.c.l.b16 %v3213
        %v3310 = vunpack.c.l.b16 %v3214
        %v3311 = vunpack.c.l.b16 %v3215
        %v3312 = vunpack.c.l.b16 %v3216
        %v3313 = vunpack.c.l.b16 %v3217
        %v3314 = vunpack.c.l.b16 %v3218
        %v3315 = vunpack.c.l.b16 %v3219
        %v3316 = vunpack.c.l.b16 %v3220
        %v3317 = vunpack.c.l.b16 %v3221
        %v3318 = vunpack.c.l.b16 %v3222
        %v3319 = vunpack.c.l.b16 %v3223
        %v3320 = vunpack.c.l.b16 %v3224
        %v3321 = vunpack.c.l.b16 %v3225
        %v3322 = vunpack.c.l.b16 %v3226
        %v3323 = vunpack.c.l.b16 %v3227
        %v3324 = vunpack.c.l.b16 %v3228
        %v3325 = vunpack.c.l.b16 %v3229
        %v3326 = vunpack.c.l.b16 %v3230
        %v3327 = vunpack.c.l.b16 %v3231
        %v3328 = vunpack.c.l.b16 %v3232
        %v3329 = vunpack.c.l.b16 %v3233
        %v3330 = vunpack.c.l.b16 %v3234
        %v3331 = vunpack.c.l.b16 %v3235
        %v3332 = vunpack.c.l.b16 %v3236
        %v3333 = vunpack.c.l.b16 %v3237
        %v3334 = vunpack.c.l.b16 %v3238
        %v3335 = vunpack.c.l.b16 %v3239
        %v3336 = vunpack.c.l.b16 %v3240
        %v3337 = vunpack.c.l.b16 %v3241
        %v3338 = vunpack.c.l.b16 %v3242
        %v3339 = vunpack.c.l.b16 %v3243
        %v3340 = vunpack.c.l.b16 %v3244
        %v3341 = vunpack.c.l.b16 %v3245
        %v3342 = vunpack.c.l.b16 %v3246
        %v3343 = vunpack.c.l.b16 %v3247
        %v3344 = vunpack.c.l.b16 %v3248
        %v3345 = vunpack.c.l.b16 %v3249
        %v3346 = vunpack.c.l.b16 %v3250
        %v3347 = vunpack.c.l.b16 %v3251
        %v3348 = vunpack.c.l.b16 %v3252
        %v3349 = vunpack.c.l.b16 %v3253
        %v3350 = vunpack.c.l.b16 %v3254
        %v3351 = vunpack.c.l.b16 %v3255
        %v3352 = vunpack.c.l.b16 %v3256
        %v3353 = vpack.c.b16 %v3306, %v3305
        %v3354 = vpack.c.b16 %v3308, %v3307
        %v3355 = vpack.c.b16 %v3310, %v3309
        %v3356 = vpack.c.b16 %v3312, %v3311
        %v3357 = vpack.c.b16 %v3314, %v3313
        %v3358 = vpack.c.b16 %v3316, %v3315
        %v3359 = vpack.c.b16 %v3318, %v3317
        %v3360 = vpack.c.b16 %v3320, %v3319
        %v3361 = vpack.c.b16 %v3322, %v3321
        %v3362 = vpack.c.b16 %v3324, %v3323
        %v3363 = vpack.c.b16 %v3326, %v3325
        %v3364 = vpack.c.b16 %v3328, %v3327
        %v3365 = vpack.c.b16 %v3330, %v3329
        %v3366 = vpack.c.b16 %v3332, %v3331
        %v3367 = vpack.c.b16 %v3334, %v3333
        %v3368 = vpack.c.b16 %v3336, %v3335
        %v3369 = vpack.c.b16 %v3338, %v3337
        %v3370 = vpack.c.b16 %v3340, %v3339
        %v3371 = vpack.c.b16 %v3342, %v3341
        %v3372 = vpack.c.b16 %v3344, %v3343
        %v3373 = vpack.c.b16 %v3346, %v3345
        %v3374 = vpack.c.b16 %v3348, %v3347
        %v3375 = vpack.c.b16 %v3350, %v3349
        %v3376 = vpack.c.b16 %v3352, %v3351
        %3401 = vmatprep.subr.bf16.mxu0 0
        %3402 = vmatpush1.bf16.msra.mxu0 %v3353
        %3403 = vmatprep.subr.bf16.mxu0 0
        %3404 = vmatpush1.bf16.msra.mxu0 %v3354
        %3405 = vmatprep.subr.bf16.mxu0 0
        %3406 = vmatpush1.bf16.msra.mxu0 %v3355
        %3407 = vmatprep.subr.bf16.mxu0 0
        %3408 = vmatpush1.bf16.msra.mxu0 %v3356
        %3409 = vmatprep.subr.bf16.mxu0 0
        %3410 = vmatpush1.bf16.msra.mxu0 %v3357
        %3411 = vmatprep.subr.bf16.mxu0 0
        %3412 = vmatpush1.bf16.msra.mxu0 %v3358
        %3413 = vmatprep.subr.bf16.mxu0 0
        %3414 = vmatpush1.bf16.msra.mxu0 %v3359
        %3415 = vmatprep.subr.bf16.mxu0 0
        %3416 = vmatpush1.bf16.msra.mxu0 %v3360
        %3417 = vmatprep.subr.bf16.mxu0 0
        %3418 = vmatpush1.bf16.msra.mxu0 %v3361
        %3419 = vmatprep.subr.bf16.mxu0 0
        %3420 = vmatpush1.bf16.msra.mxu0 %v3362
        %3421 = vmatprep.subr.bf16.mxu0 0
        %3422 = vmatpush1.bf16.msra.mxu0 %v3363
        %3423 = vmatprep.subr.bf16.mxu0 0
        %3424 = vmatpush1.bf16.msra.mxu0 %v3364
        %3425 = vmatprep.subr.bf16.mxu0 0
        %3426 = vmatpush1.bf16.msra.mxu0 %v3365
        %3427 = vmatprep.subr.bf16.mxu0 0
        %3428 = vmatpush1.bf16.msra.mxu0 %v3366
        %3429 = vmatprep.subr.bf16.mxu0 0
        %3430 = vmatpush1.bf16.msra.mxu0 %v3367
        %3431 = vmatprep.subr.bf16.mxu0 0
        %3432 = vmatpush1.bf16.msra.mxu0 %v3368
        %3433 = vmatprep.mubr.bf16.mxu0 %v1853
        %3434 = vmatmul.mubr.bf16.gmra.mrb[0].mxu0 %v1729
        %v3435 = vpop.f32.mrb[0].mxu0
        %v3436 = vadd.f32 0.0, %v3435
        %v3437 = vpop.f32.mrb[0].mxu0
        %v3438 = vpop.f32.mrb[0].mxu0
        %v3439 = vadd.f32 0.0, %v3438
        %v3440 = vpop.f32.mrb[0].mxu0
        %3441 = vmatprep.mubr.bf16.mxu0 %v1865
        %3442 = vmatmul.mubr.bf16.gmra.mrb[0].mxu0 %v1730
        %v3443 = vpop.f32.mrb[0].mxu0
        %v3444 = vadd.f32 0.0, %v3443
        %v3445 = vpop.f32.mrb[0].mxu0
        %v3446 = vpop.f32.mrb[0].mxu0
        %v3447 = vadd.f32 0.0, %v3446
        %v3448 = vpop.f32.mrb[0].mxu0
        %3449 = vmatprep.mubr.bf16.mxu0 %v1877
        %3450 = vmatmul.mubr.bf16.gmra.mrb[0].mxu0 %v1731
        %v3451 = vpop.f32.mrb[0].mxu0
        %v3452 = vadd.f32 0.0, %v3451
        %v3453 = vpop.f32.mrb[0].mxu0
        %v3454 = vpop.f32.mrb[0].mxu0
        %v3455 = vadd.f32 0.0, %v3454
        %v3456 = vpop.f32.mrb[0].mxu0
        %3457 = vmatprep.mubr.bf16.mxu0 %v1889
        %3458 = vmatmul.mubr.bf16.gmra.mrb[0].mxu0 %v1732
        %v3459 = vpop.f32.mrb[0].mxu0
        %v3460 = vadd.f32 0.0, %v3459
        %v3461 = vpop.f32.mrb[0].mxu0
        %v3462 = vpop.f32.mrb[0].mxu0
        %v3463 = vadd.f32 0.0, %v3462
        %v3464 = vpop.f32.mrb[0].mxu0
        %3465 = vmatprep.mubr.bf16.mxu0 %v1901
        %3466 = vmatmul.mubr.bf16.gmra.mrb[0].mxu0 %v1733
        %v3467 = vpop.f32.mrb[0].mxu0
        %v3468 = vadd.f32 0.0, %v3467
        %v3469 = vpop.f32.mrb[0].mxu0
        %v3470 = vpop.f32.mrb[0].mxu0
        %v3471 = vadd.f32 0.0, %v3470
        %v3472 = vpop.f32.mrb[0].mxu0
        %3473 = vmatprep.mubr.bf16.mxu0 %v1913
        %3474 = vmatmul.mubr.bf16.gmra.mrb[0].mxu0 %v1734
        %v3475 = vpop.f32.mrb[0].mxu0
        %v3476 = vadd.f32 0.0, %v3475
        %v3477 = vpop.f32.mrb[0].mxu0
        %v3478 = vpop.f32.mrb[0].mxu0
        %v3479 = vadd.f32 0.0, %v3478
        %v3480 = vpop.f32.mrb[0].mxu0
        %3481 = vmatprep.mubr.bf16.mxu0 %v1925
        %3482 = vmatmul.mubr.bf16.gmra.mrb[0].mxu0 %v1735
        %v3483 = vpop.f32.mrb[0].mxu0
        %v3484 = vadd.f32 0.0, %v3483
        %v3485 = vpop.f32.mrb[0].mxu0
        %v3486 = vpop.f32.mrb[0].mxu0
        %v3487 = vadd.f32 0.0, %v3486
        %v3488 = vpop.f32.mrb[0].mxu0
        %3489 = vmatprep.mubr.bf16.mxu0 %v1937
        %3490 = vmatmul.mubr.bf16.gmra.mrb[0].mxu0 %v1736
        %v3491 = vpop.f32.mrb[0].mxu0
        %v3492 = vadd.f32 0.0, %v3491
        %v3493 = vpop.f32.mrb[0].mxu0
        %v3494 = vpop.f32.mrb[0].mxu0
        %v3495 = vadd.f32 0.0, %v3494
        %v3496 = vpop.f32.mrb[0].mxu0
        %3497 = vmatprep.mubr.bf16.mxu0 %v1949
        %3498 = vmatmul.mubr.bf16.gmra.mrb[0].mxu0 %v1737
        %v3499 = vpop.f32.mrb[0].mxu0
        %v3500 = vadd.f32 0.0, %v3499
        %v3501 = vpop.f32.mrb[0].mxu0
        %v3502 = vpop.f32.mrb[0].mxu0
        %v3503 = vadd.f32 0.0, %v3502
        %v3504 = vpop.f32.mrb[0].mxu0
        %3505 = vmatprep.mubr.bf16.mxu0 %v1961
        %3506 = vmatmul.mubr.bf16.gmra.mrb[0].mxu0 %v1738
        %v3507 = vpop.f32.mrb[0].mxu0
        %v3508 = vadd.f32 0.0, %v3507
        %v3509 = vpop.f32.mrb[0].mxu0
        %v3510 = vpop.f32.mrb[0].mxu0
        %v3511 = vadd.f32 0.0, %v3510
        %v3512 = vpop.f32.mrb[0].mxu0
        %3513 = vmatprep.mubr.bf16.mxu0 %v1973
        %3514 = vmatmul.mubr.bf16.gmra.mrb[0].mxu0 %v1739
        %v3515 = vpop.f32.mrb[0].mxu0
        %v3516 = vadd.f32 0.0, %v3515
        %v3517 = vpop.f32.mrb[0].mxu0
        %v3518 = vpop.f32.mrb[0].mxu0
        %v3519 = vadd.f32 0.0, %v3518
        %v3520 = vpop.f32.mrb[0].mxu0
        %3521 = vmatprep.mubr.bf16.mxu0 %v1985
        %3522 = vmatmul.mubr.bf16.gmra.mrb[0].mxu0 %v1740
        %v3523 = vpop.f32.mrb[0].mxu0
        %v3524 = vadd.f32 0.0, %v3523
        %v3525 = vpop.f32.mrb[0].mxu0
        %v3526 = vpop.f32.mrb[0].mxu0
        %v3527 = vadd.f32 0.0, %v3526
        %v3528 = vpop.f32.mrb[0].mxu0
        %3529 = vmatprep.mubr.bf16.mxu0 %v1997
        %3530 = vmatmul.mubr.bf16.gmra.mrb[0].mxu0 %v1741
        %v3531 = vpop.f32.mrb[0].mxu0
        %v3532 = vadd.f32 0.0, %v3531
        %v3533 = vpop.f32.mrb[0].mxu0
        %v3534 = vpop.f32.mrb[0].mxu0
        %v3535 = vadd.f32 0.0, %v3534
        %v3536 = vpop.f32.mrb[0].mxu0
        %3537 = vmatprep.mubr.bf16.mxu0 %v2009
        %3538 = vmatmul.mubr.bf16.gmra.mrb[0].mxu0 %v1742
        %v3539 = vpop.f32.mrb[0].mxu0
        %v3540 = vadd.f32 0.0, %v3539
        %v3541 = vpop.f32.mrb[0].mxu0
        %v3542 = vpop.f32.mrb[0].mxu0
        %v3543 = vadd.f32 0.0, %v3542
        %v3544 = vpop.f32.mrb[0].mxu0
        %3545 = vmatprep.mubr.bf16.mxu0 %v2021
        %3546 = vmatmul.mubr.bf16.gmra.mrb[0].mxu0 %v1743
        %v3547 = vpop.f32.mrb[0].mxu0
        %v3548 = vadd.f32 0.0, %v3547
        %v3549 = vpop.f32.mrb[0].mxu0
        %v3550 = vpop.f32.mrb[0].mxu0
        %v3551 = vadd.f32 0.0, %v3550
        %v3552 = vpop.f32.mrb[0].mxu0
        %3553 = vmatprep.mubr.bf16.mxu0 %v2033
        %3554 = vmatmul.mubr.bf16.gmra.mrb[0].mxu0 %v1744
        %v3555 = vpop.f32.mrb[0].mxu0
        %v3556 = vadd.f32 0.0, %v3555
        %v3557 = vpop.f32.mrb[0].mxu0
        %v3558 = vpop.f32.mrb[0].mxu0
        %v3559 = vadd.f32 0.0, %v3558
        %v3560 = vpop.f32.mrb[0].mxu0
        %3561 = vdwg.mxu0
        %3562 = vmatprep.subr.bf16.mxu0 0
        %3563 = vmatpush1.bf16.msra.mxu0 %v3369
        %3564 = vmatprep.subr.bf16.mxu0 0
        %3565 = vmatpush1.bf16.msra.mxu0 %v3370
        %3566 = vmatprep.subr.bf16.mxu0 0
        %3567 = vmatpush1.bf16.msra.mxu0 %v3371
        %3568 = vmatprep.subr.bf16.mxu0 0
        %3569 = vmatpush1.bf16.msra.mxu0 %v3372
        %3570 = vmatprep.subr.bf16.mxu0 0
        %3571 = vmatpush1.bf16.msra.mxu0 %v3373
        %3572 = vmatprep.subr.bf16.mxu0 0
        %3573 = vmatpush1.bf16.msra.mxu0 %v3374
        %3574 = vmatprep.subr.bf16.mxu0 0
        %3575 = vmatpush1.bf16.msra.mxu0 %v3375
        %3576 = vmatprep.subr.bf16.mxu0 0
        %3577 = vmatpush1.bf16.msra.mxu0 %v3376
        %3578 = vmatprep.subr.bf16.mxu0 0
        %3579 = vmatpush1.bf16.msra.mxu0 0
        %3580 = vmatprep.subr.bf16.mxu0 0
        %3581 = vmatpush1.bf16.msra.mxu0 0
        %3582 = vmatprep.subr.bf16.mxu0 0
        %3583 = vmatpush1.bf16.msra.mxu0 0
        %3584 = vmatprep.subr.bf16.mxu0 0
        %3585 = vmatpush1.bf16.msra.mxu0 0
        %3586 = vmatprep.subr.bf16.mxu0 0
        %3587 = vmatpush1.bf16.msra.mxu0 0
        %3588 = vmatprep.subr.bf16.mxu0 0
        %3589 = vmatpush1.bf16.msra.mxu0 0
        %3590 = vmatprep.subr.bf16.mxu0 0
        %3591 = vmatpush1.bf16.msra.mxu0 0
        %3592 = vmatprep.subr.bf16.mxu0 0
        %3593 = vmatpush1.bf16.msra.mxu0 0
        %3594 = vmatprep.mubr.bf16.mxu0 0
        %3595 = vmatmul.mubr.bf16.gmra.mrb[0].mxu0 %v2115
        %v3596 = vpop.f32.mrb[0].mxu0
        %v3597 = vadd.f32 %v3436, %v3596
        %v3598 = vpop.f32.mrb[0].mxu0
        %v3599 = vpop.f32.mrb[0].mxu0
        %v3600 = vadd.f32 %v3439, %v3599
        %v3601 = vpop.f32.mrb[0].mxu0
        %3602 = vmatprep.mubr.bf16.mxu0 0
        %3603 = vmatmul.mubr.bf16.gmra.mrb[0].mxu0 %v2118
        %v3604 = vpop.f32.mrb[0].mxu0
        %v3605 = vadd.f32 %v3444, %v3604
        %v3606 = vpop.f32.mrb[0].mxu0
        %v3607 = vpop.f32.mrb[0].mxu0
        %v3608 = vadd.f32 %v3447, %v3607
        %v3609 = vpop.f32.mrb[0].mxu0
        %3610 = vmatprep.mubr.bf16.mxu0 0
        %3611 = vmatmul.mubr.bf16.gmra.mrb[0].mxu0 %v2121
        %v3612 = vpop.f32.mrb[0].mxu0
        %v3613 = vadd.f32 %v3452, %v3612
        %v3614 = vpop.f32.mrb[0].mxu0
        %v3615 = vpop.f32.mrb[0].mxu0
        %v3616 = vadd.f32 %v3455, %v3615
        %v3617 = vpop.f32.mrb[0].mxu0
        %3618 = vmatprep.mubr.bf16.mxu0 0
        %3619 = vmatmul.mubr.bf16.gmra.mrb[0].mxu0 %v2124
        %v3620 = vpop.f32.mrb[0].mxu0
        %v3621 = vadd.f32 %v3460, %v3620
        %v3622 = vpop.f32.mrb[0].mxu0
        %v3623 = vpop.f32.mrb[0].mxu0
        %v3624 = vadd.f32 %v3463, %v3623
        %v3625 = vpop.f32.mrb[0].mxu0
        %3626 = vmatprep.mubr.bf16.mxu0 0
        %3627 = vmatmul.mubr.bf16.gmra.mrb[0].mxu0 %v2127
        %v3628 = vpop.f32.mrb[0].mxu0
        %v3629 = vadd.f32 %v3468, %v3628
        %v3630 = vpop.f32.mrb[0].mxu0
        %v3631 = vpop.f32.mrb[0].mxu0
        %v3632 = vadd.f32 %v3471, %v3631
        %v3633 = vpop.f32.mrb[0].mxu0
        %3634 = vmatprep.mubr.bf16.mxu0 0
        %3635 = vmatmul.mubr.bf16.gmra.mrb[0].mxu0 %v2130
        %v3636 = vpop.f32.mrb[0].mxu0
        %v3637 = vadd.f32 %v3476, %v3636
        %v3638 = vpop.f32.mrb[0].mxu0
        %v3639 = vpop.f32.mrb[0].mxu0
        %v3640 = vadd.f32 %v3479, %v3639
        %v3641 = vpop.f32.mrb[0].mxu0
        %3642 = vmatprep.mubr.bf16.mxu0 0
        %3643 = vmatmul.mubr.bf16.gmra.mrb[0].mxu0 %v2133
        %v3644 = vpop.f32.mrb[0].mxu0
        %v3645 = vadd.f32 %v3484, %v3644
        %v3646 = vpop.f32.mrb[0].mxu0
        %v3647 = vpop.f32.mrb[0].mxu0
        %v3648 = vadd.f32 %v3487, %v3647
        %v3649 = vpop.f32.mrb[0].mxu0
        %3650 = vmatprep.mubr.bf16.mxu0 0
        %3651 = vmatmul.mubr.bf16.gmra.mrb[0].mxu0 %v2136
        %v3652 = vpop.f32.mrb[0].mxu0
        %v3653 = vadd.f32 %v3492, %v3652
        %v3654 = vpop.f32.mrb[0].mxu0
        %v3655 = vpop.f32.mrb[0].mxu0
        %v3656 = vadd.f32 %v3495, %v3655
        %v3657 = vpop.f32.mrb[0].mxu0
        %3658 = vmatprep.mubr.bf16.mxu0 0
        %3659 = vmatmul.mubr.bf16.gmra.mrb[0].mxu0 %v2139
        %v3660 = vpop.f32.mrb[0].mxu0
        %v3661 = vadd.f32 %v3500, %v3660
        %v3662 = vpop.f32.mrb[0].mxu0
        %v3663 = vpop.f32.mrb[0].mxu0
        %v3664 = vadd.f32 %v3503, %v3663
        %v3665 = vpop.f32.mrb[0].mxu0
        %3666 = vmatprep.mubr.bf16.mxu0 0
        %3667 = vmatmul.mubr.bf16.gmra.mrb[0].mxu0 %v2142
        %v3668 = vpop.f32.mrb[0].mxu0
        %v3669 = vadd.f32 %v3508, %v3668
        %v3670 = vpop.f32.mrb[0].mxu0
        %v3671 = vpop.f32.mrb[0].mxu0
        %v3672 = vadd.f32 %v3511, %v3671
        %v3673 = vpop.f32.mrb[0].mxu0
        %3674 = vmatprep.mubr.bf16.mxu0 0
        %3675 = vmatmul.mubr.bf16.gmra.mrb[0].mxu0 %v2145
        %v3676 = vpop.f32.mrb[0].mxu0
        %v3677 = vadd.f32 %v3516, %v3676
        %v3678 = vpop.f32.mrb[0].mxu0
        %v3679 = vpop.f32.mrb[0].mxu0
        %v3680 = vadd.f32 %v3519, %v3679
        %v3681 = vpop.f32.mrb[0].mxu0
        %3682 = vmatprep.mubr.bf16.mxu0 0
        %3683 = vmatmul.mubr.bf16.gmra.mrb[0].mxu0 %v2148
        %v3684 = vpop.f32.mrb[0].mxu0
        %v3685 = vadd.f32 %v3524, %v3684
        %v3686 = vpop.f32.mrb[0].mxu0
        %v3687 = vpop.f32.mrb[0].mxu0
        %v3688 = vadd.f32 %v3527, %v3687
        %v3689 = vpop.f32.mrb[0].mxu0
        %3690 = vmatprep.mubr.bf16.mxu0 0
        %3691 = vmatmul.mubr.bf16.gmra.mrb[0].mxu0 %v2151
        %v3692 = vpop.f32.mrb[0].mxu0
        %v3693 = vadd.f32 %v3532, %v3692
        %v3694 = vpop.f32.mrb[0].mxu0
        %v3695 = vpop.f32.mrb[0].mxu0
        %v3696 = vadd.f32 %v3535, %v3695
        %v3697 = vpop.f32.mrb[0].mxu0
        %3698 = vmatprep.mubr.bf16.mxu0 0
        %3699 = vmatmul.mubr.bf16.gmra.mrb[0].mxu0 %v2154
        %v3700 = vpop.f32.mrb[0].mxu0
        %v3701 = vadd.f32 %v3540, %v3700
        %v3702 = vpop.f32.mrb[0].mxu0
        %v3703 = vpop.f32.mrb[0].mxu0
        %v3704 = vadd.f32 %v3543, %v3703
        %v3705 = vpop.f32.mrb[0].mxu0
        %3706 = vmatprep.mubr.bf16.mxu0 0
        %3707 = vmatmul.mubr.bf16.gmra.mrb[0].mxu0 %v2157
        %v3708 = vpop.f32.mrb[0].mxu0
        %v3709 = vadd.f32 %v3548, %v3708
        %v3710 = vpop.f32.mrb[0].mxu0
        %v3711 = vpop.f32.mrb[0].mxu0
        %v3712 = vadd.f32 %v3551, %v3711
        %v3713 = vpop.f32.mrb[0].mxu0
        %3714 = vmatprep.mubr.bf16.mxu0 0
        %3715 = vmatmul.mubr.bf16.gmra.mrb[0].mxu0 %v2160
        %v3716 = vpop.f32.mrb[0].mxu0
        %v3717 = vadd.f32 %v3556, %v3716
        %v3718 = vpop.f32.mrb[0].mxu0
        %v3719 = vpop.f32.mrb[0].mxu0
        %v3720 = vadd.f32 %v3559, %v3719
        %v3721 = vpop.f32.mrb[0].mxu0
        %3722 = vdwg.mxu0
        %v3723 = vadd.f32 %v3082, %v3597
        %v3724 = vadd.f32 %v3085, %v3600
        %v3725 = vadd.f32 %v3090, %v3605
        %v3726 = vadd.f32 %v3093, %v3608
        %v3727 = vadd.f32 %v3098, %v3613
        %v3728 = vadd.f32 %v3101, %v3616
        %v3729 = vadd.f32 %v3106, %v3621
        %v3730 = vadd.f32 %v3109, %v3624
        %v3731 = vadd.f32 %v3114, %v3629
        %v3732 = vadd.f32 %v3117, %v3632
        %v3733 = vadd.f32 %v3122, %v3637
        %v3734 = vadd.f32 %v3125, %v3640
        %v3735 = vadd.f32 %v3130, %v3645
        %v3736 = vadd.f32 %v3133, %v3648
        %v3737 = vadd.f32 %v3138, %v3653
        %v3738 = vadd.f32 %v3141, %v3656
        %v3739 = vadd.f32 %v3146, %v3661
        %v3740 = vadd.f32 %v3149, %v3664
        %v3741 = vadd.f32 %v3154, %v3669
        %v3742 = vadd.f32 %v3157, %v3672
        %v3743 = vadd.f32 %v3162, %v3677
        %v3744 = vadd.f32 %v3165, %v3680
        %v3745 = vadd.f32 %v3170, %v3685
        %v3746 = vadd.f32 %v3173, %v3688
        %v3747 = vadd.f32 %v3178, %v3693
        %v3748 = vadd.f32 %v3181, %v3696
        %v3749 = vadd.f32 %v3186, %v3701
        %v3750 = vadd.f32 %v3189, %v3704
        %v3751 = vadd.f32 %v3194, %v3709
        %v3752 = vadd.f32 %v3197, %v3712
        %v3753 = vadd.f32 %v3202, %v3717
        %v3754 = vadd.f32 %v3205, %v3720
        %v3755 = vld [vmem:[%s4] sm:$0x1]
        %v3757 = vlaneseq
        %v3758 = vshrl.u32 %v3757, 7
        %v3759 = vsub.s32 0, %v3758
        %v3760 = vrot.slane %v3755, %v3759
        %v3762 = vadd.f32 %v3723, %v3760
        %v3763 = vadd.f32 %v3724, %v3760
        %v3764 = vadd.f32 %v3725, %v3760
        %v3765 = vadd.f32 %v3726, %v3760
        %v3766 = vadd.f32 %v3727, %v3760
        %v3767 = vadd.f32 %v3728, %v3760
        %v3768 = vadd.f32 %v3729, %v3760
        %v3769 = vadd.f32 %v3730, %v3760
        %v3770 = vadd.f32 %v3731, %v3760
        %v3771 = vadd.f32 %v3732, %v3760
        %v3772 = vadd.f32 %v3733, %v3760
        %v3773 = vadd.f32 %v3734, %v3760
        %v3774 = vadd.f32 %v3735, %v3760
        %v3775 = vadd.f32 %v3736, %v3760
        %v3776 = vadd.f32 %v3737, %v3760
        %v3777 = vadd.f32 %v3738, %v3760
        %v3778 = vadd.f32 %v3739, %v3760
        %v3779 = vadd.f32 %v3740, %v3760
        %v3780 = vadd.f32 %v3741, %v3760
        %v3781 = vadd.f32 %v3742, %v3760
        %v3782 = vadd.f32 %v3743, %v3760
        %v3783 = vadd.f32 %v3744, %v3760
        %v3784 = vadd.f32 %v3745, %v3760
        %v3785 = vadd.f32 %v3746, %v3760
        %v3786 = vadd.f32 %v3747, %v3760
        %v3787 = vadd.f32 %v3748, %v3760
        %v3788 = vadd.f32 %v3749, %v3760
        %v3789 = vadd.f32 %v3750, %v3760
        %v3790 = vadd.f32 %v3751, %v3760
        %v3791 = vadd.f32 %v3752, %v3760
        %v3792 = vadd.f32 %v3753, %v3760
        %v3793 = vadd.f32 %v3754, %v3760
        %v3794 = vmax.f32 %v3762, 0.0
        %v3795 = vmax.f32 %v3763, 0.0
        %v3796 = vmax.f32 %v3764, 0.0
        %v3797 = vmax.f32 %v3765, 0.0
        %v3798 = vmax.f32 %v3766, 0.0
        %v3799 = vmax.f32 %v3767, 0.0
        %v3800 = vmax.f32 %v3768, 0.0
        %v3801 = vmax.f32 %v3769, 0.0
        %v3802 = vmax.f32 %v3770, 0.0
        %v3803 = vmax.f32 %v3771, 0.0
        %v3804 = vmax.f32 %v3772, 0.0
        %v3805 = vmax.f32 %v3773, 0.0
        %v3806 = vmax.f32 %v3774, 0.0
        %v3807 = vmax.f32 %v3775, 0.0
        %v3808 = vmax.f32 %v3776, 0.0
        %v3809 = vmax.f32 %v3777, 0.0
        %v3810 = vmax.f32 %v3778, 0.0
        %v3811 = vmax.f32 %v3779, 0.0
        %v3812 = vmax.f32 %v3780, 0.0
        %v3813 = vmax.f32 %v3781, 0.0
        %v3814 = vmax.f32 %v3782, 0.0
        %v3815 = vmax.f32 %v3783, 0.0
        %v3816 = vmax.f32 %v3784, 0.0
        %v3817 = vmax.f32 %v3785, 0.0
        %v3818 = vmax.f32 %v3786, 0.0
        %v3819 = vmax.f32 %v3787, 0.0
        %v3820 = vmax.f32 %v3788, 0.0
        %v3821 = vmax.f32 %v3789, 0.0
        %v3822 = vmax.f32 %v3790, 0.0
        %v3823 = vmax.f32 %v3791, 0.0
        %v3824 = vmax.f32 %v3792, 0.0
        %v3825 = vmax.f32 %v3793, 0.0
        %v3826 = vpack.c.bf16 %v3795, %v3794
        %v3827 = vpack.c.bf16 %v3797, %v3796
        %v3828 = vpack.c.bf16 %v3799, %v3798
        %v3829 = vpack.c.bf16 %v3801, %v3800
        %v3830 = vpack.c.bf16 %v3803, %v3802
        %v3831 = vpack.c.bf16 %v3805, %v3804
        %v3832 = vpack.c.bf16 %v3807, %v3806
        %v3833 = vpack.c.bf16 %v3809, %v3808
        %v3834 = vpack.c.bf16 %v3811, %v3810
        %v3835 = vpack.c.bf16 %v3813, %v3812
        %v3836 = vpack.c.bf16 %v3815, %v3814
        %v3837 = vpack.c.bf16 %v3817, %v3816
        %v3838 = vpack.c.bf16 %v3819, %v3818
        %v3839 = vpack.c.bf16 %v3821, %v3820
        %v3840 = vpack.c.bf16 %v3823, %v3822
        %v3841 = vpack.c.bf16 %v3825, %v3824
        %v3842 = vld [vmem:[#allocation9] sm:$0xf]
        %v3843 = vld [vmem:[#allocation9 + $0x4] sm:$0xf]
        %v3844 = vld [vmem:[#allocation9 + $0x8] sm:$0xf]
        %v3845 = vld [vmem:[#allocation9 + $0xc] sm:$0xf]
        %v3846 = vld [vmem:[#allocation9 + $0x10] sm:$0xf]
        %v3847 = vld [vmem:[#allocation9 + $0x14] sm:$0xf]
        %v3848 = vld [vmem:[#allocation9 + $0x18] sm:$0xf]
        %v3849 = vld [vmem:[#allocation9 + $0x1c] sm:$0xf]
        %v3850 = vld [vmem:[#allocation9 + $0x20] sm:$0xf]
        %v3851 = vld [vmem:[#allocation9 + $0x24] sm:$0xf]
        %v3852 = vld [vmem:[#allocation9 + $0x28] sm:$0xf]
        %v3853 = vld [vmem:[#allocation9 + $0x2c] sm:$0xf]
        %v3854 = vld [vmem:[#allocation9 + $0x30] sm:$0xf]
        %v3855 = vld [vmem:[#allocation9 + $0x34] sm:$0xf]
        %v3856 = vld [vmem:[#allocation9 + $0x38] sm:$0xf]
        %v3857 = vld [vmem:[#allocation9 + $0x3c] sm:$0xf]
        %v3858 = vld [vmem:[%s6] sm:$0x1]
        %v3860 = vlaneseq
        %v3861 = vshrl.u32 %v3860, 7
        %v3862 = vsub.s32 0, %v3861
        %v3863 = vrot.slane %v3858, %v3862
        %v3881 = vunpack.c.l.b16 %v3842
        %v3882 = vunpack.c.l.b16 %v3843
        %v3883 = vunpack.c.l.b16 %v3844
        %v3884 = vunpack.c.l.b16 %v3845
        %v3885 = vunpack.c.l.b16 %v3846
        %v3886 = vunpack.c.l.b16 %v3847
        %v3887 = vunpack.c.l.b16 %v3848
        %v3888 = vunpack.c.l.b16 %v3849
        %v3889 = vunpack.c.l.b16 %v3850
        %v3890 = vunpack.c.l.b16 %v3851
        %v3891 = vunpack.c.l.b16 %v3852
        %v3892 = vunpack.c.l.b16 %v3853
        %v3893 = vunpack.c.l.b16 %v3854
        %v3894 = vunpack.c.l.b16 %v3855
        %v3895 = vunpack.c.l.b16 %v3856
        %v3896 = vunpack.c.l.b16 %v3857
        %v3897 = vpack.c.b16 %v3882, %v3881
        %v3898 = vpack.c.b16 %v3884, %v3883
        %v3899 = vpack.c.b16 %v3886, %v3885
        %v3900 = vpack.c.b16 %v3888, %v3887
        %v3901 = vpack.c.b16 %v3890, %v3889
        %v3902 = vpack.c.b16 %v3892, %v3891
        %v3903 = vpack.c.b16 %v3894, %v3893
        %v3904 = vpack.c.b16 %v3896, %v3895
        %3913 = vmatprep.subr.bf16.mxu0 0
        %3914 = vmatpush1.bf16.msra.mxu0 %v3897
        %3915 = vmatprep.subr.bf16.mxu0 0
        %3916 = vmatpush1.bf16.msra.mxu0 %v3898
        %3917 = vmatprep.subr.bf16.mxu0 0
        %3918 = vmatpush1.bf16.msra.mxu0 %v3899
        %3919 = vmatprep.subr.bf16.mxu0 0
        %3920 = vmatpush1.bf16.msra.mxu0 %v3900
        %3921 = vmatprep.subr.bf16.mxu0 0
        %3922 = vmatpush1.bf16.msra.mxu0 %v3901
        %3923 = vmatprep.subr.bf16.mxu0 0
        %3924 = vmatpush1.bf16.msra.mxu0 %v3902
        %3925 = vmatprep.subr.bf16.mxu0 0
        %3926 = vmatpush1.bf16.msra.mxu0 %v3903
        %3927 = vmatprep.subr.bf16.mxu0 0
        %3928 = vmatpush1.bf16.msra.mxu0 %v3904
        %3929 = vmatprep.subr.bf16.mxu0 0
        %3930 = vmatpush1.bf16.msra.mxu0 0
        %3931 = vmatprep.subr.bf16.mxu0 0
        %3932 = vmatpush1.bf16.msra.mxu0 0
        %3933 = vmatprep.subr.bf16.mxu0 0
        %3934 = vmatpush1.bf16.msra.mxu0 0
        %3935 = vmatprep.subr.bf16.mxu0 0
        %3936 = vmatpush1.bf16.msra.mxu0 0
        %3937 = vmatprep.subr.bf16.mxu0 0
        %3938 = vmatpush1.bf16.msra.mxu0 0
        %3939 = vmatprep.subr.bf16.mxu0 0
        %3940 = vmatpush1.bf16.msra.mxu0 0
        %3941 = vmatprep.subr.bf16.mxu0 0
        %3942 = vmatpush1.bf16.msra.mxu0 0
        %3943 = vmatprep.subr.bf16.mxu0 0
        %3944 = vmatpush1.bf16.msra.mxu0 0
        %3945 = vmatprep.mubr.bf16.mxu0 0
        %3946 = vmatmul.mubr.bf16.gmra.mrb[0].mxu0 %v3826
        %v3947 = vpop.f32.mrb[0].mxu0
        %v3948 = vadd.f32 %v3863, %v3947
        %v3949 = vpop.f32.mrb[0].mxu0
        %v3950 = vpop.f32.mrb[0].mxu0
        %v3951 = vadd.f32 %v3863, %v3950
        %v3952 = vpop.f32.mrb[0].mxu0
        %3953 = vmatprep.mubr.bf16.mxu0 0
        %3954 = vmatmul.mubr.bf16.gmra.mrb[0].mxu0 %v3827
        %v3955 = vpop.f32.mrb[0].mxu0
        %v3956 = vadd.f32 %v3863, %v3955
        %v3957 = vpop.f32.mrb[0].mxu0
        %v3958 = vpop.f32.mrb[0].mxu0
        %v3959 = vadd.f32 %v3863, %v3958
        %v3960 = vpop.f32.mrb[0].mxu0
        %3961 = vmatprep.mubr.bf16.mxu0 0
        %3962 = vmatmul.mubr.bf16.gmra.mrb[0].mxu0 %v3828
        %v3963 = vpop.f32.mrb[0].mxu0
        %v3964 = vadd.f32 %v3863, %v3963
        %v3965 = vpop.f32.mrb[0].mxu0
        %v3966 = vpop.f32.mrb[0].mxu0
        %v3967 = vadd.f32 %v3863, %v3966
        %v3968 = vpop.f32.mrb[0].mxu0
        %3969 = vmatprep.mubr.bf16.mxu0 0
        %3970 = vmatmul.mubr.bf16.gmra.mrb[0].mxu0 %v3829
        %v3971 = vpop.f32.mrb[0].mxu0
        %v3972 = vadd.f32 %v3863, %v3971
        %v3973 = vpop.f32.mrb[0].mxu0
        %v3974 = vpop.f32.mrb[0].mxu0
        %v3975 = vadd.f32 %v3863, %v3974
        %v3976 = vpop.f32.mrb[0].mxu0
        %3977 = vmatprep.mubr.bf16.mxu0 0
        %3978 = vmatmul.mubr.bf16.gmra.mrb[0].mxu0 %v3830
        %v3979 = vpop.f32.mrb[0].mxu0
        %v3980 = vadd.f32 %v3863, %v3979
        %v3981 = vpop.f32.mrb[0].mxu0
        %v3982 = vpop.f32.mrb[0].mxu0
        %v3983 = vadd.f32 %v3863, %v3982
        %v3984 = vpop.f32.mrb[0].mxu0
        %3985 = vmatprep.mubr.bf16.mxu0 0
        %3986 = vmatmul.mubr.bf16.gmra.mrb[0].mxu0 %v3831
        %v3987 = vpop.f32.mrb[0].mxu0
        %v3988 = vadd.f32 %v3863, %v3987
        %v3989 = vpop.f32.mrb[0].mxu0
        %v3990 = vpop.f32.mrb[0].mxu0
        %v3991 = vadd.f32 %v3863, %v3990
        %v3992 = vpop.f32.mrb[0].mxu0
        %3993 = vmatprep.mubr.bf16.mxu0 0
        %3994 = vmatmul.mubr.bf16.gmra.mrb[0].mxu0 %v3832
        %v3995 = vpop.f32.mrb[0].mxu0
        %v3996 = vadd.f32 %v3863, %v3995
        %v3997 = vpop.f32.mrb[0].mxu0
        %v3998 = vpop.f32.mrb[0].mxu0
        %v3999 = vadd.f32 %v3863, %v3998
        %v4000 = vpop.f32.mrb[0].mxu0
        %4001 = vmatprep.mubr.bf16.mxu0 0
        %4002 = vmatmul.mubr.bf16.gmra.mrb[0].mxu0 %v3833
        %v4003 = vpop.f32.mrb[0].mxu0
        %v4004 = vadd.f32 %v3863, %v4003
        %v4005 = vpop.f32.mrb[0].mxu0
        %v4006 = vpop.f32.mrb[0].mxu0
        %v4007 = vadd.f32 %v3863, %v4006
        %v4008 = vpop.f32.mrb[0].mxu0
        %4009 = vmatprep.mubr.bf16.mxu0 0
        %4010 = vmatmul.mubr.bf16.gmra.mrb[0].mxu0 %v3834
        %v4011 = vpop.f32.mrb[0].mxu0
        %v4012 = vadd.f32 %v3863, %v4011
        %v4013 = vpop.f32.mrb[0].mxu0
        %v4014 = vpop.f32.mrb[0].mxu0
        %v4015 = vadd.f32 %v3863, %v4014
        %v4016 = vpop.f32.mrb[0].mxu0
        %4017 = vmatprep.mubr.bf16.mxu0 0
        %4018 = vmatmul.mubr.bf16.gmra.mrb[0].mxu0 %v3835
        %v4019 = vpop.f32.mrb[0].mxu0
        %v4020 = vadd.f32 %v3863, %v4019
        %v4021 = vpop.f32.mrb[0].mxu0
        %v4022 = vpop.f32.mrb[0].mxu0
        %v4023 = vadd.f32 %v3863, %v4022
        %v4024 = vpop.f32.mrb[0].mxu0
        %4025 = vmatprep.mubr.bf16.mxu0 0
        %4026 = vmatmul.mubr.bf16.gmra.mrb[0].mxu0 %v3836
        %v4027 = vpop.f32.mrb[0].mxu0
        %v4028 = vadd.f32 %v3863, %v4027
        %v4029 = vpop.f32.mrb[0].mxu0
        %v4030 = vpop.f32.mrb[0].mxu0
        %v4031 = vadd.f32 %v3863, %v4030
        %v4032 = vpop.f32.mrb[0].mxu0
        %4033 = vmatprep.mubr.bf16.mxu0 0
        %4034 = vmatmul.mubr.bf16.gmra.mrb[0].mxu0 %v3837
        %v4035 = vpop.f32.mrb[0].mxu0
        %v4036 = vadd.f32 %v3863, %v4035
        %v4037 = vpop.f32.mrb[0].mxu0
        %v4038 = vpop.f32.mrb[0].mxu0
        %v4039 = vadd.f32 %v3863, %v4038
        %v4040 = vpop.f32.mrb[0].mxu0
        %4041 = vmatprep.mubr.bf16.mxu0 0
        %4042 = vmatmul.mubr.bf16.gmra.mrb[0].mxu0 %v3838
        %v4043 = vpop.f32.mrb[0].mxu0
        %v4044 = vadd.f32 %v3863, %v4043
        %v4045 = vpop.f32.mrb[0].mxu0
        %v4046 = vpop.f32.mrb[0].mxu0
        %v4047 = vadd.f32 %v3863, %v4046
        %v4048 = vpop.f32.mrb[0].mxu0
        %4049 = vmatprep.mubr.bf16.mxu0 0
        %4050 = vmatmul.mubr.bf16.gmra.mrb[0].mxu0 %v3839
        %v4051 = vpop.f32.mrb[0].mxu0
        %v4052 = vadd.f32 %v3863, %v4051
        %v4053 = vpop.f32.mrb[0].mxu0
        %v4054 = vpop.f32.mrb[0].mxu0
        %v4055 = vadd.f32 %v3863, %v4054
        %v4056 = vpop.f32.mrb[0].mxu0
        %4057 = vmatprep.mubr.bf16.mxu0 0
        %4058 = vmatmul.mubr.bf16.gmra.mrb[0].mxu0 %v3840
        %v4059 = vpop.f32.mrb[0].mxu0
        %v4060 = vadd.f32 %v3863, %v4059
        %v4061 = vpop.f32.mrb[0].mxu0
        %v4062 = vpop.f32.mrb[0].mxu0
        %v4063 = vadd.f32 %v3863, %v4062
        %v4064 = vpop.f32.mrb[0].mxu0
        %4065 = vmatprep.mubr.bf16.mxu0 0
        %4066 = vmatmul.mubr.bf16.gmra.mrb[0].mxu0 %v3841
        %v4067 = vpop.f32.mrb[0].mxu0
        %v4068 = vadd.f32 %v3863, %v4067
        %v4069 = vpop.f32.mrb[0].mxu0
        %v4070 = vpop.f32.mrb[0].mxu0
        %v4071 = vadd.f32 %v3863, %v4070
        %v4072 = vpop.f32.mrb[0].mxu0
        %4073 = vdwg.mxu0
        %s4074 = sadd.s32 %s425, 1
        %s4075 = smul.u32 %s4074, 2
        %s4076 = smul.addr %s4075, 4
        %s4077 = scalar_lea.vmem %s372, %s4076 [#allocation3]
        %v4078 = vld [vmem:[%s4077] sm:$0xf]
        %v4079 = vld [vmem:[%s4077 + $0x4] sm:$0xf]
        %v4080 = vld [vmem:[%s4077 + $0x8] sm:$0xf]
        %v4081 = vld [vmem:[%s4077 + $0xc] sm:$0xf]
        %v4082 = vld [vmem:[%s4077 + $0x10] sm:$0xf]
        %v4083 = vld [vmem:[%s4077 + $0x14] sm:$0xf]
        %v4084 = vld [vmem:[%s4077 + $0x18] sm:$0xf]
        %v4085 = vld [vmem:[%s4077 + $0x1c] sm:$0xf]
        %v4086 = vld [vmem:[%s4077 + $0x20] sm:$0xf]
        %v4087 = vld [vmem:[%s4077 + $0x24] sm:$0xf]
        %v4088 = vld [vmem:[%s4077 + $0x28] sm:$0xf]
        %v4089 = vld [vmem:[%s4077 + $0x2c] sm:$0xf]
        %v4090 = vld [vmem:[%s4077 + $0x30] sm:$0xf]
        %v4091 = vld [vmem:[%s4077 + $0x34] sm:$0xf]
        %v4092 = vld [vmem:[%s4077 + $0x38] sm:$0xf]
        %v4093 = vld [vmem:[%s4077 + $0x3c] sm:$0xf]
        %v4094 = vld [vmem:[%s4077 + $0x40] sm:$0xf]
        %v4095 = vld [vmem:[%s4077 + $0x44] sm:$0xf]
        %v4096 = vld [vmem:[%s4077 + $0x48] sm:$0xf]
        %v4097 = vld [vmem:[%s4077 + $0x4c] sm:$0xf]
        %v4098 = vld [vmem:[%s4077 + $0x50] sm:$0xf]
        %v4099 = vld [vmem:[%s4077 + $0x54] sm:$0xf]
        %v4100 = vld [vmem:[%s4077 + $0x58] sm:$0xf]
        %v4101 = vld [vmem:[%s4077 + $0x5c] sm:$0xf]
        %v4102 = vld [vmem:[%s4077 + $0x60] sm:$0xf]
        %v4103 = vld [vmem:[%s4077 + $0x64] sm:$0xf]
        %v4104 = vld [vmem:[%s4077 + $0x68] sm:$0xf]
        %v4105 = vld [vmem:[%s4077 + $0x6c] sm:$0xf]
        %v4106 = vld [vmem:[%s4077 + $0x70] sm:$0xf]
        %v4107 = vld [vmem:[%s4077 + $0x74] sm:$0xf]
        %v4108 = vld [vmem:[%s4077 + $0x78] sm:$0xf]
        %v4109 = vld [vmem:[%s4077 + $0x7c] sm:$0xf]
        %v4110 = vld [vmem:[#allocation11] sm:$0xf]
        %v4111 = vld [vmem:[#allocation11 + $0x4] sm:$0xf]
        %v4112 = vld [vmem:[#allocation11 + $0x8] sm:$0xf]
        %v4113 = vld [vmem:[#allocation11 + $0xc] sm:$0xf]
        %v4114 = vld [vmem:[#allocation11 + $0x10] sm:$0xf]
        %v4115 = vld [vmem:[#allocation11 + $0x14] sm:$0xf]
        %v4116 = vld [vmem:[#allocation11 + $0x18] sm:$0xf]
        %v4117 = vld [vmem:[#allocation11 + $0x1c] sm:$0xf]
        %v4118 = vld [vmem:[#allocation11 + $0x20] sm:$0xf]
        %v4119 = vld [vmem:[#allocation11 + $0x24] sm:$0xf]
        %v4120 = vld [vmem:[#allocation11 + $0x28] sm:$0xf]
        %v4121 = vld [vmem:[#allocation11 + $0x2c] sm:$0xf]
        %v4122 = vld [vmem:[#allocation11 + $0x30] sm:$0xf]
        %v4123 = vld [vmem:[#allocation11 + $0x34] sm:$0xf]
        %v4124 = vld [vmem:[#allocation11 + $0x38] sm:$0xf]
        %v4125 = vld [vmem:[#allocation11 + $0x3c] sm:$0xf]
        %v4126 = vld [vmem:[%s8] sm:$0x1]
        %v4128 = vlaneseq
        %v4129 = vshrl.u32 %v4128, 7
        %v4130 = vsub.s32 0, %v4129
        %v4131 = vrot.slane %v4126, %v4130
        %v4165 = vunpack.c.l.b16 %v4078
        %v4166 = vunpack.c.l.b16 %v4079
        %v4167 = vunpack.c.l.b16 %v4080
        %v4168 = vunpack.c.l.b16 %v4081
        %v4169 = vunpack.c.l.b16 %v4082
        %v4170 = vunpack.c.l.b16 %v4083
        %v4171 = vunpack.c.l.b16 %v4084
        %v4172 = vunpack.c.l.b16 %v4085
        %v4173 = vunpack.c.l.b16 %v4086
        %v4174 = vunpack.c.l.b16 %v4087
        %v4175 = vunpack.c.l.b16 %v4088
        %v4176 = vunpack.c.l.b16 %v4089
        %v4177 = vunpack.c.l.b16 %v4090
        %v4178 = vunpack.c.l.b16 %v4091
        %v4179 = vunpack.c.l.b16 %v4092
        %v4180 = vunpack.c.l.b16 %v4093
        %v4181 = vunpack.c.l.b16 %v4094
        %v4182 = vunpack.c.l.b16 %v4095
        %v4183 = vunpack.c.l.b16 %v4096
        %v4184 = vunpack.c.l.b16 %v4097
        %v4185 = vunpack.c.l.b16 %v4098
        %v4186 = vunpack.c.l.b16 %v4099
        %v4187 = vunpack.c.l.b16 %v4100
        %v4188 = vunpack.c.l.b16 %v4101
        %v4189 = vunpack.c.l.b16 %v4102
        %v4190 = vunpack.c.l.b16 %v4103
        %v4191 = vunpack.c.l.b16 %v4104
        %v4192 = vunpack.c.l.b16 %v4105
        %v4193 = vunpack.c.l.b16 %v4106
        %v4194 = vunpack.c.l.b16 %v4107
        %v4195 = vunpack.c.l.b16 %v4108
        %v4196 = vunpack.c.l.b16 %v4109
        %v4197 = vpack.c.b16 %v4166, %v4165
        %v4198 = vpack.c.b16 %v4168, %v4167
        %v4199 = vpack.c.b16 %v4170, %v4169
        %v4200 = vpack.c.b16 %v4172, %v4171
        %v4201 = vpack.c.b16 %v4174, %v4173
        %v4202 = vpack.c.b16 %v4176, %v4175
        %v4203 = vpack.c.b16 %v4178, %v4177
        %v4204 = vpack.c.b16 %v4180, %v4179
        %v4205 = vpack.c.b16 %v4182, %v4181
        %v4206 = vpack.c.b16 %v4184, %v4183
        %v4207 = vpack.c.b16 %v4186, %v4185
        %v4208 = vpack.c.b16 %v4188, %v4187
        %v4209 = vpack.c.b16 %v4190, %v4189
        %v4210 = vpack.c.b16 %v4192, %v4191
        %v4211 = vpack.c.b16 %v4194, %v4193
        %v4212 = vpack.c.b16 %v4196, %v4195
        %v4245 = vunpack.c.l.b16 %v4110
        %v4246 = vunpack.c.l.b16 %v4111
        %v4247 = vunpack.c.l.b16 %v4112
        %v4248 = vunpack.c.l.b16 %v4113
        %v4249 = vunpack.c.l.b16 %v4114
        %v4250 = vunpack.c.l.b16 %v4115
        %v4251 = vunpack.c.l.b16 %v4116
        %v4252 = vunpack.c.l.b16 %v4117
        %v4253 = vunpack.c.l.b16 %v4118
        %v4254 = vunpack.c.l.b16 %v4119
        %v4255 = vunpack.c.l.b16 %v4120
        %v4256 = vunpack.c.l.b16 %v4121
        %v4257 = vunpack.c.l.b16 %v4122
        %v4258 = vunpack.c.l.b16 %v4123
        %v4259 = vunpack.c.l.b16 %v4124
        %v4260 = vunpack.c.l.b16 %v4125
        %v4261 = vpack.c.b16 %v4246, %v4245
        %v4262 = vpack.c.b16 %v4248, %v4247
        %v4263 = vpack.c.b16 %v4250, %v4249
        %v4264 = vpack.c.b16 %v4252, %v4251
        %v4265 = vpack.c.b16 %v4254, %v4253
        %v4266 = vpack.c.b16 %v4256, %v4255
        %v4267 = vpack.c.b16 %v4258, %v4257
        %v4268 = vpack.c.b16 %v4260, %v4259
        %4277 = vmatprep.subr.bf16.mxu0 0
        %4278 = vmatpush1.bf16.msra.mxu0 %v4261
        %4279 = vmatprep.subr.bf16.mxu0 0
        %4280 = vmatpush1.bf16.msra.mxu0 %v4262
        %4281 = vmatprep.subr.bf16.mxu0 0
        %4282 = vmatpush1.bf16.msra.mxu0 %v4263
        %4283 = vmatprep.subr.bf16.mxu0 0
        %4284 = vmatpush1.bf16.msra.mxu0 %v4264
        %4285 = vmatprep.subr.bf16.mxu0 0
        %4286 = vmatpush1.bf16.msra.mxu0 %v4265
        %4287 = vmatprep.subr.bf16.mxu0 0
        %4288 = vmatpush1.bf16.msra.mxu0 %v4266
        %4289 = vmatprep.subr.bf16.mxu0 0
        %4290 = vmatpush1.bf16.msra.mxu0 %v4267
        %4291 = vmatprep.subr.bf16.mxu0 0
        %4292 = vmatpush1.bf16.msra.mxu0 %v4268
        %4293 = vmatprep.subr.bf16.mxu0 0
        %4294 = vmatpush1.bf16.msra.mxu0 0
        %4295 = vmatprep.subr.bf16.mxu0 0
        %4296 = vmatpush1.bf16.msra.mxu0 0
        %4297 = vmatprep.subr.bf16.mxu0 0
        %4298 = vmatpush1.bf16.msra.mxu0 0
        %4299 = vmatprep.subr.bf16.mxu0 0
        %4300 = vmatpush1.bf16.msra.mxu0 0
        %4301 = vmatprep.subr.bf16.mxu0 0
        %4302 = vmatpush1.bf16.msra.mxu0 0
        %4303 = vmatprep.subr.bf16.mxu0 0
        %4304 = vmatpush1.bf16.msra.mxu0 0
        %4305 = vmatprep.subr.bf16.mxu0 0
        %4306 = vmatpush1.bf16.msra.mxu0 0
        %4307 = vmatprep.subr.bf16.mxu0 0
        %4308 = vmatpush1.bf16.msra.mxu0 0
        %4309 = vmatprep.mubr.bf16.mxu0 0
        %4310 = vmatmul.mubr.bf16.gmra.mrb[0].mxu0 %v4197
        %v4311 = vpop.f32.mrb[0].mxu0
        %v4312 = vadd.f32 %v4131, %v4311
        %v4313 = vpop.f32.mrb[0].mxu0
        %v4314 = vpop.f32.mrb[0].mxu0
        %v4315 = vadd.f32 %v4131, %v4314
        %v4316 = vpop.f32.mrb[0].mxu0
        %4317 = vmatprep.mubr.bf16.mxu0 0
        %4318 = vmatmul.mubr.bf16.gmra.mrb[0].mxu0 %v4198
        %v4319 = vpop.f32.mrb[0].mxu0
        %v4320 = vadd.f32 %v4131, %v4319
        %v4321 = vpop.f32.mrb[0].mxu0
        %v4322 = vpop.f32.mrb[0].mxu0
        %v4323 = vadd.f32 %v4131, %v4322
        %v4324 = vpop.f32.mrb[0].mxu0
        %4325 = vmatprep.mubr.bf16.mxu0 0
        %4326 = vmatmul.mubr.bf16.gmra.mrb[0].mxu0 %v4199
        %v4327 = vpop.f32.mrb[0].mxu0
        %v4328 = vadd.f32 %v4131, %v4327
        %v4329 = vpop.f32.mrb[0].mxu0
        %v4330 = vpop.f32.mrb[0].mxu0
        %v4331 = vadd.f32 %v4131, %v4330
        %v4332 = vpop.f32.mrb[0].mxu0
        %4333 = vmatprep.mubr.bf16.mxu0 0
        %4334 = vmatmul.mubr.bf16.gmra.mrb[0].mxu0 %v4200
        %v4335 = vpop.f32.mrb[0].mxu0
        %v4336 = vadd.f32 %v4131, %v4335
        %v4337 = vpop.f32.mrb[0].mxu0
        %v4338 = vpop.f32.mrb[0].mxu0
        %v4339 = vadd.f32 %v4131, %v4338
        %v4340 = vpop.f32.mrb[0].mxu0
        %4341 = vmatprep.mubr.bf16.mxu0 0
        %4342 = vmatmul.mubr.bf16.gmra.mrb[0].mxu0 %v4201
        %v4343 = vpop.f32.mrb[0].mxu0
        %v4344 = vadd.f32 %v4131, %v4343
        %v4345 = vpop.f32.mrb[0].mxu0
        %v4346 = vpop.f32.mrb[0].mxu0
        %v4347 = vadd.f32 %v4131, %v4346
        %v4348 = vpop.f32.mrb[0].mxu0
        %4349 = vmatprep.mubr.bf16.mxu0 0
        %4350 = vmatmul.mubr.bf16.gmra.mrb[0].mxu0 %v4202
        %v4351 = vpop.f32.mrb[0].mxu0
        %v4352 = vadd.f32 %v4131, %v4351
        %v4353 = vpop.f32.mrb[0].mxu0
        %v4354 = vpop.f32.mrb[0].mxu0
        %v4355 = vadd.f32 %v4131, %v4354
        %v4356 = vpop.f32.mrb[0].mxu0
        %4357 = vmatprep.mubr.bf16.mxu0 0
        %4358 = vmatmul.mubr.bf16.gmra.mrb[0].mxu0 %v4203
        %v4359 = vpop.f32.mrb[0].mxu0
        %v4360 = vadd.f32 %v4131, %v4359
        %v4361 = vpop.f32.mrb[0].mxu0
        %v4362 = vpop.f32.mrb[0].mxu0
        %v4363 = vadd.f32 %v4131, %v4362
        %v4364 = vpop.f32.mrb[0].mxu0
        %4365 = vmatprep.mubr.bf16.mxu0 0
        %4366 = vmatmul.mubr.bf16.gmra.mrb[0].mxu0 %v4204
        %v4367 = vpop.f32.mrb[0].mxu0
        %v4368 = vadd.f32 %v4131, %v4367
        %v4369 = vpop.f32.mrb[0].mxu0
        %v4370 = vpop.f32.mrb[0].mxu0
        %v4371 = vadd.f32 %v4131, %v4370
        %v4372 = vpop.f32.mrb[0].mxu0
        %4373 = vmatprep.mubr.bf16.mxu0 0
        %4374 = vmatmul.mubr.bf16.gmra.mrb[0].mxu0 %v4205
        %v4375 = vpop.f32.mrb[0].mxu0
        %v4376 = vadd.f32 %v4131, %v4375
        %v4377 = vpop.f32.mrb[0].mxu0
        %v4378 = vpop.f32.mrb[0].mxu0
        %v4379 = vadd.f32 %v4131, %v4378
        %v4380 = vpop.f32.mrb[0].mxu0
        %4381 = vmatprep.mubr.bf16.mxu0 0
        %4382 = vmatmul.mubr.bf16.gmra.mrb[0].mxu0 %v4206
        %v4383 = vpop.f32.mrb[0].mxu0
        %v4384 = vadd.f32 %v4131, %v4383
        %v4385 = vpop.f32.mrb[0].mxu0
        %v4386 = vpop.f32.mrb[0].mxu0
        %v4387 = vadd.f32 %v4131, %v4386
        %v4388 = vpop.f32.mrb[0].mxu0
        %4389 = vmatprep.mubr.bf16.mxu0 0
        %4390 = vmatmul.mubr.bf16.gmra.mrb[0].mxu0 %v4207
        %v4391 = vpop.f32.mrb[0].mxu0
        %v4392 = vadd.f32 %v4131, %v4391
        %v4393 = vpop.f32.mrb[0].mxu0
        %v4394 = vpop.f32.mrb[0].mxu0
        %v4395 = vadd.f32 %v4131, %v4394
        %v4396 = vpop.f32.mrb[0].mxu0
        %4397 = vmatprep.mubr.bf16.mxu0 0
        %4398 = vmatmul.mubr.bf16.gmra.mrb[0].mxu0 %v4208
        %v4399 = vpop.f32.mrb[0].mxu0
        %v4400 = vadd.f32 %v4131, %v4399
        %v4401 = vpop.f32.mrb[0].mxu0
        %v4402 = vpop.f32.mrb[0].mxu0
        %v4403 = vadd.f32 %v4131, %v4402
        %v4404 = vpop.f32.mrb[0].mxu0
        %4405 = vmatprep.mubr.bf16.mxu0 0
        %4406 = vmatmul.mubr.bf16.gmra.mrb[0].mxu0 %v4209
        %v4407 = vpop.f32.mrb[0].mxu0
        %v4408 = vadd.f32 %v4131, %v4407
        %v4409 = vpop.f32.mrb[0].mxu0
        %v4410 = vpop.f32.mrb[0].mxu0
        %v4411 = vadd.f32 %v4131, %v4410
        %v4412 = vpop.f32.mrb[0].mxu0
        %4413 = vmatprep.mubr.bf16.mxu0 0
        %4414 = vmatmul.mubr.bf16.gmra.mrb[0].mxu0 %v4210
        %v4415 = vpop.f32.mrb[0].mxu0
        %v4416 = vadd.f32 %v4131, %v4415
        %v4417 = vpop.f32.mrb[0].mxu0
        %v4418 = vpop.f32.mrb[0].mxu0
        %v4419 = vadd.f32 %v4131, %v4418
        %v4420 = vpop.f32.mrb[0].mxu0
        %4421 = vmatprep.mubr.bf16.mxu0 0
        %4422 = vmatmul.mubr.bf16.gmra.mrb[0].mxu0 %v4211
        %v4423 = vpop.f32.mrb[0].mxu0
        %v4424 = vadd.f32 %v4131, %v4423
        %v4425 = vpop.f32.mrb[0].mxu0
        %v4426 = vpop.f32.mrb[0].mxu0
        %v4427 = vadd.f32 %v4131, %v4426
        %v4428 = vpop.f32.mrb[0].mxu0
        %4429 = vmatprep.mubr.bf16.mxu0 0
        %4430 = vmatmul.mubr.bf16.gmra.mrb[0].mxu0 %v4212
        %v4431 = vpop.f32.mrb[0].mxu0
        %v4432 = vadd.f32 %v4131, %v4431
        %v4433 = vpop.f32.mrb[0].mxu0
        %v4434 = vpop.f32.mrb[0].mxu0
        %v4435 = vadd.f32 %v4131, %v4434
        %v4436 = vpop.f32.mrb[0].mxu0
        %4437 = vdwg.mxu0
        %v4438 = vadd.f32 %v3948, %v4312
        %v4439 = vadd.f32 %v3951, %v4315
        %v4440 = vadd.f32 %v3956, %v4320
        %v4441 = vadd.f32 %v3959, %v4323
        %v4442 = vadd.f32 %v3964, %v4328
        %v4443 = vadd.f32 %v3967, %v4331
        %v4444 = vadd.f32 %v3972, %v4336
        %v4445 = vadd.f32 %v3975, %v4339
        %v4446 = vadd.f32 %v3980, %v4344
        %v4447 = vadd.f32 %v3983, %v4347
        %v4448 = vadd.f32 %v3988, %v4352
        %v4449 = vadd.f32 %v3991, %v4355
        %v4450 = vadd.f32 %v3996, %v4360
        %v4451 = vadd.f32 %v3999, %v4363
        %v4452 = vadd.f32 %v4004, %v4368
        %v4453 = vadd.f32 %v4007, %v4371
        %v4454 = vadd.f32 %v4012, %v4376
        %v4455 = vadd.f32 %v4015, %v4379
        %v4456 = vadd.f32 %v4020, %v4384
        %v4457 = vadd.f32 %v4023, %v4387
        %v4458 = vadd.f32 %v4028, %v4392
        %v4459 = vadd.f32 %v4031, %v4395
        %v4460 = vadd.f32 %v4036, %v4400
        %v4461 = vadd.f32 %v4039, %v4403
        %v4462 = vadd.f32 %v4044, %v4408
        %v4463 = vadd.f32 %v4047, %v4411
        %v4464 = vadd.f32 %v4052, %v4416
        %v4465 = vadd.f32 %v4055, %v4419
        %v4466 = vadd.f32 %v4060, %v4424
        %v4467 = vadd.f32 %v4063, %v4427
        %v4468 = vadd.f32 %v4068, %v4432
        %v4469 = vadd.f32 %v4071, %v4435
        %v4470 = vmax.f32 %v4438, 0.0
        %v4471 = vmax.f32 %v4439, 0.0
        %v4472 = vmax.f32 %v4440, 0.0
        %v4473 = vmax.f32 %v4441, 0.0
        %v4474 = vmax.f32 %v4442, 0.0
        %v4475 = vmax.f32 %v4443, 0.0
        %v4476 = vmax.f32 %v4444, 0.0
        %v4477 = vmax.f32 %v4445, 0.0
        %v4478 = vmax.f32 %v4446, 0.0
        %v4479 = vmax.f32 %v4447, 0.0
        %v4480 = vmax.f32 %v4448, 0.0
        %v4481 = vmax.f32 %v4449, 0.0
        %v4482 = vmax.f32 %v4450, 0.0
        %v4483 = vmax.f32 %v4451, 0.0
        %v4484 = vmax.f32 %v4452, 0.0
        %v4485 = vmax.f32 %v4453, 0.0
        %v4486 = vmax.f32 %v4454, 0.0
        %v4487 = vmax.f32 %v4455, 0.0
        %v4488 = vmax.f32 %v4456, 0.0
        %v4489 = vmax.f32 %v4457, 0.0
        %v4490 = vmax.f32 %v4458, 0.0
        %v4491 = vmax.f32 %v4459, 0.0
        %v4492 = vmax.f32 %v4460, 0.0
        %v4493 = vmax.f32 %v4461, 0.0
        %v4494 = vmax.f32 %v4462, 0.0
        %v4495 = vmax.f32 %v4463, 0.0
        %v4496 = vmax.f32 %v4464, 0.0
        %v4497 = vmax.f32 %v4465, 0.0
        %v4498 = vmax.f32 %v4466, 0.0
        %v4499 = vmax.f32 %v4467, 0.0
        %v4500 = vmax.f32 %v4468, 0.0
        %v4501 = vmax.f32 %v4469, 0.0
        %v4502 = vpack.c.bf16 %v4471, %v4470
        %v4503 = vpack.c.bf16 %v4473, %v4472
        %v4504 = vpack.c.bf16 %v4475, %v4474
        %v4505 = vpack.c.bf16 %v4477, %v4476
        %v4506 = vpack.c.bf16 %v4479, %v4478
        %v4507 = vpack.c.bf16 %v4481, %v4480
        %v4508 = vpack.c.bf16 %v4483, %v4482
        %v4509 = vpack.c.bf16 %v4485, %v4484
        %v4510 = vpack.c.bf16 %v4487, %v4486
        %v4511 = vpack.c.bf16 %v4489, %v4488
        %v4512 = vpack.c.bf16 %v4491, %v4490
        %v4513 = vpack.c.bf16 %v4493, %v4492
        %v4514 = vpack.c.bf16 %v4495, %v4494
        %v4515 = vpack.c.bf16 %v4497, %v4496
        %v4516 = vpack.c.bf16 %v4499, %v4498
        %v4517 = vpack.c.bf16 %v4501, %v4500
        %v4534 = vunpack.c.l.b16 %v4502
        %v4535 = vunpack.c.h.b16 %v4502
        %v4536 = vunpack.c.l.b16 %v4503
        %v4537 = vunpack.c.h.b16 %v4503
        %v4538 = vunpack.c.l.b16 %v4504
        %v4539 = vunpack.c.h.b16 %v4504
        %v4540 = vunpack.c.l.b16 %v4505
        %v4541 = vunpack.c.h.b16 %v4505
        %v4542 = vunpack.c.l.b16 %v4506
        %v4543 = vunpack.c.h.b16 %v4506
        %v4544 = vunpack.c.l.b16 %v4507
        %v4545 = vunpack.c.h.b16 %v4507
        %v4546 = vunpack.c.l.b16 %v4508
        %v4547 = vunpack.c.h.b16 %v4508
        %v4548 = vunpack.c.l.b16 %v4509
        %v4549 = vunpack.c.h.b16 %v4509
        %v4550 = vunpack.c.l.b16 %v4510
        %v4551 = vunpack.c.h.b16 %v4510
        %v4552 = vunpack.c.l.b16 %v4511
        %v4553 = vunpack.c.h.b16 %v4511
        %v4554 = vunpack.c.l.b16 %v4512
        %v4555 = vunpack.c.h.b16 %v4512
        %v4556 = vunpack.c.l.b16 %v4513
        %v4557 = vunpack.c.h.b16 %v4513
        %v4558 = vunpack.c.l.b16 %v4514
        %v4559 = vunpack.c.h.b16 %v4514
        %v4560 = vunpack.c.l.b16 %v4515
        %v4561 = vunpack.c.h.b16 %v4515
        %v4562 = vunpack.c.l.b16 %v4516
        %v4563 = vunpack.c.h.b16 %v4516
        %v4564 = vunpack.c.l.b16 %v4517
        %v4565 = vunpack.c.h.b16 %v4517
        %v4566 = vpack.c.b16 %v4534, %v4534
        %v4567 = vpack.c.b16 %v4535, %v4535
        %v4568 = vpack.c.b16 %v4536, %v4536
        %v4569 = vpack.c.b16 %v4537, %v4537
        %v4570 = vpack.c.b16 %v4538, %v4538
        %v4571 = vpack.c.b16 %v4539, %v4539
        %v4572 = vpack.c.b16 %v4540, %v4540
        %v4573 = vpack.c.b16 %v4541, %v4541
        %v4574 = vpack.c.b16 %v4542, %v4542
        %v4575 = vpack.c.b16 %v4543, %v4543
        %v4576 = vpack.c.b16 %v4544, %v4544
        %v4577 = vpack.c.b16 %v4545, %v4545
        %v4578 = vpack.c.b16 %v4546, %v4546
        %v4579 = vpack.c.b16 %v4547, %v4547
        %v4580 = vpack.c.b16 %v4548, %v4548
        %v4581 = vpack.c.b16 %v4549, %v4549
        %v4582 = vpack.c.b16 %v4550, %v4550
        %v4583 = vpack.c.b16 %v4551, %v4551
        %v4584 = vpack.c.b16 %v4552, %v4552
        %v4585 = vpack.c.b16 %v4553, %v4553
        %v4586 = vpack.c.b16 %v4554, %v4554
        %v4587 = vpack.c.b16 %v4555, %v4555
        %v4588 = vpack.c.b16 %v4556, %v4556
        %v4589 = vpack.c.b16 %v4557, %v4557
        %v4590 = vpack.c.b16 %v4558, %v4558
        %v4591 = vpack.c.b16 %v4559, %v4559
        %v4592 = vpack.c.b16 %v4560, %v4560
        %v4593 = vpack.c.b16 %v4561, %v4561
        %v4594 = vpack.c.b16 %v4562, %v4562
        %v4595 = vpack.c.b16 %v4563, %v4563
        %v4596 = vpack.c.b16 %v4564, %v4564
        %v4597 = vpack.c.b16 %v4565, %v4565
        %4630 = vst [vmem:[%s422] sm:$0xf] %v4566
        %4631 = vst [vmem:[%s422 + $0x4] sm:$0xf] %v4567
        %4632 = vst [vmem:[%s422 + $0x8] sm:$0xf] %v4568
        %4633 = vst [vmem:[%s422 + $0xc] sm:$0xf] %v4569
        %4634 = vst [vmem:[%s422 + $0x10] sm:$0xf] %v4570
        %4635 = vst [vmem:[%s422 + $0x14] sm:$0xf] %v4571
        %4636 = vst [vmem:[%s422 + $0x18] sm:$0xf] %v4572
        %4637 = vst [vmem:[%s422 + $0x1c] sm:$0xf] %v4573
        %4638 = vst [vmem:[%s422 + $0x20] sm:$0xf] %v4574
        %4639 = vst [vmem:[%s422 + $0x24] sm:$0xf] %v4575
        %4640 = vst [vmem:[%s422 + $0x28] sm:$0xf] %v4576
        %4641 = vst [vmem:[%s422 + $0x2c] sm:$0xf] %v4577
        %4642 = vst [vmem:[%s422 + $0x30] sm:$0xf] %v4578
        %4643 = vst [vmem:[%s422 + $0x34] sm:$0xf] %v4579
        %4644 = vst [vmem:[%s422 + $0x38] sm:$0xf] %v4580
        %4645 = vst [vmem:[%s422 + $0x3c] sm:$0xf] %v4581
        %4646 = vst [vmem:[%s422 + $0x40] sm:$0xf] %v4582
        %4647 = vst [vmem:[%s422 + $0x44] sm:$0xf] %v4583
        %4648 = vst [vmem:[%s422 + $0x48] sm:$0xf] %v4584
        %4649 = vst [vmem:[%s422 + $0x4c] sm:$0xf] %v4585
        %4650 = vst [vmem:[%s422 + $0x50] sm:$0xf] %v4586
        %4651 = vst [vmem:[%s422 + $0x54] sm:$0xf] %v4587
        %4652 = vst [vmem:[%s422 + $0x58] sm:$0xf] %v4588
        %4653 = vst [vmem:[%s422 + $0x5c] sm:$0xf] %v4589
        %4654 = vst [vmem:[%s422 + $0x60] sm:$0xf] %v4590
        %4655 = vst [vmem:[%s422 + $0x64] sm:$0xf] %v4591
        %4656 = vst [vmem:[%s422 + $0x68] sm:$0xf] %v4592
        %4657 = vst [vmem:[%s422 + $0x6c] sm:$0xf] %v4593
        %4658 = vst [vmem:[%s422 + $0x70] sm:$0xf] %v4594
        %4659 = vst [vmem:[%s422 + $0x74] sm:$0xf] %v4595
        %4660 = vst [vmem:[%s422 + $0x78] sm:$0xf] %v4596
        %4661 = vst [vmem:[%s422 + $0x7c] sm:$0xf] %v4597
        %s4662 = sand.u32 %s244, 1
        %s4663 = scalar_lea.sflag [#allocation5], %s4662
        %s4664 = sand.u32 %s244, 1
        %s4665 = smul.addr %s4664, 128
        %s4666 = scalar_lea.vmem [#allocation12], %s4665
        // Predicated region
        $region85: #{tpu_custom_call.1} parent=55 // pred_check
          %p4667 = pneg %p254
        $region86: #{tpu_custom_call.1} parent=55 // pred_check_branch
          %4669 = sbr.rel (%p4667) target = $region88
        $region87: #{tpu_custom_call.1} parent=55 // pred_region
          %s4670 = smul.u32 32, %s33
          %s4672 = ssub.s32 2048, 2048
          %4673 = vsyncadd %s4663, %s4672
          %s4674 = smul.addr %s32, 64
          %s4675 = sadd.s32 %s4670, %s4674
          %s4676 = smul.addr %s4675, 64
          %s4677 = scalar_lea.hbm %s9, %s4676
          %s4678 = sshll.u32 %s4666, 4
          %s4679 = int_to_ptr.vmem [resolvable:$true] %s4678
          %4684 = dma.vmem_to_hbm [thread:$0]  %s4679, 2048, %s4677, %s4663, 64, 64, 4
        $region88: #{tpu_custom_call.1} parent=55 // pred_fallthru
          _
      $region56: #{tpu_custom_call.1} parent=5 // pred_fallthru
        _
      %p4685 = scmp.le.s32.totalorder 2, %s23
      // Predicated region
      $region89: #{tpu_custom_call.1} parent=5 // pred_check
        %p4686 = pneg %p4685
      $region90: #{tpu_custom_call.1} parent=5 // pred_check_branch
        %4688 = sbr.rel (%p4686) target = $region92
      $region91: #{tpu_custom_call.1} parent=5 // pred_region
        %s4689 = ssub.s32 %s23, 2
        // Predicated region
        $region93: #{tpu_custom_call.1} parent=91 // pred_check
          %p4690 = pneg %p260
        $region94: #{tpu_custom_call.1} parent=91 // pred_check_branch
          %4692 = sbr.rel (%p4690) target = $region96
        $region95: #{tpu_custom_call.1} parent=91 // pred_region
          %s4693 = sand.u32 %s245, 1
          %s4694 = scalar_lea.sflag [#allocation5], %s4693
          %s4695 = sand.u32 %s245, 1
          %s4696 = smul.addr %s4695, 128
          %s4697 = scalar_lea.vmem [#allocation12], %s4696
          %4698 = dma.done %s4694, 2048
        $region96: #{tpu_custom_call.1} parent=91 // pred_fallthru
          _
      $region92: #{tpu_custom_call.1} parent=5 // pred_fallthru
        _
    $region6: #{tpu_custom_call.1} parent=1 // loop_footer
      %s27 = sadd.s32 1, %s23
    $region7: #{tpu_custom_call.1} parent=1 // loop_footer_branch
      %22 = sbr.rel target = $region3
    $region8: #{tpu_custom_call.1} parent=1 // loop_exit
      _
    %4699 = vsyncpa [#allocation4], 1
    %s4700 = scalar_lea.sflag [#allocation4], 1
    %4701 = vsyncpa %s4700, 1
    %4702 = vsyncpa [#allocation7], 1
    %4703 = vsyncpa [#allocation10], 1
    %4704 = vsyncpa [#allocation5], 1
    %s4705 = scalar_lea.sflag [#allocation5], 1
    %4706 = vsyncpa %s4705, 1

// kernel: tpu_custom_call.1
$region0: #{tpu_custom_call.1}
  #allocation0 [shape = 'u32[]', space=smem, size = 0x4, offset = 0x4, fixed_abs, tag = 'smem constant byte address 0x4 - core index']
  #allocation1 [shape = 'u32[144,128]{1,0:T(1,128)}', space=vmem, size = 0x12000, scoped, tag = 'internal scratch']
  #allocation2 [shape = 'bf16[18,18,128]{2,1,0:T(8,128)(2,1)}', space=vmem, size = 0x1b000, scoped, tag = 'scratch operand']
  %s0 = inlined_call_operand.hbm [shape: bf16[2,34,16,128], index: 0, kind: input, shape index: {}]
  %s1 = inlined_call_operand.hbm [shape: bf16[128,128], index: 1, kind: input, shape index: {}]
  %s2 = inlined_call_operand.vmem [shape: f32[1,128], index: 2, kind: input, shape index: {}]
  %s3 = inlined_call_operand.hbm [shape: bf16[3,384,128], index: 3, kind: input, shape index: {}]
  %s4 = inlined_call_operand.vmem [shape: f32[1,128], index: 4, kind: input, shape index: {}]
  %s5 = inlined_call_operand.hbm [shape: bf16[128,128], index: 5, kind: input, shape index: {}]
  %s6 = inlined_call_operand.vmem [shape: f32[1,128], index: 6, kind: input, shape index: {}]
  %s7 = inlined_call_operand.hbm [shape: bf16[128,128], index: 7, kind: input, shape index: {}]
  %s8 = inlined_call_operand.vmem [shape: f32[1,128], index: 8, kind: input, shape index: {}]
  %s9 = inlined_call_operand.hbm [shape: bf16[2,512,128], index: 9, kind: output, shape index: {}]
  %s10 = sld [smem:[#allocation0]]
  $region97: #{tpu_custom_call.1} parent=0
    _
  %s12 = ssub.s32 1, %s10
  %s13 = scalar_select 0, %s12, %s10
  $region1: #{tpu_custom_call.1} parent=0
    #allocation3 [shape = 'u8[278528]{0}', space=vmem, size = 0x44000, scoped, tag = 'input window, operand 0']
    #allocation4 [shape = 's32[2]{0}', space=sflag, size = 0x8, scoped, tag = 'scoped memory for tpu_custom_call.1']
    #allocation5 [shape = 's32[2]{0}', space=sflag, size = 0x8, scoped, tag = 'scoped memory for tpu_custom_call.1']
    #allocation6 [shape = 'u8[32768]{0}', space=vmem, size = 0x8000, scoped, tag = 'input window, operand 1, single buffered']
    #allocation7 [shape = 's32[1]{0}', space=sflag, size = 0x4, scoped, tag = 'scoped memory for tpu_custom_call.1']
    #allocation8 [shape = 'u8[294912]{0}', space=vmem, size = 0x48000, scoped, tag = 'input window, operand 3, single buffered']
    #allocation9 [shape = 'u8[32768]{0}', space=vmem, size = 0x8000, scoped, tag = 'input window, operand 5, single buffered']
    #allocation10 [shape = 's32[1]{0}', space=sflag, size = 0x4, scoped, tag = 'scoped memory for tpu_custom_call.1']
    #allocation11 [shape = 'u8[32768]{0}', space=vmem, size = 0x8000, scoped, tag = 'input window, operand 7, single buffered']
    #allocation12 [shape = 'u8[131072]{0}', space=vmem, size = 0x20000, scoped, tag = 'output window, operand 0']
    %14 = vsyncpa [#allocation4], 0
    %s15 = scalar_lea.sflag [#allocation4], 1
    %16 = vsyncpa %s15, 0
    %17 = vsyncpa [#allocation7], 0
    %18 = vsyncpa [#allocation10], 0
    %19 = vsyncpa [#allocation5], 0
    %s20 = scalar_lea.sflag [#allocation5], 1
    %21 = vsyncpa %s20, 0
    loop: start=0, step=1, limit=6
    $region2: #{tpu_custom_call.1} parent=1 // loop_pre_header
      _
    $region3: #{tpu_custom_call.1} parent=1 // loop_header
      %s23 = sphi 0, %s27
      %p24 = scmp.ge.s32.totalorder %s23, 6
      %s30 = sphi 0, %s42
      %s31 = sphi 0, %s38
      %s32 = sphi 0, %s30
      %s33 = sphi 0, %s31
      %s34 = sphi 0, %s32
      %s35 = sphi 0, %s33
      %s45 = sphi 0, %s47
      %s48 = sphi 0, %s45
      %s49 = sphi 0, %s48
      %s65 = sphi 0, %s49
      %s69 = sphi 0, %s69
      %s71 = sphi 0, %s69
      %s72 = sphi 0, %s71
      %s86 = sphi 0, %s72
      %s90 = sphi 0, %s90
      %s92 = sphi 0, %s90
      %s93 = sphi 0, %s92
      %s107 = sphi 0, %s93
      %s111 = sphi 0, %s111
      %s113 = sphi 0, %s111
      %s114 = sphi 0, %s113
      %s128 = sphi 0, %s114
      %s132 = sphi 0, %s132
      %s134 = sphi 0, %s132
      %s135 = sphi 0, %s134
      %s149 = sphi 0, %s135
      %s153 = sphi 0, %s153
      %s155 = sphi 0, %s153
      %s156 = sphi 0, %s155
      %s170 = sphi 0, %s156
      %s174 = sphi 0, %s174
      %s176 = sphi 0, %s174
      %s177 = sphi 0, %s176
      %s191 = sphi 0, %s177
      %s195 = sphi 0, %s195
      %s197 = sphi 0, %s195
      %s198 = sphi 0, %s197
      %s212 = sphi 0, %s198
      %s216 = sphi 0, %s216
      %s218 = sphi 0, %s216
      %s219 = sphi 0, %s218
      %s233 = sphi 0, %s219
      %s241 = sphi 0, %s243
      %s244 = sphi 0, %s241
      %s245 = sphi 0, %s244
      %s261 = sphi 0, %s245
    $region4: #{tpu_custom_call.1} parent=1 // loop_header_branch
      %26 = sbr.rel (%p24) target = $region8
    $region5: #{tpu_custom_call.1} parent=1 // loop_body
      %s28 = ssub.s32 %s23, 1
      %s29 = ssub.s32 %s23, 2
      %s36 = sadd.s32 1, %s31
      %p37 = scmp.ge.s32.totalorder %s36, 2
      %s38 = scalar_select %p37, 0, %s36
      %s39 = sadd.s32 1, %s30
      %s40 = scalar_select %p37, %s39, %s30
      %p41 = scmp.ge.s32.totalorder %s40, 2
      %s42 = scalar_select %p41, 0, %s40
      %s43 = ssub.s32 %s30, %s42
      %p44 = scmp.eq.s32.totalorder %s43, 0
      %s46 = sadd.s32 %s45, 1
      %s47 = scalar_select %p44, %s45, %s46
      %p50 = pneg %p44
      %p51 = scmp.eq.s32.totalorder %s23, 3
      %p52 = por %p50, %p51
      %p53 = scmp.ne.s32.totalorder %s45, %s48
      %p54 = scmp.eq.s32.totalorder %s23, 0
      %p55 = por %p53, %p54
      %p56 = scmp.ne.s32.totalorder %s45, %s48
      %p57 = scmp.eq.s32.totalorder %s28, 3
      %p58 = por %p56, %p57
      %p59 = scmp.ne.s32.totalorder %s48, %s49
      %p60 = scmp.eq.s32.totalorder %s28, 0
      %p61 = por %p59, %p60
      %p62 = scmp.ne.s32.totalorder %s48, %s49
      %p63 = scmp.eq.s32.totalorder %s29, 3
      %p64 = por %p62, %p63
      %p66 = scmp.ne.s32.totalorder %s49, %s65
      %p67 = scmp.eq.s32.totalorder %s29, 0
      %p68 = por %p66, %p67
      %s70 = sadd.s32 %s69, 1
      %p73 = scmp.eq.s32.totalorder %s23, 3
      %p74 = scmp.ne.s32.totalorder %s69, %s71
      %p75 = scmp.eq.s32.totalorder %s23, 0
      %p76 = por %p74, %p75
      %p77 = scmp.ne.s32.totalorder %s69, %s71
      %p78 = scmp.eq.s32.totalorder %s28, 3
      %p79 = por %p77, %p78
      %p80 = scmp.ne.s32.totalorder %s71, %s72
      %p81 = scmp.eq.s32.totalorder %s28, 0
      %p82 = por %p80, %p81
      %p83 = scmp.ne.s32.totalorder %s71, %s72
      %p84 = scmp.eq.s32.totalorder %s29, 3
      %p85 = por %p83, %p84
      %p87 = scmp.ne.s32.totalorder %s72, %s86
      %p88 = scmp.eq.s32.totalorder %s29, 0
      %p89 = por %p87, %p88
      %s91 = sadd.s32 %s90, 1
      %p94 = scmp.eq.s32.totalorder %s23, 3
      %p95 = scmp.ne.s32.totalorder %s90, %s92
      %p96 = scmp.eq.s32.totalorder %s23, 0
      %p97 = por %p95, %p96
      %p98 = scmp.ne.s32.totalorder %s90, %s92
      %p99 = scmp.eq.s32.totalorder %s28, 3
      %p100 = por %p98, %p99
      %p101 = scmp.ne.s32.totalorder %s92, %s93
      %p102 = scmp.eq.s32.totalorder %s28, 0
      %p103 = por %p101, %p102
      %p104 = scmp.ne.s32.totalorder %s92, %s93
      %p105 = scmp.eq.s32.totalorder %s29, 3
      %p106 = por %p104, %p105
      %p108 = scmp.ne.s32.totalorder %s93, %s107
      %p109 = scmp.eq.s32.totalorder %s29, 0
      %p110 = por %p108, %p109
      %s112 = sadd.s32 %s111, 1
      %p115 = scmp.eq.s32.totalorder %s23, 3
      %p116 = scmp.ne.s32.totalorder %s111, %s113
      %p117 = scmp.eq.s32.totalorder %s23, 0
      %p118 = por %p116, %p117
      %p119 = scmp.ne.s32.totalorder %s111, %s113
      %p120 = scmp.eq.s32.totalorder %s28, 3
      %p121 = por %p119, %p120
      %p122 = scmp.ne.s32.totalorder %s113, %s114
      %p123 = scmp.eq.s32.totalorder %s28, 0
      %p124 = por %p122, %p123
      %p125 = scmp.ne.s32.totalorder %s113, %s114
      %p126 = scmp.eq.s32.totalorder %s29, 3
      %p127 = por %p125, %p126
      %p129 = scmp.ne.s32.totalorder %s114, %s128
      %p130 = scmp.eq.s32.totalorder %s29, 0
      %p131 = por %p129, %p130
      %s133 = sadd.s32 %s132, 1
      %p136 = scmp.eq.s32.totalorder %s23, 3
      %p137 = scmp.ne.s32.totalorder %s132, %s134
      %p138 = scmp.eq.s32.totalorder %s23, 0
      %p139 = por %p137, %p138
      %p140 = scmp.ne.s32.totalorder %s132, %s134
      %p141 = scmp.eq.s32.totalorder %s28, 3
      %p142 = por %p140, %p141
      %p143 = scmp.ne.s32.totalorder %s134, %s135
      %p144 = scmp.eq.s32.totalorder %s28, 0
      %p145 = por %p143, %p144
      %p146 = scmp.ne.s32.totalorder %s134, %s135
      %p147 = scmp.eq.s32.totalorder %s29, 3
      %p148 = por %p146, %p147
      %p150 = scmp.ne.s32.totalorder %s135, %s149
      %p151 = scmp.eq.s32.totalorder %s29, 0
      %p152 = por %p150, %p151
      %s154 = sadd.s32 %s153, 1
      %p157 = scmp.eq.s32.totalorder %s23, 3
      %p158 = scmp.ne.s32.totalorder %s153, %s155
      %p159 = scmp.eq.s32.totalorder %s23, 0
      %p160 = por %p158, %p159
      %p161 = scmp.ne.s32.totalorder %s153, %s155
      %p162 = scmp.eq.s32.totalorder %s28, 3
      %p163 = por %p161, %p162
      %p164 = scmp.ne.s32.totalorder %s155, %s156
      %p165 = scmp.eq.s32.totalorder %s28, 0
      %p166 = por %p164, %p165
      %p167 = scmp.ne.s32.totalorder %s155, %s156
      %p168 = scmp.eq.s32.totalorder %s29, 3
      %p169 = por %p167, %p168
      %p171 = scmp.ne.s32.totalorder %s156, %s170
      %p172 = scmp.eq.s32.totalorder %s29, 0
      %p173 = por %p171, %p172
      %s175 = sadd.s32 %s174, 1
      %p178 = scmp.eq.s32.totalorder %s23, 3
      %p179 = scmp.ne.s32.totalorder %s174, %s176
      %p180 = scmp.eq.s32.totalorder %s23, 0
      %p181 = por %p179, %p180
      %p182 = scmp.ne.s32.totalorder %s174, %s176
      %p183 = scmp.eq.s32.totalorder %s28, 3
      %p184 = por %p182, %p183
      %p185 = scmp.ne.s32.totalorder %s176, %s177
      %p186 = scmp.eq.s32.totalorder %s28, 0
      %p187 = por %p185, %p186
      %p188 = scmp.ne.s32.totalorder %s176, %s177
      %p189 = scmp.eq.s32.totalorder %s29, 3
      %p190 = por %p188, %p189
      %p192 = scmp.ne.s32.totalorder %s177, %s191
      %p193 = scmp.eq.s32.totalorder %s29, 0
      %p194 = por %p192, %p193
      %s196 = sadd.s32 %s195, 1
      %p199 = scmp.eq.s32.totalorder %s23, 3
      %p200 = scmp.ne.s32.totalorder %s195, %s197
      %p201 = scmp.eq.s32.totalorder %s23, 0
      %p202 = por %p200, %p201
      %p203 = scmp.ne.s32.totalorder %s195, %s197
      %p204 = scmp.eq.s32.totalorder %s28, 3
      %p205 = por %p203, %p204
      %p206 = scmp.ne.s32.totalorder %s197, %s198
      %p207 = scmp.eq.s32.totalorder %s28, 0
      %p208 = por %p206, %p207
      %p209 = scmp.ne.s32.totalorder %s197, %s198
      %p210 = scmp.eq.s32.totalorder %s29, 3
      %p211 = por %p209, %p210
      %p213 = scmp.ne.s32.totalorder %s198, %s212
      %p214 = scmp.eq.s32.totalorder %s29, 0
      %p215 = por %p213, %p214
      %s217 = sadd.s32 %s216, 1
      %p220 = scmp.eq.s32.totalorder %s23, 3
      %p221 = scmp.ne.s32.totalorder %s216, %s218
      %p222 = scmp.eq.s32.totalorder %s23, 0
      %p223 = por %p221, %p222
      %p224 = scmp.ne.s32.totalorder %s216, %s218
      %p225 = scmp.eq.s32.totalorder %s28, 3
      %p226 = por %p224, %p225
      %p227 = scmp.ne.s32.totalorder %s218, %s219
      %p228 = scmp.eq.s32.totalorder %s28, 0
      %p229 = por %p227, %p228
      %p230 = scmp.ne.s32.totalorder %s218, %s219
      %p231 = scmp.eq.s32.totalorder %s29, 3
      %p232 = por %p230, %p231
      %p234 = scmp.ne.s32.totalorder %s219, %s233
      %p235 = scmp.eq.s32.totalorder %s29, 0
      %p236 = por %p234, %p235
      %s237 = ssub.s32 %s30, %s42
      %s238 = ssub.s32 %s31, %s38
      %s239 = sor.u32 %s237, %s238
      %p240 = scmp.eq.s32.totalorder %s239, 0
      %s242 = sadd.s32 %s241, 1
      %s243 = scalar_select %p240, %s241, %s242
      %p246 = pneg %p240
      %p247 = scmp.eq.s32.totalorder %s23, 3
      %p248 = por %p246, %p247
      %p249 = scmp.ne.s32.totalorder %s241, %s244
      %p250 = scmp.eq.s32.totalorder %s23, 0
      %p251 = por %p249, %p250
      %p252 = scmp.ne.s32.totalorder %s241, %s244
      %p253 = scmp.eq.s32.totalorder %s28, 3
      %p254 = por %p252, %p253
      %p255 = scmp.ne.s32.totalorder %s244, %s245
      %p256 = scmp.eq.s32.totalorder %s28, 0
      %p257 = por %p255, %p256
      %p258 = scmp.ne.s32.totalorder %s244, %s245
      %p259 = scmp.eq.s32.totalorder %s29, 3
      %p260 = por %p258, %p259
      %p262 = scmp.ne.s32.totalorder %s245, %s261
      %p263 = scmp.eq.s32.totalorder %s29, 0
      %p264 = por %p262, %p263
      %p265 = scmp.le.s32.totalorder 1, %s23
      %p266 = scmp.lt.s32.totalorder %s23, 5
      %p267 = pnand %p265, %p266
      %p268 = pneg %p267
      // Predicated region
      $region9: #{tpu_custom_call.1} parent=5 // pred_check
        _
      $region10: #{tpu_custom_call.1} parent=5 // pred_check_branch
        %270 = sbr.rel (%p267) target = $region12
      $region11: #{tpu_custom_call.1} parent=5 // pred_region
        %s271 = ssub.s32 %s23, 1
        // Predicated region
        $region13: #{tpu_custom_call.1} parent=11 // pred_check
          %p272 = pneg %p82
        $region14: #{tpu_custom_call.1} parent=11 // pred_check_branch
          %274 = sbr.rel (%p272) target = $region16
        $region15: #{tpu_custom_call.1} parent=11 // pred_region
          %s276 = ssub.s32 1024, 1024
          %277 = vsyncadd [#allocation7], %s276
          %s278 = sshll.u32 [#allocation6], 4
          %s279 = int_to_ptr.vmem [resolvable:$true] %s278
          %284 = dma.hbm_to_vmem [thread:$0]  %s1, 1024, %s279, [#allocation7], 64, 64, 4
        $region16: #{tpu_custom_call.1} parent=11 // pred_fallthru
          _
        // Predicated region
        $region17: #{tpu_custom_call.1} parent=11 // pred_check
          %p285 = pneg %p103
        $region18: #{tpu_custom_call.1} parent=11 // pred_check_branch
          %287 = sbr.rel (%p285) target = $region20
        $region19: #{tpu_custom_call.1} parent=11 // pred_region
          _
        $region20: #{tpu_custom_call.1} parent=11 // pred_fallthru
          _
        // Predicated region
        $region21: #{tpu_custom_call.1} parent=11 // pred_check
          %p288 = pneg %p124
        $region22: #{tpu_custom_call.1} parent=11 // pred_check_branch
          %290 = sbr.rel (%p288) target = $region24
        $region23: #{tpu_custom_call.1} parent=11 // pred_region
          %s292 = ssub.s32 9216, 9216
          %293 = vsyncadd [#allocation7], %s292
          %s294 = sshll.u32 [#allocation8], 4
          %s295 = int_to_ptr.vmem [resolvable:$true] %s294
          %300 = dma.hbm_to_vmem [thread:$0]  %s3, 9216, %s295, [#allocation7], 64, 64, 4
        $region24: #{tpu_custom_call.1} parent=11 // pred_fallthru
          _
        // Predicated region
        $region25: #{tpu_custom_call.1} parent=11 // pred_check
          %p301 = pneg %p145
        $region26: #{tpu_custom_call.1} parent=11 // pred_check_branch
          %303 = sbr.rel (%p301) target = $region28
        $region27: #{tpu_custom_call.1} parent=11 // pred_region
          _
        $region28: #{tpu_custom_call.1} parent=11 // pred_fallthru
          _
        // Predicated region
        $region29: #{tpu_custom_call.1} parent=11 // pred_check
          %p304 = pneg %p166
        $region30: #{tpu_custom_call.1} parent=11 // pred_check_branch
          %306 = sbr.rel (%p304) target = $region32
        $region31: #{tpu_custom_call.1} parent=11 // pred_region
          %s308 = ssub.s32 1024, 1024
          %309 = vsyncadd [#allocation10], %s308
          %s310 = sshll.u32 [#allocation9], 4
          %s311 = int_to_ptr.vmem [resolvable:$true] %s310
          %316 = dma.hbm_to_vmem [thread:$0]  %s5, 1024, %s311, [#allocation10], 64, 64, 4
        $region32: #{tpu_custom_call.1} parent=11 // pred_fallthru
          _
        // Predicated region
        $region33: #{tpu_custom_call.1} parent=11 // pred_check
          %p317 = pneg %p187
        $region34: #{tpu_custom_call.1} parent=11 // pred_check_branch
          %319 = sbr.rel (%p317) target = $region36
        $region35: #{tpu_custom_call.1} parent=11 // pred_region
          _
        $region36: #{tpu_custom_call.1} parent=11 // pred_fallthru
          _
        // Predicated region
        $region37: #{tpu_custom_call.1} parent=11 // pred_check
          %p320 = pneg %p208
        $region38: #{tpu_custom_call.1} parent=11 // pred_check_branch
          %322 = sbr.rel (%p320) target = $region40
        $region39: #{tpu_custom_call.1} parent=11 // pred_region
          %s324 = ssub.s32 1024, 1024
          %325 = vsyncadd [#allocation10], %s324
          %s326 = sshll.u32 [#allocation11], 4
          %s327 = int_to_ptr.vmem [resolvable:$true] %s326
          %332 = dma.hbm_to_vmem [thread:$0]  %s7, 1024, %s327, [#allocation10], 64, 64, 4
        $region40: #{tpu_custom_call.1} parent=11 // pred_fallthru
          _
        // Predicated region
        $region41: #{tpu_custom_call.1} parent=11 // pred_check
          %p333 = pneg %p229
        $region42: #{tpu_custom_call.1} parent=11 // pred_check_branch
          %335 = sbr.rel (%p333) target = $region44
        $region43: #{tpu_custom_call.1} parent=11 // pred_region
          _
        $region44: #{tpu_custom_call.1} parent=11 // pred_fallthru
          _
      $region12: #{tpu_custom_call.1} parent=5 // pred_fallthru
        _
      %p336 = scmp.lt.s32.totalorder %s23, 4
      // Predicated region
      $region45: #{tpu_custom_call.1} parent=5 // pred_check
        %p337 = pneg %p336
      $region46: #{tpu_custom_call.1} parent=5 // pred_check_branch
        %339 = sbr.rel (%p337) target = $region48
      $region47: #{tpu_custom_call.1} parent=5 // pred_region
        // Predicated region
        $region49: #{tpu_custom_call.1} parent=47 // pred_check
          %p340 = pneg %p55
        $region50: #{tpu_custom_call.1} parent=47 // pred_check_branch
          %342 = sbr.rel (%p340) target = $region52
        $region51: #{tpu_custom_call.1} parent=47 // pred_region
          %s343 = sand.u32 %s45, 1
          %s344 = scalar_lea.sflag [#allocation4], %s343
          %s345 = sand.u32 %s45, 1
          %s346 = smul.addr %s345, 272
          %s347 = scalar_lea.vmem [#allocation3], %s346
          %s349 = ssub.s32 4352, 4352
          %350 = vsyncadd %s344, %s349
          %s351 = smul.addr %s30, 68
          %s352 = smul.addr %s351, 64
          %s353 = scalar_lea.hbm %s0, %s352
          %s354 = sshll.u32 %s347, 4
          %s355 = int_to_ptr.vmem [resolvable:$true] %s354
          %360 = dma.hbm_to_vmem [thread:$0]  %s353, 4352, %s355, %s344, 64, 64, 4
        $region52: #{tpu_custom_call.1} parent=47 // pred_fallthru
          _
      $region48: #{tpu_custom_call.1} parent=5 // pred_fallthru
        _
      %p361 = scmp.le.s32.totalorder 1, %s23
      %p362 = scmp.lt.s32.totalorder %s23, 5
      %p363 = pnand %p361, %p362
      %p364 = pneg %p363
      // Predicated region
      $region53: #{tpu_custom_call.1} parent=5 // pred_check
        _
      $region54: #{tpu_custom_call.1} parent=5 // pred_check_branch
        %366 = sbr.rel (%p363) target = $region56
      $region55: #{tpu_custom_call.1} parent=5 // pred_region
        %s367 = ssub.s32 %s23, 1
        %s368 = sand.u32 %s48, 1
        %s369 = scalar_lea.sflag [#allocation4], %s368
        %s370 = sand.u32 %s48, 1
        %s371 = smul.addr %s370, 272
        %s372 = scalar_lea.vmem [#allocation3], %s371
        // Predicated region
        $region57: #{tpu_custom_call.1} parent=55 // pred_check
          %p373 = pneg %p61
        $region58: #{tpu_custom_call.1} parent=55 // pred_check_branch
          %375 = sbr.rel (%p373) target = $region60
        $region59: #{tpu_custom_call.1} parent=55 // pred_region
          %376 = dma.done %s369, 4352
        $region60: #{tpu_custom_call.1} parent=55 // pred_fallthru
          _
        // Predicated region
        $region61: #{tpu_custom_call.1} parent=55 // pred_check
          %p377 = pneg %p82
        $region62: #{tpu_custom_call.1} parent=55 // pred_check_branch
          %379 = sbr.rel (%p377) target = $region64
        $region63: #{tpu_custom_call.1} parent=55 // pred_region
          %380 = dma.done [#allocation7], 1024
        $region64: #{tpu_custom_call.1} parent=55 // pred_fallthru
          _
        // Predicated region
        $region65: #{tpu_custom_call.1} parent=55 // pred_check
          %p381 = pneg %p124
        $region66: #{tpu_custom_call.1} parent=55 // pred_check_branch
          %383 = sbr.rel (%p381) target = $region68
        $region67: #{tpu_custom_call.1} parent=55 // pred_region
          %384 = dma.done [#allocation7], 9216
        $region68: #{tpu_custom_call.1} parent=55 // pred_fallthru
          _
        // Predicated region
        $region69: #{tpu_custom_call.1} parent=55 // pred_check
          %p385 = pneg %p166
        $region70: #{tpu_custom_call.1} parent=55 // pred_check_branch
          %387 = sbr.rel (%p385) target = $region72
        $region71: #{tpu_custom_call.1} parent=55 // pred_region
          %388 = dma.done [#allocation10], 1024
        $region72: #{tpu_custom_call.1} parent=55 // pred_fallthru
          _
        // Predicated region
        $region73: #{tpu_custom_call.1} parent=55 // pred_check
          %p389 = pneg %p208
        $region74: #{tpu_custom_call.1} parent=55 // pred_check_branch
          %391 = sbr.rel (%p389) target = $region76
        $region75: #{tpu_custom_call.1} parent=55 // pred_region
          %392 = dma.done [#allocation10], 1024
        $region76: #{tpu_custom_call.1} parent=55 // pred_fallthru
          _
        %s393 = sand.u32 %s48, 1
        %s394 = scalar_lea.sflag [#allocation4], %s393
        %s395 = sand.u32 %s48, 1
        %s396 = smul.addr %s395, 272
        %s397 = scalar_lea.vmem [#allocation3], %s396
        %p398 = pneg %p61
        %p399 = pneg %p58
        %p400 = pneg %p82
        %p401 = pneg %p79
        %p402 = pneg %p103
        %p403 = pneg %p100
        %p404 = pneg %p124
        %p405 = pneg %p121
        %p406 = pneg %p145
        %p407 = pneg %p142
        %p408 = pneg %p166
        %p409 = pneg %p163
        %p410 = pneg %p187
        %p411 = pneg %p184
        %p412 = pneg %p208
        %p413 = pneg %p205
        %p414 = pneg %p229
        %p415 = pneg %p226
        %p416 = pneg %p257
        %p417 = pneg %p254
        %s418 = sand.u32 %s244, 1
        %s419 = scalar_lea.sflag [#allocation5], %s418
        %s420 = sand.u32 %s244, 1
        %s421 = smul.addr %s420, 128
        %s422 = scalar_lea.vmem [#allocation12], %s421
        %s423 = smul.u32 32, %s33
        %s425 = smul.u32 %s33, 16
        %s426 = smul.u32 %s425, 2
        %s427 = smul.addr %s426, 4
        %s428 = scalar_lea.vmem %s372, %s427 [#allocation3]
        %v429 = vld [vmem:[%s428] sm:$0xf]
        %v430 = vld [vmem:[%s428 + $0x4] sm:$0xf]
        %v431 = vld [vmem:[%s428 + $0x8] sm:$0xf]
        %v432 = vld [vmem:[%s428 + $0xc] sm:$0xf]
        %v433 = vld [vmem:[%s428 + $0x10] sm:$0xf]
        %v434 = vld [vmem:[%s428 + $0x14] sm:$0xf]
        %v435 = vld [vmem:[%s428 + $0x18] sm:$0xf]
        %v436 = vld [vmem:[%s428 + $0x1c] sm:$0xf]
        %v437 = vld [vmem:[%s428 + $0x20] sm:$0xf]
        %v438 = vld [vmem:[%s428 + $0x24] sm:$0xf]
        %v439 = vld [vmem:[%s428 + $0x28] sm:$0xf]
        %v440 = vld [vmem:[%s428 + $0x2c] sm:$0xf]
        %v441 = vld [vmem:[%s428 + $0x30] sm:$0xf]
        %v442 = vld [vmem:[%s428 + $0x34] sm:$0xf]
        %v443 = vld [vmem:[%s428 + $0x38] sm:$0xf]
        %v444 = vld [vmem:[%s428 + $0x3c] sm:$0xf]
        %v445 = vld [vmem:[%s428 + $0x40] sm:$0xf]
        %v446 = vld [vmem:[%s428 + $0x44] sm:$0xf]
        %v447 = vld [vmem:[%s428 + $0x48] sm:$0xf]
        %v448 = vld [vmem:[%s428 + $0x4c] sm:$0xf]
        %v449 = vld [vmem:[%s428 + $0x50] sm:$0xf]
        %v450 = vld [vmem:[%s428 + $0x54] sm:$0xf]
        %v451 = vld [vmem:[%s428 + $0x58] sm:$0xf]
        %v452 = vld [vmem:[%s428 + $0x5c] sm:$0xf]
        %v453 = vld [vmem:[%s428 + $0x60] sm:$0xf]
        %v454 = vld [vmem:[%s428 + $0x64] sm:$0xf]
        %v455 = vld [vmem:[%s428 + $0x68] sm:$0xf]
        %v456 = vld [vmem:[%s428 + $0x6c] sm:$0xf]
        %v457 = vld [vmem:[%s428 + $0x70] sm:$0xf]
        %v458 = vld [vmem:[%s428 + $0x74] sm:$0xf]
        %v459 = vld [vmem:[%s428 + $0x78] sm:$0xf]
        %v460 = vld [vmem:[%s428 + $0x7c] sm:$0xf]
        %v461 = vld [vmem:[%s428 + $0x80] sm:$0xf]
        %v462 = vld [vmem:[%s428 + $0x84] sm:$0xf]
        %v463 = vld [vmem:[%s428 + $0x88] sm:$0xf]
        %v464 = vld [vmem:[%s428 + $0x8c] sm:$0xf]
        %v465 = vld [vmem:[#allocation6] sm:$0xf]
        %v466 = vld [vmem:[#allocation6 + $0x4] sm:$0xf]
        %v467 = vld [vmem:[#allocation6 + $0x8] sm:$0xf]
        %v468 = vld [vmem:[#allocation6 + $0xc] sm:$0xf]
        %v469 = vld [vmem:[#allocation6 + $0x10] sm:$0xf]
        %v470 = vld [vmem:[#allocation6 + $0x14] sm:$0xf]
        %v471 = vld [vmem:[#allocation6 + $0x18] sm:$0xf]
        %v472 = vld [vmem:[#allocation6 + $0x1c] sm:$0xf]
        %v473 = vld [vmem:[#allocation6 + $0x20] sm:$0xf]
        %v474 = vld [vmem:[#allocation6 + $0x24] sm:$0xf]
        %v475 = vld [vmem:[#allocation6 + $0x28] sm:$0xf]
        %v476 = vld [vmem:[#allocation6 + $0x2c] sm:$0xf]
        %v477 = vld [vmem:[#allocation6 + $0x30] sm:$0xf]
        %v478 = vld [vmem:[#allocation6 + $0x34] sm:$0xf]
        %v479 = vld [vmem:[#allocation6 + $0x38] sm:$0xf]
        %v480 = vld [vmem:[#allocation6 + $0x3c] sm:$0xf]
        %v481 = vld [vmem:[%s2] sm:$0x1]
        %v483 = vlaneseq
        %v484 = vshrl.u32 %v483, 7
        %v485 = vsub.s32 0, %v484
        %v486 = vrot.slane %v481, %v485
        %v524 = vunpack.c.l.b16 %v429
        %v525 = vunpack.c.l.b16 %v430
        %v526 = vunpack.c.l.b16 %v431
        %v527 = vunpack.c.l.b16 %v432
        %v528 = vunpack.c.l.b16 %v433
        %v529 = vunpack.c.l.b16 %v434
        %v530 = vunpack.c.l.b16 %v435
        %v531 = vunpack.c.l.b16 %v436
        %v532 = vunpack.c.l.b16 %v437
        %v533 = vunpack.c.l.b16 %v438
        %v534 = vunpack.c.l.b16 %v439
        %v535 = vunpack.c.l.b16 %v440
        %v536 = vunpack.c.l.b16 %v441
        %v537 = vunpack.c.l.b16 %v442
        %v538 = vunpack.c.l.b16 %v443
        %v539 = vunpack.c.l.b16 %v444
        %v540 = vunpack.c.l.b16 %v445
        %v541 = vunpack.c.l.b16 %v446
        %v542 = vunpack.c.l.b16 %v447
        %v543 = vunpack.c.l.b16 %v448
        %v544 = vunpack.c.l.b16 %v449
        %v545 = vunpack.c.l.b16 %v450
        %v546 = vunpack.c.l.b16 %v451
        %v547 = vunpack.c.l.b16 %v452
        %v548 = vunpack.c.l.b16 %v453
        %v549 = vunpack.c.l.b16 %v454
        %v550 = vunpack.c.l.b16 %v455
        %v551 = vunpack.c.l.b16 %v456
        %v552 = vunpack.c.l.b16 %v457
        %v553 = vunpack.c.l.b16 %v458
        %v554 = vunpack.c.l.b16 %v459
        %v555 = vunpack.c.l.b16 %v460
        %v556 = vunpack.c.l.b16 %v461
        %v557 = vunpack.c.l.b16 %v462
        %v558 = vunpack.c.l.b16 %v463
        %v559 = vunpack.c.l.b16 %v464
        %v560 = vpack.c.b16 %v525, %v524
        %v561 = vpack.c.b16 %v527, %v526
        %v562 = vpack.c.b16 %v529, %v528
        %v563 = vpack.c.b16 %v531, %v530
        %v564 = vpack.c.b16 %v533, %v532
        %v565 = vpack.c.b16 %v535, %v534
        %v566 = vpack.c.b16 %v537, %v536
        %v567 = vpack.c.b16 %v539, %v538
        %v568 = vpack.c.b16 %v541, %v540
        %v569 = vpack.c.b16 %v543, %v542
        %v570 = vpack.c.b16 %v545, %v544
        %v571 = vpack.c.b16 %v547, %v546
        %v572 = vpack.c.b16 %v549, %v548
        %v573 = vpack.c.b16 %v551, %v550
        %v574 = vpack.c.b16 %v553, %v552
        %v575 = vpack.c.b16 %v555, %v554
        %v576 = vpack.c.b16 %v557, %v556
        %v577 = vpack.c.b16 %v559, %v558
        %v612 = vunpack.c.l.b16 %v465
        %v613 = vunpack.c.l.b16 %v466
        %v614 = vunpack.c.l.b16 %v467
        %v615 = vunpack.c.l.b16 %v468
        %v616 = vunpack.c.l.b16 %v469
        %v617 = vunpack.c.l.b16 %v470
        %v618 = vunpack.c.l.b16 %v471
        %v619 = vunpack.c.l.b16 %v472
        %v620 = vunpack.c.l.b16 %v473
        %v621 = vunpack.c.l.b16 %v474
        %v622 = vunpack.c.l.b16 %v475
        %v623 = vunpack.c.l.b16 %v476
        %v624 = vunpack.c.l.b16 %v477
        %v625 = vunpack.c.l.b16 %v478
        %v626 = vunpack.c.l.b16 %v479
        %v627 = vunpack.c.l.b16 %v480
        %v628 = vpack.c.b16 %v613, %v612
        %v629 = vpack.c.b16 %v615, %v614
        %v630 = vpack.c.b16 %v617, %v616
        %v631 = vpack.c.b16 %v619, %v618
        %v632 = vpack.c.b16 %v621, %v620
        %v633 = vpack.c.b16 %v623, %v622
        %v634 = vpack.c.b16 %v625, %v624
        %v635 = vpack.c.b16 %v627, %v626
        %644 = vmatprep.subr.bf16.mxu0 0
        %645 = vmatpush1.bf16.msra.mxu0 %v628
        %646 = vmatprep.subr.bf16.mxu0 0
        %647 = vmatpush1.bf16.msra.mxu0 %v629
        %648 = vmatprep.subr.bf16.mxu0 0
        %649 = vmatpush1.bf16.msra.mxu0 %v630
        %650 = vmatprep.subr.bf16.mxu0 0
        %651 = vmatpush1.bf16.msra.mxu0 %v631
        %652 = vmatprep.subr.bf16.mxu0 0
        %653 = vmatpush1.bf16.msra.mxu0 %v632
        %654 = vmatprep.subr.bf16.mxu0 0
        %655 = vmatpush1.bf16.msra.mxu0 %v633
        %656 = vmatprep.subr.bf16.mxu0 0
        %657 = vmatpush1.bf16.msra.mxu0 %v634
        %658 = vmatprep.subr.bf16.mxu0 0
        %659 = vmatpush1.bf16.msra.mxu0 %v635
        %660 = vmatprep.subr.bf16.mxu0 0
        %661 = vmatpush1.bf16.msra.mxu0 0
        %662 = vmatprep.subr.bf16.mxu0 0
        %663 = vmatpush1.bf16.msra.mxu0 0
        %664 = vmatprep.subr.bf16.mxu0 0
        %665 = vmatpush1.bf16.msra.mxu0 0
        %666 = vmatprep.subr.bf16.mxu0 0
        %667 = vmatpush1.bf16.msra.mxu0 0
        %668 = vmatprep.subr.bf16.mxu0 0
        %669 = vmatpush1.bf16.msra.mxu0 0
        %670 = vmatprep.subr.bf16.mxu0 0
        %671 = vmatpush1.bf16.msra.mxu0 0
        %672 = vmatprep.subr.bf16.mxu0 0
        %673 = vmatpush1.bf16.msra.mxu0 0
        %674 = vmatprep.subr.bf16.mxu0 0
        %675 = vmatpush1.bf16.msra.mxu0 0
        %676 = vmatprep.mubr.bf16.mxu0 0
        %677 = vmatmul.mubr.bf16.gmra.mrb[0].mxu0 %v560
        %v678 = vpop.f32.mrb[0].mxu0
        %v679 = vadd.f32 %v486, %v678
        %v680 = vpop.f32.mrb[0].mxu0
        %v681 = vpop.f32.mrb[0].mxu0
        %v682 = vadd.f32 %v486, %v681
        %v683 = vpop.f32.mrb[0].mxu0
        %684 = vmatprep.mubr.bf16.mxu0 0
        %685 = vmatmul.mubr.bf16.gmra.mrb[0].mxu0 %v561
        %v686 = vpop.f32.mrb[0].mxu0
        %v687 = vadd.f32 %v486, %v686
        %v688 = vpop.f32.mrb[0].mxu0
        %v689 = vpop.f32.mrb[0].mxu0
        %v690 = vadd.f32 %v486, %v689
        %v691 = vpop.f32.mrb[0].mxu0
        %692 = vmatprep.mubr.bf16.mxu0 0
        %693 = vmatmul.mubr.bf16.gmra.mrb[0].mxu0 %v562
        %v694 = vpop.f32.mrb[0].mxu0
        %v695 = vadd.f32 %v486, %v694
        %v696 = vpop.f32.mrb[0].mxu0
        %v697 = vpop.f32.mrb[0].mxu0
        %v698 = vadd.f32 %v486, %v697
        %v699 = vpop.f32.mrb[0].mxu0
        %700 = vmatprep.mubr.bf16.mxu0 0
        %701 = vmatmul.mubr.bf16.gmra.mrb[0].mxu0 %v563
        %v702 = vpop.f32.mrb[0].mxu0
        %v703 = vadd.f32 %v486, %v702
        %v704 = vpop.f32.mrb[0].mxu0
        %v705 = vpop.f32.mrb[0].mxu0
        %v706 = vadd.f32 %v486, %v705
        %v707 = vpop.f32.mrb[0].mxu0
        %708 = vmatprep.mubr.bf16.mxu0 0
        %709 = vmatmul.mubr.bf16.gmra.mrb[0].mxu0 %v564
        %v710 = vpop.f32.mrb[0].mxu0
        %v711 = vadd.f32 %v486, %v710
        %v712 = vpop.f32.mrb[0].mxu0
        %v713 = vpop.f32.mrb[0].mxu0
        %v714 = vadd.f32 %v486, %v713
        %v715 = vpop.f32.mrb[0].mxu0
        %716 = vmatprep.mubr.bf16.mxu0 0
        %717 = vmatmul.mubr.bf16.gmra.mrb[0].mxu0 %v565
        %v718 = vpop.f32.mrb[0].mxu0
        %v719 = vadd.f32 %v486, %v718
        %v720 = vpop.f32.mrb[0].mxu0
        %v721 = vpop.f32.mrb[0].mxu0
        %v722 = vadd.f32 %v486, %v721
        %v723 = vpop.f32.mrb[0].mxu0
        %724 = vmatprep.mubr.bf16.mxu0 0
        %725 = vmatmul.mubr.bf16.gmra.mrb[0].mxu0 %v566
        %v726 = vpop.f32.mrb[0].mxu0
        %v727 = vadd.f32 %v486, %v726
        %v728 = vpop.f32.mrb[0].mxu0
        %v729 = vpop.f32.mrb[0].mxu0
        %v730 = vadd.f32 %v486, %v729
        %v731 = vpop.f32.mrb[0].mxu0
        %732 = vmatprep.mubr.bf16.mxu0 0
        %733 = vmatmul.mubr.bf16.gmra.mrb[0].mxu0 %v567
        %v734 = vpop.f32.mrb[0].mxu0
        %v735 = vadd.f32 %v486, %v734
        %v736 = vpop.f32.mrb[0].mxu0
        %v737 = vpop.f32.mrb[0].mxu0
        %v738 = vadd.f32 %v486, %v737
        %v739 = vpop.f32.mrb[0].mxu0
        %740 = vmatprep.mubr.bf16.mxu0 0
        %741 = vmatmul.mubr.bf16.gmra.mrb[0].mxu0 %v568
        %v742 = vpop.f32.mrb[0].mxu0
        %v743 = vadd.f32 %v486, %v742
        %v744 = vpop.f32.mrb[0].mxu0
        %v745 = vpop.f32.mrb[0].mxu0
        %v746 = vadd.f32 %v486, %v745
        %v747 = vpop.f32.mrb[0].mxu0
        %748 = vmatprep.mubr.bf16.mxu0 0
        %749 = vmatmul.mubr.bf16.gmra.mrb[0].mxu0 %v569
        %v750 = vpop.f32.mrb[0].mxu0
        %v751 = vadd.f32 %v486, %v750
        %v752 = vpop.f32.mrb[0].mxu0
        %v753 = vpop.f32.mrb[0].mxu0
        %v754 = vadd.f32 %v486, %v753
        %v755 = vpop.f32.mrb[0].mxu0
        %756 = vmatprep.mubr.bf16.mxu0 0
        %757 = vmatmul.mubr.bf16.gmra.mrb[0].mxu0 %v570
        %v758 = vpop.f32.mrb[0].mxu0
        %v759 = vadd.f32 %v486, %v758
        %v760 = vpop.f32.mrb[0].mxu0
        %v761 = vpop.f32.mrb[0].mxu0
        %v762 = vadd.f32 %v486, %v761
        %v763 = vpop.f32.mrb[0].mxu0
        %764 = vmatprep.mubr.bf16.mxu0 0
        %765 = vmatmul.mubr.bf16.gmra.mrb[0].mxu0 %v571
        %v766 = vpop.f32.mrb[0].mxu0
        %v767 = vadd.f32 %v486, %v766
        %v768 = vpop.f32.mrb[0].mxu0
        %v769 = vpop.f32.mrb[0].mxu0
        %v770 = vadd.f32 %v486, %v769
        %v771 = vpop.f32.mrb[0].mxu0
        %772 = vmatprep.mubr.bf16.mxu0 0
        %773 = vmatmul.mubr.bf16.gmra.mrb[0].mxu0 %v572
        %v774 = vpop.f32.mrb[0].mxu0
        %v775 = vadd.f32 %v486, %v774
        %v776 = vpop.f32.mrb[0].mxu0
        %v777 = vpop.f32.mrb[0].mxu0
        %v778 = vadd.f32 %v486, %v777
        %v779 = vpop.f32.mrb[0].mxu0
        %780 = vmatprep.mubr.bf16.mxu0 0
        %781 = vmatmul.mubr.bf16.gmra.mrb[0].mxu0 %v573
        %v782 = vpop.f32.mrb[0].mxu0
        %v783 = vadd.f32 %v486, %v782
        %v784 = vpop.f32.mrb[0].mxu0
        %v785 = vpop.f32.mrb[0].mxu0
        %v786 = vadd.f32 %v486, %v785
        %v787 = vpop.f32.mrb[0].mxu0
        %788 = vmatprep.mubr.bf16.mxu0 0
        %789 = vmatmul.mubr.bf16.gmra.mrb[0].mxu0 %v574
        %v790 = vpop.f32.mrb[0].mxu0
        %v791 = vadd.f32 %v486, %v790
        %v792 = vpop.f32.mrb[0].mxu0
        %v793 = vpop.f32.mrb[0].mxu0
        %v794 = vadd.f32 %v486, %v793
        %v795 = vpop.f32.mrb[0].mxu0
        %796 = vmatprep.mubr.bf16.mxu0 0
        %797 = vmatmul.mubr.bf16.gmra.mrb[0].mxu0 %v575
        %v798 = vpop.f32.mrb[0].mxu0
        %v799 = vadd.f32 %v486, %v798
        %v800 = vpop.f32.mrb[0].mxu0
        %v801 = vpop.f32.mrb[0].mxu0
        %v802 = vadd.f32 %v486, %v801
        %v803 = vpop.f32.mrb[0].mxu0
        %804 = vmatprep.mubr.bf16.mxu0 0
        %805 = vmatmul.mubr.bf16.gmra.mrb[0].mxu0 %v576
        %v806 = vpop.f32.mrb[0].mxu0
        %v807 = vadd.f32 %v486, %v806
        %v808 = vpop.f32.mrb[0].mxu0
        %v809 = vpop.f32.mrb[0].mxu0
        %v810 = vadd.f32 %v486, %v809
        %v811 = vpop.f32.mrb[0].mxu0
        %812 = vmatprep.mubr.bf16.mxu0 0
        %813 = vmatmul.mubr.bf16.gmra.mrb[0].mxu0 %v577
        %v814 = vpop.f32.mrb[0].mxu0
        %v815 = vadd.f32 %v486, %v814
        %v816 = vpop.f32.mrb[0].mxu0
        %v817 = vpop.f32.mrb[0].mxu0
        %v818 = vadd.f32 %v486, %v817
        %v819 = vpop.f32.mrb[0].mxu0
        %820 = vdwg.mxu0
        %v821 = vmax.f32 %v679, 0.0
        %v822 = vmax.f32 %v682, 0.0
        %v823 = vmax.f32 %v687, 0.0
        %v824 = vmax.f32 %v690, 0.0
        %v825 = vmax.f32 %v695, 0.0
        %v826 = vmax.f32 %v698, 0.0
        %v827 = vmax.f32 %v703, 0.0
        %v828 = vmax.f32 %v706, 0.0
        %v829 = vmax.f32 %v711, 0.0
        %v830 = vmax.f32 %v714, 0.0
        %v831 = vmax.f32 %v719, 0.0
        %v832 = vmax.f32 %v722, 0.0
        %v833 = vmax.f32 %v727, 0.0
        %v834 = vmax.f32 %v730, 0.0
        %v835 = vmax.f32 %v735, 0.0
        %v836 = vmax.f32 %v738, 0.0
        %v837 = vmax.f32 %v743, 0.0
        %v838 = vmax.f32 %v746, 0.0
        %v839 = vmax.f32 %v751, 0.0
        %v840 = vmax.f32 %v754, 0.0
        %v841 = vmax.f32 %v759, 0.0
        %v842 = vmax.f32 %v762, 0.0
        %v843 = vmax.f32 %v767, 0.0
        %v844 = vmax.f32 %v770, 0.0
        %v845 = vmax.f32 %v775, 0.0
        %v846 = vmax.f32 %v778, 0.0
        %v847 = vmax.f32 %v783, 0.0
        %v848 = vmax.f32 %v786, 0.0
        %v849 = vmax.f32 %v791, 0.0
        %v850 = vmax.f32 %v794, 0.0
        %v851 = vmax.f32 %v799, 0.0
        %v852 = vmax.f32 %v802, 0.0
        %v853 = vmax.f32 %v807, 0.0
        %v854 = vmax.f32 %v810, 0.0
        %v855 = vmax.f32 %v815, 0.0
        %v856 = vmax.f32 %v818, 0.0
        %v857 = vpack.c.bf16 %v822, %v821
        %v858 = vpack.c.bf16 %v824, %v823
        %v859 = vpack.c.bf16 %v826, %v825
        %v860 = vpack.c.bf16 %v828, %v827
        %v861 = vpack.c.bf16 %v830, %v829
        %v862 = vpack.c.bf16 %v832, %v831
        %v863 = vpack.c.bf16 %v834, %v833
        %v864 = vpack.c.bf16 %v836, %v835
        %v865 = vpack.c.bf16 %v838, %v837
        %v866 = vpack.c.bf16 %v840, %v839
        %v867 = vpack.c.bf16 %v842, %v841
        %v868 = vpack.c.bf16 %v844, %v843
        %v869 = vpack.c.bf16 %v846, %v845
        %v870 = vpack.c.bf16 %v848, %v847
        %v871 = vpack.c.bf16 %v850, %v849
        %v872 = vpack.c.bf16 %v852, %v851
        %v873 = vpack.c.bf16 %v854, %v853
        %v874 = vpack.c.bf16 %v856, %v855
        %v893 = vunpack.c.l.b16 %v857
        %v894 = vunpack.c.h.b16 %v857
        %v895 = vunpack.c.l.b16 %v858
        %v896 = vunpack.c.h.b16 %v858
        %v897 = vunpack.c.l.b16 %v859
        %v898 = vunpack.c.h.b16 %v859
        %v899 = vunpack.c.l.b16 %v860
        %v900 = vunpack.c.h.b16 %v860
        %v901 = vunpack.c.l.b16 %v861
        %v902 = vunpack.c.h.b16 %v861
        %v903 = vunpack.c.l.b16 %v862
        %v904 = vunpack.c.h.b16 %v862
        %v905 = vunpack.c.l.b16 %v863
        %v906 = vunpack.c.h.b16 %v863
        %v907 = vunpack.c.l.b16 %v864
        %v908 = vunpack.c.h.b16 %v864
        %v909 = vunpack.c.l.b16 %v865
        %v910 = vunpack.c.h.b16 %v865
        %v911 = vunpack.c.l.b16 %v866
        %v912 = vunpack.c.h.b16 %v866
        %v913 = vunpack.c.l.b16 %v867
        %v914 = vunpack.c.h.b16 %v867
        %v915 = vunpack.c.l.b16 %v868
        %v916 = vunpack.c.h.b16 %v868
        %v917 = vunpack.c.l.b16 %v869
        %v918 = vunpack.c.h.b16 %v869
        %v919 = vunpack.c.l.b16 %v870
        %v920 = vunpack.c.h.b16 %v870
        %v921 = vunpack.c.l.b16 %v871
        %v922 = vunpack.c.h.b16 %v871
        %v923 = vunpack.c.l.b16 %v872
        %v924 = vunpack.c.h.b16 %v872
        %v925 = vunpack.c.l.b16 %v873
        %v926 = vunpack.c.h.b16 %v873
        %v927 = vunpack.c.l.b16 %v874
        %v928 = vunpack.c.h.b16 %v874
        %v929 = vpack.c.b16 %v893, %v893
        %v930 = vpack.c.b16 %v894, %v894
        %v931 = vpack.c.b16 %v895, %v895
        %v932 = vpack.c.b16 %v896, %v896
        %v933 = vpack.c.b16 %v897, %v897
        %v934 = vpack.c.b16 %v898, %v898
        %v935 = vpack.c.b16 %v899, %v899
        %v936 = vpack.c.b16 %v900, %v900
        %v937 = vpack.c.b16 %v901, %v901
        %v938 = vpack.c.b16 %v902, %v902
        %v939 = vpack.c.b16 %v903, %v903
        %v940 = vpack.c.b16 %v904, %v904
        %v941 = vpack.c.b16 %v905, %v905
        %v942 = vpack.c.b16 %v906, %v906
        %v943 = vpack.c.b16 %v907, %v907
        %v944 = vpack.c.b16 %v908, %v908
        %v945 = vpack.c.b16 %v909, %v909
        %v946 = vpack.c.b16 %v910, %v910
        %v947 = vpack.c.b16 %v911, %v911
        %v948 = vpack.c.b16 %v912, %v912
        %v949 = vpack.c.b16 %v913, %v913
        %v950 = vpack.c.b16 %v914, %v914
        %v951 = vpack.c.b16 %v915, %v915
        %v952 = vpack.c.b16 %v916, %v916
        %v953 = vpack.c.b16 %v917, %v917
        %v954 = vpack.c.b16 %v918, %v918
        %v955 = vpack.c.b16 %v919, %v919
        %v956 = vpack.c.b16 %v920, %v920
        %v957 = vpack.c.b16 %v921, %v921
        %v958 = vpack.c.b16 %v922, %v922
        %v959 = vpack.c.b16 %v923, %v923
        %v960 = vpack.c.b16 %v924, %v924
        %v961 = vpack.c.b16 %v925, %v925
        %v962 = vpack.c.b16 %v926, %v926
        %v963 = vpack.c.b16 %v927, %v927
        %v964 = vpack.c.b16 %v928, %v928
        %vm965 = vsmask.f32 256
        %vm966 = vsmask.f32 4368
        %vm967 = vmor %vm965, %vm966
        %v969 = vshrl.u32 %v929, 16
        %v971 = vrot.slane %v969, 7
        %v972 = vshll.u32 %v929, 16
        %v974 = vor.u32 %v971, %v972
        %v975 = vrot.slane %v971, 4
        %v977 = vshrl.u32 %v930, 16
        %v979 = vrot.slane %v977, 7
        %v980 = vshll.u32 %v930, 16
        %v982 = vor.u32 %v979, %v980
        %v983 = vsel %vm967, %v975, %v982
        %v984 = vrot.slane %v979, 4
        %v986 = vshrl.u32 %v931, 16
        %v988 = vrot.slane %v986, 7
        %v989 = vshll.u32 %v931, 16
        %v991 = vor.u32 %v988, %v989
        %v992 = vrot.slane %v988, 4
        %v994 = vshrl.u32 %v932, 16
        %v996 = vrot.slane %v994, 7
        %v997 = vshll.u32 %v932, 16
        %v999 = vor.u32 %v996, %v997
        %v1000 = vsel %vm967, %v992, %v999
        %v1001 = vrot.slane %v996, 4
        %v1003 = vshrl.u32 %v933, 16
        %v1005 = vrot.slane %v1003, 7
        %v1006 = vshll.u32 %v933, 16
        %v1008 = vor.u32 %v1005, %v1006
        %v1009 = vrot.slane %v1005, 4
        %v1011 = vshrl.u32 %v934, 16
        %v1013 = vrot.slane %v1011, 7
        %v1014 = vshll.u32 %v934, 16
        %v1016 = vor.u32 %v1013, %v1014
        %v1017 = vsel %vm967, %v1009, %v1016
        %v1018 = vrot.slane %v1013, 4
        %v1020 = vshrl.u32 %v935, 16
        %v1022 = vrot.slane %v1020, 7
        %v1023 = vshll.u32 %v935, 16
        %v1025 = vor.u32 %v1022, %v1023
        %v1026 = vrot.slane %v1022, 4
        %v1028 = vshrl.u32 %v936, 16
        %v1030 = vrot.slane %v1028, 7
        %v1031 = vshll.u32 %v936, 16
        %v1033 = vor.u32 %v1030, %v1031
        %v1034 = vsel %vm967, %v1026, %v1033
        %v1035 = vrot.slane %v1030, 4
        %v1037 = vshrl.u32 %v937, 16
        %v1039 = vrot.slane %v1037, 7
        %v1040 = vshll.u32 %v937, 16
        %v1042 = vor.u32 %v1039, %v1040
        %v1043 = vrot.slane %v1039, 4
        %v1045 = vshrl.u32 %v938, 16
        %v1047 = vrot.slane %v1045, 7
        %v1048 = vshll.u32 %v938, 16
        %v1050 = vor.u32 %v1047, %v1048
        %v1051 = vsel %vm967, %v1043, %v1050
        %v1052 = vrot.slane %v1047, 4
        %v1054 = vshrl.u32 %v939, 16
        %v1056 = vrot.slane %v1054, 7
        %v1057 = vshll.u32 %v939, 16
        %v1059 = vor.u32 %v1056, %v1057
        %v1060 = vrot.slane %v1056, 4
        %v1062 = vshrl.u32 %v940, 16
        %v1064 = vrot.slane %v1062, 7
        %v1065 = vshll.u32 %v940, 16
        %v1067 = vor.u32 %v1064, %v1065
        %v1068 = vsel %vm967, %v1060, %v1067
        %v1069 = vrot.slane %v1064, 4
        %v1071 = vshrl.u32 %v941, 16
        %v1073 = vrot.slane %v1071, 7
        %v1074 = vshll.u32 %v941, 16
        %v1076 = vor.u32 %v1073, %v1074
        %v1077 = vrot.slane %v1073, 4
        %v1079 = vshrl.u32 %v942, 16
        %v1081 = vrot.slane %v1079, 7
        %v1082 = vshll.u32 %v942, 16
        %v1084 = vor.u32 %v1081, %v1082
        %v1085 = vsel %vm967, %v1077, %v1084
        %v1086 = vrot.slane %v1081, 4
        %v1088 = vshrl.u32 %v943, 16
        %v1090 = vrot.slane %v1088, 7
        %v1091 = vshll.u32 %v943, 16
        %v1093 = vor.u32 %v1090, %v1091
        %v1094 = vrot.slane %v1090, 4
        %v1096 = vshrl.u32 %v944, 16
        %v1098 = vrot.slane %v1096, 7
        %v1099 = vshll.u32 %v944, 16
        %v1101 = vor.u32 %v1098, %v1099
        %v1102 = vsel %vm967, %v1094, %v1101
        %v1103 = vrot.slane %v1098, 4
        %v1105 = vshrl.u32 %v945, 16
        %v1107 = vrot.slane %v1105, 7
        %v1108 = vshll.u32 %v945, 16
        %v1110 = vor.u32 %v1107, %v1108
        %v1111 = vrot.slane %v1107, 4
        %v1113 = vshrl.u32 %v946, 16
        %v1115 = vrot.slane %v1113, 7
        %v1116 = vshll.u32 %v946, 16
        %v1118 = vor.u32 %v1115, %v1116
        %v1119 = vsel %vm967, %v1111, %v1118
        %v1120 = vrot.slane %v1115, 4
        %v1122 = vshrl.u32 %v947, 16
        %v1124 = vrot.slane %v1122, 7
        %v1125 = vshll.u32 %v947, 16
        %v1127 = vor.u32 %v1124, %v1125
        %v1128 = vrot.slane %v1124, 4
        %v1130 = vshrl.u32 %v948, 16
        %v1132 = vrot.slane %v1130, 7
        %v1133 = vshll.u32 %v948, 16
        %v1135 = vor.u32 %v1132, %v1133
        %v1136 = vsel %vm967, %v1128, %v1135
        %v1137 = vrot.slane %v1132, 4
        %v1139 = vshrl.u32 %v949, 16
        %v1141 = vrot.slane %v1139, 7
        %v1142 = vshll.u32 %v949, 16
        %v1144 = vor.u32 %v1141, %v1142
        %v1145 = vrot.slane %v1141, 4
        %v1147 = vshrl.u32 %v950, 16
        %v1149 = vrot.slane %v1147, 7
        %v1150 = vshll.u32 %v950, 16
        %v1152 = vor.u32 %v1149, %v1150
        %v1153 = vsel %vm967, %v1145, %v1152
        %v1154 = vrot.slane %v1149, 4
        %v1156 = vshrl.u32 %v951, 16
        %v1158 = vrot.slane %v1156, 7
        %v1159 = vshll.u32 %v951, 16
        %v1161 = vor.u32 %v1158, %v1159
        %v1162 = vrot.slane %v1158, 4
        %v1164 = vshrl.u32 %v952, 16
        %v1166 = vrot.slane %v1164, 7
        %v1167 = vshll.u32 %v952, 16
        %v1169 = vor.u32 %v1166, %v1167
        %v1170 = vsel %vm967, %v1162, %v1169
        %v1171 = vrot.slane %v1166, 4
        %v1173 = vshrl.u32 %v953, 16
        %v1175 = vrot.slane %v1173, 7
        %v1176 = vshll.u32 %v953, 16
        %v1178 = vor.u32 %v1175, %v1176
        %v1179 = vrot.slane %v1175, 4
        %v1181 = vshrl.u32 %v954, 16
        %v1183 = vrot.slane %v1181, 7
        %v1184 = vshll.u32 %v954, 16
        %v1186 = vor.u32 %v1183, %v1184
        %v1187 = vsel %vm967, %v1179, %v1186
        %v1188 = vrot.slane %v1183, 4
        %v1190 = vshrl.u32 %v955, 16
        %v1192 = vrot.slane %v1190, 7
        %v1193 = vshll.u32 %v955, 16
        %v1195 = vor.u32 %v1192, %v1193
        %v1196 = vrot.slane %v1192, 4
        %v1198 = vshrl.u32 %v956, 16
        %v1200 = vrot.slane %v1198, 7
        %v1201 = vshll.u32 %v956, 16
        %v1203 = vor.u32 %v1200, %v1201
        %v1204 = vsel %vm967, %v1196, %v1203
        %v1205 = vrot.slane %v1200, 4
        %v1207 = vshrl.u32 %v957, 16
        %v1209 = vrot.slane %v1207, 7
        %v1210 = vshll.u32 %v957, 16
        %v1212 = vor.u32 %v1209, %v1210
        %v1213 = vrot.slane %v1209, 4
        %v1215 = vshrl.u32 %v958, 16
        %v1217 = vrot.slane %v1215, 7
        %v1218 = vshll.u32 %v958, 16
        %v1220 = vor.u32 %v1217, %v1218
        %v1221 = vsel %vm967, %v1213, %v1220
        %v1222 = vrot.slane %v1217, 4
        %v1224 = vshrl.u32 %v959, 16
        %v1226 = vrot.slane %v1224, 7
        %v1227 = vshll.u32 %v959, 16
        %v1229 = vor.u32 %v1226, %v1227
        %v1230 = vrot.slane %v1226, 4
        %v1232 = vshrl.u32 %v960, 16
        %v1234 = vrot.slane %v1232, 7
        %v1235 = vshll.u32 %v960, 16
        %v1237 = vor.u32 %v1234, %v1235
        %v1238 = vsel %vm967, %v1230, %v1237
        %v1239 = vrot.slane %v1234, 4
        %v1241 = vshrl.u32 %v961, 16
        %v1243 = vrot.slane %v1241, 7
        %v1244 = vshll.u32 %v961, 16
        %v1246 = vor.u32 %v1243, %v1244
        %v1247 = vrot.slane %v1243, 4
        %v1249 = vshrl.u32 %v962, 16
        %v1251 = vrot.slane %v1249, 7
        %v1252 = vshll.u32 %v962, 16
        %v1254 = vor.u32 %v1251, %v1252
        %v1255 = vsel %vm967, %v1247, %v1254
        %v1256 = vrot.slane %v1251, 4
        %v1258 = vshrl.u32 %v963, 16
        %v1260 = vrot.slane %v1258, 7
        %v1261 = vshll.u32 %v963, 16
        %v1263 = vor.u32 %v1260, %v1261
        %v1264 = vrot.slane %v1260, 4
        %v1266 = vshrl.u32 %v964, 16
        %v1268 = vrot.slane %v1266, 7
        %v1269 = vshll.u32 %v964, 16
        %v1271 = vor.u32 %v1268, %v1269
        %v1272 = vsel %vm967, %v1264, %v1271
        %v1273 = vrot.slane %v1268, 4
        %vm1328 = vcmask 1043456
        %vm1329 = vsmask.f32 7938
        %vm1330 = vmand %vm1328, %vm1329
        %v1331 = vld [vmem:[#allocation2] sm:$0xf]
        %v1332 = vsel %vm1330, %v974, %v1331
        %1333 = vst [vmem:[#allocation2] sm:$0xf] %v1332
        %1334 = vst [vmem:[#allocation2 + $0x4] sm:$0xf] %v983
        %vm1335 = vcmask 1040384
        %vm1336 = vmand %vm1335, %vm965
        %v1337 = vld [vmem:[#allocation2 + $0x8] sm:$0x1]
        %v1338 = vsel %vm1336, %v984, %v1337
        %1339 = vst [vmem:[#allocation2 + $0x8] sm:$0x1] %v1338
        %v1340 = vld [vmem:[#allocation2 + $0xc] sm:$0xf]
        %v1341 = vsel %vm1330, %v991, %v1340
        %1342 = vst [vmem:[#allocation2 + $0xc] sm:$0xf] %v1341
        %1343 = vst [vmem:[#allocation2 + $0x10] sm:$0xf] %v1000
        %v1344 = vld [vmem:[#allocation2 + $0x14] sm:$0x1]
        %v1345 = vsel %vm1336, %v1001, %v1344
        %1346 = vst [vmem:[#allocation2 + $0x14] sm:$0x1] %v1345
        %v1347 = vld [vmem:[#allocation2 + $0x18] sm:$0xf]
        %v1348 = vsel %vm1330, %v1008, %v1347
        %1349 = vst [vmem:[#allocation2 + $0x18] sm:$0xf] %v1348
        %1350 = vst [vmem:[#allocation2 + $0x1c] sm:$0xf] %v1017
        %v1351 = vld [vmem:[#allocation2 + $0x20] sm:$0x1]
        %v1352 = vsel %vm1336, %v1018, %v1351
        %1353 = vst [vmem:[#allocation2 + $0x20] sm:$0x1] %v1352
        %v1354 = vld [vmem:[#allocation2 + $0x24] sm:$0xf]
        %v1355 = vsel %vm1330, %v1025, %v1354
        %1356 = vst [vmem:[#allocation2 + $0x24] sm:$0xf] %v1355
        %1357 = vst [vmem:[#allocation2 + $0x28] sm:$0xf] %v1034
        %v1358 = vld [vmem:[#allocation2 + $0x2c] sm:$0x1]
        %v1359 = vsel %vm1336, %v1035, %v1358
        %1360 = vst [vmem:[#allocation2 + $0x2c] sm:$0x1] %v1359
        %v1361 = vld [vmem:[#allocation2 + $0x30] sm:$0xf]
        %v1362 = vsel %vm1330, %v1042, %v1361
        %1363 = vst [vmem:[#allocation2 + $0x30] sm:$0xf] %v1362
        %1364 = vst [vmem:[#allocation2 + $0x34] sm:$0xf] %v1051
        %v1365 = vld [vmem:[#allocation2 + $0x38] sm:$0x1]
        %v1366 = vsel %vm1336, %v1052, %v1365
        %1367 = vst [vmem:[#allocation2 + $0x38] sm:$0x1] %v1366
        %v1368 = vld [vmem:[#allocation2 + $0x3c] sm:$0xf]
        %v1369 = vsel %vm1330, %v1059, %v1368
        %1370 = vst [vmem:[#allocation2 + $0x3c] sm:$0xf] %v1369
        %1371 = vst [vmem:[#allocation2 + $0x40] sm:$0xf] %v1068
        %v1372 = vld [vmem:[#allocation2 + $0x44] sm:$0x1]
        %v1373 = vsel %vm1336, %v1069, %v1372
        %1374 = vst [vmem:[#allocation2 + $0x44] sm:$0x1] %v1373
        %v1375 = vld [vmem:[#allocation2 + $0x48] sm:$0xf]
        %v1376 = vsel %vm1330, %v1076, %v1375
        %1377 = vst [vmem:[#allocation2 + $0x48] sm:$0xf] %v1376
        %1378 = vst [vmem:[#allocation2 + $0x4c] sm:$0xf] %v1085
        %v1379 = vld [vmem:[#allocation2 + $0x50] sm:$0x1]
        %v1380 = vsel %vm1336, %v1086, %v1379
        %1381 = vst [vmem:[#allocation2 + $0x50] sm:$0x1] %v1380
        %v1382 = vld [vmem:[#allocation2 + $0x54] sm:$0xf]
        %v1383 = vsel %vm1330, %v1093, %v1382
        %1384 = vst [vmem:[#allocation2 + $0x54] sm:$0xf] %v1383
        %1385 = vst [vmem:[#allocation2 + $0x58] sm:$0xf] %v1102
        %v1386 = vld [vmem:[#allocation2 + $0x5c] sm:$0x1]
        %v1387 = vsel %vm1336, %v1103, %v1386
        %1388 = vst [vmem:[#allocation2 + $0x5c] sm:$0x1] %v1387
        %v1389 = vld [vmem:[#allocation2 + $0x60] sm:$0xf]
        %v1390 = vsel %vm1330, %v1110, %v1389
        %1391 = vst [vmem:[#allocation2 + $0x60] sm:$0xf] %v1390
        %1392 = vst [vmem:[#allocation2 + $0x64] sm:$0xf] %v1119
        %v1393 = vld [vmem:[#allocation2 + $0x68] sm:$0x1]
        %v1394 = vsel %vm1336, %v1120, %v1393
        %1395 = vst [vmem:[#allocation2 + $0x68] sm:$0x1] %v1394
        %v1396 = vld [vmem:[#allocation2 + $0x6c] sm:$0xf]
        %v1397 = vsel %vm1330, %v1127, %v1396
        %1398 = vst [vmem:[#allocation2 + $0x6c] sm:$0xf] %v1397
        %1399 = vst [vmem:[#allocation2 + $0x70] sm:$0xf] %v1136
        %v1400 = vld [vmem:[#allocation2 + $0x74] sm:$0x1]
        %v1401 = vsel %vm1336, %v1137, %v1400
        %1402 = vst [vmem:[#allocation2 + $0x74] sm:$0x1] %v1401
        %v1403 = vld [vmem:[#allocation2 + $0x78] sm:$0xf]
        %v1404 = vsel %vm1330, %v1144, %v1403
        %1405 = vst [vmem:[#allocation2 + $0x78] sm:$0xf] %v1404
        %1406 = vst [vmem:[#allocation2 + $0x7c] sm:$0xf] %v1153
        %v1407 = vld [vmem:[#allocation2 + $0x80] sm:$0x1]
        %v1408 = vsel %vm1336, %v1154, %v1407
        %1409 = vst [vmem:[#allocation2 + $0x80] sm:$0x1] %v1408
        %v1410 = vld [vmem:[#allocation2 + $0x84] sm:$0xf]
        %v1411 = vsel %vm1330, %v1161, %v1410
        %1412 = vst [vmem:[#allocation2 + $0x84] sm:$0xf] %v1411
        %1413 = vst [vmem:[#allocation2 + $0x88] sm:$0xf] %v1170
        %v1414 = vld [vmem:[#allocation2 + $0x8c] sm:$0x1]
        %v1415 = vsel %vm1336, %v1171, %v1414
        %1416 = vst [vmem:[#allocation2 + $0x8c] sm:$0x1] %v1415
        %v1417 = vld [vmem:[#allocation2 + $0x90] sm:$0xf]
        %v1418 = vsel %vm1330, %v1178, %v1417
        %1419 = vst [vmem:[#allocation2 + $0x90] sm:$0xf] %v1418
        %1420 = vst [vmem:[#allocation2 + $0x94] sm:$0xf] %v1187
        %v1421 = vld [vmem:[#allocation2 + $0x98] sm:$0x1]
        %v1422 = vsel %vm1336, %v1188, %v1421
        %1423 = vst [vmem:[#allocation2 + $0x98] sm:$0x1] %v1422
        %v1424 = vld [vmem:[#allocation2 + $0x9c] sm:$0xf]
        %v1425 = vsel %vm1330, %v1195, %v1424
        %1426 = vst [vmem:[#allocation2 + $0x9c] sm:$0xf] %v1425
        %1427 = vst [vmem:[#allocation2 + $0xa0] sm:$0xf] %v1204
        %v1428 = vld [vmem:[#allocation2 + $0xa4] sm:$0x1]
        %v1429 = vsel %vm1336, %v1205, %v1428
        %1430 = vst [vmem:[#allocation2 + $0xa4] sm:$0x1] %v1429
        %v1431 = vld [vmem:[#allocation2 + $0xa8] sm:$0xf]
        %v1432 = vsel %vm1330, %v1212, %v1431
        %1433 = vst [vmem:[#allocation2 + $0xa8] sm:$0xf] %v1432
        %1434 = vst [vmem:[#allocation2 + $0xac] sm:$0xf] %v1221
        %v1435 = vld [vmem:[#allocation2 + $0xb0] sm:$0x1]
        %v1436 = vsel %vm1336, %v1222, %v1435
        %1437 = vst [vmem:[#allocation2 + $0xb0] sm:$0x1] %v1436
        %v1438 = vld [vmem:[#allocation2 + $0xb4] sm:$0xf]
        %v1439 = vsel %vm1330, %v1229, %v1438
        %1440 = vst [vmem:[#allocation2 + $0xb4] sm:$0xf] %v1439
        %1441 = vst [vmem:[#allocation2 + $0xb8] sm:$0xf] %v1238
        %v1442 = vld [vmem:[#allocation2 + $0xbc] sm:$0x1]
        %v1443 = vsel %vm1336, %v1239, %v1442
        %1444 = vst [vmem:[#allocation2 + $0xbc] sm:$0x1] %v1443
        %v1445 = vld [vmem:[#allocation2 + $0xc0] sm:$0xf]
        %v1446 = vsel %vm1330, %v1246, %v1445
        %1447 = vst [vmem:[#allocation2 + $0xc0] sm:$0xf] %v1446
        %1448 = vst [vmem:[#allocation2 + $0xc4] sm:$0xf] %v1255
        %v1449 = vld [vmem:[#allocation2 + $0xc8] sm:$0x1]
        %v1450 = vsel %vm1336, %v1256, %v1449
        %1451 = vst [vmem:[#allocation2 + $0xc8] sm:$0x1] %v1450
        %v1452 = vld [vmem:[#allocation2 + $0xcc] sm:$0xf]
        %v1453 = vsel %vm1330, %v1263, %v1452
        %1454 = vst [vmem:[#allocation2 + $0xcc] sm:$0xf] %v1453
        %1455 = vst [vmem:[#allocation2 + $0xd0] sm:$0xf] %v1272
        %v1456 = vld [vmem:[#allocation2 + $0xd4] sm:$0x1]
        %v1457 = vsel %vm1336, %v1273, %v1456
        %1458 = vst [vmem:[#allocation2 + $0xd4] sm:$0x1] %v1457
        %v1459 = vld [vmem:[#allocation2] sm:$0x1]
        %v1460 = vsel %vm1336, 0, %v1459
        %1461 = vst [vmem:[#allocation2] sm:$0x1] %v1460
        %v1462 = vld [vmem:[#allocation2 + $0xc] sm:$0x1]
        %v1463 = vsel %vm1336, 0, %v1462
        %1464 = vst [vmem:[#allocation2 + $0xc] sm:$0x1] %v1463
        %v1465 = vld [vmem:[#allocation2 + $0x18] sm:$0x1]
        %v1466 = vsel %vm1336, 0, %v1465
        %1467 = vst [vmem:[#allocation2 + $0x18] sm:$0x1] %v1466
        %v1468 = vld [vmem:[#allocation2 + $0x24] sm:$0x1]
        %v1469 = vsel %vm1336, 0, %v1468
        %1470 = vst [vmem:[#allocation2 + $0x24] sm:$0x1] %v1469
        %v1471 = vld [vmem:[#allocation2 + $0x30] sm:$0x1]
        %v1472 = vsel %vm1336, 0, %v1471
        %1473 = vst [vmem:[#allocation2 + $0x30] sm:$0x1] %v1472
        %v1474 = vld [vmem:[#allocation2 + $0x3c] sm:$0x1]
        %v1475 = vsel %vm1336, 0, %v1474
        %1476 = vst [vmem:[#allocation2 + $0x3c] sm:$0x1] %v1475
        %v1477 = vld [vmem:[#allocation2 + $0x48] sm:$0x1]
        %v1478 = vsel %vm1336, 0, %v1477
        %1479 = vst [vmem:[#allocation2 + $0x48] sm:$0x1] %v1478
        %v1480 = vld [vmem:[#allocation2 + $0x54] sm:$0x1]
        %v1481 = vsel %vm1336, 0, %v1480
        %1482 = vst [vmem:[#allocation2 + $0x54] sm:$0x1] %v1481
        %v1483 = vld [vmem:[#allocation2 + $0x60] sm:$0x1]
        %v1484 = vsel %vm1336, 0, %v1483
        %1485 = vst [vmem:[#allocation2 + $0x60] sm:$0x1] %v1484
        %v1486 = vld [vmem:[#allocation2 + $0x6c] sm:$0x1]
        %v1487 = vsel %vm1336, 0, %v1486
        %1488 = vst [vmem:[#allocation2 + $0x6c] sm:$0x1] %v1487
        %v1489 = vld [vmem:[#allocation2 + $0x78] sm:$0x1]
        %v1490 = vsel %vm1336, 0, %v1489
        %1491 = vst [vmem:[#allocation2 + $0x78] sm:$0x1] %v1490
        %v1492 = vld [vmem:[#allocation2 + $0x84] sm:$0x1]
        %v1493 = vsel %vm1336, 0, %v1492
        %1494 = vst [vmem:[#allocation2 + $0x84] sm:$0x1] %v1493
        %v1495 = vld [vmem:[#allocation2 + $0x90] sm:$0x1]
        %v1496 = vsel %vm1336, 0, %v1495
        %1497 = vst [vmem:[#allocation2 + $0x90] sm:$0x1] %v1496
        %v1498 = vld [vmem:[#allocation2 + $0x9c] sm:$0x1]
        %v1499 = vsel %vm1336, 0, %v1498
        %1500 = vst [vmem:[#allocation2 + $0x9c] sm:$0x1] %v1499
        %v1501 = vld [vmem:[#allocation2 + $0xa8] sm:$0x1]
        %v1502 = vsel %vm1336, 0, %v1501
        %1503 = vst [vmem:[#allocation2 + $0xa8] sm:$0x1] %v1502
        %v1504 = vld [vmem:[#allocation2 + $0xb4] sm:$0x1]
        %v1505 = vsel %vm1336, 0, %v1504
        %1506 = vst [vmem:[#allocation2 + $0xb4] sm:$0x1] %v1505
        %v1507 = vld [vmem:[#allocation2 + $0xc0] sm:$0x1]
        %v1508 = vsel %vm1336, 0, %v1507
        %1509 = vst [vmem:[#allocation2 + $0xc0] sm:$0x1] %v1508
        %v1510 = vld [vmem:[#allocation2 + $0xcc] sm:$0x1]
        %v1511 = vsel %vm1336, 0, %v1510
        %1512 = vst [vmem:[#allocation2 + $0xcc] sm:$0x1] %v1511
        %vm1513 = vmand %vm1335, %vm1329
        %v1514 = vld [vmem:[#allocation2 + $0x8] sm:$0x1]
        %v1515 = vsel %vm1513, 0, %v1514
        %1516 = vst [vmem:[#allocation2 + $0x8] sm:$0x1] %v1515
        %v1517 = vld [vmem:[#allocation2 + $0x14] sm:$0x1]
        %v1518 = vsel %vm1513, 0, %v1517
        %1519 = vst [vmem:[#allocation2 + $0x14] sm:$0x1] %v1518
        %v1520 = vld [vmem:[#allocation2 + $0x20] sm:$0x1]
        %v1521 = vsel %vm1513, 0, %v1520
        %1522 = vst [vmem:[#allocation2 + $0x20] sm:$0x1] %v1521
        %v1523 = vld [vmem:[#allocation2 + $0x2c] sm:$0x1]
        %v1524 = vsel %vm1513, 0, %v1523
        %1525 = vst [vmem:[#allocation2 + $0x2c] sm:$0x1] %v1524
        %v1526 = vld [vmem:[#allocation2 + $0x38] sm:$0x1]
        %v1527 = vsel %vm1513, 0, %v1526
        %1528 = vst [vmem:[#allocation2 + $0x38] sm:$0x1] %v1527
        %v1529 = vld [vmem:[#allocation2 + $0x44] sm:$0x1]
        %v1530 = vsel %vm1513, 0, %v1529
        %1531 = vst [vmem:[#allocation2 + $0x44] sm:$0x1] %v1530
        %v1532 = vld [vmem:[#allocation2 + $0x50] sm:$0x1]
        %v1533 = vsel %vm1513, 0, %v1532
        %1534 = vst [vmem:[#allocation2 + $0x50] sm:$0x1] %v1533
        %v1535 = vld [vmem:[#allocation2 + $0x5c] sm:$0x1]
        %v1536 = vsel %vm1513, 0, %v1535
        %1537 = vst [vmem:[#allocation2 + $0x5c] sm:$0x1] %v1536
        %v1538 = vld [vmem:[#allocation2 + $0x68] sm:$0x1]
        %v1539 = vsel %vm1513, 0, %v1538
        %1540 = vst [vmem:[#allocation2 + $0x68] sm:$0x1] %v1539
        %v1541 = vld [vmem:[#allocation2 + $0x74] sm:$0x1]
        %v1542 = vsel %vm1513, 0, %v1541
        %1543 = vst [vmem:[#allocation2 + $0x74] sm:$0x1] %v1542
        %v1544 = vld [vmem:[#allocation2 + $0x80] sm:$0x1]
        %v1545 = vsel %vm1513, 0, %v1544
        %1546 = vst [vmem:[#allocation2 + $0x80] sm:$0x1] %v1545
        %v1547 = vld [vmem:[#allocation2 + $0x8c] sm:$0x1]
        %v1548 = vsel %vm1513, 0, %v1547
        %1549 = vst [vmem:[#allocation2 + $0x8c] sm:$0x1] %v1548
        %v1550 = vld [vmem:[#allocation2 + $0x98] sm:$0x1]
        %v1551 = vsel %vm1513, 0, %v1550
        %1552 = vst [vmem:[#allocation2 + $0x98] sm:$0x1] %v1551
        %v1553 = vld [vmem:[#allocation2 + $0xa4] sm:$0x1]
        %v1554 = vsel %vm1513, 0, %v1553
        %1555 = vst [vmem:[#allocation2 + $0xa4] sm:$0x1] %v1554
        %v1556 = vld [vmem:[#allocation2 + $0xb0] sm:$0x1]
        %v1557 = vsel %vm1513, 0, %v1556
        %1558 = vst [vmem:[#allocation2 + $0xb0] sm:$0x1] %v1557
        %v1559 = vld [vmem:[#allocation2 + $0xbc] sm:$0x1]
        %v1560 = vsel %vm1513, 0, %v1559
        %1561 = vst [vmem:[#allocation2 + $0xbc] sm:$0x1] %v1560
        %v1562 = vld [vmem:[#allocation2 + $0xc8] sm:$0x1]
        %v1563 = vsel %vm1513, 0, %v1562
        %1564 = vst [vmem:[#allocation2 + $0xc8] sm:$0x1] %v1563
        %v1565 = vld [vmem:[#allocation2 + $0xd4] sm:$0x1]
        %v1566 = vsel %vm1513, 0, %v1565
        %1567 = vst [vmem:[#allocation2 + $0xd4] sm:$0x1] %v1566
        %p1568 = scmp.eq.s32.totalorder %s33, 0
        // Predicated region
        $region77: #{tpu_custom_call.1} parent=55 // pred_check
          %p1569 = pneg %p1568
        $region78: #{tpu_custom_call.1} parent=55 // pred_check_branch
          %1571 = sbr.rel (%p1569) target = $region80
        $region79: #{tpu_custom_call.1} parent=55 // pred_region
          %1572 = vst [vmem:[#allocation2] sm:$0xf] 0
          %1573 = vst [vmem:[#allocation2 + $0x4] sm:$0xf] 0
          %1574 = vst [vmem:[#allocation2 + $0x8] sm:$0x1] 0
        $region80: #{tpu_custom_call.1} parent=55 // pred_fallthru
          _
        %p1575 = scmp.eq.s32.totalorder %s33, 1
        // Predicated region
        $region81: #{tpu_custom_call.1} parent=55 // pred_check
          %p1576 = pneg %p1575
        $region82: #{tpu_custom_call.1} parent=55 // pred_check_branch
          %1578 = sbr.rel (%p1576) target = $region84
        $region83: #{tpu_custom_call.1} parent=55 // pred_region
          %s1579 = scalar_lea.vmem [#allocation2], 204
          %1580 = vst [vmem:[%s1579] sm:$0xf] 0
          %1581 = vst [vmem:[%s1579 + $0x4] sm:$0xf] 0
          %1582 = vst [vmem:[%s1579 + $0x8] sm:$0x1] 0
        $region84: #{tpu_custom_call.1} parent=55 // pred_fallthru
          _
        %v1583 = vld [vmem:[#allocation2] sm:$0xf]
        %v1584 = vld [vmem:[#allocation2 + $0x4] sm:$0xf]
        %v1585 = vld [vmem:[#allocation2 + $0xc] sm:$0xf]
        %v1586 = vld [vmem:[#allocation2 + $0x10] sm:$0xf]
        %v1587 = vld [vmem:[#allocation2 + $0x18] sm:$0xf]
        %v1588 = vld [vmem:[#allocation2 + $0x1c] sm:$0xf]
        %v1589 = vld [vmem:[#allocation2 + $0x24] sm:$0xf]
        %v1590 = vld [vmem:[#allocation2 + $0x28] sm:$0xf]
        %v1591 = vld [vmem:[#allocation2 + $0x30] sm:$0xf]
        %v1592 = vld [vmem:[#allocation2 + $0x34] sm:$0xf]
        %v1593 = vld [vmem:[#allocation2 + $0x3c] sm:$0xf]
        %v1594 = vld [vmem:[#allocation2 + $0x40] sm:$0xf]
        %v1595 = vld [vmem:[#allocation2 + $0x48] sm:$0xf]
        %v1596 = vld [vmem:[#allocation2 + $0x4c] sm:$0xf]
        %v1597 = vld [vmem:[#allocation2 + $0x54] sm:$0xf]
        %v1598 = vld [vmem:[#allocation2 + $0x58] sm:$0xf]
        %v1599 = vld [vmem:[#allocation2 + $0x60] sm:$0xf]
        %v1600 = vld [vmem:[#allocation2 + $0x64] sm:$0xf]
        %v1601 = vld [vmem:[#allocation2 + $0x6c] sm:$0xf]
        %v1602 = vld [vmem:[#allocation2 + $0x70] sm:$0xf]
        %v1603 = vld [vmem:[#allocation2 + $0x78] sm:$0xf]
        %v1604 = vld [vmem:[#allocation2 + $0x7c] sm:$0xf]
        %v1605 = vld [vmem:[#allocation2 + $0x84] sm:$0xf]
        %v1606 = vld [vmem:[#allocation2 + $0x88] sm:$0xf]
        %v1607 = vld [vmem:[#allocation2 + $0x90] sm:$0xf]
        %v1608 = vld [vmem:[#allocation2 + $0x94] sm:$0xf]
        %v1609 = vld [vmem:[#allocation2 + $0x9c] sm:$0xf]
        %v1610 = vld [vmem:[#allocation2 + $0xa0] sm:$0xf]
        %v1611 = vld [vmem:[#allocation2 + $0xa8] sm:$0xf]
        %v1612 = vld [vmem:[#allocation2 + $0xac] sm:$0xf]
        %v1613 = vld [vmem:[#allocation2 + $0xb4] sm:$0xf]
        %v1614 = vld [vmem:[#allocation2 + $0xb8] sm:$0xf]
        %v1615 = vld [vmem:[#allocation2 + $0xc0] sm:$0xf]
        %v1616 = vld [vmem:[#allocation2 + $0xc4] sm:$0xf]
        %v1617 = vld [vmem:[#allocation2 + $0xcc] sm:$0xf]
        %v1618 = vld [vmem:[#allocation2 + $0xd0] sm:$0xf]
        %v1619 = vld [vmem:[#allocation2 + $0x8] sm:$0x1]
        %v1620 = vld [vmem:[#allocation2 + $0x14] sm:$0x1]
        %v1621 = vld [vmem:[#allocation2 + $0x20] sm:$0x1]
        %v1622 = vld [vmem:[#allocation2 + $0x2c] sm:$0x1]
        %v1623 = vld [vmem:[#allocation2 + $0x38] sm:$0x1]
        %v1624 = vld [vmem:[#allocation2 + $0x44] sm:$0x1]
        %v1625 = vld [vmem:[#allocation2 + $0x50] sm:$0x1]
        %v1626 = vld [vmem:[#allocation2 + $0x5c] sm:$0x1]
        %v1627 = vld [vmem:[#allocation2 + $0x68] sm:$0x1]
        %v1628 = vld [vmem:[#allocation2 + $0x74] sm:$0x1]
        %v1629 = vld [vmem:[#allocation2 + $0x80] sm:$0x1]
        %v1630 = vld [vmem:[#allocation2 + $0x8c] sm:$0x1]
        %v1631 = vld [vmem:[#allocation2 + $0x98] sm:$0x1]
        %v1632 = vld [vmem:[#allocation2 + $0xa4] sm:$0x1]
        %v1633 = vld [vmem:[#allocation2 + $0xb0] sm:$0x1]
        %v1634 = vld [vmem:[#allocation2 + $0xbc] sm:$0x1]
        %v1635 = vld [vmem:[#allocation2 + $0xc8] sm:$0x1]
        %v1636 = vld [vmem:[#allocation2 + $0xd4] sm:$0x1]
        %v1637 = vld [vmem:[#allocation2] sm:$0xe]
        %v1638 = vld [vmem:[#allocation2 + $0xc] sm:$0xe]
        %v1639 = vld [vmem:[#allocation2 + $0x18] sm:$0xe]
        %v1640 = vld [vmem:[#allocation2 + $0x24] sm:$0xe]
        %v1641 = vld [vmem:[#allocation2 + $0x30] sm:$0xe]
        %v1642 = vld [vmem:[#allocation2 + $0x3c] sm:$0xe]
        %v1643 = vld [vmem:[#allocation2 + $0x48] sm:$0xe]
        %v1644 = vld [vmem:[#allocation2 + $0x54] sm:$0xe]
        %v1645 = vld [vmem:[#allocation2 + $0x60] sm:$0xe]
        %v1646 = vld [vmem:[#allocation2 + $0x6c] sm:$0xe]
        %v1647 = vld [vmem:[#allocation2 + $0x78] sm:$0xe]
        %v1648 = vld [vmem:[#allocation2 + $0x84] sm:$0xe]
        %v1649 = vld [vmem:[#allocation2 + $0x90] sm:$0xe]
        %v1650 = vld [vmem:[#allocation2 + $0x9c] sm:$0xe]
        %v1651 = vld [vmem:[#allocation2 + $0xa8] sm:$0xe]
        %v1652 = vld [vmem:[#allocation2 + $0xb4] sm:$0xe]
        %v1653 = vld [vmem:[#allocation2 + $0xc0] sm:$0xe]
        %v1654 = vld [vmem:[#allocation2 + $0xcc] sm:$0xe]
        %v1691 = vunpack.c.l.b16 %v1583
        %v1692 = vunpack.c.l.b16 %v1584
        %v1693 = vunpack.c.l.b16 %v1585
        %v1694 = vunpack.c.l.b16 %v1586
        %v1695 = vunpack.c.l.b16 %v1587
        %v1696 = vunpack.c.l.b16 %v1588
        %v1697 = vunpack.c.l.b16 %v1589
        %v1698 = vunpack.c.l.b16 %v1590
        %v1699 = vunpack.c.l.b16 %v1591
        %v1700 = vunpack.c.l.b16 %v1592
        %v1701 = vunpack.c.l.b16 %v1593
        %v1702 = vunpack.c.l.b16 %v1594
        %v1703 = vunpack.c.l.b16 %v1595
        %v1704 = vunpack.c.l.b16 %v1596
        %v1705 = vunpack.c.l.b16 %v1597
        %v1706 = vunpack.c.l.b16 %v1598
        %v1707 = vunpack.c.l.b16 %v1599
        %v1708 = vunpack.c.l.b16 %v1600
        %v1709 = vunpack.c.l.b16 %v1601
        %v1710 = vunpack.c.l.b16 %v1602
        %v1711 = vunpack.c.l.b16 %v1603
        %v1712 = vunpack.c.l.b16 %v1604
        %v1713 = vunpack.c.l.b16 %v1605
        %v1714 = vunpack.c.l.b16 %v1606
        %v1715 = vunpack.c.l.b16 %v1607
        %v1716 = vunpack.c.l.b16 %v1608
        %v1717 = vunpack.c.l.b16 %v1609
        %v1718 = vunpack.c.l.b16 %v1610
        %v1719 = vunpack.c.l.b16 %v1611
        %v1720 = vunpack.c.l.b16 %v1612
        %v1721 = vunpack.c.l.b16 %v1613
        %v1722 = vunpack.c.l.b16 %v1614
        %v1723 = vunpack.c.l.b16 %v1615
        %v1724 = vunpack.c.l.b16 %v1616
        %v1725 = vunpack.c.l.b16 %v1617
        %v1726 = vunpack.c.l.b16 %v1618
        %v1727 = vpack.c.b16 %v1692, %v1691
        %v1728 = vpack.c.b16 %v1694, %v1693
        %v1729 = vpack.c.b16 %v1696, %v1695
        %v1730 = vpack.c.b16 %v1698, %v1697
        %v1731 = vpack.c.b16 %v1700, %v1699
        %v1732 = vpack.c.b16 %v1702, %v1701
        %v1733 = vpack.c.b16 %v1704, %v1703
        %v1734 = vpack.c.b16 %v1706, %v1705
        %v1735 = vpack.c.b16 %v1708, %v1707
        %v1736 = vpack.c.b16 %v1710, %v1709
        %v1737 = vpack.c.b16 %v1712, %v1711
        %v1738 = vpack.c.b16 %v1714, %v1713
        %v1739 = vpack.c.b16 %v1716, %v1715
        %v1740 = vpack.c.b16 %v1718, %v1717
        %v1741 = vpack.c.b16 %v1720, %v1719
        %v1742 = vpack.c.b16 %v1722, %v1721
        %v1743 = vpack.c.b16 %v1724, %v1723
        %v1744 = vpack.c.b16 %v1726, %v1725
        %v1781 = vunpack.c.l.b16 %v1619
        %v1782 = vunpack.c.l.b16 %v1620
        %v1783 = vunpack.c.l.b16 %v1621
        %v1784 = vunpack.c.l.b16 %v1622
        %v1785 = vunpack.c.l.b16 %v1623
        %v1786 = vunpack.c.l.b16 %v1624
        %v1787 = vunpack.c.l.b16 %v1625
        %v1788 = vunpack.c.l.b16 %v1626
        %v1789 = vunpack.c.l.b16 %v1627
        %v1790 = vunpack.c.l.b16 %v1628
        %v1791 = vunpack.c.l.b16 %v1629
        %v1792 = vunpack.c.l.b16 %v1630
        %v1793 = vunpack.c.l.b16 %v1631
        %v1794 = vunpack.c.l.b16 %v1632
        %v1795 = vunpack.c.l.b16 %v1633
        %v1796 = vunpack.c.l.b16 %v1634
        %v1797 = vunpack.c.l.b16 %v1635
        %v1798 = vunpack.c.l.b16 %v1636
        %v1799 = vpack.c.b16 %v1781, %v1781
        %v1800 = vpack.c.b16 %v1782, %v1782
        %v1801 = vpack.c.b16 %v1783, %v1783
        %v1802 = vpack.c.b16 %v1784, %v1784
        %v1803 = vpack.c.b16 %v1785, %v1785
        %v1804 = vpack.c.b16 %v1786, %v1786
        %v1805 = vpack.c.b16 %v1787, %v1787
        %v1806 = vpack.c.b16 %v1788, %v1788
        %v1807 = vpack.c.b16 %v1789, %v1789
        %v1808 = vpack.c.b16 %v1790, %v1790
        %v1809 = vpack.c.b16 %v1791, %v1791
        %v1810 = vpack.c.b16 %v1792, %v1792
        %v1811 = vpack.c.b16 %v1793, %v1793
        %v1812 = vpack.c.b16 %v1794, %v1794
        %v1813 = vpack.c.b16 %v1795, %v1795
        %v1814 = vpack.c.b16 %v1796, %v1796
        %v1815 = vpack.c.b16 %v1797, %v1797
        %v1816 = vpack.c.b16 %v1798, %v1798
        %vm1817 = vsmask.f32 7424
        %v1819 = vshrl.u32 %v1727, 16
        %v1821 = vshll.u32 %v1727, 16
        %v1823 = vrot.slane %v1821, 1
        %v1824 = vor.u32 %v1819, %v1823
        %v1826 = vshll.u32 %v1799, 16
        %v1828 = vrot.slane %v1826, 1
        %v1829 = vsel %vm1817, %v1824, %v1828
        %v1831 = vshrl.u32 %v1728, 16
        %v1833 = vshll.u32 %v1728, 16
        %v1835 = vrot.slane %v1833, 1
        %v1836 = vor.u32 %v1831, %v1835
        %v1838 = vshll.u32 %v1800, 16
        %v1840 = vrot.slane %v1838, 1
        %v1841 = vsel %vm1817, %v1836, %v1840
        %v1843 = vshrl.u32 %v1729, 16
        %v1845 = vshll.u32 %v1729, 16
        %v1847 = vrot.slane %v1845, 1
        %v1848 = vor.u32 %v1843, %v1847
        %v1850 = vshll.u32 %v1801, 16
        %v1852 = vrot.slane %v1850, 1
        %v1853 = vsel %vm1817, %v1848, %v1852
        %v1855 = vshrl.u32 %v1730, 16
        %v1857 = vshll.u32 %v1730, 16
        %v1859 = vrot.slane %v1857, 1
        %v1860 = vor.u32 %v1855, %v1859
        %v1862 = vshll.u32 %v1802, 16
        %v1864 = vrot.slane %v1862, 1
        %v1865 = vsel %vm1817, %v1860, %v1864
        %v1867 = vshrl.u32 %v1731, 16
        %v1869 = vshll.u32 %v1731, 16
        %v1871 = vrot.slane %v1869, 1
        %v1872 = vor.u32 %v1867, %v1871
        %v1874 = vshll.u32 %v1803, 16
        %v1876 = vrot.slane %v1874, 1
        %v1877 = vsel %vm1817, %v1872, %v1876
        %v1879 = vshrl.u32 %v1732, 16
        %v1881 = vshll.u32 %v1732, 16
        %v1883 = vrot.slane %v1881, 1
        %v1884 = vor.u32 %v1879, %v1883
        %v1886 = vshll.u32 %v1804, 16
        %v1888 = vrot.slane %v1886, 1
        %v1889 = vsel %vm1817, %v1884, %v1888
        %v1891 = vshrl.u32 %v1733, 16
        %v1893 = vshll.u32 %v1733, 16
        %v1895 = vrot.slane %v1893, 1
        %v1896 = vor.u32 %v1891, %v1895
        %v1898 = vshll.u32 %v1805, 16
        %v1900 = vrot.slane %v1898, 1
        %v1901 = vsel %vm1817, %v1896, %v1900
        %v1903 = vshrl.u32 %v1734, 16
        %v1905 = vshll.u32 %v1734, 16
        %v1907 = vrot.slane %v1905, 1
        %v1908 = vor.u32 %v1903, %v1907
        %v1910 = vshll.u32 %v1806, 16
        %v1912 = vrot.slane %v1910, 1
        %v1913 = vsel %vm1817, %v1908, %v1912
        %v1915 = vshrl.u32 %v1735, 16
        %v1917 = vshll.u32 %v1735, 16
        %v1919 = vrot.slane %v1917, 1
        %v1920 = vor.u32 %v1915, %v1919
        %v1922 = vshll.u32 %v1807, 16
        %v1924 = vrot.slane %v1922, 1
        %v1925 = vsel %vm1817, %v1920, %v1924
        %v1927 = vshrl.u32 %v1736, 16
        %v1929 = vshll.u32 %v1736, 16
        %v1931 = vrot.slane %v1929, 1
        %v1932 = vor.u32 %v1927, %v1931
        %v1934 = vshll.u32 %v1808, 16
        %v1936 = vrot.slane %v1934, 1
        %v1937 = vsel %vm1817, %v1932, %v1936
        %v1939 = vshrl.u32 %v1737, 16
        %v1941 = vshll.u32 %v1737, 16
        %v1943 = vrot.slane %v1941, 1
        %v1944 = vor.u32 %v1939, %v1943
        %v1946 = vshll.u32 %v1809, 16
        %v1948 = vrot.slane %v1946, 1
        %v1949 = vsel %vm1817, %v1944, %v1948
        %v1951 = vshrl.u32 %v1738, 16
        %v1953 = vshll.u32 %v1738, 16
        %v1955 = vrot.slane %v1953, 1
        %v1956 = vor.u32 %v1951, %v1955
        %v1958 = vshll.u32 %v1810, 16
        %v1960 = vrot.slane %v1958, 1
        %v1961 = vsel %vm1817, %v1956, %v1960
        %v1963 = vshrl.u32 %v1739, 16
        %v1965 = vshll.u32 %v1739, 16
        %v1967 = vrot.slane %v1965, 1
        %v1968 = vor.u32 %v1963, %v1967
        %v1970 = vshll.u32 %v1811, 16
        %v1972 = vrot.slane %v1970, 1
        %v1973 = vsel %vm1817, %v1968, %v1972
        %v1975 = vshrl.u32 %v1740, 16
        %v1977 = vshll.u32 %v1740, 16
        %v1979 = vrot.slane %v1977, 1
        %v1980 = vor.u32 %v1975, %v1979
        %v1982 = vshll.u32 %v1812, 16
        %v1984 = vrot.slane %v1982, 1
        %v1985 = vsel %vm1817, %v1980, %v1984
        %v1987 = vshrl.u32 %v1741, 16
        %v1989 = vshll.u32 %v1741, 16
        %v1991 = vrot.slane %v1989, 1
        %v1992 = vor.u32 %v1987, %v1991
        %v1994 = vshll.u32 %v1813, 16
        %v1996 = vrot.slane %v1994, 1
        %v1997 = vsel %vm1817, %v1992, %v1996
        %v1999 = vshrl.u32 %v1742, 16
        %v2001 = vshll.u32 %v1742, 16
        %v2003 = vrot.slane %v2001, 1
        %v2004 = vor.u32 %v1999, %v2003
        %v2006 = vshll.u32 %v1814, 16
        %v2008 = vrot.slane %v2006, 1
        %v2009 = vsel %vm1817, %v2004, %v2008
        %v2011 = vshrl.u32 %v1743, 16
        %v2013 = vshll.u32 %v1743, 16
        %v2015 = vrot.slane %v2013, 1
        %v2016 = vor.u32 %v2011, %v2015
        %v2018 = vshll.u32 %v1815, 16
        %v2020 = vrot.slane %v2018, 1
        %v2021 = vsel %vm1817, %v2016, %v2020
        %v2023 = vshrl.u32 %v1744, 16
        %v2025 = vshll.u32 %v1744, 16
        %v2027 = vrot.slane %v2025, 1
        %v2028 = vor.u32 %v2023, %v2027
        %v2030 = vshll.u32 %v1816, 16
        %v2032 = vrot.slane %v2030, 1
        %v2033 = vsel %vm1817, %v2028, %v2032
        %v2070 = vunpack.c.l.b16 %v1637
        %v2071 = vunpack.c.l.b16 %v1638
        %v2072 = vunpack.c.l.b16 %v1639
        %v2073 = vunpack.c.l.b16 %v1640
        %v2074 = vunpack.c.l.b16 %v1641
        %v2075 = vunpack.c.l.b16 %v1642
        %v2076 = vunpack.c.l.b16 %v1643
        %v2077 = vunpack.c.l.b16 %v1644
        %v2078 = vunpack.c.l.b16 %v1645
        %v2079 = vunpack.c.l.b16 %v1646
        %v2080 = vunpack.c.l.b16 %v1647
        %v2081 = vunpack.c.l.b16 %v1648
        %v2082 = vunpack.c.l.b16 %v1649
        %v2083 = vunpack.c.l.b16 %v1650
        %v2084 = vunpack.c.l.b16 %v1651
        %v2085 = vunpack.c.l.b16 %v1652
        %v2086 = vunpack.c.l.b16 %v1653
        %v2087 = vunpack.c.l.b16 %v1654
        %v2088 = vpack.c.b16 %v1692, %v2070
        %v2089 = vpack.c.b16 %v1694, %v2071
        %v2090 = vpack.c.b16 %v1696, %v2072
        %v2091 = vpack.c.b16 %v1698, %v2073
        %v2092 = vpack.c.b16 %v1700, %v2074
        %v2093 = vpack.c.b16 %v1702, %v2075
        %v2094 = vpack.c.b16 %v1704, %v2076
        %v2095 = vpack.c.b16 %v1706, %v2077
        %v2096 = vpack.c.b16 %v1708, %v2078
        %v2097 = vpack.c.b16 %v1710, %v2079
        %v2098 = vpack.c.b16 %v1712, %v2080
        %v2099 = vpack.c.b16 %v1714, %v2081
        %v2100 = vpack.c.b16 %v1716, %v2082
        %v2101 = vpack.c.b16 %v1718, %v2083
        %v2102 = vpack.c.b16 %v1720, %v2084
        %v2103 = vpack.c.b16 %v1722, %v2085
        %v2104 = vpack.c.b16 %v1724, %v2086
        %v2105 = vpack.c.b16 %v1726, %v2087
        %vm2106 = vcmask 1046528
        %v2107 = vrot.slane %v2088, 1
        %v2108 = vrot.slane %v1799, 1
        %v2109 = vsel %vm2106, %v2107, %v2108
        %v2110 = vrot.slane %v2089, 1
        %v2111 = vrot.slane %v1800, 1
        %v2112 = vsel %vm2106, %v2110, %v2111
        %v2113 = vrot.slane %v2090, 1
        %v2114 = vrot.slane %v1801, 1
        %v2115 = vsel %vm2106, %v2113, %v2114
        %v2116 = vrot.slane %v2091, 1
        %v2117 = vrot.slane %v1802, 1
        %v2118 = vsel %vm2106, %v2116, %v2117
        %v2119 = vrot.slane %v2092, 1
        %v2120 = vrot.slane %v1803, 1
        %v2121 = vsel %vm2106, %v2119, %v2120
        %v2122 = vrot.slane %v2093, 1
        %v2123 = vrot.slane %v1804, 1
        %v2124 = vsel %vm2106, %v2122, %v2123
        %v2125 = vrot.slane %v2094, 1
        %v2126 = vrot.slane %v1805, 1
        %v2127 = vsel %vm2106, %v2125, %v2126
        %v2128 = vrot.slane %v2095, 1
        %v2129 = vrot.slane %v1806, 1
        %v2130 = vsel %vm2106, %v2128, %v2129
        %v2131 = vrot.slane %v2096, 1
        %v2132 = vrot.slane %v1807, 1
        %v2133 = vsel %vm2106, %v2131, %v2132
        %v2134 = vrot.slane %v2097, 1
        %v2135 = vrot.slane %v1808, 1
        %v2136 = vsel %vm2106, %v2134, %v2135
        %v2137 = vrot.slane %v2098, 1
        %v2138 = vrot.slane %v1809, 1
        %v2139 = vsel %vm2106, %v2137, %v2138
        %v2140 = vrot.slane %v2099, 1
        %v2141 = vrot.slane %v1810, 1
        %v2142 = vsel %vm2106, %v2140, %v2141
        %v2143 = vrot.slane %v2100, 1
        %v2144 = vrot.slane %v1811, 1
        %v2145 = vsel %vm2106, %v2143, %v2144
        %v2146 = vrot.slane %v2101, 1
        %v2147 = vrot.slane %v1812, 1
        %v2148 = vsel %vm2106, %v2146, %v2147
        %v2149 = vrot.slane %v2102, 1
        %v2150 = vrot.slane %v1813, 1
        %v2151 = vsel %vm2106, %v2149, %v2150
        %v2152 = vrot.slane %v2103, 1
        %v2153 = vrot.slane %v1814, 1
        %v2154 = vsel %vm2106, %v2152, %v2153
        %v2155 = vrot.slane %v2104, 1
        %v2156 = vrot.slane %v1815, 1
        %v2157 = vsel %vm2106, %v2155, %v2156
        %v2158 = vrot.slane %v2105, 1
        %v2159 = vrot.slane %v1816, 1
        %v2160 = vsel %vm2106, %v2158, %v2159
        %v2179 = vld [vmem:[#allocation8] sm:$0xf]
        %v2180 = vld [vmem:[#allocation8 + $0x4] sm:$0xf]
        %v2181 = vld [vmem:[#allocation8 + $0x8] sm:$0xf]
        %v2182 = vld [vmem:[#allocation8 + $0xc] sm:$0xf]
        %v2183 = vld [vmem:[#allocation8 + $0x10] sm:$0xf]
        %v2184 = vld [vmem:[#allocation8 + $0x14] sm:$0xf]
        %v2185 = vld [vmem:[#allocation8 + $0x18] sm:$0xf]
        %v2186 = vld [vmem:[#allocation8 + $0x1c] sm:$0xf]
        %v2187 = vld [vmem:[#allocation8 + $0x20] sm:$0xf]
        %v2188 = vld [vmem:[#allocation8 + $0x24] sm:$0xf]
        %v2189 = vld [vmem:[#allocation8 + $0x28] sm:$0xf]
        %v2190 = vld [vmem:[#allocation8 + $0x2c] sm:$0xf]
        %v2191 = vld [vmem:[#allocation8 + $0x30] sm:$0xf]
        %v2192 = vld [vmem:[#allocation8 + $0x34] sm:$0xf]
        %v2193 = vld [vmem:[#allocation8 + $0x38] sm:$0xf]
        %v2194 = vld [vmem:[#allocation8 + $0x3c] sm:$0xf]
        %v2195 = vld [vmem:[#allocation8 + $0x40] sm:$0xf]
        %v2196 = vld [vmem:[#allocation8 + $0x44] sm:$0xf]
        %v2197 = vld [vmem:[#allocation8 + $0x48] sm:$0xf]
        %v2198 = vld [vmem:[#allocation8 + $0x4c] sm:$0xf]
        %v2199 = vld [vmem:[#allocation8 + $0x50] sm:$0xf]
        %v2200 = vld [vmem:[#allocation8 + $0x54] sm:$0xf]
        %v2201 = vld [vmem:[#allocation8 + $0x58] sm:$0xf]
        %v2202 = vld [vmem:[#allocation8 + $0x5c] sm:$0xf]
        %v2203 = vld [vmem:[#allocation8 + $0x60] sm:$0xf]
        %v2204 = vld [vmem:[#allocation8 + $0x64] sm:$0xf]
        %v2205 = vld [vmem:[#allocation8 + $0x68] sm:$0xf]
        %v2206 = vld [vmem:[#allocation8 + $0x6c] sm:$0xf]
        %v2207 = vld [vmem:[#allocation8 + $0x70] sm:$0xf]
        %v2208 = vld [vmem:[#allocation8 + $0x74] sm:$0xf]
        %v2209 = vld [vmem:[#allocation8 + $0x78] sm:$0xf]
        %v2210 = vld [vmem:[#allocation8 + $0x7c] sm:$0xf]
        %v2211 = vld [vmem:[#allocation8 + $0x80] sm:$0xf]
        %v2212 = vld [vmem:[#allocation8 + $0x84] sm:$0xf]
        %v2213 = vld [vmem:[#allocation8 + $0x88] sm:$0xf]
        %v2214 = vld [vmem:[#allocation8 + $0x8c] sm:$0xf]
        %v2215 = vld [vmem:[#allocation8 + $0x90] sm:$0xf]
        %v2216 = vld [vmem:[#allocation8 + $0x94] sm:$0xf]
        %v2217 = vld [vmem:[#allocation8 + $0x98] sm:$0xf]
        %v2218 = vld [vmem:[#allocation8 + $0x9c] sm:$0xf]
        %v2219 = vld [vmem:[#allocation8 + $0xa0] sm:$0xf]
        %v2220 = vld [vmem:[#allocation8 + $0xa4] sm:$0xf]
        %v2221 = vld [vmem:[#allocation8 + $0xa8] sm:$0xf]
        %v2222 = vld [vmem:[#allocation8 + $0xac] sm:$0xf]
        %v2223 = vld [vmem:[#allocation8 + $0xb0] sm:$0xf]
        %v2224 = vld [vmem:[#allocation8 + $0xb4] sm:$0xf]
        %v2225 = vld [vmem:[#allocation8 + $0xb8] sm:$0xf]
        %v2226 = vld [vmem:[#allocation8 + $0xbc] sm:$0xf]
        %s2227 = scalar_lea.vmem [#allocation8], 192
        %v2228 = vld [vmem:[%s2227] sm:$0xf]
        %v2229 = vld [vmem:[%s2227 + $0x4] sm:$0xf]
        %v2230 = vld [vmem:[%s2227 + $0x8] sm:$0xf]
        %v2231 = vld [vmem:[%s2227 + $0xc] sm:$0xf]
        %v2232 = vld [vmem:[%s2227 + $0x10] sm:$0xf]
        %v2233 = vld [vmem:[%s2227 + $0x14] sm:$0xf]
        %v2234 = vld [vmem:[%s2227 + $0x18] sm:$0xf]
        %v2235 = vld [vmem:[%s2227 + $0x1c] sm:$0xf]
        %v2236 = vld [vmem:[%s2227 + $0x20] sm:$0xf]
        %v2237 = vld [vmem:[%s2227 + $0x24] sm:$0xf]
        %v2238 = vld [vmem:[%s2227 + $0x28] sm:$0xf]
        %v2239 = vld [vmem:[%s2227 + $0x2c] sm:$0xf]
        %v2240 = vld [vmem:[%s2227 + $0x30] sm:$0xf]
        %v2241 = vld [vmem:[%s2227 + $0x34] sm:$0xf]
        %v2242 = vld [vmem:[%s2227 + $0x38] sm:$0xf]
        %v2243 = vld [vmem:[%s2227 + $0x3c] sm:$0xf]
        %v2244 = vld [vmem:[%s2227 + $0x40] sm:$0xf]
        %v2245 = vld [vmem:[%s2227 + $0x44] sm:$0xf]
        %v2246 = vld [vmem:[%s2227 + $0x48] sm:$0xf]
        %v2247 = vld [vmem:[%s2227 + $0x4c] sm:$0xf]
        %v2248 = vld [vmem:[%s2227 + $0x50] sm:$0xf]
        %v2249 = vld [vmem:[%s2227 + $0x54] sm:$0xf]
        %v2250 = vld [vmem:[%s2227 + $0x58] sm:$0xf]
        %v2251 = vld [vmem:[%s2227 + $0x5c] sm:$0xf]
        %v2252 = vld [vmem:[%s2227 + $0x60] sm:$0xf]
        %v2253 = vld [vmem:[%s2227 + $0x64] sm:$0xf]
        %v2254 = vld [vmem:[%s2227 + $0x68] sm:$0xf]
        %v2255 = vld [vmem:[%s2227 + $0x6c] sm:$0xf]
        %v2256 = vld [vmem:[%s2227 + $0x70] sm:$0xf]
        %v2257 = vld [vmem:[%s2227 + $0x74] sm:$0xf]
        %v2258 = vld [vmem:[%s2227 + $0x78] sm:$0xf]
        %v2259 = vld [vmem:[%s2227 + $0x7c] sm:$0xf]
        %v2260 = vld [vmem:[%s2227 + $0x80] sm:$0xf]
        %v2261 = vld [vmem:[%s2227 + $0x84] sm:$0xf]
        %v2262 = vld [vmem:[%s2227 + $0x88] sm:$0xf]
        %v2263 = vld [vmem:[%s2227 + $0x8c] sm:$0xf]
        %v2264 = vld [vmem:[%s2227 + $0x90] sm:$0xf]
        %v2265 = vld [vmem:[%s2227 + $0x94] sm:$0xf]
        %v2266 = vld [vmem:[%s2227 + $0x98] sm:$0xf]
        %v2267 = vld [vmem:[%s2227 + $0x9c] sm:$0xf]
        %v2268 = vld [vmem:[%s2227 + $0xa0] sm:$0xf]
        %v2269 = vld [vmem:[%s2227 + $0xa4] sm:$0xf]
        %v2270 = vld [vmem:[%s2227 + $0xa8] sm:$0xf]
        %v2271 = vld [vmem:[%s2227 + $0xac] sm:$0xf]
        %v2272 = vld [vmem:[%s2227 + $0xb0] sm:$0xf]
        %v2273 = vld [vmem:[%s2227 + $0xb4] sm:$0xf]
        %v2274 = vld [vmem:[%s2227 + $0xb8] sm:$0xf]
        %v2275 = vld [vmem:[%s2227 + $0xbc] sm:$0xf]
        %v2324 = vunpack.c.l.b16 %v2228
        %v2325 = vunpack.c.l.b16 %v2229
        %v2326 = vunpack.c.l.b16 %v2230
        %v2327 = vunpack.c.l.b16 %v2231
        %v2328 = vunpack.c.l.b16 %v2232
        %v2329 = vunpack.c.l.b16 %v2233
        %v2330 = vunpack.c.l.b16 %v2234
        %v2331 = vunpack.c.l.b16 %v2235
        %v2332 = vunpack.c.l.b16 %v2236
        %v2333 = vunpack.c.l.b16 %v2237
        %v2334 = vunpack.c.l.b16 %v2238
        %v2335 = vunpack.c.l.b16 %v2239
        %v2336 = vunpack.c.l.b16 %v2240
        %v2337 = vunpack.c.l.b16 %v2241
        %v2338 = vunpack.c.l.b16 %v2242
        %v2339 = vunpack.c.l.b16 %v2243
        %v2340 = vunpack.c.l.b16 %v2244
        %v2341 = vunpack.c.l.b16 %v2245
        %v2342 = vunpack.c.l.b16 %v2246
        %v2343 = vunpack.c.l.b16 %v2247
        %v2344 = vunpack.c.l.b16 %v2248
        %v2345 = vunpack.c.l.b16 %v2249
        %v2346 = vunpack.c.l.b16 %v2250
        %v2347 = vunpack.c.l.b16 %v2251
        %v2348 = vunpack.c.l.b16 %v2252
        %v2349 = vunpack.c.l.b16 %v2253
        %v2350 = vunpack.c.l.b16 %v2254
        %v2351 = vunpack.c.l.b16 %v2255
        %v2352 = vunpack.c.l.b16 %v2256
        %v2353 = vunpack.c.l.b16 %v2257
        %v2354 = vunpack.c.l.b16 %v2258
        %v2355 = vunpack.c.l.b16 %v2259
        %v2356 = vunpack.c.l.b16 %v2260
        %v2357 = vunpack.c.l.b16 %v2261
        %v2358 = vunpack.c.l.b16 %v2262
        %v2359 = vunpack.c.l.b16 %v2263
        %v2360 = vunpack.c.l.b16 %v2264
        %v2361 = vunpack.c.l.b16 %v2265
        %v2362 = vunpack.c.l.b16 %v2266
        %v2363 = vunpack.c.l.b16 %v2267
        %v2364 = vunpack.c.l.b16 %v2268
        %v2365 = vunpack.c.l.b16 %v2269
        %v2366 = vunpack.c.l.b16 %v2270
        %v2367 = vunpack.c.l.b16 %v2271
        %v2368 = vunpack.c.l.b16 %v2272
        %v2369 = vunpack.c.l.b16 %v2273
        %v2370 = vunpack.c.l.b16 %v2274
        %v2371 = vunpack.c.l.b16 %v2275
        %v2372 = vpack.c.b16 %v2325, %v2324
        %v2373 = vpack.c.b16 %v2327, %v2326
        %v2374 = vpack.c.b16 %v2329, %v2328
        %v2375 = vpack.c.b16 %v2331, %v2330
        %v2376 = vpack.c.b16 %v2333, %v2332
        %v2377 = vpack.c.b16 %v2335, %v2334
        %v2378 = vpack.c.b16 %v2337, %v2336
        %v2379 = vpack.c.b16 %v2339, %v2338
        %v2380 = vpack.c.b16 %v2341, %v2340
        %v2381 = vpack.c.b16 %v2343, %v2342
        %v2382 = vpack.c.b16 %v2345, %v2344
        %v2383 = vpack.c.b16 %v2347, %v2346
        %v2384 = vpack.c.b16 %v2349, %v2348
        %v2385 = vpack.c.b16 %v2351, %v2350
        %v2386 = vpack.c.b16 %v2353, %v2352
        %v2387 = vpack.c.b16 %v2355, %v2354
        %v2388 = vpack.c.b16 %v2357, %v2356
        %v2389 = vpack.c.b16 %v2359, %v2358
        %v2390 = vpack.c.b16 %v2361, %v2360
        %v2391 = vpack.c.b16 %v2363, %v2362
        %v2392 = vpack.c.b16 %v2365, %v2364
        %v2393 = vpack.c.b16 %v2367, %v2366
        %v2394 = vpack.c.b16 %v2369, %v2368
        %v2395 = vpack.c.b16 %v2371, %v2370
        %2420 = vmatprep.subr.bf16.mxu0 0
        %2421 = vmatpush1.bf16.msra.mxu0 %v2372
        %2422 = vmatprep.subr.bf16.mxu0 0
        %2423 = vmatpush1.bf16.msra.mxu0 %v2373
        %2424 = vmatprep.subr.bf16.mxu0 0
        %2425 = vmatpush1.bf16.msra.mxu0 %v2374
        %2426 = vmatprep.subr.bf16.mxu0 0
        %2427 = vmatpush1.bf16.msra.mxu0 %v2375
        %2428 = vmatprep.subr.bf16.mxu0 0
        %2429 = vmatpush1.bf16.msra.mxu0 %v2376
        %2430 = vmatprep.subr.bf16.mxu0 0
        %2431 = vmatpush1.bf16.msra.mxu0 %v2377
        %2432 = vmatprep.subr.bf16.mxu0 0
        %2433 = vmatpush1.bf16.msra.mxu0 %v2378
        %2434 = vmatprep.subr.bf16.mxu0 0
        %2435 = vmatpush1.bf16.msra.mxu0 %v2379
        %2436 = vmatprep.subr.bf16.mxu0 0
        %2437 = vmatpush1.bf16.msra.mxu0 %v2380
        %2438 = vmatprep.subr.bf16.mxu0 0
        %2439 = vmatpush1.bf16.msra.mxu0 %v2381
        %2440 = vmatprep.subr.bf16.mxu0 0
        %2441 = vmatpush1.bf16.msra.mxu0 %v2382
        %2442 = vmatprep.subr.bf16.mxu0 0
        %2443 = vmatpush1.bf16.msra.mxu0 %v2383
        %2444 = vmatprep.subr.bf16.mxu0 0
        %2445 = vmatpush1.bf16.msra.mxu0 %v2384
        %2446 = vmatprep.subr.bf16.mxu0 0
        %2447 = vmatpush1.bf16.msra.mxu0 %v2385
        %2448 = vmatprep.subr.bf16.mxu0 0
        %2449 = vmatpush1.bf16.msra.mxu0 %v2386
        %2450 = vmatprep.subr.bf16.mxu0 0
        %2451 = vmatpush1.bf16.msra.mxu0 %v2387
        %2452 = vmatprep.mubr.bf16.mxu0 %v1841
        %2453 = vmatmul.mubr.bf16.gmra.mrb[0].mxu0 %v1728
        %v2454 = vpop.f32.mrb[0].mxu0
        %v2455 = vadd.f32 0.0, %v2454
        %v2456 = vpop.f32.mrb[0].mxu0
        %v2457 = vpop.f32.mrb[0].mxu0
        %v2458 = vadd.f32 0.0, %v2457
        %v2459 = vpop.f32.mrb[0].mxu0
        %2460 = vmatprep.mubr.bf16.mxu0 %v1853
        %2461 = vmatmul.mubr.bf16.gmra.mrb[0].mxu0 %v1729
        %v2462 = vpop.f32.mrb[0].mxu0
        %v2463 = vadd.f32 0.0, %v2462
        %v2464 = vpop.f32.mrb[0].mxu0
        %v2465 = vpop.f32.mrb[0].mxu0
        %v2466 = vadd.f32 0.0, %v2465
        %v2467 = vpop.f32.mrb[0].mxu0
        %2468 = vmatprep.mubr.bf16.mxu0 %v1865
        %2469 = vmatmul.mubr.bf16.gmra.mrb[0].mxu0 %v1730
        %v2470 = vpop.f32.mrb[0].mxu0
        %v2471 = vadd.f32 0.0, %v2470
        %v2472 = vpop.f32.mrb[0].mxu0
        %v2473 = vpop.f32.mrb[0].mxu0
        %v2474 = vadd.f32 0.0, %v2473
        %v2475 = vpop.f32.mrb[0].mxu0
        %2476 = vmatprep.mubr.bf16.mxu0 %v1877
        %2477 = vmatmul.mubr.bf16.gmra.mrb[0].mxu0 %v1731
        %v2478 = vpop.f32.mrb[0].mxu0
        %v2479 = vadd.f32 0.0, %v2478
        %v2480 = vpop.f32.mrb[0].mxu0
        %v2481 = vpop.f32.mrb[0].mxu0
        %v2482 = vadd.f32 0.0, %v2481
        %v2483 = vpop.f32.mrb[0].mxu0
        %2484 = vmatprep.mubr.bf16.mxu0 %v1889
        %2485 = vmatmul.mubr.bf16.gmra.mrb[0].mxu0 %v1732
        %v2486 = vpop.f32.mrb[0].mxu0
        %v2487 = vadd.f32 0.0, %v2486
        %v2488 = vpop.f32.mrb[0].mxu0
        %v2489 = vpop.f32.mrb[0].mxu0
        %v2490 = vadd.f32 0.0, %v2489
        %v2491 = vpop.f32.mrb[0].mxu0
        %2492 = vmatprep.mubr.bf16.mxu0 %v1901
        %2493 = vmatmul.mubr.bf16.gmra.mrb[0].mxu0 %v1733
        %v2494 = vpop.f32.mrb[0].mxu0
        %v2495 = vadd.f32 0.0, %v2494
        %v2496 = vpop.f32.mrb[0].mxu0
        %v2497 = vpop.f32.mrb[0].mxu0
        %v2498 = vadd.f32 0.0, %v2497
        %v2499 = vpop.f32.mrb[0].mxu0
        %2500 = vmatprep.mubr.bf16.mxu0 %v1913
        %2501 = vmatmul.mubr.bf16.gmra.mrb[0].mxu0 %v1734
        %v2502 = vpop.f32.mrb[0].mxu0
        %v2503 = vadd.f32 0.0, %v2502
        %v2504 = vpop.f32.mrb[0].mxu0
        %v2505 = vpop.f32.mrb[0].mxu0
        %v2506 = vadd.f32 0.0, %v2505
        %v2507 = vpop.f32.mrb[0].mxu0
        %2508 = vmatprep.mubr.bf16.mxu0 %v1925
        %2509 = vmatmul.mubr.bf16.gmra.mrb[0].mxu0 %v1735
        %v2510 = vpop.f32.mrb[0].mxu0
        %v2511 = vadd.f32 0.0, %v2510
        %v2512 = vpop.f32.mrb[0].mxu0
        %v2513 = vpop.f32.mrb[0].mxu0
        %v2514 = vadd.f32 0.0, %v2513
        %v2515 = vpop.f32.mrb[0].mxu0
        %2516 = vmatprep.mubr.bf16.mxu0 %v1937
        %2517 = vmatmul.mubr.bf16.gmra.mrb[0].mxu0 %v1736
        %v2518 = vpop.f32.mrb[0].mxu0
        %v2519 = vadd.f32 0.0, %v2518
        %v2520 = vpop.f32.mrb[0].mxu0
        %v2521 = vpop.f32.mrb[0].mxu0
        %v2522 = vadd.f32 0.0, %v2521
        %v2523 = vpop.f32.mrb[0].mxu0
        %2524 = vmatprep.mubr.bf16.mxu0 %v1949
        %2525 = vmatmul.mubr.bf16.gmra.mrb[0].mxu0 %v1737
        %v2526 = vpop.f32.mrb[0].mxu0
        %v2527 = vadd.f32 0.0, %v2526
        %v2528 = vpop.f32.mrb[0].mxu0
        %v2529 = vpop.f32.mrb[0].mxu0
        %v2530 = vadd.f32 0.0, %v2529
        %v2531 = vpop.f32.mrb[0].mxu0
        %2532 = vmatprep.mubr.bf16.mxu0 %v1961
        %2533 = vmatmul.mubr.bf16.gmra.mrb[0].mxu0 %v1738
        %v2534 = vpop.f32.mrb[0].mxu0
        %v2535 = vadd.f32 0.0, %v2534
        %v2536 = vpop.f32.mrb[0].mxu0
        %v2537 = vpop.f32.mrb[0].mxu0
        %v2538 = vadd.f32 0.0, %v2537
        %v2539 = vpop.f32.mrb[0].mxu0
        %2540 = vmatprep.mubr.bf16.mxu0 %v1973
        %2541 = vmatmul.mubr.bf16.gmra.mrb[0].mxu0 %v1739
        %v2542 = vpop.f32.mrb[0].mxu0
        %v2543 = vadd.f32 0.0, %v2542
        %v2544 = vpop.f32.mrb[0].mxu0
        %v2545 = vpop.f32.mrb[0].mxu0
        %v2546 = vadd.f32 0.0, %v2545
        %v2547 = vpop.f32.mrb[0].mxu0
        %2548 = vmatprep.mubr.bf16.mxu0 %v1985
        %2549 = vmatmul.mubr.bf16.gmra.mrb[0].mxu0 %v1740
        %v2550 = vpop.f32.mrb[0].mxu0
        %v2551 = vadd.f32 0.0, %v2550
        %v2552 = vpop.f32.mrb[0].mxu0
        %v2553 = vpop.f32.mrb[0].mxu0
        %v2554 = vadd.f32 0.0, %v2553
        %v2555 = vpop.f32.mrb[0].mxu0
        %2556 = vmatprep.mubr.bf16.mxu0 %v1997
        %2557 = vmatmul.mubr.bf16.gmra.mrb[0].mxu0 %v1741
        %v2558 = vpop.f32.mrb[0].mxu0
        %v2559 = vadd.f32 0.0, %v2558
        %v2560 = vpop.f32.mrb[0].mxu0
        %v2561 = vpop.f32.mrb[0].mxu0
        %v2562 = vadd.f32 0.0, %v2561
        %v2563 = vpop.f32.mrb[0].mxu0
        %2564 = vmatprep.mubr.bf16.mxu0 %v2009
        %2565 = vmatmul.mubr.bf16.gmra.mrb[0].mxu0 %v1742
        %v2566 = vpop.f32.mrb[0].mxu0
        %v2567 = vadd.f32 0.0, %v2566
        %v2568 = vpop.f32.mrb[0].mxu0
        %v2569 = vpop.f32.mrb[0].mxu0
        %v2570 = vadd.f32 0.0, %v2569
        %v2571 = vpop.f32.mrb[0].mxu0
        %2572 = vmatprep.mubr.bf16.mxu0 %v2021
        %2573 = vmatmul.mubr.bf16.gmra.mrb[0].mxu0 %v1743
        %v2574 = vpop.f32.mrb[0].mxu0
        %v2575 = vadd.f32 0.0, %v2574
        %v2576 = vpop.f32.mrb[0].mxu0
        %v2577 = vpop.f32.mrb[0].mxu0
        %v2578 = vadd.f32 0.0, %v2577
        %v2579 = vpop.f32.mrb[0].mxu0
        %2580 = vdwg.mxu0
        %2581 = vmatprep.subr.bf16.mxu0 0
        %2582 = vmatpush1.bf16.msra.mxu0 %v2388
        %2583 = vmatprep.subr.bf16.mxu0 0
        %2584 = vmatpush1.bf16.msra.mxu0 %v2389
        %2585 = vmatprep.subr.bf16.mxu0 0
        %2586 = vmatpush1.bf16.msra.mxu0 %v2390
        %2587 = vmatprep.subr.bf16.mxu0 0
        %2588 = vmatpush1.bf16.msra.mxu0 %v2391
        %2589 = vmatprep.subr.bf16.mxu0 0
        %2590 = vmatpush1.bf16.msra.mxu0 %v2392
        %2591 = vmatprep.subr.bf16.mxu0 0
        %2592 = vmatpush1.bf16.msra.mxu0 %v2393
        %2593 = vmatprep.subr.bf16.mxu0 0
        %2594 = vmatpush1.bf16.msra.mxu0 %v2394
        %2595 = vmatprep.subr.bf16.mxu0 0
        %2596 = vmatpush1.bf16.msra.mxu0 %v2395
        %2597 = vmatprep.subr.bf16.mxu0 0
        %2598 = vmatpush1.bf16.msra.mxu0 0
        %2599 = vmatprep.subr.bf16.mxu0 0
        %2600 = vmatpush1.bf16.msra.mxu0 0
        %2601 = vmatprep.subr.bf16.mxu0 0
        %2602 = vmatpush1.bf16.msra.mxu0 0
        %2603 = vmatprep.subr.bf16.mxu0 0
        %2604 = vmatpush1.bf16.msra.mxu0 0
        %2605 = vmatprep.subr.bf16.mxu0 0
        %2606 = vmatpush1.bf16.msra.mxu0 0
        %2607 = vmatprep.subr.bf16.mxu0 0
        %2608 = vmatpush1.bf16.msra.mxu0 0
        %2609 = vmatprep.subr.bf16.mxu0 0
        %2610 = vmatpush1.bf16.msra.mxu0 0
        %2611 = vmatprep.subr.bf16.mxu0 0
        %2612 = vmatpush1.bf16.msra.mxu0 0
        %2613 = vmatprep.mubr.bf16.mxu0 0
        %2614 = vmatmul.mubr.bf16.gmra.mrb[0].mxu0 %v2112
        %v2615 = vpop.f32.mrb[0].mxu0
        %v2616 = vadd.f32 %v2455, %v2615
        %v2617 = vpop.f32.mrb[0].mxu0
        %v2618 = vpop.f32.mrb[0].mxu0
        %v2619 = vadd.f32 %v2458, %v2618
        %v2620 = vpop.f32.mrb[0].mxu0
        %2621 = vmatprep.mubr.bf16.mxu0 0
        %2622 = vmatmul.mubr.bf16.gmra.mrb[0].mxu0 %v2115
        %v2623 = vpop.f32.mrb[0].mxu0
        %v2624 = vadd.f32 %v2463, %v2623
        %v2625 = vpop.f32.mrb[0].mxu0
        %v2626 = vpop.f32.mrb[0].mxu0
        %v2627 = vadd.f32 %v2466, %v2626
        %v2628 = vpop.f32.mrb[0].mxu0
        %2629 = vmatprep.mubr.bf16.mxu0 0
        %2630 = vmatmul.mubr.bf16.gmra.mrb[0].mxu0 %v2118
        %v2631 = vpop.f32.mrb[0].mxu0
        %v2632 = vadd.f32 %v2471, %v2631
        %v2633 = vpop.f32.mrb[0].mxu0
        %v2634 = vpop.f32.mrb[0].mxu0
        %v2635 = vadd.f32 %v2474, %v2634
        %v2636 = vpop.f32.mrb[0].mxu0
        %2637 = vmatprep.mubr.bf16.mxu0 0
        %2638 = vmatmul.mubr.bf16.gmra.mrb[0].mxu0 %v2121
        %v2639 = vpop.f32.mrb[0].mxu0
        %v2640 = vadd.f32 %v2479, %v2639
        %v2641 = vpop.f32.mrb[0].mxu0
        %v2642 = vpop.f32.mrb[0].mxu0
        %v2643 = vadd.f32 %v2482, %v2642
        %v2644 = vpop.f32.mrb[0].mxu0
        %2645 = vmatprep.mubr.bf16.mxu0 0
        %2646 = vmatmul.mubr.bf16.gmra.mrb[0].mxu0 %v2124
        %v2647 = vpop.f32.mrb[0].mxu0
        %v2648 = vadd.f32 %v2487, %v2647
        %v2649 = vpop.f32.mrb[0].mxu0
        %v2650 = vpop.f32.mrb[0].mxu0
        %v2651 = vadd.f32 %v2490, %v2650
        %v2652 = vpop.f32.mrb[0].mxu0
        %2653 = vmatprep.mubr.bf16.mxu0 0
        %2654 = vmatmul.mubr.bf16.gmra.mrb[0].mxu0 %v2127
        %v2655 = vpop.f32.mrb[0].mxu0
        %v2656 = vadd.f32 %v2495, %v2655
        %v2657 = vpop.f32.mrb[0].mxu0
        %v2658 = vpop.f32.mrb[0].mxu0
        %v2659 = vadd.f32 %v2498, %v2658
        %v2660 = vpop.f32.mrb[0].mxu0
        %2661 = vmatprep.mubr.bf16.mxu0 0
        %2662 = vmatmul.mubr.bf16.gmra.mrb[0].mxu0 %v2130
        %v2663 = vpop.f32.mrb[0].mxu0
        %v2664 = vadd.f32 %v2503, %v2663
        %v2665 = vpop.f32.mrb[0].mxu0
        %v2666 = vpop.f32.mrb[0].mxu0
        %v2667 = vadd.f32 %v2506, %v2666
        %v2668 = vpop.f32.mrb[0].mxu0
        %2669 = vmatprep.mubr.bf16.mxu0 0
        %2670 = vmatmul.mubr.bf16.gmra.mrb[0].mxu0 %v2133
        %v2671 = vpop.f32.mrb[0].mxu0
        %v2672 = vadd.f32 %v2511, %v2671
        %v2673 = vpop.f32.mrb[0].mxu0
        %v2674 = vpop.f32.mrb[0].mxu0
        %v2675 = vadd.f32 %v2514, %v2674
        %v2676 = vpop.f32.mrb[0].mxu0
        %2677 = vmatprep.mubr.bf16.mxu0 0
        %2678 = vmatmul.mubr.bf16.gmra.mrb[0].mxu0 %v2136
        %v2679 = vpop.f32.mrb[0].mxu0
        %v2680 = vadd.f32 %v2519, %v2679
        %v2681 = vpop.f32.mrb[0].mxu0
        %v2682 = vpop.f32.mrb[0].mxu0
        %v2683 = vadd.f32 %v2522, %v2682
        %v2684 = vpop.f32.mrb[0].mxu0
        %2685 = vmatprep.mubr.bf16.mxu0 0
        %2686 = vmatmul.mubr.bf16.gmra.mrb[0].mxu0 %v2139
        %v2687 = vpop.f32.mrb[0].mxu0
        %v2688 = vadd.f32 %v2527, %v2687
        %v2689 = vpop.f32.mrb[0].mxu0
        %v2690 = vpop.f32.mrb[0].mxu0
        %v2691 = vadd.f32 %v2530, %v2690
        %v2692 = vpop.f32.mrb[0].mxu0
        %2693 = vmatprep.mubr.bf16.mxu0 0
        %2694 = vmatmul.mubr.bf16.gmra.mrb[0].mxu0 %v2142
        %v2695 = vpop.f32.mrb[0].mxu0
        %v2696 = vadd.f32 %v2535, %v2695
        %v2697 = vpop.f32.mrb[0].mxu0
        %v2698 = vpop.f32.mrb[0].mxu0
        %v2699 = vadd.f32 %v2538, %v2698
        %v2700 = vpop.f32.mrb[0].mxu0
        %2701 = vmatprep.mubr.bf16.mxu0 0
        %2702 = vmatmul.mubr.bf16.gmra.mrb[0].mxu0 %v2145
        %v2703 = vpop.f32.mrb[0].mxu0
        %v2704 = vadd.f32 %v2543, %v2703
        %v2705 = vpop.f32.mrb[0].mxu0
        %v2706 = vpop.f32.mrb[0].mxu0
        %v2707 = vadd.f32 %v2546, %v2706
        %v2708 = vpop.f32.mrb[0].mxu0
        %2709 = vmatprep.mubr.bf16.mxu0 0
        %2710 = vmatmul.mubr.bf16.gmra.mrb[0].mxu0 %v2148
        %v2711 = vpop.f32.mrb[0].mxu0
        %v2712 = vadd.f32 %v2551, %v2711
        %v2713 = vpop.f32.mrb[0].mxu0
        %v2714 = vpop.f32.mrb[0].mxu0
        %v2715 = vadd.f32 %v2554, %v2714
        %v2716 = vpop.f32.mrb[0].mxu0
        %2717 = vmatprep.mubr.bf16.mxu0 0
        %2718 = vmatmul.mubr.bf16.gmra.mrb[0].mxu0 %v2151
        %v2719 = vpop.f32.mrb[0].mxu0
        %v2720 = vadd.f32 %v2559, %v2719
        %v2721 = vpop.f32.mrb[0].mxu0
        %v2722 = vpop.f32.mrb[0].mxu0
        %v2723 = vadd.f32 %v2562, %v2722
        %v2724 = vpop.f32.mrb[0].mxu0
        %2725 = vmatprep.mubr.bf16.mxu0 0
        %2726 = vmatmul.mubr.bf16.gmra.mrb[0].mxu0 %v2154
        %v2727 = vpop.f32.mrb[0].mxu0
        %v2728 = vadd.f32 %v2567, %v2727
        %v2729 = vpop.f32.mrb[0].mxu0
        %v2730 = vpop.f32.mrb[0].mxu0
        %v2731 = vadd.f32 %v2570, %v2730
        %v2732 = vpop.f32.mrb[0].mxu0
        %2733 = vmatprep.mubr.bf16.mxu0 0
        %2734 = vmatmul.mubr.bf16.gmra.mrb[0].mxu0 %v2157
        %v2735 = vpop.f32.mrb[0].mxu0
        %v2736 = vadd.f32 %v2575, %v2735
        %v2737 = vpop.f32.mrb[0].mxu0
        %v2738 = vpop.f32.mrb[0].mxu0
        %v2739 = vadd.f32 %v2578, %v2738
        %v2740 = vpop.f32.mrb[0].mxu0
        %2741 = vdwg.mxu0
        %v2790 = vunpack.c.l.b16 %v2179
        %v2791 = vunpack.c.l.b16 %v2180
        %v2792 = vunpack.c.l.b16 %v2181
        %v2793 = vunpack.c.l.b16 %v2182
        %v2794 = vunpack.c.l.b16 %v2183
        %v2795 = vunpack.c.l.b16 %v2184
        %v2796 = vunpack.c.l.b16 %v2185
        %v2797 = vunpack.c.l.b16 %v2186
        %v2798 = vunpack.c.l.b16 %v2187
        %v2799 = vunpack.c.l.b16 %v2188
        %v2800 = vunpack.c.l.b16 %v2189
        %v2801 = vunpack.c.l.b16 %v2190
        %v2802 = vunpack.c.l.b16 %v2191
        %v2803 = vunpack.c.l.b16 %v2192
        %v2804 = vunpack.c.l.b16 %v2193
        %v2805 = vunpack.c.l.b16 %v2194
        %v2806 = vunpack.c.l.b16 %v2195
        %v2807 = vunpack.c.l.b16 %v2196
        %v2808 = vunpack.c.l.b16 %v2197
        %v2809 = vunpack.c.l.b16 %v2198
        %v2810 = vunpack.c.l.b16 %v2199
        %v2811 = vunpack.c.l.b16 %v2200
        %v2812 = vunpack.c.l.b16 %v2201
        %v2813 = vunpack.c.l.b16 %v2202
        %v2814 = vunpack.c.l.b16 %v2203
        %v2815 = vunpack.c.l.b16 %v2204
        %v2816 = vunpack.c.l.b16 %v2205
        %v2817 = vunpack.c.l.b16 %v2206
        %v2818 = vunpack.c.l.b16 %v2207
        %v2819 = vunpack.c.l.b16 %v2208
        %v2820 = vunpack.c.l.b16 %v2209
        %v2821 = vunpack.c.l.b16 %v2210
        %v2822 = vunpack.c.l.b16 %v2211
        %v2823 = vunpack.c.l.b16 %v2212
        %v2824 = vunpack.c.l.b16 %v2213
        %v2825 = vunpack.c.l.b16 %v2214
        %v2826 = vunpack.c.l.b16 %v2215
        %v2827 = vunpack.c.l.b16 %v2216
        %v2828 = vunpack.c.l.b16 %v2217
        %v2829 = vunpack.c.l.b16 %v2218
        %v2830 = vunpack.c.l.b16 %v2219
        %v2831 = vunpack.c.l.b16 %v2220
        %v2832 = vunpack.c.l.b16 %v2221
        %v2833 = vunpack.c.l.b16 %v2222
        %v2834 = vunpack.c.l.b16 %v2223
        %v2835 = vunpack.c.l.b16 %v2224
        %v2836 = vunpack.c.l.b16 %v2225
        %v2837 = vunpack.c.l.b16 %v2226
        %v2838 = vpack.c.b16 %v2791, %v2790
        %v2839 = vpack.c.b16 %v2793, %v2792
        %v2840 = vpack.c.b16 %v2795, %v2794
        %v2841 = vpack.c.b16 %v2797, %v2796
        %v2842 = vpack.c.b16 %v2799, %v2798
        %v2843 = vpack.c.b16 %v2801, %v2800
        %v2844 = vpack.c.b16 %v2803, %v2802
        %v2845 = vpack.c.b16 %v2805, %v2804
        %v2846 = vpack.c.b16 %v2807, %v2806
        %v2847 = vpack.c.b16 %v2809, %v2808
        %v2848 = vpack.c.b16 %v2811, %v2810
        %v2849 = vpack.c.b16 %v2813, %v2812
        %v2850 = vpack.c.b16 %v2815, %v2814
        %v2851 = vpack.c.b16 %v2817, %v2816
        %v2852 = vpack.c.b16 %v2819, %v2818
        %v2853 = vpack.c.b16 %v2821, %v2820
        %v2854 = vpack.c.b16 %v2823, %v2822
        %v2855 = vpack.c.b16 %v2825, %v2824
        %v2856 = vpack.c.b16 %v2827, %v2826
        %v2857 = vpack.c.b16 %v2829, %v2828
        %v2858 = vpack.c.b16 %v2831, %v2830
        %v2859 = vpack.c.b16 %v2833, %v2832
        %v2860 = vpack.c.b16 %v2835, %v2834
        %v2861 = vpack.c.b16 %v2837, %v2836
        %2886 = vmatprep.subr.bf16.mxu0 0
        %2887 = vmatpush1.bf16.msra.mxu0 %v2838
        %2888 = vmatprep.subr.bf16.mxu0 0
        %2889 = vmatpush1.bf16.msra.mxu0 %v2839
        %2890 = vmatprep.subr.bf16.mxu0 0
        %2891 = vmatpush1.bf16.msra.mxu0 %v2840
        %2892 = vmatprep.subr.bf16.mxu0 0
        %2893 = vmatpush1.bf16.msra.mxu0 %v2841
        %2894 = vmatprep.subr.bf16.mxu0 0
        %2895 = vmatpush1.bf16.msra.mxu0 %v2842
        %2896 = vmatprep.subr.bf16.mxu0 0
        %2897 = vmatpush1.bf16.msra.mxu0 %v2843
        %2898 = vmatprep.subr.bf16.mxu0 0
        %2899 = vmatpush1.bf16.msra.mxu0 %v2844
        %2900 = vmatprep.subr.bf16.mxu0 0
        %2901 = vmatpush1.bf16.msra.mxu0 %v2845
        %2902 = vmatprep.subr.bf16.mxu0 0
        %2903 = vmatpush1.bf16.msra.mxu0 %v2846
        %2904 = vmatprep.subr.bf16.mxu0 0
        %2905 = vmatpush1.bf16.msra.mxu0 %v2847
        %2906 = vmatprep.subr.bf16.mxu0 0
        %2907 = vmatpush1.bf16.msra.mxu0 %v2848
        %2908 = vmatprep.subr.bf16.mxu0 0
        %2909 = vmatpush1.bf16.msra.mxu0 %v2849
        %2910 = vmatprep.subr.bf16.mxu0 0
        %2911 = vmatpush1.bf16.msra.mxu0 %v2850
        %2912 = vmatprep.subr.bf16.mxu0 0
        %2913 = vmatpush1.bf16.msra.mxu0 %v2851
        %2914 = vmatprep.subr.bf16.mxu0 0
        %2915 = vmatpush1.bf16.msra.mxu0 %v2852
        %2916 = vmatprep.subr.bf16.mxu0 0
        %2917 = vmatpush1.bf16.msra.mxu0 %v2853
        %2918 = vmatprep.mubr.bf16.mxu0 %v1829
        %2919 = vmatmul.mubr.bf16.gmra.mrb[0].mxu0 %v1727
        %v2920 = vpop.f32.mrb[0].mxu0
        %v2921 = vadd.f32 %v2616, %v2920
        %v2922 = vpop.f32.mrb[0].mxu0
        %v2923 = vpop.f32.mrb[0].mxu0
        %v2924 = vadd.f32 %v2619, %v2923
        %v2925 = vpop.f32.mrb[0].mxu0
        %2926 = vmatprep.mubr.bf16.mxu0 %v1841
        %2927 = vmatmul.mubr.bf16.gmra.mrb[0].mxu0 %v1728
        %v2928 = vpop.f32.mrb[0].mxu0
        %v2929 = vadd.f32 %v2624, %v2928
        %v2930 = vpop.f32.mrb[0].mxu0
        %v2931 = vpop.f32.mrb[0].mxu0
        %v2932 = vadd.f32 %v2627, %v2931
        %v2933 = vpop.f32.mrb[0].mxu0
        %2934 = vmatprep.mubr.bf16.mxu0 %v1853
        %2935 = vmatmul.mubr.bf16.gmra.mrb[0].mxu0 %v1729
        %v2936 = vpop.f32.mrb[0].mxu0
        %v2937 = vadd.f32 %v2632, %v2936
        %v2938 = vpop.f32.mrb[0].mxu0
        %v2939 = vpop.f32.mrb[0].mxu0
        %v2940 = vadd.f32 %v2635, %v2939
        %v2941 = vpop.f32.mrb[0].mxu0
        %2942 = vmatprep.mubr.bf16.mxu0 %v1865
        %2943 = vmatmul.mubr.bf16.gmra.mrb[0].mxu0 %v1730
        %v2944 = vpop.f32.mrb[0].mxu0
        %v2945 = vadd.f32 %v2640, %v2944
        %v2946 = vpop.f32.mrb[0].mxu0
        %v2947 = vpop.f32.mrb[0].mxu0
        %v2948 = vadd.f32 %v2643, %v2947
        %v2949 = vpop.f32.mrb[0].mxu0
        %2950 = vmatprep.mubr.bf16.mxu0 %v1877
        %2951 = vmatmul.mubr.bf16.gmra.mrb[0].mxu0 %v1731
        %v2952 = vpop.f32.mrb[0].mxu0
        %v2953 = vadd.f32 %v2648, %v2952
        %v2954 = vpop.f32.mrb[0].mxu0
        %v2955 = vpop.f32.mrb[0].mxu0
        %v2956 = vadd.f32 %v2651, %v2955
        %v2957 = vpop.f32.mrb[0].mxu0
        %2958 = vmatprep.mubr.bf16.mxu0 %v1889
        %2959 = vmatmul.mubr.bf16.gmra.mrb[0].mxu0 %v1732
        %v2960 = vpop.f32.mrb[0].mxu0
        %v2961 = vadd.f32 %v2656, %v2960
        %v2962 = vpop.f32.mrb[0].mxu0
        %v2963 = vpop.f32.mrb[0].mxu0
        %v2964 = vadd.f32 %v2659, %v2963
        %v2965 = vpop.f32.mrb[0].mxu0
        %2966 = vmatprep.mubr.bf16.mxu0 %v1901
        %2967 = vmatmul.mubr.bf16.gmra.mrb[0].mxu0 %v1733
        %v2968 = vpop.f32.mrb[0].mxu0
        %v2969 = vadd.f32 %v2664, %v2968
        %v2970 = vpop.f32.mrb[0].mxu0
        %v2971 = vpop.f32.mrb[0].mxu0
        %v2972 = vadd.f32 %v2667, %v2971
        %v2973 = vpop.f32.mrb[0].mxu0
        %2974 = vmatprep.mubr.bf16.mxu0 %v1913
        %2975 = vmatmul.mubr.bf16.gmra.mrb[0].mxu0 %v1734
        %v2976 = vpop.f32.mrb[0].mxu0
        %v2977 = vadd.f32 %v2672, %v2976
        %v2978 = vpop.f32.mrb[0].mxu0
        %v2979 = vpop.f32.mrb[0].mxu0
        %v2980 = vadd.f32 %v2675, %v2979
        %v2981 = vpop.f32.mrb[0].mxu0
        %2982 = vmatprep.mubr.bf16.mxu0 %v1925
        %2983 = vmatmul.mubr.bf16.gmra.mrb[0].mxu0 %v1735
        %v2984 = vpop.f32.mrb[0].mxu0
        %v2985 = vadd.f32 %v2680, %v2984
        %v2986 = vpop.f32.mrb[0].mxu0
        %v2987 = vpop.f32.mrb[0].mxu0
        %v2988 = vadd.f32 %v2683, %v2987
        %v2989 = vpop.f32.mrb[0].mxu0
        %2990 = vmatprep.mubr.bf16.mxu0 %v1937
        %2991 = vmatmul.mubr.bf16.gmra.mrb[0].mxu0 %v1736
        %v2992 = vpop.f32.mrb[0].mxu0
        %v2993 = vadd.f32 %v2688, %v2992
        %v2994 = vpop.f32.mrb[0].mxu0
        %v2995 = vpop.f32.mrb[0].mxu0
        %v2996 = vadd.f32 %v2691, %v2995
        %v2997 = vpop.f32.mrb[0].mxu0
        %2998 = vmatprep.mubr.bf16.mxu0 %v1949
        %2999 = vmatmul.mubr.bf16.gmra.mrb[0].mxu0 %v1737
        %v3000 = vpop.f32.mrb[0].mxu0
        %v3001 = vadd.f32 %v2696, %v3000
        %v3002 = vpop.f32.mrb[0].mxu0
        %v3003 = vpop.f32.mrb[0].mxu0
        %v3004 = vadd.f32 %v2699, %v3003
        %v3005 = vpop.f32.mrb[0].mxu0
        %3006 = vmatprep.mubr.bf16.mxu0 %v1961
        %3007 = vmatmul.mubr.bf16.gmra.mrb[0].mxu0 %v1738
        %v3008 = vpop.f32.mrb[0].mxu0
        %v3009 = vadd.f32 %v2704, %v3008
        %v3010 = vpop.f32.mrb[0].mxu0
        %v3011 = vpop.f32.mrb[0].mxu0
        %v3012 = vadd.f32 %v2707, %v3011
        %v3013 = vpop.f32.mrb[0].mxu0
        %3014 = vmatprep.mubr.bf16.mxu0 %v1973
        %3015 = vmatmul.mubr.bf16.gmra.mrb[0].mxu0 %v1739
        %v3016 = vpop.f32.mrb[0].mxu0
        %v3017 = vadd.f32 %v2712, %v3016
        %v3018 = vpop.f32.mrb[0].mxu0
        %v3019 = vpop.f32.mrb[0].mxu0
        %v3020 = vadd.f32 %v2715, %v3019
        %v3021 = vpop.f32.mrb[0].mxu0
        %3022 = vmatprep.mubr.bf16.mxu0 %v1985
        %3023 = vmatmul.mubr.bf16.gmra.mrb[0].mxu0 %v1740
        %v3024 = vpop.f32.mrb[0].mxu0
        %v3025 = vadd.f32 %v2720, %v3024
        %v3026 = vpop.f32.mrb[0].mxu0
        %v3027 = vpop.f32.mrb[0].mxu0
        %v3028 = vadd.f32 %v2723, %v3027
        %v3029 = vpop.f32.mrb[0].mxu0
        %3030 = vmatprep.mubr.bf16.mxu0 %v1997
        %3031 = vmatmul.mubr.bf16.gmra.mrb[0].mxu0 %v1741
        %v3032 = vpop.f32.mrb[0].mxu0
        %v3033 = vadd.f32 %v2728, %v3032
        %v3034 = vpop.f32.mrb[0].mxu0
        %v3035 = vpop.f32.mrb[0].mxu0
        %v3036 = vadd.f32 %v2731, %v3035
        %v3037 = vpop.f32.mrb[0].mxu0
        %3038 = vmatprep.mubr.bf16.mxu0 %v2009
        %3039 = vmatmul.mubr.bf16.gmra.mrb[0].mxu0 %v1742
        %v3040 = vpop.f32.mrb[0].mxu0
        %v3041 = vadd.f32 %v2736, %v3040
        %v3042 = vpop.f32.mrb[0].mxu0
        %v3043 = vpop.f32.mrb[0].mxu0
        %v3044 = vadd.f32 %v2739, %v3043
        %v3045 = vpop.f32.mrb[0].mxu0
        %3046 = vdwg.mxu0
        %3047 = vmatprep.subr.bf16.mxu0 0
        %3048 = vmatpush1.bf16.msra.mxu0 %v2854
        %3049 = vmatprep.subr.bf16.mxu0 0
        %3050 = vmatpush1.bf16.msra.mxu0 %v2855
        %3051 = vmatprep.subr.bf16.mxu0 0
        %3052 = vmatpush1.bf16.msra.mxu0 %v2856
        %3053 = vmatprep.subr.bf16.mxu0 0
        %3054 = vmatpush1.bf16.msra.mxu0 %v2857
        %3055 = vmatprep.subr.bf16.mxu0 0
        %3056 = vmatpush1.bf16.msra.mxu0 %v2858
        %3057 = vmatprep.subr.bf16.mxu0 0
        %3058 = vmatpush1.bf16.msra.mxu0 %v2859
        %3059 = vmatprep.subr.bf16.mxu0 0
        %3060 = vmatpush1.bf16.msra.mxu0 %v2860
        %3061 = vmatprep.subr.bf16.mxu0 0
        %3062 = vmatpush1.bf16.msra.mxu0 %v2861
        %3063 = vmatprep.subr.bf16.mxu0 0
        %3064 = vmatpush1.bf16.msra.mxu0 0
        %3065 = vmatprep.subr.bf16.mxu0 0
        %3066 = vmatpush1.bf16.msra.mxu0 0
        %3067 = vmatprep.subr.bf16.mxu0 0
        %3068 = vmatpush1.bf16.msra.mxu0 0
        %3069 = vmatprep.subr.bf16.mxu0 0
        %3070 = vmatpush1.bf16.msra.mxu0 0
        %3071 = vmatprep.subr.bf16.mxu0 0
        %3072 = vmatpush1.bf16.msra.mxu0 0
        %3073 = vmatprep.subr.bf16.mxu0 0
        %3074 = vmatpush1.bf16.msra.mxu0 0
        %3075 = vmatprep.subr.bf16.mxu0 0
        %3076 = vmatpush1.bf16.msra.mxu0 0
        %3077 = vmatprep.subr.bf16.mxu0 0
        %3078 = vmatpush1.bf16.msra.mxu0 0
        %3079 = vmatprep.mubr.bf16.mxu0 0
        %3080 = vmatmul.mubr.bf16.gmra.mrb[0].mxu0 %v2109
        %v3081 = vpop.f32.mrb[0].mxu0
        %v3082 = vadd.f32 %v2921, %v3081
        %v3083 = vpop.f32.mrb[0].mxu0
        %v3084 = vpop.f32.mrb[0].mxu0
        %v3085 = vadd.f32 %v2924, %v3084
        %v3086 = vpop.f32.mrb[0].mxu0
        %3087 = vmatprep.mubr.bf16.mxu0 0
        %3088 = vmatmul.mubr.bf16.gmra.mrb[0].mxu0 %v2112
        %v3089 = vpop.f32.mrb[0].mxu0
        %v3090 = vadd.f32 %v2929, %v3089
        %v3091 = vpop.f32.mrb[0].mxu0
        %v3092 = vpop.f32.mrb[0].mxu0
        %v3093 = vadd.f32 %v2932, %v3092
        %v3094 = vpop.f32.mrb[0].mxu0
        %3095 = vmatprep.mubr.bf16.mxu0 0
        %3096 = vmatmul.mubr.bf16.gmra.mrb[0].mxu0 %v2115
        %v3097 = vpop.f32.mrb[0].mxu0
        %v3098 = vadd.f32 %v2937, %v3097
        %v3099 = vpop.f32.mrb[0].mxu0
        %v3100 = vpop.f32.mrb[0].mxu0
        %v3101 = vadd.f32 %v2940, %v3100
        %v3102 = vpop.f32.mrb[0].mxu0
        %3103 = vmatprep.mubr.bf16.mxu0 0
        %3104 = vmatmul.mubr.bf16.gmra.mrb[0].mxu0 %v2118
        %v3105 = vpop.f32.mrb[0].mxu0
        %v3106 = vadd.f32 %v2945, %v3105
        %v3107 = vpop.f32.mrb[0].mxu0
        %v3108 = vpop.f32.mrb[0].mxu0
        %v3109 = vadd.f32 %v2948, %v3108
        %v3110 = vpop.f32.mrb[0].mxu0
        %3111 = vmatprep.mubr.bf16.mxu0 0
        %3112 = vmatmul.mubr.bf16.gmra.mrb[0].mxu0 %v2121
        %v3113 = vpop.f32.mrb[0].mxu0
        %v3114 = vadd.f32 %v2953, %v3113
        %v3115 = vpop.f32.mrb[0].mxu0
        %v3116 = vpop.f32.mrb[0].mxu0
        %v3117 = vadd.f32 %v2956, %v3116
        %v3118 = vpop.f32.mrb[0].mxu0
        %3119 = vmatprep.mubr.bf16.mxu0 0
        %3120 = vmatmul.mubr.bf16.gmra.mrb[0].mxu0 %v2124
        %v3121 = vpop.f32.mrb[0].mxu0
        %v3122 = vadd.f32 %v2961, %v3121
        %v3123 = vpop.f32.mrb[0].mxu0
        %v3124 = vpop.f32.mrb[0].mxu0
        %v3125 = vadd.f32 %v2964, %v3124
        %v3126 = vpop.f32.mrb[0].mxu0
        %3127 = vmatprep.mubr.bf16.mxu0 0
        %3128 = vmatmul.mubr.bf16.gmra.mrb[0].mxu0 %v2127
        %v3129 = vpop.f32.mrb[0].mxu0
        %v3130 = vadd.f32 %v2969, %v3129
        %v3131 = vpop.f32.mrb[0].mxu0
        %v3132 = vpop.f32.mrb[0].mxu0
        %v3133 = vadd.f32 %v2972, %v3132
        %v3134 = vpop.f32.mrb[0].mxu0
        %3135 = vmatprep.mubr.bf16.mxu0 0
        %3136 = vmatmul.mubr.bf16.gmra.mrb[0].mxu0 %v2130
        %v3137 = vpop.f32.mrb[0].mxu0
        %v3138 = vadd.f32 %v2977, %v3137
        %v3139 = vpop.f32.mrb[0].mxu0
        %v3140 = vpop.f32.mrb[0].mxu0
        %v3141 = vadd.f32 %v2980, %v3140
        %v3142 = vpop.f32.mrb[0].mxu0
        %3143 = vmatprep.mubr.bf16.mxu0 0
        %3144 = vmatmul.mubr.bf16.gmra.mrb[0].mxu0 %v2133
        %v3145 = vpop.f32.mrb[0].mxu0
        %v3146 = vadd.f32 %v2985, %v3145
        %v3147 = vpop.f32.mrb[0].mxu0
        %v3148 = vpop.f32.mrb[0].mxu0
        %v3149 = vadd.f32 %v2988, %v3148
        %v3150 = vpop.f32.mrb[0].mxu0
        %3151 = vmatprep.mubr.bf16.mxu0 0
        %3152 = vmatmul.mubr.bf16.gmra.mrb[0].mxu0 %v2136
        %v3153 = vpop.f32.mrb[0].mxu0
        %v3154 = vadd.f32 %v2993, %v3153
        %v3155 = vpop.f32.mrb[0].mxu0
        %v3156 = vpop.f32.mrb[0].mxu0
        %v3157 = vadd.f32 %v2996, %v3156
        %v3158 = vpop.f32.mrb[0].mxu0
        %3159 = vmatprep.mubr.bf16.mxu0 0
        %3160 = vmatmul.mubr.bf16.gmra.mrb[0].mxu0 %v2139
        %v3161 = vpop.f32.mrb[0].mxu0
        %v3162 = vadd.f32 %v3001, %v3161
        %v3163 = vpop.f32.mrb[0].mxu0
        %v3164 = vpop.f32.mrb[0].mxu0
        %v3165 = vadd.f32 %v3004, %v3164
        %v3166 = vpop.f32.mrb[0].mxu0
        %3167 = vmatprep.mubr.bf16.mxu0 0
        %3168 = vmatmul.mubr.bf16.gmra.mrb[0].mxu0 %v2142
        %v3169 = vpop.f32.mrb[0].mxu0
        %v3170 = vadd.f32 %v3009, %v3169
        %v3171 = vpop.f32.mrb[0].mxu0
        %v3172 = vpop.f32.mrb[0].mxu0
        %v3173 = vadd.f32 %v3012, %v3172
        %v3174 = vpop.f32.mrb[0].mxu0
        %3175 = vmatprep.mubr.bf16.mxu0 0
        %3176 = vmatmul.mubr.bf16.gmra.mrb[0].mxu0 %v2145
        %v3177 = vpop.f32.mrb[0].mxu0
        %v3178 = vadd.f32 %v3017, %v3177
        %v3179 = vpop.f32.mrb[0].mxu0
        %v3180 = vpop.f32.mrb[0].mxu0
        %v3181 = vadd.f32 %v3020, %v3180
        %v3182 = vpop.f32.mrb[0].mxu0
        %3183 = vmatprep.mubr.bf16.mxu0 0
        %3184 = vmatmul.mubr.bf16.gmra.mrb[0].mxu0 %v2148
        %v3185 = vpop.f32.mrb[0].mxu0
        %v3186 = vadd.f32 %v3025, %v3185
        %v3187 = vpop.f32.mrb[0].mxu0
        %v3188 = vpop.f32.mrb[0].mxu0
        %v3189 = vadd.f32 %v3028, %v3188
        %v3190 = vpop.f32.mrb[0].mxu0
        %3191 = vmatprep.mubr.bf16.mxu0 0
        %3192 = vmatmul.mubr.bf16.gmra.mrb[0].mxu0 %v2151
        %v3193 = vpop.f32.mrb[0].mxu0
        %v3194 = vadd.f32 %v3033, %v3193
        %v3195 = vpop.f32.mrb[0].mxu0
        %v3196 = vpop.f32.mrb[0].mxu0
        %v3197 = vadd.f32 %v3036, %v3196
        %v3198 = vpop.f32.mrb[0].mxu0
        %3199 = vmatprep.mubr.bf16.mxu0 0
        %3200 = vmatmul.mubr.bf16.gmra.mrb[0].mxu0 %v2154
        %v3201 = vpop.f32.mrb[0].mxu0
        %v3202 = vadd.f32 %v3041, %v3201
        %v3203 = vpop.f32.mrb[0].mxu0
        %v3204 = vpop.f32.mrb[0].mxu0
        %v3205 = vadd.f32 %v3044, %v3204
        %v3206 = vpop.f32.mrb[0].mxu0
        %3207 = vdwg.mxu0
        %s3208 = scalar_lea.vmem [#allocation8], 384
        %v3209 = vld [vmem:[%s3208] sm:$0xf]
        %v3210 = vld [vmem:[%s3208 + $0x4] sm:$0xf]
        %v3211 = vld [vmem:[%s3208 + $0x8] sm:$0xf]
        %v3212 = vld [vmem:[%s3208 + $0xc] sm:$0xf]
        %v3213 = vld [vmem:[%s3208 + $0x10] sm:$0xf]
        %v3214 = vld [vmem:[%s3208 + $0x14] sm:$0xf]
        %v3215 = vld [vmem:[%s3208 + $0x18] sm:$0xf]
        %v3216 = vld [vmem:[%s3208 + $0x1c] sm:$0xf]
        %v3217 = vld [vmem:[%s3208 + $0x20] sm:$0xf]
        %v3218 = vld [vmem:[%s3208 + $0x24] sm:$0xf]
        %v3219 = vld [vmem:[%s3208 + $0x28] sm:$0xf]
        %v3220 = vld [vmem:[%s3208 + $0x2c] sm:$0xf]
        %v3221 = vld [vmem:[%s3208 + $0x30] sm:$0xf]
        %v3222 = vld [vmem:[%s3208 + $0x34] sm:$0xf]
        %v3223 = vld [vmem:[%s3208 + $0x38] sm:$0xf]
        %v3224 = vld [vmem:[%s3208 + $0x3c] sm:$0xf]
        %v3225 = vld [vmem:[%s3208 + $0x40] sm:$0xf]
        %v3226 = vld [vmem:[%s3208 + $0x44] sm:$0xf]
        %v3227 = vld [vmem:[%s3208 + $0x48] sm:$0xf]
        %v3228 = vld [vmem:[%s3208 + $0x4c] sm:$0xf]
        %v3229 = vld [vmem:[%s3208 + $0x50] sm:$0xf]
        %v3230 = vld [vmem:[%s3208 + $0x54] sm:$0xf]
        %v3231 = vld [vmem:[%s3208 + $0x58] sm:$0xf]
        %v3232 = vld [vmem:[%s3208 + $0x5c] sm:$0xf]
        %v3233 = vld [vmem:[%s3208 + $0x60] sm:$0xf]
        %v3234 = vld [vmem:[%s3208 + $0x64] sm:$0xf]
        %v3235 = vld [vmem:[%s3208 + $0x68] sm:$0xf]
        %v3236 = vld [vmem:[%s3208 + $0x6c] sm:$0xf]
        %v3237 = vld [vmem:[%s3208 + $0x70] sm:$0xf]
        %v3238 = vld [vmem:[%s3208 + $0x74] sm:$0xf]
        %v3239 = vld [vmem:[%s3208 + $0x78] sm:$0xf]
        %v3240 = vld [vmem:[%s3208 + $0x7c] sm:$0xf]
        %v3241 = vld [vmem:[%s3208 + $0x80] sm:$0xf]
        %v3242 = vld [vmem:[%s3208 + $0x84] sm:$0xf]
        %v3243 = vld [vmem:[%s3208 + $0x88] sm:$0xf]
        %v3244 = vld [vmem:[%s3208 + $0x8c] sm:$0xf]
        %v3245 = vld [vmem:[%s3208 + $0x90] sm:$0xf]
        %v3246 = vld [vmem:[%s3208 + $0x94] sm:$0xf]
        %v3247 = vld [vmem:[%s3208 + $0x98] sm:$0xf]
        %v3248 = vld [vmem:[%s3208 + $0x9c] sm:$0xf]
        %v3249 = vld [vmem:[%s3208 + $0xa0] sm:$0xf]
        %v3250 = vld [vmem:[%s3208 + $0xa4] sm:$0xf]
        %v3251 = vld [vmem:[%s3208 + $0xa8] sm:$0xf]
        %v3252 = vld [vmem:[%s3208 + $0xac] sm:$0xf]
        %v3253 = vld [vmem:[%s3208 + $0xb0] sm:$0xf]
        %v3254 = vld [vmem:[%s3208 + $0xb4] sm:$0xf]
        %v3255 = vld [vmem:[%s3208 + $0xb8] sm:$0xf]
        %v3256 = vld [vmem:[%s3208 + $0xbc] sm:$0xf]
        %v3305 = vunpack.c.l.b16 %v3209
        %v3306 = vunpack.c.l.b16 %v3210
        %v3307 = vunpack.c.l.b16 %v3211
        %v3308 = vunpack.c.l.b16 %v3212
        %v3309 = vunpack.c.l.b16 %v3213
        %v3310 = vunpack.c.l.b16 %v3214
        %v3311 = vunpack.c.l.b16 %v3215
        %v3312 = vunpack.c.l.b16 %v3216
        %v3313 = vunpack.c.l.b16 %v3217
        %v3314 = vunpack.c.l.b16 %v3218
        %v3315 = vunpack.c.l.b16 %v3219
        %v3316 = vunpack.c.l.b16 %v3220
        %v3317 = vunpack.c.l.b16 %v3221
        %v3318 = vunpack.c.l.b16 %v3222
        %v3319 = vunpack.c.l.b16 %v3223
        %v3320 = vunpack.c.l.b16 %v3224
        %v3321 = vunpack.c.l.b16 %v3225
        %v3322 = vunpack.c.l.b16 %v3226
        %v3323 = vunpack.c.l.b16 %v3227
        %v3324 = vunpack.c.l.b16 %v3228
        %v3325 = vunpack.c.l.b16 %v3229
        %v3326 = vunpack.c.l.b16 %v3230
        %v3327 = vunpack.c.l.b16 %v3231
        %v3328 = vunpack.c.l.b16 %v3232
        %v3329 = vunpack.c.l.b16 %v3233
        %v3330 = vunpack.c.l.b16 %v3234
        %v3331 = vunpack.c.l.b16 %v3235
        %v3332 = vunpack.c.l.b16 %v3236
        %v3333 = vunpack.c.l.b16 %v3237
        %v3334 = vunpack.c.l.b16 %v3238
        %v3335 = vunpack.c.l.b16 %v3239
        %v3336 = vunpack.c.l.b16 %v3240
        %v3337 = vunpack.c.l.b16 %v3241
        %v3338 = vunpack.c.l.b16 %v3242
        %v3339 = vunpack.c.l.b16 %v3243
        %v3340 = vunpack.c.l.b16 %v3244
        %v3341 = vunpack.c.l.b16 %v3245
        %v3342 = vunpack.c.l.b16 %v3246
        %v3343 = vunpack.c.l.b16 %v3247
        %v3344 = vunpack.c.l.b16 %v3248
        %v3345 = vunpack.c.l.b16 %v3249
        %v3346 = vunpack.c.l.b16 %v3250
        %v3347 = vunpack.c.l.b16 %v3251
        %v3348 = vunpack.c.l.b16 %v3252
        %v3349 = vunpack.c.l.b16 %v3253
        %v3350 = vunpack.c.l.b16 %v3254
        %v3351 = vunpack.c.l.b16 %v3255
        %v3352 = vunpack.c.l.b16 %v3256
        %v3353 = vpack.c.b16 %v3306, %v3305
        %v3354 = vpack.c.b16 %v3308, %v3307
        %v3355 = vpack.c.b16 %v3310, %v3309
        %v3356 = vpack.c.b16 %v3312, %v3311
        %v3357 = vpack.c.b16 %v3314, %v3313
        %v3358 = vpack.c.b16 %v3316, %v3315
        %v3359 = vpack.c.b16 %v3318, %v3317
        %v3360 = vpack.c.b16 %v3320, %v3319
        %v3361 = vpack.c.b16 %v3322, %v3321
        %v3362 = vpack.c.b16 %v3324, %v3323
        %v3363 = vpack.c.b16 %v3326, %v3325
        %v3364 = vpack.c.b16 %v3328, %v3327
        %v3365 = vpack.c.b16 %v3330, %v3329
        %v3366 = vpack.c.b16 %v3332, %v3331
        %v3367 = vpack.c.b16 %v3334, %v3333
        %v3368 = vpack.c.b16 %v3336, %v3335
        %v3369 = vpack.c.b16 %v3338, %v3337
        %v3370 = vpack.c.b16 %v3340, %v3339
        %v3371 = vpack.c.b16 %v3342, %v3341
        %v3372 = vpack.c.b16 %v3344, %v3343
        %v3373 = vpack.c.b16 %v3346, %v3345
        %v3374 = vpack.c.b16 %v3348, %v3347
        %v3375 = vpack.c.b16 %v3350, %v3349
        %v3376 = vpack.c.b16 %v3352, %v3351
        %3401 = vmatprep.subr.bf16.mxu0 0
        %3402 = vmatpush1.bf16.msra.mxu0 %v3353
        %3403 = vmatprep.subr.bf16.mxu0 0
        %3404 = vmatpush1.bf16.msra.mxu0 %v3354
        %3405 = vmatprep.subr.bf16.mxu0 0
        %3406 = vmatpush1.bf16.msra.mxu0 %v3355
        %3407 = vmatprep.subr.bf16.mxu0 0
        %3408 = vmatpush1.bf16.msra.mxu0 %v3356
        %3409 = vmatprep.subr.bf16.mxu0 0
        %3410 = vmatpush1.bf16.msra.mxu0 %v3357
        %3411 = vmatprep.subr.bf16.mxu0 0
        %3412 = vmatpush1.bf16.msra.mxu0 %v3358
        %3413 = vmatprep.subr.bf16.mxu0 0
        %3414 = vmatpush1.bf16.msra.mxu0 %v3359
        %3415 = vmatprep.subr.bf16.mxu0 0
        %3416 = vmatpush1.bf16.msra.mxu0 %v3360
        %3417 = vmatprep.subr.bf16.mxu0 0
        %3418 = vmatpush1.bf16.msra.mxu0 %v3361
        %3419 = vmatprep.subr.bf16.mxu0 0
        %3420 = vmatpush1.bf16.msra.mxu0 %v3362
        %3421 = vmatprep.subr.bf16.mxu0 0
        %3422 = vmatpush1.bf16.msra.mxu0 %v3363
        %3423 = vmatprep.subr.bf16.mxu0 0
        %3424 = vmatpush1.bf16.msra.mxu0 %v3364
        %3425 = vmatprep.subr.bf16.mxu0 0
        %3426 = vmatpush1.bf16.msra.mxu0 %v3365
        %3427 = vmatprep.subr.bf16.mxu0 0
        %3428 = vmatpush1.bf16.msra.mxu0 %v3366
        %3429 = vmatprep.subr.bf16.mxu0 0
        %3430 = vmatpush1.bf16.msra.mxu0 %v3367
        %3431 = vmatprep.subr.bf16.mxu0 0
        %3432 = vmatpush1.bf16.msra.mxu0 %v3368
        %3433 = vmatprep.mubr.bf16.mxu0 %v1853
        %3434 = vmatmul.mubr.bf16.gmra.mrb[0].mxu0 %v1729
        %v3435 = vpop.f32.mrb[0].mxu0
        %v3436 = vadd.f32 0.0, %v3435
        %v3437 = vpop.f32.mrb[0].mxu0
        %v3438 = vpop.f32.mrb[0].mxu0
        %v3439 = vadd.f32 0.0, %v3438
        %v3440 = vpop.f32.mrb[0].mxu0
        %3441 = vmatprep.mubr.bf16.mxu0 %v1865
        %3442 = vmatmul.mubr.bf16.gmra.mrb[0].mxu0 %v1730
        %v3443 = vpop.f32.mrb[0].mxu0
        %v3444 = vadd.f32 0.0, %v3443
        %v3445 = vpop.f32.mrb[0].mxu0
        %v3446 = vpop.f32.mrb[0].mxu0
        %v3447 = vadd.f32 0.0, %v3446
        %v3448 = vpop.f32.mrb[0].mxu0
        %3449 = vmatprep.mubr.bf16.mxu0 %v1877
        %3450 = vmatmul.mubr.bf16.gmra.mrb[0].mxu0 %v1731
        %v3451 = vpop.f32.mrb[0].mxu0
        %v3452 = vadd.f32 0.0, %v3451
        %v3453 = vpop.f32.mrb[0].mxu0
        %v3454 = vpop.f32.mrb[0].mxu0
        %v3455 = vadd.f32 0.0, %v3454
        %v3456 = vpop.f32.mrb[0].mxu0
        %3457 = vmatprep.mubr.bf16.mxu0 %v1889
        %3458 = vmatmul.mubr.bf16.gmra.mrb[0].mxu0 %v1732
        %v3459 = vpop.f32.mrb[0].mxu0
        %v3460 = vadd.f32 0.0, %v3459
        %v3461 = vpop.f32.mrb[0].mxu0
        %v3462 = vpop.f32.mrb[0].mxu0
        %v3463 = vadd.f32 0.0, %v3462
        %v3464 = vpop.f32.mrb[0].mxu0
        %3465 = vmatprep.mubr.bf16.mxu0 %v1901
        %3466 = vmatmul.mubr.bf16.gmra.mrb[0].mxu0 %v1733
        %v3467 = vpop.f32.mrb[0].mxu0
        %v3468 = vadd.f32 0.0, %v3467
        %v3469 = vpop.f32.mrb[0].mxu0
        %v3470 = vpop.f32.mrb[0].mxu0
        %v3471 = vadd.f32 0.0, %v3470
        %v3472 = vpop.f32.mrb[0].mxu0
        %3473 = vmatprep.mubr.bf16.mxu0 %v1913
        %3474 = vmatmul.mubr.bf16.gmra.mrb[0].mxu0 %v1734
        %v3475 = vpop.f32.mrb[0].mxu0
        %v3476 = vadd.f32 0.0, %v3475
        %v3477 = vpop.f32.mrb[0].mxu0
        %v3478 = vpop.f32.mrb[0].mxu0
        %v3479 = vadd.f32 0.0, %v3478
        %v3480 = vpop.f32.mrb[0].mxu0
        %3481 = vmatprep.mubr.bf16.mxu0 %v1925
        %3482 = vmatmul.mubr.bf16.gmra.mrb[0].mxu0 %v1735
        %v3483 = vpop.f32.mrb[0].mxu0
        %v3484 = vadd.f32 0.0, %v3483
        %v3485 = vpop.f32.mrb[0].mxu0
        %v3486 = vpop.f32.mrb[0].mxu0
        %v3487 = vadd.f32 0.0, %v3486
        %v3488 = vpop.f32.mrb[0].mxu0
        %3489 = vmatprep.mubr.bf16.mxu0 %v1937
        %3490 = vmatmul.mubr.bf16.gmra.mrb[0].mxu0 %v1736
        %v3491 = vpop.f32.mrb[0].mxu0
        %v3492 = vadd.f32 0.0, %v3491
        %v3493 = vpop.f32.mrb[0].mxu0
        %v3494 = vpop.f32.mrb[0].mxu0
        %v3495 = vadd.f32 0.0, %v3494
        %v3496 = vpop.f32.mrb[0].mxu0
        %3497 = vmatprep.mubr.bf16.mxu0 %v1949
        %3498 = vmatmul.mubr.bf16.gmra.mrb[0].mxu0 %v1737
        %v3499 = vpop.f32.mrb[0].mxu0
        %v3500 = vadd.f32 0.0, %v3499
        %v3501 = vpop.f32.mrb[0].mxu0
        %v3502 = vpop.f32.mrb[0].mxu0
        %v3503 = vadd.f32 0.0, %v3502
        %v3504 = vpop.f32.mrb[0].mxu0
        %3505 = vmatprep.mubr.bf16.mxu0 %v1961
        %3506 = vmatmul.mubr.bf16.gmra.mrb[0].mxu0 %v1738
        %v3507 = vpop.f32.mrb[0].mxu0
        %v3508 = vadd.f32 0.0, %v3507
        %v3509 = vpop.f32.mrb[0].mxu0
        %v3510 = vpop.f32.mrb[0].mxu0
        %v3511 = vadd.f32 0.0, %v3510
        %v3512 = vpop.f32.mrb[0].mxu0
        %3513 = vmatprep.mubr.bf16.mxu0 %v1973
        %3514 = vmatmul.mubr.bf16.gmra.mrb[0].mxu0 %v1739
        %v3515 = vpop.f32.mrb[0].mxu0
        %v3516 = vadd.f32 0.0, %v3515
        %v3517 = vpop.f32.mrb[0].mxu0
        %v3518 = vpop.f32.mrb[0].mxu0
        %v3519 = vadd.f32 0.0, %v3518
        %v3520 = vpop.f32.mrb[0].mxu0
        %3521 = vmatprep.mubr.bf16.mxu0 %v1985
        %3522 = vmatmul.mubr.bf16.gmra.mrb[0].mxu0 %v1740
        %v3523 = vpop.f32.mrb[0].mxu0
        %v3524 = vadd.f32 0.0, %v3523
        %v3525 = vpop.f32.mrb[0].mxu0
        %v3526 = vpop.f32.mrb[0].mxu0
        %v3527 = vadd.f32 0.0, %v3526
        %v3528 = vpop.f32.mrb[0].mxu0
        %3529 = vmatprep.mubr.bf16.mxu0 %v1997
        %3530 = vmatmul.mubr.bf16.gmra.mrb[0].mxu0 %v1741
        %v3531 = vpop.f32.mrb[0].mxu0
        %v3532 = vadd.f32 0.0, %v3531
        %v3533 = vpop.f32.mrb[0].mxu0
        %v3534 = vpop.f32.mrb[0].mxu0
        %v3535 = vadd.f32 0.0, %v3534
        %v3536 = vpop.f32.mrb[0].mxu0
        %3537 = vmatprep.mubr.bf16.mxu0 %v2009
        %3538 = vmatmul.mubr.bf16.gmra.mrb[0].mxu0 %v1742
        %v3539 = vpop.f32.mrb[0].mxu0
        %v3540 = vadd.f32 0.0, %v3539
        %v3541 = vpop.f32.mrb[0].mxu0
        %v3542 = vpop.f32.mrb[0].mxu0
        %v3543 = vadd.f32 0.0, %v3542
        %v3544 = vpop.f32.mrb[0].mxu0
        %3545 = vmatprep.mubr.bf16.mxu0 %v2021
        %3546 = vmatmul.mubr.bf16.gmra.mrb[0].mxu0 %v1743
        %v3547 = vpop.f32.mrb[0].mxu0
        %v3548 = vadd.f32 0.0, %v3547
        %v3549 = vpop.f32.mrb[0].mxu0
        %v3550 = vpop.f32.mrb[0].mxu0
        %v3551 = vadd.f32 0.0, %v3550
        %v3552 = vpop.f32.mrb[0].mxu0
        %3553 = vmatprep.mubr.bf16.mxu0 %v2033
        %3554 = vmatmul.mubr.bf16.gmra.mrb[0].mxu0 %v1744
        %v3555 = vpop.f32.mrb[0].mxu0
        %v3556 = vadd.f32 0.0, %v3555
        %v3557 = vpop.f32.mrb[0].mxu0
        %v3558 = vpop.f32.mrb[0].mxu0
        %v3559 = vadd.f32 0.0, %v3558
        %v3560 = vpop.f32.mrb[0].mxu0
        %3561 = vdwg.mxu0
        %3562 = vmatprep.subr.bf16.mxu0 0
        %3563 = vmatpush1.bf16.msra.mxu0 %v3369
        %3564 = vmatprep.subr.bf16.mxu0 0
        %3565 = vmatpush1.bf16.msra.mxu0 %v3370
        %3566 = vmatprep.subr.bf16.mxu0 0
        %3567 = vmatpush1.bf16.msra.mxu0 %v3371
        %3568 = vmatprep.subr.bf16.mxu0 0
        %3569 = vmatpush1.bf16.msra.mxu0 %v3372
        %3570 = vmatprep.subr.bf16.mxu0 0
        %3571 = vmatpush1.bf16.msra.mxu0 %v3373
        %3572 = vmatprep.subr.bf16.mxu0 0
        %3573 = vmatpush1.bf16.msra.mxu0 %v3374
        %3574 = vmatprep.subr.bf16.mxu0 0
        %3575 = vmatpush1.bf16.msra.mxu0 %v3375
        %3576 = vmatprep.subr.bf16.mxu0 0
        %3577 = vmatpush1.bf16.msra.mxu0 %v3376
        %3578 = vmatprep.subr.bf16.mxu0 0
        %3579 = vmatpush1.bf16.msra.mxu0 0
        %3580 = vmatprep.subr.bf16.mxu0 0
        %3581 = vmatpush1.bf16.msra.mxu0 0
        %3582 = vmatprep.subr.bf16.mxu0 0
        %3583 = vmatpush1.bf16.msra.mxu0 0
        %3584 = vmatprep.subr.bf16.mxu0 0
        %3585 = vmatpush1.bf16.msra.mxu0 0
        %3586 = vmatprep.subr.bf16.mxu0 0
        %3587 = vmatpush1.bf16.msra.mxu0 0
        %3588 = vmatprep.subr.bf16.mxu0 0
        %3589 = vmatpush1.bf16.msra.mxu0 0
        %3590 = vmatprep.subr.bf16.mxu0 0
        %3591 = vmatpush1.bf16.msra.mxu0 0
        %3592 = vmatprep.subr.bf16.mxu0 0
        %3593 = vmatpush1.bf16.msra.mxu0 0
        %3594 = vmatprep.mubr.bf16.mxu0 0
        %3595 = vmatmul.mubr.bf16.gmra.mrb[0].mxu0 %v2115
        %v3596 = vpop.f32.mrb[0].mxu0
        %v3597 = vadd.f32 %v3436, %v3596
        %v3598 = vpop.f32.mrb[0].mxu0
        %v3599 = vpop.f32.mrb[0].mxu0
        %v3600 = vadd.f32 %v3439, %v3599
        %v3601 = vpop.f32.mrb[0].mxu0
        %3602 = vmatprep.mubr.bf16.mxu0 0
        %3603 = vmatmul.mubr.bf16.gmra.mrb[0].mxu0 %v2118
        %v3604 = vpop.f32.mrb[0].mxu0
        %v3605 = vadd.f32 %v3444, %v3604
        %v3606 = vpop.f32.mrb[0].mxu0
        %v3607 = vpop.f32.mrb[0].mxu0
        %v3608 = vadd.f32 %v3447, %v3607
        %v3609 = vpop.f32.mrb[0].mxu0
        %3610 = vmatprep.mubr.bf16.mxu0 0
        %3611 = vmatmul.mubr.bf16.gmra.mrb[0].mxu0 %v2121
        %v3612 = vpop.f32.mrb[0].mxu0
        %v3613 = vadd.f32 %v3452, %v3612
        %v3614 = vpop.f32.mrb[0].mxu0
        %v3615 = vpop.f32.mrb[0].mxu0
        %v3616 = vadd.f32 %v3455, %v3615
        %v3617 = vpop.f32.mrb[0].mxu0
        %3618 = vmatprep.mubr.bf16.mxu0 0
        %3619 = vmatmul.mubr.bf16.gmra.mrb[0].mxu0 %v2124
        %v3620 = vpop.f32.mrb[0].mxu0
        %v3621 = vadd.f32 %v3460, %v3620
        %v3622 = vpop.f32.mrb[0].mxu0
        %v3623 = vpop.f32.mrb[0].mxu0
        %v3624 = vadd.f32 %v3463, %v3623
        %v3625 = vpop.f32.mrb[0].mxu0
        %3626 = vmatprep.mubr.bf16.mxu0 0
        %3627 = vmatmul.mubr.bf16.gmra.mrb[0].mxu0 %v2127
        %v3628 = vpop.f32.mrb[0].mxu0
        %v3629 = vadd.f32 %v3468, %v3628
        %v3630 = vpop.f32.mrb[0].mxu0
        %v3631 = vpop.f32.mrb[0].mxu0
        %v3632 = vadd.f32 %v3471, %v3631
        %v3633 = vpop.f32.mrb[0].mxu0
        %3634 = vmatprep.mubr.bf16.mxu0 0
        %3635 = vmatmul.mubr.bf16.gmra.mrb[0].mxu0 %v2130
        %v3636 = vpop.f32.mrb[0].mxu0
        %v3637 = vadd.f32 %v3476, %v3636
        %v3638 = vpop.f32.mrb[0].mxu0
        %v3639 = vpop.f32.mrb[0].mxu0
        %v3640 = vadd.f32 %v3479, %v3639
        %v3641 = vpop.f32.mrb[0].mxu0
        %3642 = vmatprep.mubr.bf16.mxu0 0
        %3643 = vmatmul.mubr.bf16.gmra.mrb[0].mxu0 %v2133
        %v3644 = vpop.f32.mrb[0].mxu0
        %v3645 = vadd.f32 %v3484, %v3644
        %v3646 = vpop.f32.mrb[0].mxu0
        %v3647 = vpop.f32.mrb[0].mxu0
        %v3648 = vadd.f32 %v3487, %v3647
        %v3649 = vpop.f32.mrb[0].mxu0
        %3650 = vmatprep.mubr.bf16.mxu0 0
        %3651 = vmatmul.mubr.bf16.gmra.mrb[0].mxu0 %v2136
        %v3652 = vpop.f32.mrb[0].mxu0
        %v3653 = vadd.f32 %v3492, %v3652
        %v3654 = vpop.f32.mrb[0].mxu0
        %v3655 = vpop.f32.mrb[0].mxu0
        %v3656 = vadd.f32 %v3495, %v3655
        %v3657 = vpop.f32.mrb[0].mxu0
        %3658 = vmatprep.mubr.bf16.mxu0 0
        %3659 = vmatmul.mubr.bf16.gmra.mrb[0].mxu0 %v2139
        %v3660 = vpop.f32.mrb[0].mxu0
        %v3661 = vadd.f32 %v3500, %v3660
        %v3662 = vpop.f32.mrb[0].mxu0
        %v3663 = vpop.f32.mrb[0].mxu0
        %v3664 = vadd.f32 %v3503, %v3663
        %v3665 = vpop.f32.mrb[0].mxu0
        %3666 = vmatprep.mubr.bf16.mxu0 0
        %3667 = vmatmul.mubr.bf16.gmra.mrb[0].mxu0 %v2142
        %v3668 = vpop.f32.mrb[0].mxu0
        %v3669 = vadd.f32 %v3508, %v3668
        %v3670 = vpop.f32.mrb[0].mxu0
        %v3671 = vpop.f32.mrb[0].mxu0
        %v3672 = vadd.f32 %v3511, %v3671
        %v3673 = vpop.f32.mrb[0].mxu0
        %3674 = vmatprep.mubr.bf16.mxu0 0
        %3675 = vmatmul.mubr.bf16.gmra.mrb[0].mxu0 %v2145
        %v3676 = vpop.f32.mrb[0].mxu0
        %v3677 = vadd.f32 %v3516, %v3676
        %v3678 = vpop.f32.mrb[0].mxu0
        %v3679 = vpop.f32.mrb[0].mxu0
        %v3680 = vadd.f32 %v3519, %v3679
        %v3681 = vpop.f32.mrb[0].mxu0
        %3682 = vmatprep.mubr.bf16.mxu0 0
        %3683 = vmatmul.mubr.bf16.gmra.mrb[0].mxu0 %v2148
        %v3684 = vpop.f32.mrb[0].mxu0
        %v3685 = vadd.f32 %v3524, %v3684
        %v3686 = vpop.f32.mrb[0].mxu0
        %v3687 = vpop.f32.mrb[0].mxu0
        %v3688 = vadd.f32 %v3527, %v3687
        %v3689 = vpop.f32.mrb[0].mxu0
        %3690 = vmatprep.mubr.bf16.mxu0 0
        %3691 = vmatmul.mubr.bf16.gmra.mrb[0].mxu0 %v2151
        %v3692 = vpop.f32.mrb[0].mxu0
        %v3693 = vadd.f32 %v3532, %v3692
        %v3694 = vpop.f32.mrb[0].mxu0
        %v3695 = vpop.f32.mrb[0].mxu0
        %v3696 = vadd.f32 %v3535, %v3695
        %v3697 = vpop.f32.mrb[0].mxu0
        %3698 = vmatprep.mubr.bf16.mxu0 0
        %3699 = vmatmul.mubr.bf16.gmra.mrb[0].mxu0 %v2154
        %v3700 = vpop.f32.mrb[0].mxu0
        %v3701 = vadd.f32 %v3540, %v3700
        %v3702 = vpop.f32.mrb[0].mxu0
        %v3703 = vpop.f32.mrb[0].mxu0
        %v3704 = vadd.f32 %v3543, %v3703
        %v3705 = vpop.f32.mrb[0].mxu0
        %3706 = vmatprep.mubr.bf16.mxu0 0
        %3707 = vmatmul.mubr.bf16.gmra.mrb[0].mxu0 %v2157
        %v3708 = vpop.f32.mrb[0].mxu0
        %v3709 = vadd.f32 %v3548, %v3708
        %v3710 = vpop.f32.mrb[0].mxu0
        %v3711 = vpop.f32.mrb[0].mxu0
        %v3712 = vadd.f32 %v3551, %v3711
        %v3713 = vpop.f32.mrb[0].mxu0
        %3714 = vmatprep.mubr.bf16.mxu0 0
        %3715 = vmatmul.mubr.bf16.gmra.mrb[0].mxu0 %v2160
        %v3716 = vpop.f32.mrb[0].mxu0
        %v3717 = vadd.f32 %v3556, %v3716
        %v3718 = vpop.f32.mrb[0].mxu0
        %v3719 = vpop.f32.mrb[0].mxu0
        %v3720 = vadd.f32 %v3559, %v3719
        %v3721 = vpop.f32.mrb[0].mxu0
        %3722 = vdwg.mxu0
        %v3723 = vadd.f32 %v3082, %v3597
        %v3724 = vadd.f32 %v3085, %v3600
        %v3725 = vadd.f32 %v3090, %v3605
        %v3726 = vadd.f32 %v3093, %v3608
        %v3727 = vadd.f32 %v3098, %v3613
        %v3728 = vadd.f32 %v3101, %v3616
        %v3729 = vadd.f32 %v3106, %v3621
        %v3730 = vadd.f32 %v3109, %v3624
        %v3731 = vadd.f32 %v3114, %v3629
        %v3732 = vadd.f32 %v3117, %v3632
        %v3733 = vadd.f32 %v3122, %v3637
        %v3734 = vadd.f32 %v3125, %v3640
        %v3735 = vadd.f32 %v3130, %v3645
        %v3736 = vadd.f32 %v3133, %v3648
        %v3737 = vadd.f32 %v3138, %v3653
        %v3738 = vadd.f32 %v3141, %v3656
        %v3739 = vadd.f32 %v3146, %v3661
        %v3740 = vadd.f32 %v3149, %v3664
        %v3741 = vadd.f32 %v3154, %v3669
        %v3742 = vadd.f32 %v3157, %v3672
        %v3743 = vadd.f32 %v3162, %v3677
        %v3744 = vadd.f32 %v3165, %v3680
        %v3745 = vadd.f32 %v3170, %v3685
        %v3746 = vadd.f32 %v3173, %v3688
        %v3747 = vadd.f32 %v3178, %v3693
        %v3748 = vadd.f32 %v3181, %v3696
        %v3749 = vadd.f32 %v3186, %v3701
        %v3750 = vadd.f32 %v3189, %v3704
        %v3751 = vadd.f32 %v3194, %v3709
        %v3752 = vadd.f32 %v3197, %v3712
        %v3753 = vadd.f32 %v3202, %v3717
        %v3754 = vadd.f32 %v3205, %v3720
        %v3755 = vld [vmem:[%s4] sm:$0x1]
        %v3757 = vlaneseq
        %v3758 = vshrl.u32 %v3757, 7
        %v3759 = vsub.s32 0, %v3758
        %v3760 = vrot.slane %v3755, %v3759
        %v3762 = vadd.f32 %v3723, %v3760
        %v3763 = vadd.f32 %v3724, %v3760
        %v3764 = vadd.f32 %v3725, %v3760
        %v3765 = vadd.f32 %v3726, %v3760
        %v3766 = vadd.f32 %v3727, %v3760
        %v3767 = vadd.f32 %v3728, %v3760
        %v3768 = vadd.f32 %v3729, %v3760
        %v3769 = vadd.f32 %v3730, %v3760
        %v3770 = vadd.f32 %v3731, %v3760
        %v3771 = vadd.f32 %v3732, %v3760
        %v3772 = vadd.f32 %v3733, %v3760
        %v3773 = vadd.f32 %v3734, %v3760
        %v3774 = vadd.f32 %v3735, %v3760
        %v3775 = vadd.f32 %v3736, %v3760
        %v3776 = vadd.f32 %v3737, %v3760
        %v3777 = vadd.f32 %v3738, %v3760
        %v3778 = vadd.f32 %v3739, %v3760
        %v3779 = vadd.f32 %v3740, %v3760
        %v3780 = vadd.f32 %v3741, %v3760
        %v3781 = vadd.f32 %v3742, %v3760
        %v3782 = vadd.f32 %v3743, %v3760
        %v3783 = vadd.f32 %v3744, %v3760
        %v3784 = vadd.f32 %v3745, %v3760
        %v3785 = vadd.f32 %v3746, %v3760
        %v3786 = vadd.f32 %v3747, %v3760
        %v3787 = vadd.f32 %v3748, %v3760
        %v3788 = vadd.f32 %v3749, %v3760
        %v3789 = vadd.f32 %v3750, %v3760
        %v3790 = vadd.f32 %v3751, %v3760
        %v3791 = vadd.f32 %v3752, %v3760
        %v3792 = vadd.f32 %v3753, %v3760
        %v3793 = vadd.f32 %v3754, %v3760
        %v3794 = vmax.f32 %v3762, 0.0
        %v3795 = vmax.f32 %v3763, 0.0
        %v3796 = vmax.f32 %v3764, 0.0
        %v3797 = vmax.f32 %v3765, 0.0
        %v3798 = vmax.f32 %v3766, 0.0
        %v3799 = vmax.f32 %v3767, 0.0
        %v3800 = vmax.f32 %v3768, 0.0
        %v3801 = vmax.f32 %v3769, 0.0
        %v3802 = vmax.f32 %v3770, 0.0
        %v3803 = vmax.f32 %v3771, 0.0
        %v3804 = vmax.f32 %v3772, 0.0
        %v3805 = vmax.f32 %v3773, 0.0
        %v3806 = vmax.f32 %v3774, 0.0
        %v3807 = vmax.f32 %v3775, 0.0
        %v3808 = vmax.f32 %v3776, 0.0
        %v3809 = vmax.f32 %v3777, 0.0
        %v3810 = vmax.f32 %v3778, 0.0
        %v3811 = vmax.f32 %v3779, 0.0
        %v3812 = vmax.f32 %v3780, 0.0
        %v3813 = vmax.f32 %v3781, 0.0
        %v3814 = vmax.f32 %v3782, 0.0
        %v3815 = vmax.f32 %v3783, 0.0
        %v3816 = vmax.f32 %v3784, 0.0
        %v3817 = vmax.f32 %v3785, 0.0
        %v3818 = vmax.f32 %v3786, 0.0
        %v3819 = vmax.f32 %v3787, 0.0
        %v3820 = vmax.f32 %v3788, 0.0
        %v3821 = vmax.f32 %v3789, 0.0
        %v3822 = vmax.f32 %v3790, 0.0
        %v3823 = vmax.f32 %v3791, 0.0
        %v3824 = vmax.f32 %v3792, 0.0
        %v3825 = vmax.f32 %v3793, 0.0
        %v3826 = vpack.c.bf16 %v3795, %v3794
        %v3827 = vpack.c.bf16 %v3797, %v3796
        %v3828 = vpack.c.bf16 %v3799, %v3798
        %v3829 = vpack.c.bf16 %v3801, %v3800
        %v3830 = vpack.c.bf16 %v3803, %v3802
        %v3831 = vpack.c.bf16 %v3805, %v3804
        %v3832 = vpack.c.bf16 %v3807, %v3806
        %v3833 = vpack.c.bf16 %v3809, %v3808
        %v3834 = vpack.c.bf16 %v3811, %v3810
        %v3835 = vpack.c.bf16 %v3813, %v3812
        %v3836 = vpack.c.bf16 %v3815, %v3814
        %v3837 = vpack.c.bf16 %v3817, %v3816
        %v3838 = vpack.c.bf16 %v3819, %v3818
        %v3839 = vpack.c.bf16 %v3821, %v3820
        %v3840 = vpack.c.bf16 %v3823, %v3822
        %v3841 = vpack.c.bf16 %v3825, %v3824
        %v3842 = vld [vmem:[#allocation9] sm:$0xf]
        %v3843 = vld [vmem:[#allocation9 + $0x4] sm:$0xf]
        %v3844 = vld [vmem:[#allocation9 + $0x8] sm:$0xf]
        %v3845 = vld [vmem:[#allocation9 + $0xc] sm:$0xf]
        %v3846 = vld [vmem:[#allocation9 + $0x10] sm:$0xf]
        %v3847 = vld [vmem:[#allocation9 + $0x14] sm:$0xf]
        %v3848 = vld [vmem:[#allocation9 + $0x18] sm:$0xf]
        %v3849 = vld [vmem:[#allocation9 + $0x1c] sm:$0xf]
        %v3850 = vld [vmem:[#allocation9 + $0x20] sm:$0xf]
        %v3851 = vld [vmem:[#allocation9 + $0x24] sm:$0xf]
        %v3852 = vld [vmem:[#allocation9 + $0x28] sm:$0xf]
        %v3853 = vld [vmem:[#allocation9 + $0x2c] sm:$0xf]
        %v3854 = vld [vmem:[#allocation9 + $0x30] sm:$0xf]
        %v3855 = vld [vmem:[#allocation9 + $0x34] sm:$0xf]
        %v3856 = vld [vmem:[#allocation9 + $0x38] sm:$0xf]
        %v3857 = vld [vmem:[#allocation9 + $0x3c] sm:$0xf]
        %v3858 = vld [vmem:[%s6] sm:$0x1]
        %v3860 = vlaneseq
        %v3861 = vshrl.u32 %v3860, 7
        %v3862 = vsub.s32 0, %v3861
        %v3863 = vrot.slane %v3858, %v3862
        %v3881 = vunpack.c.l.b16 %v3842
        %v3882 = vunpack.c.l.b16 %v3843
        %v3883 = vunpack.c.l.b16 %v3844
        %v3884 = vunpack.c.l.b16 %v3845
        %v3885 = vunpack.c.l.b16 %v3846
        %v3886 = vunpack.c.l.b16 %v3847
        %v3887 = vunpack.c.l.b16 %v3848
        %v3888 = vunpack.c.l.b16 %v3849
        %v3889 = vunpack.c.l.b16 %v3850
        %v3890 = vunpack.c.l.b16 %v3851
        %v3891 = vunpack.c.l.b16 %v3852
        %v3892 = vunpack.c.l.b16 %v3853
        %v3893 = vunpack.c.l.b16 %v3854
        %v3894 = vunpack.c.l.b16 %v3855
        %v3895 = vunpack.c.l.b16 %v3856
        %v3896 = vunpack.c.l.b16 %v3857
        %v3897 = vpack.c.b16 %v3882, %v3881
        %v3898 = vpack.c.b16 %v3884, %v3883
        %v3899 = vpack.c.b16 %v3886, %v3885
        %v3900 = vpack.c.b16 %v3888, %v3887
        %v3901 = vpack.c.b16 %v3890, %v3889
        %v3902 = vpack.c.b16 %v3892, %v3891
        %v3903 = vpack.c.b16 %v3894, %v3893
        %v3904 = vpack.c.b16 %v3896, %v3895
        %3913 = vmatprep.subr.bf16.mxu0 0
        %3914 = vmatpush1.bf16.msra.mxu0 %v3897
        %3915 = vmatprep.subr.bf16.mxu0 0
        %3916 = vmatpush1.bf16.msra.mxu0 %v3898
        %3917 = vmatprep.subr.bf16.mxu0 0
        %3918 = vmatpush1.bf16.msra.mxu0 %v3899
        %3919 = vmatprep.subr.bf16.mxu0 0
        %3920 = vmatpush1.bf16.msra.mxu0 %v3900
        %3921 = vmatprep.subr.bf16.mxu0 0
        %3922 = vmatpush1.bf16.msra.mxu0 %v3901
        %3923 = vmatprep.subr.bf16.mxu0 0
        %3924 = vmatpush1.bf16.msra.mxu0 %v3902
        %3925 = vmatprep.subr.bf16.mxu0 0
        %3926 = vmatpush1.bf16.msra.mxu0 %v3903
        %3927 = vmatprep.subr.bf16.mxu0 0
        %3928 = vmatpush1.bf16.msra.mxu0 %v3904
        %3929 = vmatprep.subr.bf16.mxu0 0
        %3930 = vmatpush1.bf16.msra.mxu0 0
        %3931 = vmatprep.subr.bf16.mxu0 0
        %3932 = vmatpush1.bf16.msra.mxu0 0
        %3933 = vmatprep.subr.bf16.mxu0 0
        %3934 = vmatpush1.bf16.msra.mxu0 0
        %3935 = vmatprep.subr.bf16.mxu0 0
        %3936 = vmatpush1.bf16.msra.mxu0 0
        %3937 = vmatprep.subr.bf16.mxu0 0
        %3938 = vmatpush1.bf16.msra.mxu0 0
        %3939 = vmatprep.subr.bf16.mxu0 0
        %3940 = vmatpush1.bf16.msra.mxu0 0
        %3941 = vmatprep.subr.bf16.mxu0 0
        %3942 = vmatpush1.bf16.msra.mxu0 0
        %3943 = vmatprep.subr.bf16.mxu0 0
        %3944 = vmatpush1.bf16.msra.mxu0 0
        %3945 = vmatprep.mubr.bf16.mxu0 0
        %3946 = vmatmul.mubr.bf16.gmra.mrb[0].mxu0 %v3826
        %v3947 = vpop.f32.mrb[0].mxu0
        %v3948 = vadd.f32 %v3863, %v3947
        %v3949 = vpop.f32.mrb[0].mxu0
        %v3950 = vpop.f32.mrb[0].mxu0
        %v3951 = vadd.f32 %v3863, %v3950
        %v3952 = vpop.f32.mrb[0].mxu0
        %3953 = vmatprep.mubr.bf16.mxu0 0
        %3954 = vmatmul.mubr.bf16.gmra.mrb[0].mxu0 %v3827
        %v3955 = vpop.f32.mrb[0].mxu0
        %v3956 = vadd.f32 %v3863, %v3955
        %v3957 = vpop.f32.mrb[0].mxu0
        %v3958 = vpop.f32.mrb[0].mxu0
        %v3959 = vadd.f32 %v3863, %v3958
        %v3960 = vpop.f32.mrb[0].mxu0
        %3961 = vmatprep.mubr.bf16.mxu0 0
        %3962 = vmatmul.mubr.bf16.gmra.mrb[0].mxu0 %v3828
        %v3963 = vpop.f32.mrb[0].mxu0
        %v3964 = vadd.f32 %v3863, %v3963
        %v3965 = vpop.f32.mrb[0].mxu0
        %v3966 = vpop.f32.mrb[0].mxu0
        %v3967 = vadd.f32 %v3863, %v3966
        %v3968 = vpop.f32.mrb[0].mxu0
        %3969 = vmatprep.mubr.bf16.mxu0 0
        %3970 = vmatmul.mubr.bf16.gmra.mrb[0].mxu0 %v3829
        %v3971 = vpop.f32.mrb[0].mxu0
        %v3972 = vadd.f32 %v3863, %v3971
        %v3973 = vpop.f32.mrb[0].mxu0
        %v3974 = vpop.f32.mrb[0].mxu0
        %v3975 = vadd.f32 %v3863, %v3974
        %v3976 = vpop.f32.mrb[0].mxu0
        %3977 = vmatprep.mubr.bf16.mxu0 0
        %3978 = vmatmul.mubr.bf16.gmra.mrb[0].mxu0 %v3830
        %v3979 = vpop.f32.mrb[0].mxu0
        %v3980 = vadd.f32 %v3863, %v3979
        %v3981 = vpop.f32.mrb[0].mxu0
        %v3982 = vpop.f32.mrb[0].mxu0
        %v3983 = vadd.f32 %v3863, %v3982
        %v3984 = vpop.f32.mrb[0].mxu0
        %3985 = vmatprep.mubr.bf16.mxu0 0
        %3986 = vmatmul.mubr.bf16.gmra.mrb[0].mxu0 %v3831
        %v3987 = vpop.f32.mrb[0].mxu0
        %v3988 = vadd.f32 %v3863, %v3987
        %v3989 = vpop.f32.mrb[0].mxu0
        %v3990 = vpop.f32.mrb[0].mxu0
        %v3991 = vadd.f32 %v3863, %v3990
        %v3992 = vpop.f32.mrb[0].mxu0
        %3993 = vmatprep.mubr.bf16.mxu0 0
        %3994 = vmatmul.mubr.bf16.gmra.mrb[0].mxu0 %v3832
        %v3995 = vpop.f32.mrb[0].mxu0
        %v3996 = vadd.f32 %v3863, %v3995
        %v3997 = vpop.f32.mrb[0].mxu0
        %v3998 = vpop.f32.mrb[0].mxu0
        %v3999 = vadd.f32 %v3863, %v3998
        %v4000 = vpop.f32.mrb[0].mxu0
        %4001 = vmatprep.mubr.bf16.mxu0 0
        %4002 = vmatmul.mubr.bf16.gmra.mrb[0].mxu0 %v3833
        %v4003 = vpop.f32.mrb[0].mxu0
        %v4004 = vadd.f32 %v3863, %v4003
        %v4005 = vpop.f32.mrb[0].mxu0
        %v4006 = vpop.f32.mrb[0].mxu0
        %v4007 = vadd.f32 %v3863, %v4006
        %v4008 = vpop.f32.mrb[0].mxu0
        %4009 = vmatprep.mubr.bf16.mxu0 0
        %4010 = vmatmul.mubr.bf16.gmra.mrb[0].mxu0 %v3834
        %v4011 = vpop.f32.mrb[0].mxu0
        %v4012 = vadd.f32 %v3863, %v4011
        %v4013 = vpop.f32.mrb[0].mxu0
        %v4014 = vpop.f32.mrb[0].mxu0
        %v4015 = vadd.f32 %v3863, %v4014
        %v4016 = vpop.f32.mrb[0].mxu0
        %4017 = vmatprep.mubr.bf16.mxu0 0
        %4018 = vmatmul.mubr.bf16.gmra.mrb[0].mxu0 %v3835
        %v4019 = vpop.f32.mrb[0].mxu0
        %v4020 = vadd.f32 %v3863, %v4019
        %v4021 = vpop.f32.mrb[0].mxu0
        %v4022 = vpop.f32.mrb[0].mxu0
        %v4023 = vadd.f32 %v3863, %v4022
        %v4024 = vpop.f32.mrb[0].mxu0
        %4025 = vmatprep.mubr.bf16.mxu0 0
        %4026 = vmatmul.mubr.bf16.gmra.mrb[0].mxu0 %v3836
        %v4027 = vpop.f32.mrb[0].mxu0
        %v4028 = vadd.f32 %v3863, %v4027
        %v4029 = vpop.f32.mrb[0].mxu0
        %v4030 = vpop.f32.mrb[0].mxu0
        %v4031 = vadd.f32 %v3863, %v4030
        %v4032 = vpop.f32.mrb[0].mxu0
        %4033 = vmatprep.mubr.bf16.mxu0 0
        %4034 = vmatmul.mubr.bf16.gmra.mrb[0].mxu0 %v3837
        %v4035 = vpop.f32.mrb[0].mxu0
        %v4036 = vadd.f32 %v3863, %v4035
        %v4037 = vpop.f32.mrb[0].mxu0
        %v4038 = vpop.f32.mrb[0].mxu0
        %v4039 = vadd.f32 %v3863, %v4038
        %v4040 = vpop.f32.mrb[0].mxu0
        %4041 = vmatprep.mubr.bf16.mxu0 0
        %4042 = vmatmul.mubr.bf16.gmra.mrb[0].mxu0 %v3838
        %v4043 = vpop.f32.mrb[0].mxu0
        %v4044 = vadd.f32 %v3863, %v4043
        %v4045 = vpop.f32.mrb[0].mxu0
        %v4046 = vpop.f32.mrb[0].mxu0
        %v4047 = vadd.f32 %v3863, %v4046
        %v4048 = vpop.f32.mrb[0].mxu0
        %4049 = vmatprep.mubr.bf16.mxu0 0
        %4050 = vmatmul.mubr.bf16.gmra.mrb[0].mxu0 %v3839
        %v4051 = vpop.f32.mrb[0].mxu0
        %v4052 = vadd.f32 %v3863, %v4051
        %v4053 = vpop.f32.mrb[0].mxu0
        %v4054 = vpop.f32.mrb[0].mxu0
        %v4055 = vadd.f32 %v3863, %v4054
        %v4056 = vpop.f32.mrb[0].mxu0
        %4057 = vmatprep.mubr.bf16.mxu0 0
        %4058 = vmatmul.mubr.bf16.gmra.mrb[0].mxu0 %v3840
        %v4059 = vpop.f32.mrb[0].mxu0
        %v4060 = vadd.f32 %v3863, %v4059
        %v4061 = vpop.f32.mrb[0].mxu0
        %v4062 = vpop.f32.mrb[0].mxu0
        %v4063 = vadd.f32 %v3863, %v4062
        %v4064 = vpop.f32.mrb[0].mxu0
        %4065 = vmatprep.mubr.bf16.mxu0 0
        %4066 = vmatmul.mubr.bf16.gmra.mrb[0].mxu0 %v3841
        %v4067 = vpop.f32.mrb[0].mxu0
        %v4068 = vadd.f32 %v3863, %v4067
        %v4069 = vpop.f32.mrb[0].mxu0
        %v4070 = vpop.f32.mrb[0].mxu0
        %v4071 = vadd.f32 %v3863, %v4070
        %v4072 = vpop.f32.mrb[0].mxu0
        %4073 = vdwg.mxu0
        %s4074 = sadd.s32 %s425, 1
        %s4075 = smul.u32 %s4074, 2
        %s4076 = smul.addr %s4075, 4
        %s4077 = scalar_lea.vmem %s372, %s4076 [#allocation3]
        %v4078 = vld [vmem:[%s4077] sm:$0xf]
        %v4079 = vld [vmem:[%s4077 + $0x4] sm:$0xf]
        %v4080 = vld [vmem:[%s4077 + $0x8] sm:$0xf]
        %v4081 = vld [vmem:[%s4077 + $0xc] sm:$0xf]
        %v4082 = vld [vmem:[%s4077 + $0x10] sm:$0xf]
        %v4083 = vld [vmem:[%s4077 + $0x14] sm:$0xf]
        %v4084 = vld [vmem:[%s4077 + $0x18] sm:$0xf]
        %v4085 = vld [vmem:[%s4077 + $0x1c] sm:$0xf]
        %v4086 = vld [vmem:[%s4077 + $0x20] sm:$0xf]
        %v4087 = vld [vmem:[%s4077 + $0x24] sm:$0xf]
        %v4088 = vld [vmem:[%s4077 + $0x28] sm:$0xf]
        %v4089 = vld [vmem:[%s4077 + $0x2c] sm:$0xf]
        %v4090 = vld [vmem:[%s4077 + $0x30] sm:$0xf]
        %v4091 = vld [vmem:[%s4077 + $0x34] sm:$0xf]
        %v4092 = vld [vmem:[%s4077 + $0x38] sm:$0xf]
        %v4093 = vld [vmem:[%s4077 + $0x3c] sm:$0xf]
        %v4094 = vld [vmem:[%s4077 + $0x40] sm:$0xf]
        %v4095 = vld [vmem:[%s4077 + $0x44] sm:$0xf]
        %v4096 = vld [vmem:[%s4077 + $0x48] sm:$0xf]
        %v4097 = vld [vmem:[%s4077 + $0x4c] sm:$0xf]
        %v4098 = vld [vmem:[%s4077 + $0x50] sm:$0xf]
        %v4099 = vld [vmem:[%s4077 + $0x54] sm:$0xf]
        %v4100 = vld [vmem:[%s4077 + $0x58] sm:$0xf]
        %v4101 = vld [vmem:[%s4077 + $0x5c] sm:$0xf]
        %v4102 = vld [vmem:[%s4077 + $0x60] sm:$0xf]
        %v4103 = vld [vmem:[%s4077 + $0x64] sm:$0xf]
        %v4104 = vld [vmem:[%s4077 + $0x68] sm:$0xf]
        %v4105 = vld [vmem:[%s4077 + $0x6c] sm:$0xf]
        %v4106 = vld [vmem:[%s4077 + $0x70] sm:$0xf]
        %v4107 = vld [vmem:[%s4077 + $0x74] sm:$0xf]
        %v4108 = vld [vmem:[%s4077 + $0x78] sm:$0xf]
        %v4109 = vld [vmem:[%s4077 + $0x7c] sm:$0xf]
        %v4110 = vld [vmem:[#allocation11] sm:$0xf]
        %v4111 = vld [vmem:[#allocation11 + $0x4] sm:$0xf]
        %v4112 = vld [vmem:[#allocation11 + $0x8] sm:$0xf]
        %v4113 = vld [vmem:[#allocation11 + $0xc] sm:$0xf]
        %v4114 = vld [vmem:[#allocation11 + $0x10] sm:$0xf]
        %v4115 = vld [vmem:[#allocation11 + $0x14] sm:$0xf]
        %v4116 = vld [vmem:[#allocation11 + $0x18] sm:$0xf]
        %v4117 = vld [vmem:[#allocation11 + $0x1c] sm:$0xf]
        %v4118 = vld [vmem:[#allocation11 + $0x20] sm:$0xf]
        %v4119 = vld [vmem:[#allocation11 + $0x24] sm:$0xf]
        %v4120 = vld [vmem:[#allocation11 + $0x28] sm:$0xf]
        %v4121 = vld [vmem:[#allocation11 + $0x2c] sm:$0xf]
        %v4122 = vld [vmem:[#allocation11 + $0x30] sm:$0xf]
        %v4123 = vld [vmem:[#allocation11 + $0x34] sm:$0xf]
        %v4124 = vld [vmem:[#allocation11 + $0x38] sm:$0xf]
        %v4125 = vld [vmem:[#allocation11 + $0x3c] sm:$0xf]
        %v4126 = vld [vmem:[%s8] sm:$0x1]
        %v4128 = vlaneseq
        %v4129 = vshrl.u32 %v4128, 7
        %v4130 = vsub.s32 0, %v4129
        %v4131 = vrot.slane %v4126, %v4130
        %v4165 = vunpack.c.l.b16 %v4078
        %v4166 = vunpack.c.l.b16 %v4079
        %v4167 = vunpack.c.l.b16 %v4080
        %v4168 = vunpack.c.l.b16 %v4081
        %v4169 = vunpack.c.l.b16 %v4082
        %v4170 = vunpack.c.l.b16 %v4083
        %v4171 = vunpack.c.l.b16 %v4084
        %v4172 = vunpack.c.l.b16 %v4085
        %v4173 = vunpack.c.l.b16 %v4086
        %v4174 = vunpack.c.l.b16 %v4087
        %v4175 = vunpack.c.l.b16 %v4088
        %v4176 = vunpack.c.l.b16 %v4089
        %v4177 = vunpack.c.l.b16 %v4090
        %v4178 = vunpack.c.l.b16 %v4091
        %v4179 = vunpack.c.l.b16 %v4092
        %v4180 = vunpack.c.l.b16 %v4093
        %v4181 = vunpack.c.l.b16 %v4094
        %v4182 = vunpack.c.l.b16 %v4095
        %v4183 = vunpack.c.l.b16 %v4096
        %v4184 = vunpack.c.l.b16 %v4097
        %v4185 = vunpack.c.l.b16 %v4098
        %v4186 = vunpack.c.l.b16 %v4099
        %v4187 = vunpack.c.l.b16 %v4100
        %v4188 = vunpack.c.l.b16 %v4101
        %v4189 = vunpack.c.l.b16 %v4102
        %v4190 = vunpack.c.l.b16 %v4103
        %v4191 = vunpack.c.l.b16 %v4104
        %v4192 = vunpack.c.l.b16 %v4105
        %v4193 = vunpack.c.l.b16 %v4106
        %v4194 = vunpack.c.l.b16 %v4107
        %v4195 = vunpack.c.l.b16 %v4108
        %v4196 = vunpack.c.l.b16 %v4109
        %v4197 = vpack.c.b16 %v4166, %v4165
        %v4198 = vpack.c.b16 %v4168, %v4167
        %v4199 = vpack.c.b16 %v4170, %v4169
        %v4200 = vpack.c.b16 %v4172, %v4171
        %v4201 = vpack.c.b16 %v4174, %v4173
        %v4202 = vpack.c.b16 %v4176, %v4175
        %v4203 = vpack.c.b16 %v4178, %v4177
        %v4204 = vpack.c.b16 %v4180, %v4179
        %v4205 = vpack.c.b16 %v4182, %v4181
        %v4206 = vpack.c.b16 %v4184, %v4183
        %v4207 = vpack.c.b16 %v4186, %v4185
        %v4208 = vpack.c.b16 %v4188, %v4187
        %v4209 = vpack.c.b16 %v4190, %v4189
        %v4210 = vpack.c.b16 %v4192, %v4191
        %v4211 = vpack.c.b16 %v4194, %v4193
        %v4212 = vpack.c.b16 %v4196, %v4195
        %v4245 = vunpack.c.l.b16 %v4110
        %v4246 = vunpack.c.l.b16 %v4111
        %v4247 = vunpack.c.l.b16 %v4112
        %v4248 = vunpack.c.l.b16 %v4113
        %v4249 = vunpack.c.l.b16 %v4114
        %v4250 = vunpack.c.l.b16 %v4115
        %v4251 = vunpack.c.l.b16 %v4116
        %v4252 = vunpack.c.l.b16 %v4117
        %v4253 = vunpack.c.l.b16 %v4118
        %v4254 = vunpack.c.l.b16 %v4119
        %v4255 = vunpack.c.l.b16 %v4120
        %v4256 = vunpack.c.l.b16 %v4121
        %v4257 = vunpack.c.l.b16 %v4122
        %v4258 = vunpack.c.l.b16 %v4123
        %v4259 = vunpack.c.l.b16 %v4124
        %v4260 = vunpack.c.l.b16 %v4125
        %v4261 = vpack.c.b16 %v4246, %v4245
        %v4262 = vpack.c.b16 %v4248, %v4247
        %v4263 = vpack.c.b16 %v4250, %v4249
        %v4264 = vpack.c.b16 %v4252, %v4251
        %v4265 = vpack.c.b16 %v4254, %v4253
        %v4266 = vpack.c.b16 %v4256, %v4255
        %v4267 = vpack.c.b16 %v4258, %v4257
        %v4268 = vpack.c.b16 %v4260, %v4259
        %4277 = vmatprep.subr.bf16.mxu0 0
        %4278 = vmatpush1.bf16.msra.mxu0 %v4261
        %4279 = vmatprep.subr.bf16.mxu0 0
        %4280 = vmatpush1.bf16.msra.mxu0 %v4262
        %4281 = vmatprep.subr.bf16.mxu0 0
        %4282 = vmatpush1.bf16.msra.mxu0 %v4263
        %4283 = vmatprep.subr.bf16.mxu0 0
        %4284 = vmatpush1.bf16.msra.mxu0 %v4264
        %4285 = vmatprep.subr.bf16.mxu0 0
        %4286 = vmatpush1.bf16.msra.mxu0 %v4265
        %4287 = vmatprep.subr.bf16.mxu0 0
        %4288 = vmatpush1.bf16.msra.mxu0 %v4266
        %4289 = vmatprep.subr.bf16.mxu0 0
        %4290 = vmatpush1.bf16.msra.mxu0 %v4267
        %4291 = vmatprep.subr.bf16.mxu0 0
        %4292 = vmatpush1.bf16.msra.mxu0 %v4268
        %4293 = vmatprep.subr.bf16.mxu0 0
        %4294 = vmatpush1.bf16.msra.mxu0 0
        %4295 = vmatprep.subr.bf16.mxu0 0
        %4296 = vmatpush1.bf16.msra.mxu0 0
        %4297 = vmatprep.subr.bf16.mxu0 0
        %4298 = vmatpush1.bf16.msra.mxu0 0
        %4299 = vmatprep.subr.bf16.mxu0 0
        %4300 = vmatpush1.bf16.msra.mxu0 0
        %4301 = vmatprep.subr.bf16.mxu0 0
        %4302 = vmatpush1.bf16.msra.mxu0 0
        %4303 = vmatprep.subr.bf16.mxu0 0
        %4304 = vmatpush1.bf16.msra.mxu0 0
        %4305 = vmatprep.subr.bf16.mxu0 0
        %4306 = vmatpush1.bf16.msra.mxu0 0
        %4307 = vmatprep.subr.bf16.mxu0 0
        %4308 = vmatpush1.bf16.msra.mxu0 0
        %4309 = vmatprep.mubr.bf16.mxu0 0
        %4310 = vmatmul.mubr.bf16.gmra.mrb[0].mxu0 %v4197
        %v4311 = vpop.f32.mrb[0].mxu0
        %v4312 = vadd.f32 %v4131, %v4311
        %v4313 = vpop.f32.mrb[0].mxu0
        %v4314 = vpop.f32.mrb[0].mxu0
        %v4315 = vadd.f32 %v4131, %v4314
        %v4316 = vpop.f32.mrb[0].mxu0
        %4317 = vmatprep.mubr.bf16.mxu0 0
        %4318 = vmatmul.mubr.bf16.gmra.mrb[0].mxu0 %v4198
        %v4319 = vpop.f32.mrb[0].mxu0
        %v4320 = vadd.f32 %v4131, %v4319
        %v4321 = vpop.f32.mrb[0].mxu0
        %v4322 = vpop.f32.mrb[0].mxu0
        %v4323 = vadd.f32 %v4131, %v4322
        %v4324 = vpop.f32.mrb[0].mxu0
        %4325 = vmatprep.mubr.bf16.mxu0 0
        %4326 = vmatmul.mubr.bf16.gmra.mrb[0].mxu0 %v4199
        %v4327 = vpop.f32.mrb[0].mxu0
        %v4328 = vadd.f32 %v4131, %v4327
        %v4329 = vpop.f32.mrb[0].mxu0
        %v4330 = vpop.f32.mrb[0].mxu0
        %v4331 = vadd.f32 %v4131, %v4330
        %v4332 = vpop.f32.mrb[0].mxu0
        %4333 = vmatprep.mubr.bf16.mxu0 0
        %4334 = vmatmul.mubr.bf16.gmra.mrb[0].mxu0 %v4200
        %v4335 = vpop.f32.mrb[0].mxu0
        %v4336 = vadd.f32 %v4131, %v4335
        %v4337 = vpop.f32.mrb[0].mxu0
        %v4338 = vpop.f32.mrb[0].mxu0
        %v4339 = vadd.f32 %v4131, %v4338
        %v4340 = vpop.f32.mrb[0].mxu0
        %4341 = vmatprep.mubr.bf16.mxu0 0
        %4342 = vmatmul.mubr.bf16.gmra.mrb[0].mxu0 %v4201
        %v4343 = vpop.f32.mrb[0].mxu0
        %v4344 = vadd.f32 %v4131, %v4343
        %v4345 = vpop.f32.mrb[0].mxu0
        %v4346 = vpop.f32.mrb[0].mxu0
        %v4347 = vadd.f32 %v4131, %v4346
        %v4348 = vpop.f32.mrb[0].mxu0
        %4349 = vmatprep.mubr.bf16.mxu0 0
        %4350 = vmatmul.mubr.bf16.gmra.mrb[0].mxu0 %v4202
        %v4351 = vpop.f32.mrb[0].mxu0
        %v4352 = vadd.f32 %v4131, %v4351
        %v4353 = vpop.f32.mrb[0].mxu0
        %v4354 = vpop.f32.mrb[0].mxu0
        %v4355 = vadd.f32 %v4131, %v4354
        %v4356 = vpop.f32.mrb[0].mxu0
        %4357 = vmatprep.mubr.bf16.mxu0 0
        %4358 = vmatmul.mubr.bf16.gmra.mrb[0].mxu0 %v4203
        %v4359 = vpop.f32.mrb[0].mxu0
        %v4360 = vadd.f32 %v4131, %v4359
        %v4361 = vpop.f32.mrb[0].mxu0
        %v4362 = vpop.f32.mrb[0].mxu0
        %v4363 = vadd.f32 %v4131, %v4362
        %v4364 = vpop.f32.mrb[0].mxu0
        %4365 = vmatprep.mubr.bf16.mxu0 0
        %4366 = vmatmul.mubr.bf16.gmra.mrb[0].mxu0 %v4204
        %v4367 = vpop.f32.mrb[0].mxu0
        %v4368 = vadd.f32 %v4131, %v4367
        %v4369 = vpop.f32.mrb[0].mxu0
        %v4370 = vpop.f32.mrb[0].mxu0
        %v4371 = vadd.f32 %v4131, %v4370
        %v4372 = vpop.f32.mrb[0].mxu0
        %4373 = vmatprep.mubr.bf16.mxu0 0
        %4374 = vmatmul.mubr.bf16.gmra.mrb[0].mxu0 %v4205
        %v4375 = vpop.f32.mrb[0].mxu0
        %v4376 = vadd.f32 %v4131, %v4375
        %v4377 = vpop.f32.mrb[0].mxu0
        %v4378 = vpop.f32.mrb[0].mxu0
        %v4379 = vadd.f32 %v4131, %v4378
        %v4380 = vpop.f32.mrb[0].mxu0
        %4381 = vmatprep.mubr.bf16.mxu0 0
        %4382 = vmatmul.mubr.bf16.gmra.mrb[0].mxu0 %v4206
        %v4383 = vpop.f32.mrb[0].mxu0
        %v4384 = vadd.f32 %v4131, %v4383
        %v4385 = vpop.f32.mrb[0].mxu0
        %v4386 = vpop.f32.mrb[0].mxu0
        %v4387 = vadd.f32 %v4131, %v4386
        %v4388 = vpop.f32.mrb[0].mxu0
        %4389 = vmatprep.mubr.bf16.mxu0 0
        %4390 = vmatmul.mubr.bf16.gmra.mrb[0].mxu0 %v4207
        %v4391 = vpop.f32.mrb[0].mxu0
        %v4392 = vadd.f32 %v4131, %v4391
        %v4393 = vpop.f32.mrb[0].mxu0
        %v4394 = vpop.f32.mrb[0].mxu0
        %v4395 = vadd.f32 %v4131, %v4394
        %v4396 = vpop.f32.mrb[0].mxu0
        %4397 = vmatprep.mubr.bf16.mxu0 0
        %4398 = vmatmul.mubr.bf16.gmra.mrb[0].mxu0 %v4208
        %v4399 = vpop.f32.mrb[0].mxu0
        %v4400 = vadd.f32 %v4131, %v4399
        %v4401 = vpop.f32.mrb[0].mxu0
        %v4402 = vpop.f32.mrb[0].mxu0
        %v4403 = vadd.f32 %v4131, %v4402
        %v4404 = vpop.f32.mrb[0].mxu0
        %4405 = vmatprep.mubr.bf16.mxu0 0
        %4406 = vmatmul.mubr.bf16.gmra.mrb[0].mxu0 %v4209
        %v4407 = vpop.f32.mrb[0].mxu0
        %v4408 = vadd.f32 %v4131, %v4407
        %v4409 = vpop.f32.mrb[0].mxu0
        %v4410 = vpop.f32.mrb[0].mxu0
        %v4411 = vadd.f32 %v4131, %v4410
        %v4412 = vpop.f32.mrb[0].mxu0
        %4413 = vmatprep.mubr.bf16.mxu0 0
        %4414 = vmatmul.mubr.bf16.gmra.mrb[0].mxu0 %v4210
        %v4415 = vpop.f32.mrb[0].mxu0
        %v4416 = vadd.f32 %v4131, %v4415
        %v4417 = vpop.f32.mrb[0].mxu0
        %v4418 = vpop.f32.mrb[0].mxu0
        %v4419 = vadd.f32 %v4131, %v4418
        %v4420 = vpop.f32.mrb[0].mxu0
        %4421 = vmatprep.mubr.bf16.mxu0 0
        %4422 = vmatmul.mubr.bf16.gmra.mrb[0].mxu0 %v4211
        %v4423 = vpop.f32.mrb[0].mxu0
        %v4424 = vadd.f32 %v4131, %v4423
        %v4425 = vpop.f32.mrb[0].mxu0
        %v4426 = vpop.f32.mrb[0].mxu0
        %v4427 = vadd.f32 %v4131, %v4426
        %v4428 = vpop.f32.mrb[0].mxu0
        %4429 = vmatprep.mubr.bf16.mxu0 0
        %4430 = vmatmul.mubr.bf16.gmra.mrb[0].mxu0 %v4212
        %v4431 = vpop.f32.mrb[0].mxu0
        %v4432 = vadd.f32 %v4131, %v4431
        %v4433 = vpop.f32.mrb[0].mxu0
        %v4434 = vpop.f32.mrb[0].mxu0
        %v4435 = vadd.f32 %v4131, %v4434
        %v4436 = vpop.f32.mrb[0].mxu0
        %4437 = vdwg.mxu0
        %v4438 = vadd.f32 %v3948, %v4312
        %v4439 = vadd.f32 %v3951, %v4315
        %v4440 = vadd.f32 %v3956, %v4320
        %v4441 = vadd.f32 %v3959, %v4323
        %v4442 = vadd.f32 %v3964, %v4328
        %v4443 = vadd.f32 %v3967, %v4331
        %v4444 = vadd.f32 %v3972, %v4336
        %v4445 = vadd.f32 %v3975, %v4339
        %v4446 = vadd.f32 %v3980, %v4344
        %v4447 = vadd.f32 %v3983, %v4347
        %v4448 = vadd.f32 %v3988, %v4352
        %v4449 = vadd.f32 %v3991, %v4355
        %v4450 = vadd.f32 %v3996, %v4360
        %v4451 = vadd.f32 %v3999, %v4363
        %v4452 = vadd.f32 %v4004, %v4368
        %v4453 = vadd.f32 %v4007, %v4371
        %v4454 = vadd.f32 %v4012, %v4376
        %v4455 = vadd.f32 %v4015, %v4379
        %v4456 = vadd.f32 %v4020, %v4384
        %v4457 = vadd.f32 %v4023, %v4387
        %v4458 = vadd.f32 %v4028, %v4392
        %v4459 = vadd.f32 %v4031, %v4395
        %v4460 = vadd.f32 %v4036, %v4400
        %v4461 = vadd.f32 %v4039, %v4403
        %v4462 = vadd.f32 %v4044, %v4408
        %v4463 = vadd.f32 %v4047, %v4411
        %v4464 = vadd.f32 %v4052, %v4416
        %v4465 = vadd.f32 %v4055, %v4419
        %v4466 = vadd.f32 %v4060, %v4424
        %v4467 = vadd.f32 %v4063, %v4427
        %v4468 = vadd.f32 %v4068, %v4432
        %v4469 = vadd.f32 %v4071, %v4435
        %v4470 = vmax.f32 %v4438, 0.0
        %v4471 = vmax.f32 %v4439, 0.0
        %v4472 = vmax.f32 %v4440, 0.0
        %v4473 = vmax.f32 %v4441, 0.0
        %v4474 = vmax.f32 %v4442, 0.0
        %v4475 = vmax.f32 %v4443, 0.0
        %v4476 = vmax.f32 %v4444, 0.0
        %v4477 = vmax.f32 %v4445, 0.0
        %v4478 = vmax.f32 %v4446, 0.0
        %v4479 = vmax.f32 %v4447, 0.0
        %v4480 = vmax.f32 %v4448, 0.0
        %v4481 = vmax.f32 %v4449, 0.0
        %v4482 = vmax.f32 %v4450, 0.0
        %v4483 = vmax.f32 %v4451, 0.0
        %v4484 = vmax.f32 %v4452, 0.0
        %v4485 = vmax.f32 %v4453, 0.0
        %v4486 = vmax.f32 %v4454, 0.0
        %v4487 = vmax.f32 %v4455, 0.0
        %v4488 = vmax.f32 %v4456, 0.0
        %v4489 = vmax.f32 %v4457, 0.0
        %v4490 = vmax.f32 %v4458, 0.0
        %v4491 = vmax.f32 %v4459, 0.0
        %v4492 = vmax.f32 %v4460, 0.0
        %v4493 = vmax.f32 %v4461, 0.0
        %v4494 = vmax.f32 %v4462, 0.0
        %v4495 = vmax.f32 %v4463, 0.0
        %v4496 = vmax.f32 %v4464, 0.0
        %v4497 = vmax.f32 %v4465, 0.0
        %v4498 = vmax.f32 %v4466, 0.0
        %v4499 = vmax.f32 %v4467, 0.0
        %v4500 = vmax.f32 %v4468, 0.0
        %v4501 = vmax.f32 %v4469, 0.0
        %v4502 = vpack.c.bf16 %v4471, %v4470
        %v4503 = vpack.c.bf16 %v4473, %v4472
        %v4504 = vpack.c.bf16 %v4475, %v4474
        %v4505 = vpack.c.bf16 %v4477, %v4476
        %v4506 = vpack.c.bf16 %v4479, %v4478
        %v4507 = vpack.c.bf16 %v4481, %v4480
        %v4508 = vpack.c.bf16 %v4483, %v4482
        %v4509 = vpack.c.bf16 %v4485, %v4484
        %v4510 = vpack.c.bf16 %v4487, %v4486
        %v4511 = vpack.c.bf16 %v4489, %v4488
        %v4512 = vpack.c.bf16 %v4491, %v4490
        %v4513 = vpack.c.bf16 %v4493, %v4492
        %v4514 = vpack.c.bf16 %v4495, %v4494
        %v4515 = vpack.c.bf16 %v4497, %v4496
        %v4516 = vpack.c.bf16 %v4499, %v4498
        %v4517 = vpack.c.bf16 %v4501, %v4500
        %v4534 = vunpack.c.l.b16 %v4502
        %v4535 = vunpack.c.h.b16 %v4502
        %v4536 = vunpack.c.l.b16 %v4503
        %v4537 = vunpack.c.h.b16 %v4503
        %v4538 = vunpack.c.l.b16 %v4504
        %v4539 = vunpack.c.h.b16 %v4504
        %v4540 = vunpack.c.l.b16 %v4505
        %v4541 = vunpack.c.h.b16 %v4505
        %v4542 = vunpack.c.l.b16 %v4506
        %v4543 = vunpack.c.h.b16 %v4506
        %v4544 = vunpack.c.l.b16 %v4507
        %v4545 = vunpack.c.h.b16 %v4507
        %v4546 = vunpack.c.l.b16 %v4508
        %v4547 = vunpack.c.h.b16 %v4508
        %v4548 = vunpack.c.l.b16 %v4509
        %v4549 = vunpack.c.h.b16 %v4509
        %v4550 = vunpack.c.l.b16 %v4510
        %v4551 = vunpack.c.h.b16 %v4510
        %v4552 = vunpack.c.l.b16 %v4511
        %v4553 = vunpack.c.h.b16 %v4511
        %v4554 = vunpack.c.l.b16 %v4512
        %v4555 = vunpack.c.h.b16 %v4512
        %v4556 = vunpack.c.l.b16 %v4513
        %v4557 = vunpack.c.h.b16 %v4513
        %v4558 = vunpack.c.l.b16 %v4514
        %v4559 = vunpack.c.h.b16 %v4514
        %v4560 = vunpack.c.l.b16 %v4515
        %v4561 = vunpack.c.h.b16 %v4515
        %v4562 = vunpack.c.l.b16 %v4516
        %v4563 = vunpack.c.h.b16 %v4516
        %v4564 = vunpack.c.l.b16 %v4517
        %v4565 = vunpack.c.h.b16 %v4517
        %v4566 = vpack.c.b16 %v4534, %v4534
        %v4567 = vpack.c.b16 %v4535, %v4535
        %v4568 = vpack.c.b16 %v4536, %v4536
        %v4569 = vpack.c.b16 %v4537, %v4537
        %v4570 = vpack.c.b16 %v4538, %v4538
        %v4571 = vpack.c.b16 %v4539, %v4539
        %v4572 = vpack.c.b16 %v4540, %v4540
        %v4573 = vpack.c.b16 %v4541, %v4541
        %v4574 = vpack.c.b16 %v4542, %v4542
        %v4575 = vpack.c.b16 %v4543, %v4543
        %v4576 = vpack.c.b16 %v4544, %v4544
        %v4577 = vpack.c.b16 %v4545, %v4545
        %v4578 = vpack.c.b16 %v4546, %v4546
        %v4579 = vpack.c.b16 %v4547, %v4547
        %v4580 = vpack.c.b16 %v4548, %v4548
        %v4581 = vpack.c.b16 %v4549, %v4549
        %v4582 = vpack.c.b16 %v4550, %v4550
        %v4583 = vpack.c.b16 %v4551, %v4551
        %v4584 = vpack.c.b16 %v4552, %v4552
        %v4585 = vpack.c.b16 %v4553, %v4553
        %v4586 = vpack.c.b16 %v4554, %v4554
        %v4587 = vpack.c.b16 %v4555, %v4555
        %v4588 = vpack.c.b16 %v4556, %v4556
        %v4589 = vpack.c.b16 %v4557, %v4557
        %v4590 = vpack.c.b16 %v4558, %v4558
        %v4591 = vpack.c.b16 %v4559, %v4559
        %v4592 = vpack.c.b16 %v4560, %v4560
        %v4593 = vpack.c.b16 %v4561, %v4561
        %v4594 = vpack.c.b16 %v4562, %v4562
        %v4595 = vpack.c.b16 %v4563, %v4563
        %v4596 = vpack.c.b16 %v4564, %v4564
        %v4597 = vpack.c.b16 %v4565, %v4565
        %4630 = vst [vmem:[%s422] sm:$0xf] %v4566
        %4631 = vst [vmem:[%s422 + $0x4] sm:$0xf] %v4567
        %4632 = vst [vmem:[%s422 + $0x8] sm:$0xf] %v4568
        %4633 = vst [vmem:[%s422 + $0xc] sm:$0xf] %v4569
        %4634 = vst [vmem:[%s422 + $0x10] sm:$0xf] %v4570
        %4635 = vst [vmem:[%s422 + $0x14] sm:$0xf] %v4571
        %4636 = vst [vmem:[%s422 + $0x18] sm:$0xf] %v4572
        %4637 = vst [vmem:[%s422 + $0x1c] sm:$0xf] %v4573
        %4638 = vst [vmem:[%s422 + $0x20] sm:$0xf] %v4574
        %4639 = vst [vmem:[%s422 + $0x24] sm:$0xf] %v4575
        %4640 = vst [vmem:[%s422 + $0x28] sm:$0xf] %v4576
        %4641 = vst [vmem:[%s422 + $0x2c] sm:$0xf] %v4577
        %4642 = vst [vmem:[%s422 + $0x30] sm:$0xf] %v4578
        %4643 = vst [vmem:[%s422 + $0x34] sm:$0xf] %v4579
        %4644 = vst [vmem:[%s422 + $0x38] sm:$0xf] %v4580
        %4645 = vst [vmem:[%s422 + $0x3c] sm:$0xf] %v4581
        %4646 = vst [vmem:[%s422 + $0x40] sm:$0xf] %v4582
        %4647 = vst [vmem:[%s422 + $0x44] sm:$0xf] %v4583
        %4648 = vst [vmem:[%s422 + $0x48] sm:$0xf] %v4584
        %4649 = vst [vmem:[%s422 + $0x4c] sm:$0xf] %v4585
        %4650 = vst [vmem:[%s422 + $0x50] sm:$0xf] %v4586
        %4651 = vst [vmem:[%s422 + $0x54] sm:$0xf] %v4587
        %4652 = vst [vmem:[%s422 + $0x58] sm:$0xf] %v4588
        %4653 = vst [vmem:[%s422 + $0x5c] sm:$0xf] %v4589
        %4654 = vst [vmem:[%s422 + $0x60] sm:$0xf] %v4590
        %4655 = vst [vmem:[%s422 + $0x64] sm:$0xf] %v4591
        %4656 = vst [vmem:[%s422 + $0x68] sm:$0xf] %v4592
        %4657 = vst [vmem:[%s422 + $0x6c] sm:$0xf] %v4593
        %4658 = vst [vmem:[%s422 + $0x70] sm:$0xf] %v4594
        %4659 = vst [vmem:[%s422 + $0x74] sm:$0xf] %v4595
        %4660 = vst [vmem:[%s422 + $0x78] sm:$0xf] %v4596
        %4661 = vst [vmem:[%s422 + $0x7c] sm:$0xf] %v4597
        %s4662 = sand.u32 %s244, 1
        %s4663 = scalar_lea.sflag [#allocation5], %s4662
        %s4664 = sand.u32 %s244, 1
        %s4665 = smul.addr %s4664, 128
        %s4666 = scalar_lea.vmem [#allocation12], %s4665
        // Predicated region
        $region85: #{tpu_custom_call.1} parent=55 // pred_check
          %p4667 = pneg %p254
        $region86: #{tpu_custom_call.1} parent=55 // pred_check_branch
          %4669 = sbr.rel (%p4667) target = $region88
        $region87: #{tpu_custom_call.1} parent=55 // pred_region
          %s4670 = smul.u32 32, %s33
          %s4672 = ssub.s32 2048, 2048
          %4673 = vsyncadd %s4663, %s4672
          %s4674 = smul.addr %s32, 64
          %s4675 = sadd.s32 %s4670, %s4674
          %s4676 = smul.addr %s4675, 64
          %s4677 = scalar_lea.hbm %s9, %s4676
          %s4678 = sshll.u32 %s4666, 4
          %s4679 = int_to_ptr.vmem [resolvable:$true] %s4678
          %4684 = dma.vmem_to_hbm [thread:$0]  %s4679, 2048, %s4677, %s4663, 64, 64, 4
        $region88: #{tpu_custom_call.1} parent=55 // pred_fallthru
          _
      $region56: #{tpu_custom_call.1} parent=5 // pred_fallthru
        _
      %p4685 = scmp.le.s32.totalorder 2, %s23
      // Predicated region
      $region89: #{tpu_custom_call.1} parent=5 // pred_check
        %p4686 = pneg %p4685
      $region90: #{tpu_custom_call.1} parent=5 // pred_check_branch
        %4688 = sbr.rel (%p4686) target = $region92
      $region91: #{tpu_custom_call.1} parent=5 // pred_region
        %s4689 = ssub.s32 %s23, 2
        // Predicated region
        $region93: #{tpu_custom_call.1} parent=91 // pred_check
          %p4690 = pneg %p260
        $region94: #{tpu_custom_call.1} parent=91 // pred_check_branch
          %4692 = sbr.rel (%p4690) target = $region96
        $region95: #{tpu_custom_call.1} parent=91 // pred_region
          %s4693 = sand.u32 %s245, 1
          %s4694 = scalar_lea.sflag [#allocation5], %s4693
          %s4695 = sand.u32 %s245, 1
          %s4696 = smul.addr %s4695, 128
          %s4697 = scalar_lea.vmem [#allocation12], %s4696
          %4698 = dma.done %s4694, 2048
        $region96: #{tpu_custom_call.1} parent=91 // pred_fallthru
          _
      $region92: #{tpu_custom_call.1} parent=5 // pred_fallthru
        _
    $region6: #{tpu_custom_call.1} parent=1 // loop_footer
      %s27 = sadd.s32 1, %s23
    $region7: #{tpu_custom_call.1} parent=1 // loop_footer_branch
      %22 = sbr.rel target = $region3
    $region8: #{tpu_custom_call.1} parent=1 // loop_exit
      _
    %4699 = vsyncpa [#allocation4], 1
    %s4700 = scalar_lea.sflag [#allocation4], 1
    %4701 = vsyncpa %s4700, 1
    %4702 = vsyncpa [#allocation7], 1
    %4703 = vsyncpa [#allocation10], 1
    %4704 = vsyncpa [#allocation5], 1
    %s4705 = scalar_lea.sflag [#allocation5], 1
    %4706 = vsyncpa %s4705, 1

</llo_original>
